<compile_context>
chip_gen: v6e
topology: v6e:2x2x1
jax: 0.10.0
libtpu: 0.0.40
codegen_flags: <defaults>
</compile_context>

<pallas_src>
import numpy as np

import jax
import jax.numpy as jnp
from jax import lax
from jax.experimental import pallas as pl
from jax.experimental.pallas import tpu as pltpu


# ------------------------------ fused kernel --------------------------------

def _lenet_kernel(img4_ref, w1e_ref, b1_ref, w2e_ref, b2_ref,
                  fc1w_ref, fc1b_ref, fc2w_ref, fc2b_ref, fc3w_ref, fc3b_ref,
                  o_ref):
    """Full LeNet forward for one batch tile, entirely in VMEM.

    img4_ref: (4, 4, nb, 7, 7) = 4x4 polyphase split of the (nb, 28, 28) image:
              img4[m, l, n, s, t] == img[n, 4*s + m, 4*t + l].
    o_ref:    (nb, 1, 10) logits.
    """
    f32 = jnp.float32
    nb = img4_ref.shape[2]

    # ---- conv1 (5x5, 1->6) + ReLU + 2x2/2 max-pool --------------------------
    # Patch row (r, s) holds img[n, 4u + r, 4v + s] for the pooled-output pixel
    # (2u + p, 2v + q); r = 2p + i + kh, s = 2q + j + kw with (i, j) the pooling
    # branch.  All 8x8 (r, s) slices are unit-stride reads of the phase planes.
    taps = []
    for r in range(8):
        for s in range(8):
            taps.append(img4_ref[r % 4, s % 4, :,
                                 r // 4:r // 4 + 6,
                                 s // 4:s // 4 + 6])              # (nb, 6, 6)
    p1 = jnp.stack(taps, axis=0).reshape(64, nb * 36)             # (64, nb*36)
    # One wide MXU matmul covers all 4 phases x 4 pooling branches x 6 channels.
    r1 = jnp.dot(w1e_ref[...], p1, preferred_element_type=f32)    # (96, nb*36)
    # Max over the 4 pooling branches (24 rows per branch), then shared bias +
    # ReLU applied once (hoisted out of the branches).
    pooled1 = jnp.maximum(jnp.maximum(r1[0:24], r1[24:48]),
                          jnp.maximum(r1[48:72], r1[72:96]))
    a1 = jnp.maximum(pooled1 + b1_ref[...], 0.0)                  # (24, nb*36)

    # ---- conv2 (5x5, 6->16) + ReLU + 2x2/2 max-pool --------------------------
    # a1 rows = (output phase p*2+q)*6 + channel; cols = (n, u, v) with the
    # 12x12 post-pool pixel at (2u + p, 2v + q) -> unit-stride slices again.
    a1r = a1.reshape(4, 6, nb, 6, 6)
    pieces = []
    for r in range(6):
        for s in range(6):
            sl = a1r[(r % 2) * 2 + (s % 2), :, :,
                     r // 2:r // 2 + 4,
                     s // 2:s // 2 + 4]                           # (6, nb, 4, 4)
            pieces.append(sl.reshape(6, nb * 16))
    p2 = jnp.concatenate(pieces, axis=0)                          # (216, nb*16)
    r2 = jnp.dot(w2e_ref[...], p2, preferred_element_type=f32)    # (64, nb*16)
    pooled2 = jnp.maximum(jnp.maximum(r2[0:16], r2[16:32]),
                          jnp.maximum(r2[32:48], r2[48:64]))
    a2 = jnp.maximum(pooled2 + b2_ref[...], 0.0)                  # (16, nb*16)

    # ---- flatten to torch (n, c*16 + h*4 + w) order, fc1 -> fc2 -> fc3 -------
    xflat = a2.reshape(16, nb, 16).transpose(1, 0, 2).reshape(nb, 256)
    h = jnp.dot(xflat, fc1w_ref[...], preferred_element_type=f32) + fc1b_ref[...]
    h = jnp.maximum(h, 0.0)
    h = jnp.dot(h, fc2w_ref[...], preferred_element_type=f32) + fc2b_ref[...]
    h = jnp.maximum(h, 0.0)
    logits = jnp.dot(h, fc3w_ref[...], preferred_element_type=f32) + fc3b_ref[...]
    o_ref[...] = logits.reshape(nb, 1, 10)


# ------------------------------ kernel wrapper -------------------------------

def _batch_block(n):
    """Batch-tile size: >=2 grid steps whenever n >= 2 (v7x megacore),
    capped so the per-step working set stays small."""
    if n <= 1:
        return 1
    return min(16, pl.cdiv(n, 2))


def net_forward(params, x):
    """x: (N, 1, 28, 28) NCHW fp32 -> (N, 10).  Matches torch Net.forward."""
    x = x.astype(jnp.float32)
    n = x.shape[0]
    # Byte-neutral 4x4 polyphase split of the input image (done once by XLA):
    # img4[m, l, n, s, t] = img[n, 4*s + m, 4*t + l].
    img = x.reshape(n, 28, 28)
    img4 = img.reshape(n, 7, 4, 7, 4).transpose(2, 4, 0, 1, 3)    # (4,4,N,7,7)

    nb = _batch_block(n)
    grid = (pl.cdiv(n, nb),)

    def resident(shape):  # whole-array block, VMEM-resident across grid steps
        return pl.BlockSpec(shape, lambda b, shape=shape: (0,) * len(shape))

    out = pl.pallas_call(
        _lenet_kernel,
        out_shape=jax.ShapeDtypeStruct((n, 1, 10), jnp.float32),
        grid=grid,
        in_specs=[
            pl.BlockSpec((4, 4, nb, 7, 7), lambda b: (0, 0, b, 0, 0)),
            resident((96, 64)),    # conv1 expanded weight
            resident((24, 1)),     # conv1 bias (tiled per output phase)
            resident((64, 216)),   # conv2 expanded weight
            resident((16, 1)),     # conv2 bias
            resident((256, 120)), resident((1, 120)),   # fc1
            resident((120, 84)), resident((1, 84)),     # fc2
            resident((84, 10)), resident((1, 10)),      # fc3
        ],
        out_specs=pl.BlockSpec((nb, 1, 10), lambda b: (b, 0, 0)),
        compiler_params=pltpu.CompilerParams(
            dimension_semantics=("parallel",),
            vmem_limit_bytes=32 * 1024 * 1024),
    )(img4, params["w1e"], params["b1"], params["w2e"], params["b2"],
      params["fc1_w"], params["fc1_b"], params["fc2_w"], params["fc2_b"],
      params["fc3_w"], params["fc3_b"])
    return out.reshape(n, 10)


# ------------------------------- parameters ---------------------------------

def _uniform(key, shape, fan_in):
    bound = 1.0 / jnp.sqrt(jnp.float32(fan_in))
    return jax.random.uniform(key, shape, jnp.float32, -bound, bound)


def init_torch_params(key):
    """Parameters in the original PyTorch layouts."""
    ks = jax.random.split(key, 10)
    return {
        "conv1_w": _uniform(ks[0], (6, 1, 5, 5), 1 * 5 * 5),
        "conv1_b": _uniform(ks[1], (6,), 1 * 5 * 5),
        "conv2_w": _uniform(ks[2], (16, 6, 5, 5), 6 * 5 * 5),
        "conv2_b": _uniform(ks[3], (16,), 6 * 5 * 5),
        "fc1_w": _uniform(ks[4], (120, 256), 256),
        "fc1_b": _uniform(ks[5], (120,), 256),
        "fc2_w": _uniform(ks[6], (84, 120), 120),
        "fc2_b": _uniform(ks[7], (84,), 120),
        "fc3_w": _uniform(ks[8], (10, 84), 84),
        "fc3_b": _uniform(ks[9], (10,), 84),
    }


def prepare_params(tp):
    """One-time re-layout into the fused kernel's matmul form (init time only).

    conv1: W1e[(i*2+j)*24 + (p*2+q)*6 + c, r*8 + s] = w1[c, r-2p-i, s-2q-j]
    conv2: W2e[(i*2+j)*16 + co, (r*6+s)*6 + ci]     = w2[co, ci, r-i, s-j]
    (zero where the kernel tap index falls outside 0..4).
    """
    w1 = np.asarray(tp["conv1_w"], np.float32)[:, 0]      # (6, 5, 5)
    b1 = np.asarray(tp["conv1_b"], np.float32)
    w2 = np.asarray(tp["conv2_w"], np.float32)             # (16, 6, 5, 5)
    b2 = np.asarray(tp["conv2_b"], np.float32)

    w1e = np.zeros((96, 64), np.float32)
    for i in range(2):
        for j in range(2):
            br = 2 * i + j
            for p in range(2):
                for q in range(2):
                    ph = 2 * p + q
                    row0 = br * 24 + ph * 6
                    for r in range(8):
                        kh = r - 2 * p - i
                        if not 0 <= kh < 5:
                            continue
                        for s in range(8):
                            kw = s - 2 * q - j
                            if not 0 <= kw < 5:
                                continue
                            w1e[row0:row0 + 6, r * 8 + s] = w1[:, kh, kw]

    w2e = np.zeros((64, 216), np.float32)
    for i in range(2):
        for j in range(2):
            br = 2 * i + j
            for r in range(6):
                kh = r - i
                if not 0 <= kh < 5:
                    continue
                for s in range(6):
                    kw = s - j
                    if not 0 <= kw < 5:
                        continue
                    col0 = (r * 6 + s) * 6
                    w2e[br * 16:br * 16 + 16, col0:col0 + 6] = w2[:, :, kh, kw]

    return {
        "w1e": jnp.asarray(w1e),
        "b1": jnp.asarray(np.tile(b1, 4).reshape(24, 1)),
        "w2e": jnp.asarray(w2e),
        "b2": jnp.asarray(b2.reshape(16, 1)),
        # fc weights transposed once so the kernel computes y = x @ W^T + b
        # without any transpose in the hot path.
        "fc1_w": jnp.asarray(np.asarray(tp["fc1_w"], np.float32).T),   # (256,120)
        "fc1_b": jnp.asarray(np.asarray(tp["fc1_b"], np.float32).reshape(1, 120)),
        "fc2_w": jnp.asarray(np.asarray(tp["fc2_w"], np.float32).T),   # (120,84)
        "fc2_b": jnp.asarray(np.asarray(tp["fc2_b"], np.float32).reshape(1, 84)),
        "fc3_w": jnp.asarray(np.asarray(tp["fc3_w"], np.float32).T),   # (84,10)
        "fc3_b": jnp.asarray(np.asarray(tp["fc3_b"], np.float32).reshape(1, 10)),
    }


# ------------------------------ pure-JAX reference ---------------------------

def net_forward_reference(tp, x):
    """Pure-JAX/XLA reference mirroring the torch module (fp32, HIGHEST)."""
    prec = lax.Precision.HIGHEST

    def conv(y, w, b):
        y = lax.conv_general_dilated(
            y, w, (1, 1), "VALID",
            dimension_numbers=("NCHW", "OIHW", "NCHW"), precision=prec)
        return jax.nn.relu(y + b.reshape(1, -1, 1, 1))

    def pool(y):
        n, c, h, w = y.shape
        return jnp.max(y.reshape(n, c, h // 2, 2, w // 2, 2), axis=(3, 5))

    y = pool(conv(x, tp["conv1_w"], tp["conv1_b"]))
    y = pool(conv(y, tp["conv2_w"], tp["conv2_b"]))
    y = y.reshape(y.shape[0], -1)
    y = jax.nn.relu(jnp.dot(y, tp["fc1_w"].T, precision=prec) + tp["fc1_b"])
    y = jax.nn.relu(jnp.dot(y, tp["fc2_w"].T, precision=prec) + tp["fc2_b"])
    return jnp.dot(y, tp["fc3_w"].T, precision=prec) + tp["fc3_b"]


# ---------------------------------- main -------------------------------------

if __name__ == "__main__":
    key = jax.random.PRNGKey(0)
    k_params, k_input = jax.random.split(key)
    torch_params = init_torch_params(k_params)
    params = prepare_params(torch_params)

    # MNIST-shaped input (the 16*4*4 flatten implies 28x28 single-channel).
    x = jax.random.normal(k_input, (2, 1, 28, 28), jnp.float32)

    out = jax.block_until_ready(jax.jit(net_forward)(params, x))
    assert out.shape == (2, 10), out.shape
    assert out.dtype == jnp.float32

    ref = jax.block_until_ready(jax.jit(net_forward_reference)(torch_params, x))
    max_err = float(jnp.max(jnp.abs(out - ref)))
    assert jnp.allclose(out, ref, rtol=5e-3, atol=5e-3), max_err

    print("KERNEL_OK")
</pallas_src>

<mosaic_0001>
module attributes {stable_mosaic.version = 11 : i64} {
  func.func @_lenet_kernel(%arg0: i32, %arg1: memref<4x4x1x7x7xf32, #tpu.memory_space<vmem>>, %arg2: memref<96x64xf32, #tpu.memory_space<vmem>>, %arg3: memref<24x1xf32, #tpu.memory_space<vmem>>, %arg4: memref<64x216xf32, #tpu.memory_space<vmem>>, %arg5: memref<16x1xf32, #tpu.memory_space<vmem>>, %arg6: memref<256x120xf32, #tpu.memory_space<vmem>>, %arg7: memref<1x120xf32, #tpu.memory_space<vmem>>, %arg8: memref<120x84xf32, #tpu.memory_space<vmem>>, %arg9: memref<1x84xf32, #tpu.memory_space<vmem>>, %arg10: memref<84x10xf32, #tpu.memory_space<vmem>>, %arg11: memref<1x10xf32, #tpu.memory_space<vmem>>, %arg12: memref<1x1x10xf32, #tpu.memory_space<vmem>>) attributes {dimension_semantics = [#tpu.dimension_semantics<parallel>], iteration_bounds = array<i64: 2>, scalar_prefetch = 0 : i64, scratch_operands = 0 : i64, tpu.core_type = #tpu.core_type<tc>, window_params = [{transform_indices = @transform_0, window_bounds = array<i64: 4, 4, 1, 7, 7>}, {pipeline_mode = #tpu.pipeline_mode<synchronous>, transform_indices = @transform_1, window_bounds = array<i64: 96, 64>}, {pipeline_mode = #tpu.pipeline_mode<synchronous>, transform_indices = @transform_2, window_bounds = array<i64: 24, 1>}, {pipeline_mode = #tpu.pipeline_mode<synchronous>, transform_indices = @transform_3, window_bounds = array<i64: 64, 216>}, {pipeline_mode = #tpu.pipeline_mode<synchronous>, transform_indices = @transform_4, window_bounds = array<i64: 16, 1>}, {pipeline_mode = #tpu.pipeline_mode<synchronous>, transform_indices = @transform_5, window_bounds = array<i64: 256, 120>}, {pipeline_mode = #tpu.pipeline_mode<synchronous>, transform_indices = @transform_6, window_bounds = array<i64: 1, 120>}, {pipeline_mode = #tpu.pipeline_mode<synchronous>, transform_indices = @transform_7, window_bounds = array<i64: 120, 84>}, {pipeline_mode = #tpu.pipeline_mode<synchronous>, transform_indices = @transform_8, window_bounds = array<i64: 1, 84>}, {pipeline_mode = #tpu.pipeline_mode<synchronous>, transform_indices = @transform_9, window_bounds = array<i64: 84, 10>}, {pipeline_mode = #tpu.pipeline_mode<synchronous>, transform_indices = @transform_10, window_bounds = array<i64: 1, 10>}, {transform_indices = @transform_11, window_bounds = array<i64: 1, 1, 10>}]} {
    %c0 = arith.constant 0 : index
    %c0_0 = arith.constant 0 : index
    %c0_1 = arith.constant 0 : index
    %c0_2 = arith.constant 0 : index
    %c0_3 = arith.constant 0 : index
    %0 = vector.load %arg1[%c0, %c0_0, %c0_1, %c0_2, %c0_3] : memref<4x4x1x7x7xf32, #tpu.memory_space<vmem>>, vector<1x1x1x6x6xf32>
    %1 = vector.shape_cast %0 : vector<1x1x1x6x6xf32> to vector<1x6x6xf32>
    %c0_4 = arith.constant 0 : index
    %c1 = arith.constant 1 : index
    %c0_5 = arith.constant 0 : index
    %c0_6 = arith.constant 0 : index
    %c0_7 = arith.constant 0 : index
    %2 = vector.load %arg1[%c0_4, %c1, %c0_5, %c0_6, %c0_7] : memref<4x4x1x7x7xf32, #tpu.memory_space<vmem>>, vector<1x1x1x6x6xf32>
    %3 = vector.shape_cast %2 : vector<1x1x1x6x6xf32> to vector<1x6x6xf32>
    %c0_8 = arith.constant 0 : index
    %c2 = arith.constant 2 : index
    %c0_9 = arith.constant 0 : index
    %c0_10 = arith.constant 0 : index
    %c0_11 = arith.constant 0 : index
    %4 = vector.load %arg1[%c0_8, %c2, %c0_9, %c0_10, %c0_11] : memref<4x4x1x7x7xf32, #tpu.memory_space<vmem>>, vector<1x1x1x6x6xf32>
    %5 = vector.shape_cast %4 : vector<1x1x1x6x6xf32> to vector<1x6x6xf32>
    %c0_12 = arith.constant 0 : index
    %c3 = arith.constant 3 : index
    %c0_13 = arith.constant 0 : index
    %c0_14 = arith.constant 0 : index
    %c0_15 = arith.constant 0 : index
    %6 = vector.load %arg1[%c0_12, %c3, %c0_13, %c0_14, %c0_15] : memref<4x4x1x7x7xf32, #tpu.memory_space<vmem>>, vector<1x1x1x6x6xf32>
    %7 = vector.shape_cast %6 : vector<1x1x1x6x6xf32> to vector<1x6x6xf32>
    %c0_16 = arith.constant 0 : index
    %c0_17 = arith.constant 0 : index
    %c0_18 = arith.constant 0 : index
    %c0_19 = arith.constant 0 : index
    %c1_20 = arith.constant 1 : index
    %8 = vector.load %arg1[%c0_16, %c0_17, %c0_18, %c0_19, %c1_20] : memref<4x4x1x7x7xf32, #tpu.memory_space<vmem>>, vector<1x1x1x6x6xf32>
    %9 = vector.shape_cast %8 : vector<1x1x1x6x6xf32> to vector<1x6x6xf32>
    %c0_21 = arith.constant 0 : index
    %c1_22 = arith.constant 1 : index
    %c0_23 = arith.constant 0 : index
    %c0_24 = arith.constant 0 : index
    %c1_25 = arith.constant 1 : index
    %10 = vector.load %arg1[%c0_21, %c1_22, %c0_23, %c0_24, %c1_25] : memref<4x4x1x7x7xf32, #tpu.memory_space<vmem>>, vector<1x1x1x6x6xf32>
    %11 = vector.shape_cast %10 : vector<1x1x1x6x6xf32> to vector<1x6x6xf32>
    %c0_26 = arith.constant 0 : index
    %c2_27 = arith.constant 2 : index
    %c0_28 = arith.constant 0 : index
    %c0_29 = arith.constant 0 : index
    %c1_30 = arith.constant 1 : index
    %12 = vector.load %arg1[%c0_26, %c2_27, %c0_28, %c0_29, %c1_30] : memref<4x4x1x7x7xf32, #tpu.memory_space<vmem>>, vector<1x1x1x6x6xf32>
    %13 = vector.shape_cast %12 : vector<1x1x1x6x6xf32> to vector<1x6x6xf32>
    %c0_31 = arith.constant 0 : index
    %c3_32 = arith.constant 3 : index
    %c0_33 = arith.constant 0 : index
    %c0_34 = arith.constant 0 : index
    %c1_35 = arith.constant 1 : index
    %14 = vector.load %arg1[%c0_31, %c3_32, %c0_33, %c0_34, %c1_35] : memref<4x4x1x7x7xf32, #tpu.memory_space<vmem>>, vector<1x1x1x6x6xf32>
    %15 = vector.shape_cast %14 : vector<1x1x1x6x6xf32> to vector<1x6x6xf32>
    %c1_36 = arith.constant 1 : index
    %c0_37 = arith.constant 0 : index
    %c0_38 = arith.constant 0 : index
    %c0_39 = arith.constant 0 : index
    %c0_40 = arith.constant 0 : index
    %16 = vector.load %arg1[%c1_36, %c0_37, %c0_38, %c0_39, %c0_40] : memref<4x4x1x7x7xf32, #tpu.memory_space<vmem>>, vector<1x1x1x6x6xf32>
    %17 = vector.shape_cast %16 : vector<1x1x1x6x6xf32> to vector<1x6x6xf32>
    %c1_41 = arith.constant 1 : index
    %c1_42 = arith.constant 1 : index
    %c0_43 = arith.constant 0 : index
    %c0_44 = arith.constant 0 : index
    %c0_45 = arith.constant 0 : index
    %18 = vector.load %arg1[%c1_41, %c1_42, %c0_43, %c0_44, %c0_45] : memref<4x4x1x7x7xf32, #tpu.memory_space<vmem>>, vector<1x1x1x6x6xf32>
    %19 = vector.shape_cast %18 : vector<1x1x1x6x6xf32> to vector<1x6x6xf32>
    %c1_46 = arith.constant 1 : index
    %c2_47 = arith.constant 2 : index
    %c0_48 = arith.constant 0 : index
    %c0_49 = arith.constant 0 : index
    %c0_50 = arith.constant 0 : index
    %20 = vector.load %arg1[%c1_46, %c2_47, %c0_48, %c0_49, %c0_50] : memref<4x4x1x7x7xf32, #tpu.memory_space<vmem>>, vector<1x1x1x6x6xf32>
    %21 = vector.shape_cast %20 : vector<1x1x1x6x6xf32> to vector<1x6x6xf32>
    %c1_51 = arith.constant 1 : index
    %c3_52 = arith.constant 3 : index
    %c0_53 = arith.constant 0 : index
    %c0_54 = arith.constant 0 : index
    %c0_55 = arith.constant 0 : index
    %22 = vector.load %arg1[%c1_51, %c3_52, %c0_53, %c0_54, %c0_55] : memref<4x4x1x7x7xf32, #tpu.memory_space<vmem>>, vector<1x1x1x6x6xf32>
    %23 = vector.shape_cast %22 : vector<1x1x1x6x6xf32> to vector<1x6x6xf32>
    %c1_56 = arith.constant 1 : index
    %c0_57 = arith.constant 0 : index
    %c0_58 = arith.constant 0 : index
    %c0_59 = arith.constant 0 : index
    %c1_60 = arith.constant 1 : index
    %24 = vector.load %arg1[%c1_56, %c0_57, %c0_58, %c0_59, %c1_60] : memref<4x4x1x7x7xf32, #tpu.memory_space<vmem>>, vector<1x1x1x6x6xf32>
    %25 = vector.shape_cast %24 : vector<1x1x1x6x6xf32> to vector<1x6x6xf32>
    %c1_61 = arith.constant 1 : index
    %c1_62 = arith.constant 1 : index
    %c0_63 = arith.constant 0 : index
    %c0_64 = arith.constant 0 : index
    %c1_65 = arith.constant 1 : index
    %26 = vector.load %arg1[%c1_61, %c1_62, %c0_63, %c0_64, %c1_65] : memref<4x4x1x7x7xf32, #tpu.memory_space<vmem>>, vector<1x1x1x6x6xf32>
    %27 = vector.shape_cast %26 : vector<1x1x1x6x6xf32> to vector<1x6x6xf32>
    %c1_66 = arith.constant 1 : index
    %c2_67 = arith.constant 2 : index
    %c0_68 = arith.constant 0 : index
    %c0_69 = arith.constant 0 : index
    %c1_70 = arith.constant 1 : index
    %28 = vector.load %arg1[%c1_66, %c2_67, %c0_68, %c0_69, %c1_70] : memref<4x4x1x7x7xf32, #tpu.memory_space<vmem>>, vector<1x1x1x6x6xf32>
    %29 = vector.shape_cast %28 : vector<1x1x1x6x6xf32> to vector<1x6x6xf32>
    %c1_71 = arith.constant 1 : index
    %c3_72 = arith.constant 3 : index
    %c0_73 = arith.constant 0 : index
    %c0_74 = arith.constant 0 : index
    %c1_75 = arith.constant 1 : index
    %30 = vector.load %arg1[%c1_71, %c3_72, %c0_73, %c0_74, %c1_75] : memref<4x4x1x7x7xf32, #tpu.memory_space<vmem>>, vector<1x1x1x6x6xf32>
    %31 = vector.shape_cast %30 : vector<1x1x1x6x6xf32> to vector<1x6x6xf32>
    %c2_76 = arith.constant 2 : index
    %c0_77 = arith.constant 0 : index
    %c0_78 = arith.constant 0 : index
    %c0_79 = arith.constant 0 : index
    %c0_80 = arith.constant 0 : index
    %32 = vector.load %arg1[%c2_76, %c0_77, %c0_78, %c0_79, %c0_80] : memref<4x4x1x7x7xf32, #tpu.memory_space<vmem>>, vector<1x1x1x6x6xf32>
    %33 = vector.shape_cast %32 : vector<1x1x1x6x6xf32> to vector<1x6x6xf32>
    %c2_81 = arith.constant 2 : index
    %c1_82 = arith.constant 1 : index
    %c0_83 = arith.constant 0 : index
    %c0_84 = arith.constant 0 : index
    %c0_85 = arith.constant 0 : index
    %34 = vector.load %arg1[%c2_81, %c1_82, %c0_83, %c0_84, %c0_85] : memref<4x4x1x7x7xf32, #tpu.memory_space<vmem>>, vector<1x1x1x6x6xf32>
    %35 = vector.shape_cast %34 : vector<1x1x1x6x6xf32> to vector<1x6x6xf32>
    %c2_86 = arith.constant 2 : index
    %c2_87 = arith.constant 2 : index
    %c0_88 = arith.constant 0 : index
    %c0_89 = arith.constant 0 : index
    %c0_90 = arith.constant 0 : index
    %36 = vector.load %arg1[%c2_86, %c2_87, %c0_88, %c0_89, %c0_90] : memref<4x4x1x7x7xf32, #tpu.memory_space<vmem>>, vector<1x1x1x6x6xf32>
    %37 = vector.shape_cast %36 : vector<1x1x1x6x6xf32> to vector<1x6x6xf32>
    %c2_91 = arith.constant 2 : index
    %c3_92 = arith.constant 3 : index
    %c0_93 = arith.constant 0 : index
    %c0_94 = arith.constant 0 : index
    %c0_95 = arith.constant 0 : index
    %38 = vector.load %arg1[%c2_91, %c3_92, %c0_93, %c0_94, %c0_95] : memref<4x4x1x7x7xf32, #tpu.memory_space<vmem>>, vector<1x1x1x6x6xf32>
    %39 = vector.shape_cast %38 : vector<1x1x1x6x6xf32> to vector<1x6x6xf32>
    %c2_96 = arith.constant 2 : index
    %c0_97 = arith.constant 0 : index
    %c0_98 = arith.constant 0 : index
    %c0_99 = arith.constant 0 : index
    %c1_100 = arith.constant 1 : index
    %40 = vector.load %arg1[%c2_96, %c0_97, %c0_98, %c0_99, %c1_100] : memref<4x4x1x7x7xf32, #tpu.memory_space<vmem>>, vector<1x1x1x6x6xf32>
    %41 = vector.shape_cast %40 : vector<1x1x1x6x6xf32> to vector<1x6x6xf32>
    %c2_101 = arith.constant 2 : index
    %c1_102 = arith.constant 1 : index
    %c0_103 = arith.constant 0 : index
    %c0_104 = arith.constant 0 : index
    %c1_105 = arith.constant 1 : index
    %42 = vector.load %arg1[%c2_101, %c1_102, %c0_103, %c0_104, %c1_105] : memref<4x4x1x7x7xf32, #tpu.memory_space<vmem>>, vector<1x1x1x6x6xf32>
    %43 = vector.shape_cast %42 : vector<1x1x1x6x6xf32> to vector<1x6x6xf32>
    %c2_106 = arith.constant 2 : index
    %c2_107 = arith.constant 2 : index
    %c0_108 = arith.constant 0 : index
    %c0_109 = arith.constant 0 : index
    %c1_110 = arith.constant 1 : index
    %44 = vector.load %arg1[%c2_106, %c2_107, %c0_108, %c0_109, %c1_110] : memref<4x4x1x7x7xf32, #tpu.memory_space<vmem>>, vector<1x1x1x6x6xf32>
    %45 = vector.shape_cast %44 : vector<1x1x1x6x6xf32> to vector<1x6x6xf32>
    %c2_111 = arith.constant 2 : index
    %c3_112 = arith.constant 3 : index
    %c0_113 = arith.constant 0 : index
    %c0_114 = arith.constant 0 : index
    %c1_115 = arith.constant 1 : index
    %46 = vector.load %arg1[%c2_111, %c3_112, %c0_113, %c0_114, %c1_115] : memref<4x4x1x7x7xf32, #tpu.memory_space<vmem>>, vector<1x1x1x6x6xf32>
    %47 = vector.shape_cast %46 : vector<1x1x1x6x6xf32> to vector<1x6x6xf32>
    %c3_116 = arith.constant 3 : index
    %c0_117 = arith.constant 0 : index
    %c0_118 = arith.constant 0 : index
    %c0_119 = arith.constant 0 : index
    %c0_120 = arith.constant 0 : index
    %48 = vector.load %arg1[%c3_116, %c0_117, %c0_118, %c0_119, %c0_120] : memref<4x4x1x7x7xf32, #tpu.memory_space<vmem>>, vector<1x1x1x6x6xf32>
    %49 = vector.shape_cast %48 : vector<1x1x1x6x6xf32> to vector<1x6x6xf32>
    %c3_121 = arith.constant 3 : index
    %c1_122 = arith.constant 1 : index
    %c0_123 = arith.constant 0 : index
    %c0_124 = arith.constant 0 : index
    %c0_125 = arith.constant 0 : index
    %50 = vector.load %arg1[%c3_121, %c1_122, %c0_123, %c0_124, %c0_125] : memref<4x4x1x7x7xf32, #tpu.memory_space<vmem>>, vector<1x1x1x6x6xf32>
    %51 = vector.shape_cast %50 : vector<1x1x1x6x6xf32> to vector<1x6x6xf32>
    %c3_126 = arith.constant 3 : index
    %c2_127 = arith.constant 2 : index
    %c0_128 = arith.constant 0 : index
    %c0_129 = arith.constant 0 : index
    %c0_130 = arith.constant 0 : index
    %52 = vector.load %arg1[%c3_126, %c2_127, %c0_128, %c0_129, %c0_130] : memref<4x4x1x7x7xf32, #tpu.memory_space<vmem>>, vector<1x1x1x6x6xf32>
    %53 = vector.shape_cast %52 : vector<1x1x1x6x6xf32> to vector<1x6x6xf32>
    %c3_131 = arith.constant 3 : index
    %c3_132 = arith.constant 3 : index
    %c0_133 = arith.constant 0 : index
    %c0_134 = arith.constant 0 : index
    %c0_135 = arith.constant 0 : index
    %54 = vector.load %arg1[%c3_131, %c3_132, %c0_133, %c0_134, %c0_135] : memref<4x4x1x7x7xf32, #tpu.memory_space<vmem>>, vector<1x1x1x6x6xf32>
    %55 = vector.shape_cast %54 : vector<1x1x1x6x6xf32> to vector<1x6x6xf32>
    %c3_136 = arith.constant 3 : index
    %c0_137 = arith.constant 0 : index
    %c0_138 = arith.constant 0 : index
    %c0_139 = arith.constant 0 : index
    %c1_140 = arith.constant 1 : index
    %56 = vector.load %arg1[%c3_136, %c0_137, %c0_138, %c0_139, %c1_140] : memref<4x4x1x7x7xf32, #tpu.memory_space<vmem>>, vector<1x1x1x6x6xf32>
    %57 = vector.shape_cast %56 : vector<1x1x1x6x6xf32> to vector<1x6x6xf32>
    %c3_141 = arith.constant 3 : index
    %c1_142 = arith.constant 1 : index
    %c0_143 = arith.constant 0 : index
    %c0_144 = arith.constant 0 : index
    %c1_145 = arith.constant 1 : index
    %58 = vector.load %arg1[%c3_141, %c1_142, %c0_143, %c0_144, %c1_145] : memref<4x4x1x7x7xf32, #tpu.memory_space<vmem>>, vector<1x1x1x6x6xf32>
    %59 = vector.shape_cast %58 : vector<1x1x1x6x6xf32> to vector<1x6x6xf32>
    %c3_146 = arith.constant 3 : index
    %c2_147 = arith.constant 2 : index
    %c0_148 = arith.constant 0 : index
    %c0_149 = arith.constant 0 : index
    %c1_150 = arith.constant 1 : index
    %60 = vector.load %arg1[%c3_146, %c2_147, %c0_148, %c0_149, %c1_150] : memref<4x4x1x7x7xf32, #tpu.memory_space<vmem>>, vector<1x1x1x6x6xf32>
    %61 = vector.shape_cast %60 : vector<1x1x1x6x6xf32> to vector<1x6x6xf32>
    %c3_151 = arith.constant 3 : index
    %c3_152 = arith.constant 3 : index
    %c0_153 = arith.constant 0 : index
    %c0_154 = arith.constant 0 : index
    %c1_155 = arith.constant 1 : index
    %62 = vector.load %arg1[%c3_151, %c3_152, %c0_153, %c0_154, %c1_155] : memref<4x4x1x7x7xf32, #tpu.memory_space<vmem>>, vector<1x1x1x6x6xf32>
    %63 = vector.shape_cast %62 : vector<1x1x1x6x6xf32> to vector<1x6x6xf32>
    %c0_156 = arith.constant 0 : index
    %c0_157 = arith.constant 0 : index
    %c0_158 = arith.constant 0 : index
    %c1_159 = arith.constant 1 : index
    %c0_160 = arith.constant 0 : index
    %64 = vector.load %arg1[%c0_156, %c0_157, %c0_158, %c1_159, %c0_160] : memref<4x4x1x7x7xf32, #tpu.memory_space<vmem>>, vector<1x1x1x6x6xf32>
    %65 = vector.shape_cast %64 : vector<1x1x1x6x6xf32> to vector<1x6x6xf32>
    %c0_161 = arith.constant 0 : index
    %c1_162 = arith.constant 1 : index
    %c0_163 = arith.constant 0 : index
    %c1_164 = arith.constant 1 : index
    %c0_165 = arith.constant 0 : index
    %66 = vector.load %arg1[%c0_161, %c1_162, %c0_163, %c1_164, %c0_165] : memref<4x4x1x7x7xf32, #tpu.memory_space<vmem>>, vector<1x1x1x6x6xf32>
    %67 = vector.shape_cast %66 : vector<1x1x1x6x6xf32> to vector<1x6x6xf32>
    %c0_166 = arith.constant 0 : index
    %c2_167 = arith.constant 2 : index
    %c0_168 = arith.constant 0 : index
    %c1_169 = arith.constant 1 : index
    %c0_170 = arith.constant 0 : index
    %68 = vector.load %arg1[%c0_166, %c2_167, %c0_168, %c1_169, %c0_170] : memref<4x4x1x7x7xf32, #tpu.memory_space<vmem>>, vector<1x1x1x6x6xf32>
    %69 = vector.shape_cast %68 : vector<1x1x1x6x6xf32> to vector<1x6x6xf32>
    %c0_171 = arith.constant 0 : index
    %c3_172 = arith.constant 3 : index
    %c0_173 = arith.constant 0 : index
    %c1_174 = arith.constant 1 : index
    %c0_175 = arith.constant 0 : index
    %70 = vector.load %arg1[%c0_171, %c3_172, %c0_173, %c1_174, %c0_175] : memref<4x4x1x7x7xf32, #tpu.memory_space<vmem>>, vector<1x1x1x6x6xf32>
    %71 = vector.shape_cast %70 : vector<1x1x1x6x6xf32> to vector<1x6x6xf32>
    %c0_176 = arith.constant 0 : index
    %c0_177 = arith.constant 0 : index
    %c0_178 = arith.constant 0 : index
    %c1_179 = arith.constant 1 : index
    %c1_180 = arith.constant 1 : index
    %72 = vector.load %arg1[%c0_176, %c0_177, %c0_178, %c1_179, %c1_180] : memref<4x4x1x7x7xf32, #tpu.memory_space<vmem>>, vector<1x1x1x6x6xf32>
    %73 = vector.shape_cast %72 : vector<1x1x1x6x6xf32> to vector<1x6x6xf32>
    %c0_181 = arith.constant 0 : index
    %c1_182 = arith.constant 1 : index
    %c0_183 = arith.constant 0 : index
    %c1_184 = arith.constant 1 : index
    %c1_185 = arith.constant 1 : index
    %74 = vector.load %arg1[%c0_181, %c1_182, %c0_183, %c1_184, %c1_185] : memref<4x4x1x7x7xf32, #tpu.memory_space<vmem>>, vector<1x1x1x6x6xf32>
    %75 = vector.shape_cast %74 : vector<1x1x1x6x6xf32> to vector<1x6x6xf32>
    %c0_186 = arith.constant 0 : index
    %c2_187 = arith.constant 2 : index
    %c0_188 = arith.constant 0 : index
    %c1_189 = arith.constant 1 : index
    %c1_190 = arith.constant 1 : index
    %76 = vector.load %arg1[%c0_186, %c2_187, %c0_188, %c1_189, %c1_190] : memref<4x4x1x7x7xf32, #tpu.memory_space<vmem>>, vector<1x1x1x6x6xf32>
    %77 = vector.shape_cast %76 : vector<1x1x1x6x6xf32> to vector<1x6x6xf32>
    %c0_191 = arith.constant 0 : index
    %c3_192 = arith.constant 3 : index
    %c0_193 = arith.constant 0 : index
    %c1_194 = arith.constant 1 : index
    %c1_195 = arith.constant 1 : index
    %78 = vector.load %arg1[%c0_191, %c3_192, %c0_193, %c1_194, %c1_195] : memref<4x4x1x7x7xf32, #tpu.memory_space<vmem>>, vector<1x1x1x6x6xf32>
    %79 = vector.shape_cast %78 : vector<1x1x1x6x6xf32> to vector<1x6x6xf32>
    %c1_196 = arith.constant 1 : index
    %c0_197 = arith.constant 0 : index
    %c0_198 = arith.constant 0 : index
    %c1_199 = arith.constant 1 : index
    %c0_200 = arith.constant 0 : index
    %80 = vector.load %arg1[%c1_196, %c0_197, %c0_198, %c1_199, %c0_200] : memref<4x4x1x7x7xf32, #tpu.memory_space<vmem>>, vector<1x1x1x6x6xf32>
    %81 = vector.shape_cast %80 : vector<1x1x1x6x6xf32> to vector<1x6x6xf32>
    %c1_201 = arith.constant 1 : index
    %c1_202 = arith.constant 1 : index
    %c0_203 = arith.constant 0 : index
    %c1_204 = arith.constant 1 : index
    %c0_205 = arith.constant 0 : index
    %82 = vector.load %arg1[%c1_201, %c1_202, %c0_203, %c1_204, %c0_205] : memref<4x4x1x7x7xf32, #tpu.memory_space<vmem>>, vector<1x1x1x6x6xf32>
    %83 = vector.shape_cast %82 : vector<1x1x1x6x6xf32> to vector<1x6x6xf32>
    %c1_206 = arith.constant 1 : index
    %c2_207 = arith.constant 2 : index
    %c0_208 = arith.constant 0 : index
    %c1_209 = arith.constant 1 : index
    %c0_210 = arith.constant 0 : index
    %84 = vector.load %arg1[%c1_206, %c2_207, %c0_208, %c1_209, %c0_210] : memref<4x4x1x7x7xf32, #tpu.memory_space<vmem>>, vector<1x1x1x6x6xf32>
    %85 = vector.shape_cast %84 : vector<1x1x1x6x6xf32> to vector<1x6x6xf32>
    %c1_211 = arith.constant 1 : index
    %c3_212 = arith.constant 3 : index
    %c0_213 = arith.constant 0 : index
    %c1_214 = arith.constant 1 : index
    %c0_215 = arith.constant 0 : index
    %86 = vector.load %arg1[%c1_211, %c3_212, %c0_213, %c1_214, %c0_215] : memref<4x4x1x7x7xf32, #tpu.memory_space<vmem>>, vector<1x1x1x6x6xf32>
    %87 = vector.shape_cast %86 : vector<1x1x1x6x6xf32> to vector<1x6x6xf32>
    %c1_216 = arith.constant 1 : index
    %c0_217 = arith.constant 0 : index
    %c0_218 = arith.constant 0 : index
    %c1_219 = arith.constant 1 : index
    %c1_220 = arith.constant 1 : index
    %88 = vector.load %arg1[%c1_216, %c0_217, %c0_218, %c1_219, %c1_220] : memref<4x4x1x7x7xf32, #tpu.memory_space<vmem>>, vector<1x1x1x6x6xf32>
    %89 = vector.shape_cast %88 : vector<1x1x1x6x6xf32> to vector<1x6x6xf32>
    %c1_221 = arith.constant 1 : index
    %c1_222 = arith.constant 1 : index
    %c0_223 = arith.constant 0 : index
    %c1_224 = arith.constant 1 : index
    %c1_225 = arith.constant 1 : index
    %90 = vector.load %arg1[%c1_221, %c1_222, %c0_223, %c1_224, %c1_225] : memref<4x4x1x7x7xf32, #tpu.memory_space<vmem>>, vector<1x1x1x6x6xf32>
    %91 = vector.shape_cast %90 : vector<1x1x1x6x6xf32> to vector<1x6x6xf32>
    %c1_226 = arith.constant 1 : index
    %c2_227 = arith.constant 2 : index
    %c0_228 = arith.constant 0 : index
    %c1_229 = arith.constant 1 : index
    %c1_230 = arith.constant 1 : index
    %92 = vector.load %arg1[%c1_226, %c2_227, %c0_228, %c1_229, %c1_230] : memref<4x4x1x7x7xf32, #tpu.memory_space<vmem>>, vector<1x1x1x6x6xf32>
    %93 = vector.shape_cast %92 : vector<1x1x1x6x6xf32> to vector<1x6x6xf32>
    %c1_231 = arith.constant 1 : index
    %c3_232 = arith.constant 3 : index
    %c0_233 = arith.constant 0 : index
    %c1_234 = arith.constant 1 : index
    %c1_235 = arith.constant 1 : index
    %94 = vector.load %arg1[%c1_231, %c3_232, %c0_233, %c1_234, %c1_235] : memref<4x4x1x7x7xf32, #tpu.memory_space<vmem>>, vector<1x1x1x6x6xf32>
    %95 = vector.shape_cast %94 : vector<1x1x1x6x6xf32> to vector<1x6x6xf32>
    %c2_236 = arith.constant 2 : index
    %c0_237 = arith.constant 0 : index
    %c0_238 = arith.constant 0 : index
    %c1_239 = arith.constant 1 : index
    %c0_240 = arith.constant 0 : index
    %96 = vector.load %arg1[%c2_236, %c0_237, %c0_238, %c1_239, %c0_240] : memref<4x4x1x7x7xf32, #tpu.memory_space<vmem>>, vector<1x1x1x6x6xf32>
    %97 = vector.shape_cast %96 : vector<1x1x1x6x6xf32> to vector<1x6x6xf32>
    %c2_241 = arith.constant 2 : index
    %c1_242 = arith.constant 1 : index
    %c0_243 = arith.constant 0 : index
    %c1_244 = arith.constant 1 : index
    %c0_245 = arith.constant 0 : index
    %98 = vector.load %arg1[%c2_241, %c1_242, %c0_243, %c1_244, %c0_245] : memref<4x4x1x7x7xf32, #tpu.memory_space<vmem>>, vector<1x1x1x6x6xf32>
    %99 = vector.shape_cast %98 : vector<1x1x1x6x6xf32> to vector<1x6x6xf32>
    %c2_246 = arith.constant 2 : index
    %c2_247 = arith.constant 2 : index
    %c0_248 = arith.constant 0 : index
    %c1_249 = arith.constant 1 : index
    %c0_250 = arith.constant 0 : index
    %100 = vector.load %arg1[%c2_246, %c2_247, %c0_248, %c1_249, %c0_250] : memref<4x4x1x7x7xf32, #tpu.memory_space<vmem>>, vector<1x1x1x6x6xf32>
    %101 = vector.shape_cast %100 : vector<1x1x1x6x6xf32> to vector<1x6x6xf32>
    %c2_251 = arith.constant 2 : index
    %c3_252 = arith.constant 3 : index
    %c0_253 = arith.constant 0 : index
    %c1_254 = arith.constant 1 : index
    %c0_255 = arith.constant 0 : index
    %102 = vector.load %arg1[%c2_251, %c3_252, %c0_253, %c1_254, %c0_255] : memref<4x4x1x7x7xf32, #tpu.memory_space<vmem>>, vector<1x1x1x6x6xf32>
    %103 = vector.shape_cast %102 : vector<1x1x1x6x6xf32> to vector<1x6x6xf32>
    %c2_256 = arith.constant 2 : index
    %c0_257 = arith.constant 0 : index
    %c0_258 = arith.constant 0 : index
    %c1_259 = arith.constant 1 : index
    %c1_260 = arith.constant 1 : index
    %104 = vector.load %arg1[%c2_256, %c0_257, %c0_258, %c1_259, %c1_260] : memref<4x4x1x7x7xf32, #tpu.memory_space<vmem>>, vector<1x1x1x6x6xf32>
    %105 = vector.shape_cast %104 : vector<1x1x1x6x6xf32> to vector<1x6x6xf32>
    %c2_261 = arith.constant 2 : index
    %c1_262 = arith.constant 1 : index
    %c0_263 = arith.constant 0 : index
    %c1_264 = arith.constant 1 : index
    %c1_265 = arith.constant 1 : index
    %106 = vector.load %arg1[%c2_261, %c1_262, %c0_263, %c1_264, %c1_265] : memref<4x4x1x7x7xf32, #tpu.memory_space<vmem>>, vector<1x1x1x6x6xf32>
    %107 = vector.shape_cast %106 : vector<1x1x1x6x6xf32> to vector<1x6x6xf32>
    %c2_266 = arith.constant 2 : index
    %c2_267 = arith.constant 2 : index
    %c0_268 = arith.constant 0 : index
    %c1_269 = arith.constant 1 : index
    %c1_270 = arith.constant 1 : index
    %108 = vector.load %arg1[%c2_266, %c2_267, %c0_268, %c1_269, %c1_270] : memref<4x4x1x7x7xf32, #tpu.memory_space<vmem>>, vector<1x1x1x6x6xf32>
    %109 = vector.shape_cast %108 : vector<1x1x1x6x6xf32> to vector<1x6x6xf32>
    %c2_271 = arith.constant 2 : index
    %c3_272 = arith.constant 3 : index
    %c0_273 = arith.constant 0 : index
    %c1_274 = arith.constant 1 : index
    %c1_275 = arith.constant 1 : index
    %110 = vector.load %arg1[%c2_271, %c3_272, %c0_273, %c1_274, %c1_275] : memref<4x4x1x7x7xf32, #tpu.memory_space<vmem>>, vector<1x1x1x6x6xf32>
    %111 = vector.shape_cast %110 : vector<1x1x1x6x6xf32> to vector<1x6x6xf32>
    %c3_276 = arith.constant 3 : index
    %c0_277 = arith.constant 0 : index
    %c0_278 = arith.constant 0 : index
    %c1_279 = arith.constant 1 : index
    %c0_280 = arith.constant 0 : index
    %112 = vector.load %arg1[%c3_276, %c0_277, %c0_278, %c1_279, %c0_280] : memref<4x4x1x7x7xf32, #tpu.memory_space<vmem>>, vector<1x1x1x6x6xf32>
    %113 = vector.shape_cast %112 : vector<1x1x1x6x6xf32> to vector<1x6x6xf32>
    %c3_281 = arith.constant 3 : index
    %c1_282 = arith.constant 1 : index
    %c0_283 = arith.constant 0 : index
    %c1_284 = arith.constant 1 : index
    %c0_285 = arith.constant 0 : index
    %114 = vector.load %arg1[%c3_281, %c1_282, %c0_283, %c1_284, %c0_285] : memref<4x4x1x7x7xf32, #tpu.memory_space<vmem>>, vector<1x1x1x6x6xf32>
    %115 = vector.shape_cast %114 : vector<1x1x1x6x6xf32> to vector<1x6x6xf32>
    %c3_286 = arith.constant 3 : index
    %c2_287 = arith.constant 2 : index
    %c0_288 = arith.constant 0 : index
    %c1_289 = arith.constant 1 : index
    %c0_290 = arith.constant 0 : index
    %116 = vector.load %arg1[%c3_286, %c2_287, %c0_288, %c1_289, %c0_290] : memref<4x4x1x7x7xf32, #tpu.memory_space<vmem>>, vector<1x1x1x6x6xf32>
    %117 = vector.shape_cast %116 : vector<1x1x1x6x6xf32> to vector<1x6x6xf32>
    %c3_291 = arith.constant 3 : index
    %c3_292 = arith.constant 3 : index
    %c0_293 = arith.constant 0 : index
    %c1_294 = arith.constant 1 : index
    %c0_295 = arith.constant 0 : index
    %118 = vector.load %arg1[%c3_291, %c3_292, %c0_293, %c1_294, %c0_295] : memref<4x4x1x7x7xf32, #tpu.memory_space<vmem>>, vector<1x1x1x6x6xf32>
    %119 = vector.shape_cast %118 : vector<1x1x1x6x6xf32> to vector<1x6x6xf32>
    %c3_296 = arith.constant 3 : index
    %c0_297 = arith.constant 0 : index
    %c0_298 = arith.constant 0 : index
    %c1_299 = arith.constant 1 : index
    %c1_300 = arith.constant 1 : index
    %120 = vector.load %arg1[%c3_296, %c0_297, %c0_298, %c1_299, %c1_300] : memref<4x4x1x7x7xf32, #tpu.memory_space<vmem>>, vector<1x1x1x6x6xf32>
    %121 = vector.shape_cast %120 : vector<1x1x1x6x6xf32> to vector<1x6x6xf32>
    %c3_301 = arith.constant 3 : index
    %c1_302 = arith.constant 1 : index
    %c0_303 = arith.constant 0 : index
    %c1_304 = arith.constant 1 : index
    %c1_305 = arith.constant 1 : index
    %122 = vector.load %arg1[%c3_301, %c1_302, %c0_303, %c1_304, %c1_305] : memref<4x4x1x7x7xf32, #tpu.memory_space<vmem>>, vector<1x1x1x6x6xf32>
    %123 = vector.shape_cast %122 : vector<1x1x1x6x6xf32> to vector<1x6x6xf32>
    %c3_306 = arith.constant 3 : index
    %c2_307 = arith.constant 2 : index
    %c0_308 = arith.constant 0 : index
    %c1_309 = arith.constant 1 : index
    %c1_310 = arith.constant 1 : index
    %124 = vector.load %arg1[%c3_306, %c2_307, %c0_308, %c1_309, %c1_310] : memref<4x4x1x7x7xf32, #tpu.memory_space<vmem>>, vector<1x1x1x6x6xf32>
    %125 = vector.shape_cast %124 : vector<1x1x1x6x6xf32> to vector<1x6x6xf32>
    %c3_311 = arith.constant 3 : index
    %c3_312 = arith.constant 3 : index
    %c0_313 = arith.constant 0 : index
    %c1_314 = arith.constant 1 : index
    %c1_315 = arith.constant 1 : index
    %126 = vector.load %arg1[%c3_311, %c3_312, %c0_313, %c1_314, %c1_315] : memref<4x4x1x7x7xf32, #tpu.memory_space<vmem>>, vector<1x1x1x6x6xf32>
    %127 = vector.shape_cast %126 : vector<1x1x1x6x6xf32> to vector<1x6x6xf32>
    %128 = vector.shape_cast %1 : vector<1x6x6xf32> to vector<1x1x6x6xf32>
    %129 = vector.shape_cast %3 : vector<1x6x6xf32> to vector<1x1x6x6xf32>
    %130 = vector.shape_cast %5 : vector<1x6x6xf32> to vector<1x1x6x6xf32>
    %131 = vector.shape_cast %7 : vector<1x6x6xf32> to vector<1x1x6x6xf32>
    %132 = vector.shape_cast %9 : vector<1x6x6xf32> to vector<1x1x6x6xf32>
    %133 = vector.shape_cast %11 : vector<1x6x6xf32> to vector<1x1x6x6xf32>
    %134 = vector.shape_cast %13 : vector<1x6x6xf32> to vector<1x1x6x6xf32>
    %135 = vector.shape_cast %15 : vector<1x6x6xf32> to vector<1x1x6x6xf32>
    %136 = vector.shape_cast %17 : vector<1x6x6xf32> to vector<1x1x6x6xf32>
    %137 = vector.shape_cast %19 : vector<1x6x6xf32> to vector<1x1x6x6xf32>
    %138 = vector.shape_cast %21 : vector<1x6x6xf32> to vector<1x1x6x6xf32>
    %139 = vector.shape_cast %23 : vector<1x6x6xf32> to vector<1x1x6x6xf32>
    %140 = vector.shape_cast %25 : vector<1x6x6xf32> to vector<1x1x6x6xf32>
    %141 = vector.shape_cast %27 : vector<1x6x6xf32> to vector<1x1x6x6xf32>
    %142 = vector.shape_cast %29 : vector<1x6x6xf32> to vector<1x1x6x6xf32>
    %143 = vector.shape_cast %31 : vector<1x6x6xf32> to vector<1x1x6x6xf32>
    %144 = vector.shape_cast %33 : vector<1x6x6xf32> to vector<1x1x6x6xf32>
    %145 = vector.shape_cast %35 : vector<1x6x6xf32> to vector<1x1x6x6xf32>
    %146 = vector.shape_cast %37 : vector<1x6x6xf32> to vector<1x1x6x6xf32>
    %147 = vector.shape_cast %39 : vector<1x6x6xf32> to vector<1x1x6x6xf32>
    %148 = vector.shape_cast %41 : vector<1x6x6xf32> to vector<1x1x6x6xf32>
    %149 = vector.shape_cast %43 : vector<1x6x6xf32> to vector<1x1x6x6xf32>
    %150 = vector.shape_cast %45 : vector<1x6x6xf32> to vector<1x1x6x6xf32>
    %151 = vector.shape_cast %47 : vector<1x6x6xf32> to vector<1x1x6x6xf32>
    %152 = vector.shape_cast %49 : vector<1x6x6xf32> to vector<1x1x6x6xf32>
    %153 = vector.shape_cast %51 : vector<1x6x6xf32> to vector<1x1x6x6xf32>
    %154 = vector.shape_cast %53 : vector<1x6x6xf32> to vector<1x1x6x6xf32>
    %155 = vector.shape_cast %55 : vector<1x6x6xf32> to vector<1x1x6x6xf32>
    %156 = vector.shape_cast %57 : vector<1x6x6xf32> to vector<1x1x6x6xf32>
    %157 = vector.shape_cast %59 : vector<1x6x6xf32> to vector<1x1x6x6xf32>
    %158 = vector.shape_cast %61 : vector<1x6x6xf32> to vector<1x1x6x6xf32>
    %159 = vector.shape_cast %63 : vector<1x6x6xf32> to vector<1x1x6x6xf32>
    %160 = vector.shape_cast %65 : vector<1x6x6xf32> to vector<1x1x6x6xf32>
    %161 = vector.shape_cast %67 : vector<1x6x6xf32> to vector<1x1x6x6xf32>
    %162 = vector.shape_cast %69 : vector<1x6x6xf32> to vector<1x1x6x6xf32>
    %163 = vector.shape_cast %71 : vector<1x6x6xf32> to vector<1x1x6x6xf32>
    %164 = vector.shape_cast %73 : vector<1x6x6xf32> to vector<1x1x6x6xf32>
    %165 = vector.shape_cast %75 : vector<1x6x6xf32> to vector<1x1x6x6xf32>
    %166 = vector.shape_cast %77 : vector<1x6x6xf32> to vector<1x1x6x6xf32>
    %167 = vector.shape_cast %79 : vector<1x6x6xf32> to vector<1x1x6x6xf32>
    %168 = vector.shape_cast %81 : vector<1x6x6xf32> to vector<1x1x6x6xf32>
    %169 = vector.shape_cast %83 : vector<1x6x6xf32> to vector<1x1x6x6xf32>
    %170 = vector.shape_cast %85 : vector<1x6x6xf32> to vector<1x1x6x6xf32>
    %171 = vector.shape_cast %87 : vector<1x6x6xf32> to vector<1x1x6x6xf32>
    %172 = vector.shape_cast %89 : vector<1x6x6xf32> to vector<1x1x6x6xf32>
    %173 = vector.shape_cast %91 : vector<1x6x6xf32> to vector<1x1x6x6xf32>
    %174 = vector.shape_cast %93 : vector<1x6x6xf32> to vector<1x1x6x6xf32>
    %175 = vector.shape_cast %95 : vector<1x6x6xf32> to vector<1x1x6x6xf32>
    %176 = vector.shape_cast %97 : vector<1x6x6xf32> to vector<1x1x6x6xf32>
    %177 = vector.shape_cast %99 : vector<1x6x6xf32> to vector<1x1x6x6xf32>
    %178 = vector.shape_cast %101 : vector<1x6x6xf32> to vector<1x1x6x6xf32>
    %179 = vector.shape_cast %103 : vector<1x6x6xf32> to vector<1x1x6x6xf32>
    %180 = vector.shape_cast %105 : vector<1x6x6xf32> to vector<1x1x6x6xf32>
    %181 = vector.shape_cast %107 : vector<1x6x6xf32> to vector<1x1x6x6xf32>
    %182 = vector.shape_cast %109 : vector<1x6x6xf32> to vector<1x1x6x6xf32>
    %183 = vector.shape_cast %111 : vector<1x6x6xf32> to vector<1x1x6x6xf32>
    %184 = vector.shape_cast %113 : vector<1x6x6xf32> to vector<1x1x6x6xf32>
    %185 = vector.shape_cast %115 : vector<1x6x6xf32> to vector<1x1x6x6xf32>
    %186 = vector.shape_cast %117 : vector<1x6x6xf32> to vector<1x1x6x6xf32>
    %187 = vector.shape_cast %119 : vector<1x6x6xf32> to vector<1x1x6x6xf32>
    %188 = vector.shape_cast %121 : vector<1x6x6xf32> to vector<1x1x6x6xf32>
    %189 = vector.shape_cast %123 : vector<1x6x6xf32> to vector<1x1x6x6xf32>
    %190 = vector.shape_cast %125 : vector<1x6x6xf32> to vector<1x1x6x6xf32>
    %191 = vector.shape_cast %127 : vector<1x6x6xf32> to vector<1x1x6x6xf32>
    %192 = tpu.concatenate %128, %129, %130, %131, %132, %133, %134, %135, %136, %137, %138, %139, %140, %141, %142, %143 in 0 : vector<1x1x6x6xf32>, vector<1x1x6x6xf32>, vector<1x1x6x6xf32>, vector<1x1x6x6xf32>, vector<1x1x6x6xf32>, vector<1x1x6x6xf32>, vector<1x1x6x6xf32>, vector<1x1x6x6xf32>, vector<1x1x6x6xf32>, vector<1x1x6x6xf32>, vector<1x1x6x6xf32>, vector<1x1x6x6xf32>, vector<1x1x6x6xf32>, vector<1x1x6x6xf32>, vector<1x1x6x6xf32>, vector<1x1x6x6xf32> -> vector<16x1x6x6xf32>
    %193 = tpu.concatenate %144, %145, %146, %147, %148, %149, %150, %151, %152, %153, %154, %155, %156, %157, %158, %159 in 0 : vector<1x1x6x6xf32>, vector<1x1x6x6xf32>, vector<1x1x6x6xf32>, vector<1x1x6x6xf32>, vector<1x1x6x6xf32>, vector<1x1x6x6xf32>, vector<1x1x6x6xf32>, vector<1x1x6x6xf32>, vector<1x1x6x6xf32>, vector<1x1x6x6xf32>, vector<1x1x6x6xf32>, vector<1x1x6x6xf32>, vector<1x1x6x6xf32>, vector<1x1x6x6xf32>, vector<1x1x6x6xf32>, vector<1x1x6x6xf32> -> vector<16x1x6x6xf32>
    %194 = tpu.concatenate %160, %161, %162, %163, %164, %165, %166, %167, %168, %169, %170, %171, %172, %173, %174, %175 in 0 : vector<1x1x6x6xf32>, vector<1x1x6x6xf32>, vector<1x1x6x6xf32>, vector<1x1x6x6xf32>, vector<1x1x6x6xf32>, vector<1x1x6x6xf32>, vector<1x1x6x6xf32>, vector<1x1x6x6xf32>, vector<1x1x6x6xf32>, vector<1x1x6x6xf32>, vector<1x1x6x6xf32>, vector<1x1x6x6xf32>, vector<1x1x6x6xf32>, vector<1x1x6x6xf32>, vector<1x1x6x6xf32>, vector<1x1x6x6xf32> -> vector<16x1x6x6xf32>
    %195 = tpu.concatenate %176, %177, %178, %179, %180, %181, %182, %183, %184, %185, %186, %187, %188, %189, %190, %191 in 0 : vector<1x1x6x6xf32>, vector<1x1x6x6xf32>, vector<1x1x6x6xf32>, vector<1x1x6x6xf32>, vector<1x1x6x6xf32>, vector<1x1x6x6xf32>, vector<1x1x6x6xf32>, vector<1x1x6x6xf32>, vector<1x1x6x6xf32>, vector<1x1x6x6xf32>, vector<1x1x6x6xf32>, vector<1x1x6x6xf32>, vector<1x1x6x6xf32>, vector<1x1x6x6xf32>, vector<1x1x6x6xf32>, vector<1x1x6x6xf32> -> vector<16x1x6x6xf32>
    %196 = tpu.concatenate %192, %193, %194, %195 in 0 : vector<16x1x6x6xf32>, vector<16x1x6x6xf32>, vector<16x1x6x6xf32>, vector<16x1x6x6xf32> -> vector<64x1x6x6xf32>
    %197 = vector.shape_cast %196 : vector<64x1x6x6xf32> to vector<64x36xf32>
    %c0_316 = arith.constant 0 : index
    %c0_317 = arith.constant 0 : index
    %198 = vector.load %arg2[%c0_316, %c0_317] : memref<96x64xf32, #tpu.memory_space<vmem>>, vector<96x64xf32>
    %cst = arith.constant dense<0.000000e+00> : vector<96x36xf32>
    %199 = tpu.matmul %198, %197, %cst {dimension_numbers = #tpu.dot_dimension_numbers<[1], [0], [0], [1], [0, 0, 1, 1], [], []>} : vector<96x64xf32>, vector<64x36xf32>, vector<96x36xf32> -> vector<96x36xf32>
    %200 = vector.extract_strided_slice %199 {offsets = [0, 0], sizes = [24, 36], strides = [1, 1]} : vector<96x36xf32> to vector<24x36xf32>
    %201 = vector.extract_strided_slice %199 {offsets = [24, 0], sizes = [24, 36], strides = [1, 1]} : vector<96x36xf32> to vector<24x36xf32>
    %202 = arith.maximumf %200, %201 : vector<24x36xf32>
    %203 = vector.extract_strided_slice %199 {offsets = [48, 0], sizes = [24, 36], strides = [1, 1]} : vector<96x36xf32> to vector<24x36xf32>
    %204 = vector.extract_strided_slice %199 {offsets = [72, 0], sizes = [24, 36], strides = [1, 1]} : vector<96x36xf32> to vector<24x36xf32>
    %205 = arith.maximumf %203, %204 : vector<24x36xf32>
    %206 = arith.maximumf %202, %205 : vector<24x36xf32>
    %c0_318 = arith.constant 0 : index
    %c0_319 = arith.constant 0 : index
    %207 = vector.load %arg3[%c0_318, %c0_319] : memref<24x1xf32, #tpu.memory_space<vmem>>, vector<24x1xf32>
    %208 = vector.broadcast %207 : vector<24x1xf32> to vector<24x36xf32>
    %209 = arith.addf %206, %208 : vector<24x36xf32>
    %cst_320 = arith.constant 0.000000e+00 : f32
    %210 = vector.broadcast %cst_320 : f32 to vector<24x36xf32>
    %211 = arith.maximumf %209, %210 : vector<24x36xf32>
    %212 = vector.shape_cast %211 : vector<24x36xf32> to vector<4x6x1x6x6xf32>
    %213 = vector.extract_strided_slice %212 {offsets = [0, 0, 0, 0, 0], sizes = [1, 6, 1, 4, 4], strides = [1, 1, 1, 1, 1]} : vector<4x6x1x6x6xf32> to vector<1x6x1x4x4xf32>
    %214 = vector.shape_cast %213 : vector<1x6x1x4x4xf32> to vector<6x1x4x4xf32>
    %215 = vector.shape_cast %214 : vector<6x1x4x4xf32> to vector<6x16xf32>
    %216 = vector.extract_strided_slice %212 {offsets = [1, 0, 0, 0, 0], sizes = [1, 6, 1, 4, 4], strides = [1, 1, 1, 1, 1]} : vector<4x6x1x6x6xf32> to vector<1x6x1x4x4xf32>
    %217 = vector.shape_cast %216 : vector<1x6x1x4x4xf32> to vector<6x1x4x4xf32>
    %218 = vector.shape_cast %217 : vector<6x1x4x4xf32> to vector<6x16xf32>
    %219 = vector.extract_strided_slice %212 {offsets = [0, 0, 0, 0, 1], sizes = [1, 6, 1, 4, 4], strides = [1, 1, 1, 1, 1]} : vector<4x6x1x6x6xf32> to vector<1x6x1x4x4xf32>
    %220 = vector.shape_cast %219 : vector<1x6x1x4x4xf32> to vector<6x1x4x4xf32>
    %221 = vector.shape_cast %220 : vector<6x1x4x4xf32> to vector<6x16xf32>
    %222 = vector.extract_strided_slice %212 {offsets = [1, 0, 0, 0, 1], sizes = [1, 6, 1, 4, 4], strides = [1, 1, 1, 1, 1]} : vector<4x6x1x6x6xf32> to vector<1x6x1x4x4xf32>
    %223 = vector.shape_cast %222 : vector<1x6x1x4x4xf32> to vector<6x1x4x4xf32>
    %224 = vector.shape_cast %223 : vector<6x1x4x4xf32> to vector<6x16xf32>
    %225 = vector.extract_strided_slice %212 {offsets = [0, 0, 0, 0, 2], sizes = [1, 6, 1, 4, 4], strides = [1, 1, 1, 1, 1]} : vector<4x6x1x6x6xf32> to vector<1x6x1x4x4xf32>
    %226 = vector.shape_cast %225 : vector<1x6x1x4x4xf32> to vector<6x1x4x4xf32>
    %227 = vector.shape_cast %226 : vector<6x1x4x4xf32> to vector<6x16xf32>
    %228 = vector.extract_strided_slice %212 {offsets = [1, 0, 0, 0, 2], sizes = [1, 6, 1, 4, 4], strides = [1, 1, 1, 1, 1]} : vector<4x6x1x6x6xf32> to vector<1x6x1x4x4xf32>
    %229 = vector.shape_cast %228 : vector<1x6x1x4x4xf32> to vector<6x1x4x4xf32>
    %230 = vector.shape_cast %229 : vector<6x1x4x4xf32> to vector<6x16xf32>
    %231 = vector.extract_strided_slice %212 {offsets = [2, 0, 0, 0, 0], sizes = [1, 6, 1, 4, 4], strides = [1, 1, 1, 1, 1]} : vector<4x6x1x6x6xf32> to vector<1x6x1x4x4xf32>
    %232 = vector.shape_cast %231 : vector<1x6x1x4x4xf32> to vector<6x1x4x4xf32>
    %233 = vector.shape_cast %232 : vector<6x1x4x4xf32> to vector<6x16xf32>
    %234 = vector.extract_strided_slice %212 {offsets = [3, 0, 0, 0, 0], sizes = [1, 6, 1, 4, 4], strides = [1, 1, 1, 1, 1]} : vector<4x6x1x6x6xf32> to vector<1x6x1x4x4xf32>
    %235 = vector.shape_cast %234 : vector<1x6x1x4x4xf32> to vector<6x1x4x4xf32>
    %236 = vector.shape_cast %235 : vector<6x1x4x4xf32> to vector<6x16xf32>
    %237 = vector.extract_strided_slice %212 {offsets = [2, 0, 0, 0, 1], sizes = [1, 6, 1, 4, 4], strides = [1, 1, 1, 1, 1]} : vector<4x6x1x6x6xf32> to vector<1x6x1x4x4xf32>
    %238 = vector.shape_cast %237 : vector<1x6x1x4x4xf32> to vector<6x1x4x4xf32>
    %239 = vector.shape_cast %238 : vector<6x1x4x4xf32> to vector<6x16xf32>
    %240 = vector.extract_strided_slice %212 {offsets = [3, 0, 0, 0, 1], sizes = [1, 6, 1, 4, 4], strides = [1, 1, 1, 1, 1]} : vector<4x6x1x6x6xf32> to vector<1x6x1x4x4xf32>
    %241 = vector.shape_cast %240 : vector<1x6x1x4x4xf32> to vector<6x1x4x4xf32>
    %242 = vector.shape_cast %241 : vector<6x1x4x4xf32> to vector<6x16xf32>
    %243 = vector.extract_strided_slice %212 {offsets = [2, 0, 0, 0, 2], sizes = [1, 6, 1, 4, 4], strides = [1, 1, 1, 1, 1]} : vector<4x6x1x6x6xf32> to vector<1x6x1x4x4xf32>
    %244 = vector.shape_cast %243 : vector<1x6x1x4x4xf32> to vector<6x1x4x4xf32>
    %245 = vector.shape_cast %244 : vector<6x1x4x4xf32> to vector<6x16xf32>
    %246 = vector.extract_strided_slice %212 {offsets = [3, 0, 0, 0, 2], sizes = [1, 6, 1, 4, 4], strides = [1, 1, 1, 1, 1]} : vector<4x6x1x6x6xf32> to vector<1x6x1x4x4xf32>
    %247 = vector.shape_cast %246 : vector<1x6x1x4x4xf32> to vector<6x1x4x4xf32>
    %248 = vector.shape_cast %247 : vector<6x1x4x4xf32> to vector<6x16xf32>
    %249 = vector.extract_strided_slice %212 {offsets = [0, 0, 0, 1, 0], sizes = [1, 6, 1, 4, 4], strides = [1, 1, 1, 1, 1]} : vector<4x6x1x6x6xf32> to vector<1x6x1x4x4xf32>
    %250 = vector.shape_cast %249 : vector<1x6x1x4x4xf32> to vector<6x1x4x4xf32>
    %251 = vector.shape_cast %250 : vector<6x1x4x4xf32> to vector<6x16xf32>
    %252 = vector.extract_strided_slice %212 {offsets = [1, 0, 0, 1, 0], sizes = [1, 6, 1, 4, 4], strides = [1, 1, 1, 1, 1]} : vector<4x6x1x6x6xf32> to vector<1x6x1x4x4xf32>
    %253 = vector.shape_cast %252 : vector<1x6x1x4x4xf32> to vector<6x1x4x4xf32>
    %254 = vector.shape_cast %253 : vector<6x1x4x4xf32> to vector<6x16xf32>
    %255 = vector.extract_strided_slice %212 {offsets = [0, 0, 0, 1, 1], sizes = [1, 6, 1, 4, 4], strides = [1, 1, 1, 1, 1]} : vector<4x6x1x6x6xf32> to vector<1x6x1x4x4xf32>
    %256 = vector.shape_cast %255 : vector<1x6x1x4x4xf32> to vector<6x1x4x4xf32>
    %257 = vector.shape_cast %256 : vector<6x1x4x4xf32> to vector<6x16xf32>
    %258 = vector.extract_strided_slice %212 {offsets = [1, 0, 0, 1, 1], sizes = [1, 6, 1, 4, 4], strides = [1, 1, 1, 1, 1]} : vector<4x6x1x6x6xf32> to vector<1x6x1x4x4xf32>
    %259 = vector.shape_cast %258 : vector<1x6x1x4x4xf32> to vector<6x1x4x4xf32>
    %260 = vector.shape_cast %259 : vector<6x1x4x4xf32> to vector<6x16xf32>
    %261 = vector.extract_strided_slice %212 {offsets = [0, 0, 0, 1, 2], sizes = [1, 6, 1, 4, 4], strides = [1, 1, 1, 1, 1]} : vector<4x6x1x6x6xf32> to vector<1x6x1x4x4xf32>
    %262 = vector.shape_cast %261 : vector<1x6x1x4x4xf32> to vector<6x1x4x4xf32>
    %263 = vector.shape_cast %262 : vector<6x1x4x4xf32> to vector<6x16xf32>
    %264 = vector.extract_strided_slice %212 {offsets = [1, 0, 0, 1, 2], sizes = [1, 6, 1, 4, 4], strides = [1, 1, 1, 1, 1]} : vector<4x6x1x6x6xf32> to vector<1x6x1x4x4xf32>
    %265 = vector.shape_cast %264 : vector<1x6x1x4x4xf32> to vector<6x1x4x4xf32>
    %266 = vector.shape_cast %265 : vector<6x1x4x4xf32> to vector<6x16xf32>
    %267 = vector.extract_strided_slice %212 {offsets = [2, 0, 0, 1, 0], sizes = [1, 6, 1, 4, 4], strides = [1, 1, 1, 1, 1]} : vector<4x6x1x6x6xf32> to vector<1x6x1x4x4xf32>
    %268 = vector.shape_cast %267 : vector<1x6x1x4x4xf32> to vector<6x1x4x4xf32>
    %269 = vector.shape_cast %268 : vector<6x1x4x4xf32> to vector<6x16xf32>
    %270 = vector.extract_strided_slice %212 {offsets = [3, 0, 0, 1, 0], sizes = [1, 6, 1, 4, 4], strides = [1, 1, 1, 1, 1]} : vector<4x6x1x6x6xf32> to vector<1x6x1x4x4xf32>
    %271 = vector.shape_cast %270 : vector<1x6x1x4x4xf32> to vector<6x1x4x4xf32>
    %272 = vector.shape_cast %271 : vector<6x1x4x4xf32> to vector<6x16xf32>
    %273 = vector.extract_strided_slice %212 {offsets = [2, 0, 0, 1, 1], sizes = [1, 6, 1, 4, 4], strides = [1, 1, 1, 1, 1]} : vector<4x6x1x6x6xf32> to vector<1x6x1x4x4xf32>
    %274 = vector.shape_cast %273 : vector<1x6x1x4x4xf32> to vector<6x1x4x4xf32>
    %275 = vector.shape_cast %274 : vector<6x1x4x4xf32> to vector<6x16xf32>
    %276 = vector.extract_strided_slice %212 {offsets = [3, 0, 0, 1, 1], sizes = [1, 6, 1, 4, 4], strides = [1, 1, 1, 1, 1]} : vector<4x6x1x6x6xf32> to vector<1x6x1x4x4xf32>
    %277 = vector.shape_cast %276 : vector<1x6x1x4x4xf32> to vector<6x1x4x4xf32>
    %278 = vector.shape_cast %277 : vector<6x1x4x4xf32> to vector<6x16xf32>
    %279 = vector.extract_strided_slice %212 {offsets = [2, 0, 0, 1, 2], sizes = [1, 6, 1, 4, 4], strides = [1, 1, 1, 1, 1]} : vector<4x6x1x6x6xf32> to vector<1x6x1x4x4xf32>
    %280 = vector.shape_cast %279 : vector<1x6x1x4x4xf32> to vector<6x1x4x4xf32>
    %281 = vector.shape_cast %280 : vector<6x1x4x4xf32> to vector<6x16xf32>
    %282 = vector.extract_strided_slice %212 {offsets = [3, 0, 0, 1, 2], sizes = [1, 6, 1, 4, 4], strides = [1, 1, 1, 1, 1]} : vector<4x6x1x6x6xf32> to vector<1x6x1x4x4xf32>
    %283 = vector.shape_cast %282 : vector<1x6x1x4x4xf32> to vector<6x1x4x4xf32>
    %284 = vector.shape_cast %283 : vector<6x1x4x4xf32> to vector<6x16xf32>
    %285 = vector.extract_strided_slice %212 {offsets = [0, 0, 0, 2, 0], sizes = [1, 6, 1, 4, 4], strides = [1, 1, 1, 1, 1]} : vector<4x6x1x6x6xf32> to vector<1x6x1x4x4xf32>
    %286 = vector.shape_cast %285 : vector<1x6x1x4x4xf32> to vector<6x1x4x4xf32>
    %287 = vector.shape_cast %286 : vector<6x1x4x4xf32> to vector<6x16xf32>
    %288 = vector.extract_strided_slice %212 {offsets = [1, 0, 0, 2, 0], sizes = [1, 6, 1, 4, 4], strides = [1, 1, 1, 1, 1]} : vector<4x6x1x6x6xf32> to vector<1x6x1x4x4xf32>
    %289 = vector.shape_cast %288 : vector<1x6x1x4x4xf32> to vector<6x1x4x4xf32>
    %290 = vector.shape_cast %289 : vector<6x1x4x4xf32> to vector<6x16xf32>
    %291 = vector.extract_strided_slice %212 {offsets = [0, 0, 0, 2, 1], sizes = [1, 6, 1, 4, 4], strides = [1, 1, 1, 1, 1]} : vector<4x6x1x6x6xf32> to vector<1x6x1x4x4xf32>
    %292 = vector.shape_cast %291 : vector<1x6x1x4x4xf32> to vector<6x1x4x4xf32>
    %293 = vector.shape_cast %292 : vector<6x1x4x4xf32> to vector<6x16xf32>
    %294 = vector.extract_strided_slice %212 {offsets = [1, 0, 0, 2, 1], sizes = [1, 6, 1, 4, 4], strides = [1, 1, 1, 1, 1]} : vector<4x6x1x6x6xf32> to vector<1x6x1x4x4xf32>
    %295 = vector.shape_cast %294 : vector<1x6x1x4x4xf32> to vector<6x1x4x4xf32>
    %296 = vector.shape_cast %295 : vector<6x1x4x4xf32> to vector<6x16xf32>
    %297 = vector.extract_strided_slice %212 {offsets = [0, 0, 0, 2, 2], sizes = [1, 6, 1, 4, 4], strides = [1, 1, 1, 1, 1]} : vector<4x6x1x6x6xf32> to vector<1x6x1x4x4xf32>
    %298 = vector.shape_cast %297 : vector<1x6x1x4x4xf32> to vector<6x1x4x4xf32>
    %299 = vector.shape_cast %298 : vector<6x1x4x4xf32> to vector<6x16xf32>
    %300 = vector.extract_strided_slice %212 {offsets = [1, 0, 0, 2, 2], sizes = [1, 6, 1, 4, 4], strides = [1, 1, 1, 1, 1]} : vector<4x6x1x6x6xf32> to vector<1x6x1x4x4xf32>
    %301 = vector.shape_cast %300 : vector<1x6x1x4x4xf32> to vector<6x1x4x4xf32>
    %302 = vector.shape_cast %301 : vector<6x1x4x4xf32> to vector<6x16xf32>
    %303 = vector.extract_strided_slice %212 {offsets = [2, 0, 0, 2, 0], sizes = [1, 6, 1, 4, 4], strides = [1, 1, 1, 1, 1]} : vector<4x6x1x6x6xf32> to vector<1x6x1x4x4xf32>
    %304 = vector.shape_cast %303 : vector<1x6x1x4x4xf32> to vector<6x1x4x4xf32>
    %305 = vector.shape_cast %304 : vector<6x1x4x4xf32> to vector<6x16xf32>
    %306 = vector.extract_strided_slice %212 {offsets = [3, 0, 0, 2, 0], sizes = [1, 6, 1, 4, 4], strides = [1, 1, 1, 1, 1]} : vector<4x6x1x6x6xf32> to vector<1x6x1x4x4xf32>
    %307 = vector.shape_cast %306 : vector<1x6x1x4x4xf32> to vector<6x1x4x4xf32>
    %308 = vector.shape_cast %307 : vector<6x1x4x4xf32> to vector<6x16xf32>
    %309 = vector.extract_strided_slice %212 {offsets = [2, 0, 0, 2, 1], sizes = [1, 6, 1, 4, 4], strides = [1, 1, 1, 1, 1]} : vector<4x6x1x6x6xf32> to vector<1x6x1x4x4xf32>
    %310 = vector.shape_cast %309 : vector<1x6x1x4x4xf32> to vector<6x1x4x4xf32>
    %311 = vector.shape_cast %310 : vector<6x1x4x4xf32> to vector<6x16xf32>
    %312 = vector.extract_strided_slice %212 {offsets = [3, 0, 0, 2, 1], sizes = [1, 6, 1, 4, 4], strides = [1, 1, 1, 1, 1]} : vector<4x6x1x6x6xf32> to vector<1x6x1x4x4xf32>
    %313 = vector.shape_cast %312 : vector<1x6x1x4x4xf32> to vector<6x1x4x4xf32>
    %314 = vector.shape_cast %313 : vector<6x1x4x4xf32> to vector<6x16xf32>
    %315 = vector.extract_strided_slice %212 {offsets = [2, 0, 0, 2, 2], sizes = [1, 6, 1, 4, 4], strides = [1, 1, 1, 1, 1]} : vector<4x6x1x6x6xf32> to vector<1x6x1x4x4xf32>
    %316 = vector.shape_cast %315 : vector<1x6x1x4x4xf32> to vector<6x1x4x4xf32>
    %317 = vector.shape_cast %316 : vector<6x1x4x4xf32> to vector<6x16xf32>
    %318 = vector.extract_strided_slice %212 {offsets = [3, 0, 0, 2, 2], sizes = [1, 6, 1, 4, 4], strides = [1, 1, 1, 1, 1]} : vector<4x6x1x6x6xf32> to vector<1x6x1x4x4xf32>
    %319 = vector.shape_cast %318 : vector<1x6x1x4x4xf32> to vector<6x1x4x4xf32>
    %320 = vector.shape_cast %319 : vector<6x1x4x4xf32> to vector<6x16xf32>
    %321 = tpu.concatenate %215, %218, %221, %224, %227, %230, %233, %236, %239, %242, %245, %248, %251, %254, %257, %260 in 0 : vector<6x16xf32>, vector<6x16xf32>, vector<6x16xf32>, vector<6x16xf32>, vector<6x16xf32>, vector<6x16xf32>, vector<6x16xf32>, vector<6x16xf32>, vector<6x16xf32>, vector<6x16xf32>, vector<6x16xf32>, vector<6x16xf32>, vector<6x16xf32>, vector<6x16xf32>, vector<6x16xf32>, vector<6x16xf32> -> vector<96x16xf32>
    %322 = tpu.concatenate %263, %266, %269, %272, %275, %278, %281, %284, %287, %290, %293, %296, %299, %302, %305, %308 in 0 : vector<6x16xf32>, vector<6x16xf32>, vector<6x16xf32>, vector<6x16xf32>, vector<6x16xf32>, vector<6x16xf32>, vector<6x16xf32>, vector<6x16xf32>, vector<6x16xf32>, vector<6x16xf32>, vector<6x16xf32>, vector<6x16xf32>, vector<6x16xf32>, vector<6x16xf32>, vector<6x16xf32>, vector<6x16xf32> -> vector<96x16xf32>
    %323 = tpu.concatenate %311, %314, %317, %320 in 0 : vector<6x16xf32>, vector<6x16xf32>, vector<6x16xf32>, vector<6x16xf32> -> vector<24x16xf32>
    %324 = tpu.concatenate %321, %322, %323 in 0 : vector<96x16xf32>, vector<96x16xf32>, vector<24x16xf32> -> vector<216x16xf32>
    %c0_321 = arith.constant 0 : index
    %c0_322 = arith.constant 0 : index
    %325 = vector.load %arg4[%c0_321, %c0_322] : memref<64x216xf32, #tpu.memory_space<vmem>>, vector<64x216xf32>
    %cst_323 = arith.constant dense<0.000000e+00> : vector<64x16xf32>
    %326 = tpu.matmul %325, %324, %cst_323 {dimension_numbers = #tpu.dot_dimension_numbers<[1], [0], [0], [1], [0, 0, 1, 1], [], []>} : vector<64x216xf32>, vector<216x16xf32>, vector<64x16xf32> -> vector<64x16xf32>
    %327 = vector.extract_strided_slice %326 {offsets = [0, 0], sizes = [16, 16], strides = [1, 1]} : vector<64x16xf32> to vector<16x16xf32>
    %328 = vector.extract_strided_slice %326 {offsets = [16, 0], sizes = [16, 16], strides = [1, 1]} : vector<64x16xf32> to vector<16x16xf32>
    %329 = arith.maximumf %327, %328 : vector<16x16xf32>
    %330 = vector.extract_strided_slice %326 {offsets = [32, 0], sizes = [16, 16], strides = [1, 1]} : vector<64x16xf32> to vector<16x16xf32>
    %331 = vector.extract_strided_slice %326 {offsets = [48, 0], sizes = [16, 16], strides = [1, 1]} : vector<64x16xf32> to vector<16x16xf32>
    %332 = arith.maximumf %330, %331 : vector<16x16xf32>
    %333 = arith.maximumf %329, %332 : vector<16x16xf32>
    %c0_324 = arith.constant 0 : index
    %c0_325 = arith.constant 0 : index
    %334 = vector.load %arg5[%c0_324, %c0_325] : memref<16x1xf32, #tpu.memory_space<vmem>>, vector<16x1xf32>
    %335 = vector.broadcast %334 : vector<16x1xf32> to vector<16x16xf32>
    %336 = arith.addf %333, %335 : vector<16x16xf32>
    %cst_326 = arith.constant 0.000000e+00 : f32
    %337 = vector.broadcast %cst_326 : f32 to vector<16x16xf32>
    %338 = arith.maximumf %336, %337 : vector<16x16xf32>
    %339 = vector.shape_cast %338 : vector<16x16xf32> to vector<16x1x16xf32>
    %340 = tpu.transpose %339, [1, 0, 2] : vector<16x1x16xf32> -> vector<1x16x16xf32>
    %341 = vector.shape_cast %340 : vector<1x16x16xf32> to vector<1x256xf32>
    %c0_327 = arith.constant 0 : index
    %c0_328 = arith.constant 0 : index
    %342 = vector.load %arg6[%c0_327, %c0_328] : memref<256x120xf32, #tpu.memory_space<vmem>>, vector<256x120xf32>
    %cst_329 = arith.constant dense<0.000000e+00> : vector<1x120xf32>
    %343 = tpu.matmul %341, %342, %cst_329 {dimension_numbers = #tpu.dot_dimension_numbers<[1], [0], [0], [1], [0, 0, 1, 1], [], []>} : vector<1x256xf32>, vector<256x120xf32>, vector<1x120xf32> -> vector<1x120xf32>
    %c0_330 = arith.constant 0 : index
    %c0_331 = arith.constant 0 : index
    %344 = vector.load %arg7[%c0_330, %c0_331] : memref<1x120xf32, #tpu.memory_space<vmem>>, vector<1x120xf32>
    %345 = arith.addf %343, %344 : vector<1x120xf32>
    %cst_332 = arith.constant 0.000000e+00 : f32
    %346 = vector.broadcast %cst_332 : f32 to vector<1x120xf32>
    %347 = arith.maximumf %345, %346 : vector<1x120xf32>
    %c0_333 = arith.constant 0 : index
    %c0_334 = arith.constant 0 : index
    %348 = vector.load %arg8[%c0_333, %c0_334] : memref<120x84xf32, #tpu.memory_space<vmem>>, vector<120x84xf32>
    %cst_335 = arith.constant dense<0.000000e+00> : vector<1x84xf32>
    %349 = tpu.matmul %347, %348, %cst_335 {dimension_numbers = #tpu.dot_dimension_numbers<[1], [0], [0], [1], [0, 0, 1, 1], [], []>} : vector<1x120xf32>, vector<120x84xf32>, vector<1x84xf32> -> vector<1x84xf32>
    %c0_336 = arith.constant 0 : index
    %c0_337 = arith.constant 0 : index
    %350 = vector.load %arg9[%c0_336, %c0_337] : memref<1x84xf32, #tpu.memory_space<vmem>>, vector<1x84xf32>
    %351 = arith.addf %349, %350 : vector<1x84xf32>
    %cst_338 = arith.constant 0.000000e+00 : f32
    %352 = vector.broadcast %cst_338 : f32 to vector<1x84xf32>
    %353 = arith.maximumf %351, %352 : vector<1x84xf32>
    %c0_339 = arith.constant 0 : index
    %c0_340 = arith.constant 0 : index
    %354 = vector.load %arg10[%c0_339, %c0_340] : memref<84x10xf32, #tpu.memory_space<vmem>>, vector<84x10xf32>
    %cst_341 = arith.constant dense<0.000000e+00> : vector<1x10xf32>
    %355 = tpu.matmul %353, %354, %cst_341 {dimension_numbers = #tpu.dot_dimension_numbers<[1], [0], [0], [1], [0, 0, 1, 1], [], []>} : vector<1x84xf32>, vector<84x10xf32>, vector<1x10xf32> -> vector<1x10xf32>
    %c0_342 = arith.constant 0 : index
    %c0_343 = arith.constant 0 : index
    %356 = vector.load %arg11[%c0_342, %c0_343] : memref<1x10xf32, #tpu.memory_space<vmem>>, vector<1x10xf32>
    %357 = arith.addf %355, %356 : vector<1x10xf32>
    %358 = vector.shape_cast %357 : vector<1x10xf32> to vector<1x1x10xf32>
    %c0_344 = arith.constant 0 : index
    %c0_345 = arith.constant 0 : index
    %c0_346 = arith.constant 0 : index
    %359 = vector.load %arg12[%c0_344, %c0_345, %c0_346] : memref<1x1x10xf32, #tpu.memory_space<vmem>>, vector<1x1x10xf32>
    tpu.vector_store %arg12[%c0_344, %c0_345, %c0_346], %358 {strides = array<i32>} : memref<1x1x10xf32, #tpu.memory_space<vmem>>, vector<1x1x10xf32>,
    return
  }
  func.func @transform_0(%arg0: i32) -> (i32, i32, i32, i32, i32) {
    %c0_i32 = arith.constant 0 : i32
    %c0_i32_0 = arith.constant 0 : i32
    %c0_i32_1 = arith.constant 0 : i32
    %c0_i32_2 = arith.constant 0 : i32
    %c0_i32_3 = arith.constant 0 : i32
    return %c0_i32, %c0_i32_0, %arg0, %c0_i32_1, %c0_i32_2 : i32, i32, i32, i32, i32
  }
  func.func @transform_1(%arg0: i32) -> (i32, i32) {
    %c0_i32 = arith.constant 0 : i32
    %c0_i32_0 = arith.constant 0 : i32
    %c0_i32_1 = arith.constant 0 : i32
    return %c0_i32, %c0_i32_0 : i32, i32
  }
  func.func @transform_2(%arg0: i32) -> (i32, i32) {
    %c0_i32 = arith.constant 0 : i32
    %c0_i32_0 = arith.constant 0 : i32
    %c0_i32_1 = arith.constant 0 : i32
    return %c0_i32, %c0_i32_0 : i32, i32
  }
  func.func @transform_3(%arg0: i32) -> (i32, i32) {
    %c0_i32 = arith.constant 0 : i32
    %c0_i32_0 = arith.constant 0 : i32
    %c0_i32_1 = arith.constant 0 : i32
    return %c0_i32, %c0_i32_0 : i32, i32
  }
  func.func @transform_4(%arg0: i32) -> (i32, i32) {
    %c0_i32 = arith.constant 0 : i32
    %c0_i32_0 = arith.constant 0 : i32
    %c0_i32_1 = arith.constant 0 : i32
    return %c0_i32, %c0_i32_0 : i32, i32
  }
  func.func @transform_5(%arg0: i32) -> (i32, i32) {
    %c0_i32 = arith.constant 0 : i32
    %c0_i32_0 = arith.constant 0 : i32
    %c0_i32_1 = arith.constant 0 : i32
    return %c0_i32, %c0_i32_0 : i32, i32
  }
  func.func @transform_6(%arg0: i32) -> (i32, i32) {
    %c0_i32 = arith.constant 0 : i32
    %c0_i32_0 = arith.constant 0 : i32
    %c0_i32_1 = arith.constant 0 : i32
    return %c0_i32, %c0_i32_0 : i32, i32
  }
  func.func @transform_7(%arg0: i32) -> (i32, i32) {
    %c0_i32 = arith.constant 0 : i32
    %c0_i32_0 = arith.constant 0 : i32
    %c0_i32_1 = arith.constant 0 : i32
    return %c0_i32, %c0_i32_0 : i32, i32
  }
  func.func @transform_8(%arg0: i32) -> (i32, i32) {
    %c0_i32 = arith.constant 0 : i32
    %c0_i32_0 = arith.constant 0 : i32
    %c0_i32_1 = arith.constant 0 : i32
    return %c0_i32, %c0_i32_0 : i32, i32
  }
  func.func @transform_9(%arg0: i32) -> (i32, i32) {
    %c0_i32 = arith.constant 0 : i32
    %c0_i32_0 = arith.constant 0 : i32
    %c0_i32_1 = arith.constant 0 : i32
    return %c0_i32, %c0_i32_0 : i32, i32
  }
  func.func @transform_10(%arg0: i32) -> (i32, i32) {
    %c0_i32 = arith.constant 0 : i32
    %c0_i32_0 = arith.constant 0 : i32
    %c0_i32_1 = arith.constant 0 : i32
    return %c0_i32, %c0_i32_0 : i32, i32
  }
  func.func @transform_11(%arg0: i32) -> (i32, i32, i32) {
    %c0_i32 = arith.constant 0 : i32
    %c0_i32_0 = arith.constant 0 : i32
    %c0_i32_1 = arith.constant 0 : i32
    return %arg0, %c0_i32, %c0_i32_0 : i32, i32, i32
  }
}

</mosaic_0001>

<llo_original>
// kernel: net_forward.1
$region0: #{net_forward.1}
  #allocation0 [shape = 'u32[]', space=smem, size = 0x4, offset = 0x4, fixed_abs, tag = 'smem constant byte address 0x4 - core index']
  #allocation1 [shape = 'u32[144,128]{1,0:T(1,128)}', space=vmem, size = 0x12000, scoped, tag = 'internal scratch']
  %s0 = inlined_call_operand.vmem [shape: f32[4,4,2,7,7], index: 0, kind: input, shape index: {}]
  %s1 = inlined_call_operand.vmem [shape: f32[96,64], index: 1, kind: input, shape index: {}]
  %s2 = inlined_call_operand.vmem [shape: f32[24,1], index: 2, kind: input, shape index: {}]
  %s3 = inlined_call_operand.vmem [shape: f32[64,216], index: 3, kind: input, shape index: {}]
  %s4 = inlined_call_operand.vmem [shape: f32[16,1], index: 4, kind: input, shape index: {}]
  %s5 = inlined_call_operand.vmem [shape: f32[256,120], index: 5, kind: input, shape index: {}]
  %s6 = inlined_call_operand.vmem [shape: f32[1,120], index: 6, kind: input, shape index: {}]
  %s7 = inlined_call_operand.vmem [shape: f32[120,84], index: 7, kind: input, shape index: {}]
  %s8 = inlined_call_operand.vmem [shape: f32[1,84], index: 8, kind: input, shape index: {}]
  %s9 = inlined_call_operand.vmem [shape: f32[84,10], index: 9, kind: input, shape index: {}]
  %s10 = inlined_call_operand.vmem [shape: f32[1,10], index: 10, kind: input, shape index: {}]
  %s11 = inlined_call_operand.hbm [shape: f32[2,1,10], index: 11, kind: output, shape index: {}]
  %s12 = sld [smem:[#allocation0]]
  $region115: #{net_forward.1} parent=0
    _
  %s14 = ssub.s32 1, %s12
  %s15 = scalar_select 0, %s14, %s12
  $region1: #{net_forward.1} parent=0
    #allocation2 [shape = 'u8[131072]{0}', space=vmem, size = 0x20000, scoped, tag = 'input window, operand 0']
    #allocation3 [shape = 'u8[1024]{0}', space=vmem, size = 0x400, scoped, tag = 'output window, operand 0']
    #allocation4 [shape = 's32[2]{0}', space=sflag, size = 0x8, scoped, tag = 'scoped memory for net_forward.1']
    %16 = vsyncpa [#allocation4], 0
    %s17 = scalar_lea.sflag [#allocation4], 1
    %18 = vsyncpa %s17, 0
    loop: start=0, step=1, limit=4
    $region2: #{net_forward.1} parent=1 // loop_pre_header
      _
    $region3: #{net_forward.1} parent=1 // loop_header
      %s20 = sphi 0, %s24
      %p21 = scmp.ge.s32.totalorder %s20, 4
      %s30 = sphi 0, %s32
      %s33 = sphi 0, %s30
      %s34 = sphi 0, %s33
      %s50 = sphi 0, %s34
      %s54 = sphi 0, %s54
      %s56 = sphi 0, %s54
      %s57 = sphi 0, %s56
      %s71 = sphi 0, %s57
      %s75 = sphi 0, %s75
      %s77 = sphi 0, %s75
      %s78 = sphi 0, %s77
      %s92 = sphi 0, %s78
      %s96 = sphi 0, %s96
      %s98 = sphi 0, %s96
      %s99 = sphi 0, %s98
      %s113 = sphi 0, %s99
      %s117 = sphi 0, %s117
      %s119 = sphi 0, %s117
      %s120 = sphi 0, %s119
      %s134 = sphi 0, %s120
      %s138 = sphi 0, %s138
      %s140 = sphi 0, %s138
      %s141 = sphi 0, %s140
      %s155 = sphi 0, %s141
      %s159 = sphi 0, %s159
      %s161 = sphi 0, %s159
      %s162 = sphi 0, %s161
      %s176 = sphi 0, %s162
      %s180 = sphi 0, %s180
      %s182 = sphi 0, %s180
      %s183 = sphi 0, %s182
      %s197 = sphi 0, %s183
      %s201 = sphi 0, %s201
      %s203 = sphi 0, %s201
      %s204 = sphi 0, %s203
      %s218 = sphi 0, %s204
      %s222 = sphi 0, %s222
      %s224 = sphi 0, %s222
      %s225 = sphi 0, %s224
      %s239 = sphi 0, %s225
      %s243 = sphi 0, %s243
      %s245 = sphi 0, %s243
      %s246 = sphi 0, %s245
      %s260 = sphi 0, %s246
      %s266 = sphi 0, %s268
      %s269 = sphi 0, %s266
      %s270 = sphi 0, %s269
      %s286 = sphi 0, %s270
    $region4: #{net_forward.1} parent=1 // loop_header_branch
      %23 = sbr.rel (%p21) target = $region8
    $region5: #{net_forward.1} parent=1 // loop_body
      %s25 = ssub.s32 %s20, 1
      %s26 = ssub.s32 %s20, 2
      %s27 = sadd.s32 %s20, 1
      %s28 = ssub.s32 %s20, %s27
      %p29 = scmp.eq.s32.totalorder %s28, 0
      %s31 = sadd.s32 %s30, 1
      %s32 = scalar_select %p29, %s30, %s31
      %p35 = pneg %p29
      %p36 = scmp.eq.s32.totalorder %s20, 1
      %p37 = por %p35, %p36
      %p38 = scmp.ne.s32.totalorder %s30, %s33
      %p39 = scmp.eq.s32.totalorder %s20, 0
      %p40 = por %p38, %p39
      %p41 = scmp.ne.s32.totalorder %s30, %s33
      %p42 = scmp.eq.s32.totalorder %s25, 1
      %p43 = por %p41, %p42
      %p44 = scmp.ne.s32.totalorder %s33, %s34
      %p45 = scmp.eq.s32.totalorder %s25, 0
      %p46 = por %p44, %p45
      %p47 = scmp.ne.s32.totalorder %s33, %s34
      %p48 = scmp.eq.s32.totalorder %s26, 1
      %p49 = por %p47, %p48
      %p51 = scmp.ne.s32.totalorder %s34, %s50
      %p52 = scmp.eq.s32.totalorder %s26, 0
      %p53 = por %p51, %p52
      %s55 = sadd.s32 %s54, 1
      %p58 = scmp.eq.s32.totalorder %s20, 1
      %p59 = scmp.ne.s32.totalorder %s54, %s56
      %p60 = scmp.eq.s32.totalorder %s20, 0
      %p61 = por %p59, %p60
      %p62 = scmp.ne.s32.totalorder %s54, %s56
      %p63 = scmp.eq.s32.totalorder %s25, 1
      %p64 = por %p62, %p63
      %p65 = scmp.ne.s32.totalorder %s56, %s57
      %p66 = scmp.eq.s32.totalorder %s25, 0
      %p67 = por %p65, %p66
      %p68 = scmp.ne.s32.totalorder %s56, %s57
      %p69 = scmp.eq.s32.totalorder %s26, 1
      %p70 = por %p68, %p69
      %p72 = scmp.ne.s32.totalorder %s57, %s71
      %p73 = scmp.eq.s32.totalorder %s26, 0
      %p74 = por %p72, %p73
      %s76 = sadd.s32 %s75, 1
      %p79 = scmp.eq.s32.totalorder %s20, 1
      %p80 = scmp.ne.s32.totalorder %s75, %s77
      %p81 = scmp.eq.s32.totalorder %s20, 0
      %p82 = por %p80, %p81
      %p83 = scmp.ne.s32.totalorder %s75, %s77
      %p84 = scmp.eq.s32.totalorder %s25, 1
      %p85 = por %p83, %p84
      %p86 = scmp.ne.s32.totalorder %s77, %s78
      %p87 = scmp.eq.s32.totalorder %s25, 0
      %p88 = por %p86, %p87
      %p89 = scmp.ne.s32.totalorder %s77, %s78
      %p90 = scmp.eq.s32.totalorder %s26, 1
      %p91 = por %p89, %p90
      %p93 = scmp.ne.s32.totalorder %s78, %s92
      %p94 = scmp.eq.s32.totalorder %s26, 0
      %p95 = por %p93, %p94
      %s97 = sadd.s32 %s96, 1
      %p100 = scmp.eq.s32.totalorder %s20, 1
      %p101 = scmp.ne.s32.totalorder %s96, %s98
      %p102 = scmp.eq.s32.totalorder %s20, 0
      %p103 = por %p101, %p102
      %p104 = scmp.ne.s32.totalorder %s96, %s98
      %p105 = scmp.eq.s32.totalorder %s25, 1
      %p106 = por %p104, %p105
      %p107 = scmp.ne.s32.totalorder %s98, %s99
      %p108 = scmp.eq.s32.totalorder %s25, 0
      %p109 = por %p107, %p108
      %p110 = scmp.ne.s32.totalorder %s98, %s99
      %p111 = scmp.eq.s32.totalorder %s26, 1
      %p112 = por %p110, %p111
      %p114 = scmp.ne.s32.totalorder %s99, %s113
      %p115 = scmp.eq.s32.totalorder %s26, 0
      %p116 = por %p114, %p115
      %s118 = sadd.s32 %s117, 1
      %p121 = scmp.eq.s32.totalorder %s20, 1
      %p122 = scmp.ne.s32.totalorder %s117, %s119
      %p123 = scmp.eq.s32.totalorder %s20, 0
      %p124 = por %p122, %p123
      %p125 = scmp.ne.s32.totalorder %s117, %s119
      %p126 = scmp.eq.s32.totalorder %s25, 1
      %p127 = por %p125, %p126
      %p128 = scmp.ne.s32.totalorder %s119, %s120
      %p129 = scmp.eq.s32.totalorder %s25, 0
      %p130 = por %p128, %p129
      %p131 = scmp.ne.s32.totalorder %s119, %s120
      %p132 = scmp.eq.s32.totalorder %s26, 1
      %p133 = por %p131, %p132
      %p135 = scmp.ne.s32.totalorder %s120, %s134
      %p136 = scmp.eq.s32.totalorder %s26, 0
      %p137 = por %p135, %p136
      %s139 = sadd.s32 %s138, 1
      %p142 = scmp.eq.s32.totalorder %s20, 1
      %p143 = scmp.ne.s32.totalorder %s138, %s140
      %p144 = scmp.eq.s32.totalorder %s20, 0
      %p145 = por %p143, %p144
      %p146 = scmp.ne.s32.totalorder %s138, %s140
      %p147 = scmp.eq.s32.totalorder %s25, 1
      %p148 = por %p146, %p147
      %p149 = scmp.ne.s32.totalorder %s140, %s141
      %p150 = scmp.eq.s32.totalorder %s25, 0
      %p151 = por %p149, %p150
      %p152 = scmp.ne.s32.totalorder %s140, %s141
      %p153 = scmp.eq.s32.totalorder %s26, 1
      %p154 = por %p152, %p153
      %p156 = scmp.ne.s32.totalorder %s141, %s155
      %p157 = scmp.eq.s32.totalorder %s26, 0
      %p158 = por %p156, %p157
      %s160 = sadd.s32 %s159, 1
      %p163 = scmp.eq.s32.totalorder %s20, 1
      %p164 = scmp.ne.s32.totalorder %s159, %s161
      %p165 = scmp.eq.s32.totalorder %s20, 0
      %p166 = por %p164, %p165
      %p167 = scmp.ne.s32.totalorder %s159, %s161
      %p168 = scmp.eq.s32.totalorder %s25, 1
      %p169 = por %p167, %p168
      %p170 = scmp.ne.s32.totalorder %s161, %s162
      %p171 = scmp.eq.s32.totalorder %s25, 0
      %p172 = por %p170, %p171
      %p173 = scmp.ne.s32.totalorder %s161, %s162
      %p174 = scmp.eq.s32.totalorder %s26, 1
      %p175 = por %p173, %p174
      %p177 = scmp.ne.s32.totalorder %s162, %s176
      %p178 = scmp.eq.s32.totalorder %s26, 0
      %p179 = por %p177, %p178
      %s181 = sadd.s32 %s180, 1
      %p184 = scmp.eq.s32.totalorder %s20, 1
      %p185 = scmp.ne.s32.totalorder %s180, %s182
      %p186 = scmp.eq.s32.totalorder %s20, 0
      %p187 = por %p185, %p186
      %p188 = scmp.ne.s32.totalorder %s180, %s182
      %p189 = scmp.eq.s32.totalorder %s25, 1
      %p190 = por %p188, %p189
      %p191 = scmp.ne.s32.totalorder %s182, %s183
      %p192 = scmp.eq.s32.totalorder %s25, 0
      %p193 = por %p191, %p192
      %p194 = scmp.ne.s32.totalorder %s182, %s183
      %p195 = scmp.eq.s32.totalorder %s26, 1
      %p196 = por %p194, %p195
      %p198 = scmp.ne.s32.totalorder %s183, %s197
      %p199 = scmp.eq.s32.totalorder %s26, 0
      %p200 = por %p198, %p199
      %s202 = sadd.s32 %s201, 1
      %p205 = scmp.eq.s32.totalorder %s20, 1
      %p206 = scmp.ne.s32.totalorder %s201, %s203
      %p207 = scmp.eq.s32.totalorder %s20, 0
      %p208 = por %p206, %p207
      %p209 = scmp.ne.s32.totalorder %s201, %s203
      %p210 = scmp.eq.s32.totalorder %s25, 1
      %p211 = por %p209, %p210
      %p212 = scmp.ne.s32.totalorder %s203, %s204
      %p213 = scmp.eq.s32.totalorder %s25, 0
      %p214 = por %p212, %p213
      %p215 = scmp.ne.s32.totalorder %s203, %s204
      %p216 = scmp.eq.s32.totalorder %s26, 1
      %p217 = por %p215, %p216
      %p219 = scmp.ne.s32.totalorder %s204, %s218
      %p220 = scmp.eq.s32.totalorder %s26, 0
      %p221 = por %p219, %p220
      %s223 = sadd.s32 %s222, 1
      %p226 = scmp.eq.s32.totalorder %s20, 1
      %p227 = scmp.ne.s32.totalorder %s222, %s224
      %p228 = scmp.eq.s32.totalorder %s20, 0
      %p229 = por %p227, %p228
      %p230 = scmp.ne.s32.totalorder %s222, %s224
      %p231 = scmp.eq.s32.totalorder %s25, 1
      %p232 = por %p230, %p231
      %p233 = scmp.ne.s32.totalorder %s224, %s225
      %p234 = scmp.eq.s32.totalorder %s25, 0
      %p235 = por %p233, %p234
      %p236 = scmp.ne.s32.totalorder %s224, %s225
      %p237 = scmp.eq.s32.totalorder %s26, 1
      %p238 = por %p236, %p237
      %p240 = scmp.ne.s32.totalorder %s225, %s239
      %p241 = scmp.eq.s32.totalorder %s26, 0
      %p242 = por %p240, %p241
      %s244 = sadd.s32 %s243, 1
      %p247 = scmp.eq.s32.totalorder %s20, 1
      %p248 = scmp.ne.s32.totalorder %s243, %s245
      %p249 = scmp.eq.s32.totalorder %s20, 0
      %p250 = por %p248, %p249
      %p251 = scmp.ne.s32.totalorder %s243, %s245
      %p252 = scmp.eq.s32.totalorder %s25, 1
      %p253 = por %p251, %p252
      %p254 = scmp.ne.s32.totalorder %s245, %s246
      %p255 = scmp.eq.s32.totalorder %s25, 0
      %p256 = por %p254, %p255
      %p257 = scmp.ne.s32.totalorder %s245, %s246
      %p258 = scmp.eq.s32.totalorder %s26, 1
      %p259 = por %p257, %p258
      %p261 = scmp.ne.s32.totalorder %s246, %s260
      %p262 = scmp.eq.s32.totalorder %s26, 0
      %p263 = por %p261, %p262
      %s264 = ssub.s32 %s20, %s27
      %p265 = scmp.eq.s32.totalorder %s264, 0
      %s267 = sadd.s32 %s266, 1
      %s268 = scalar_select %p265, %s266, %s267
      %p271 = pneg %p265
      %p272 = scmp.eq.s32.totalorder %s20, 1
      %p273 = por %p271, %p272
      %p274 = scmp.ne.s32.totalorder %s266, %s269
      %p275 = scmp.eq.s32.totalorder %s20, 0
      %p276 = por %p274, %p275
      %p277 = scmp.ne.s32.totalorder %s266, %s269
      %p278 = scmp.eq.s32.totalorder %s25, 1
      %p279 = por %p277, %p278
      %p280 = scmp.ne.s32.totalorder %s269, %s270
      %p281 = scmp.eq.s32.totalorder %s25, 0
      %p282 = por %p280, %p281
      %p283 = scmp.ne.s32.totalorder %s269, %s270
      %p284 = scmp.eq.s32.totalorder %s26, 1
      %p285 = por %p283, %p284
      %p287 = scmp.ne.s32.totalorder %s270, %s286
      %p288 = scmp.eq.s32.totalorder %s26, 0
      %p289 = por %p287, %p288
      %p290 = scmp.le.s32.totalorder 1, %s20
      %p291 = scmp.lt.s32.totalorder %s20, 3
      %p292 = pnand %p290, %p291
      %p293 = pneg %p292
      // Predicated region
      $region9: #{net_forward.1} parent=5 // pred_check
        _
      $region10: #{net_forward.1} parent=5 // pred_check_branch
        %295 = sbr.rel (%p292) target = $region12
      $region11: #{net_forward.1} parent=5 // pred_region
        %s296 = ssub.s32 %s20, 1
        // Predicated region
        $region13: #{net_forward.1} parent=11 // pred_check
          %p297 = pneg %p67
        $region14: #{net_forward.1} parent=11 // pred_check_branch
          %299 = sbr.rel (%p297) target = $region16
        $region15: #{net_forward.1} parent=11 // pred_region
          _
        $region16: #{net_forward.1} parent=11 // pred_fallthru
          _
        // Predicated region
        $region17: #{net_forward.1} parent=11 // pred_check
          %p300 = pneg %p88
        $region18: #{net_forward.1} parent=11 // pred_check_branch
          %302 = sbr.rel (%p300) target = $region20
        $region19: #{net_forward.1} parent=11 // pred_region
          _
        $region20: #{net_forward.1} parent=11 // pred_fallthru
          _
        // Predicated region
        $region21: #{net_forward.1} parent=11 // pred_check
          %p303 = pneg %p109
        $region22: #{net_forward.1} parent=11 // pred_check_branch
          %305 = sbr.rel (%p303) target = $region24
        $region23: #{net_forward.1} parent=11 // pred_region
          _
        $region24: #{net_forward.1} parent=11 // pred_fallthru
          _
        // Predicated region
        $region25: #{net_forward.1} parent=11 // pred_check
          %p306 = pneg %p130
        $region26: #{net_forward.1} parent=11 // pred_check_branch
          %308 = sbr.rel (%p306) target = $region28
        $region27: #{net_forward.1} parent=11 // pred_region
          _
        $region28: #{net_forward.1} parent=11 // pred_fallthru
          _
        // Predicated region
        $region29: #{net_forward.1} parent=11 // pred_check
          %p309 = pneg %p151
        $region30: #{net_forward.1} parent=11 // pred_check_branch
          %311 = sbr.rel (%p309) target = $region32
        $region31: #{net_forward.1} parent=11 // pred_region
          _
        $region32: #{net_forward.1} parent=11 // pred_fallthru
          _
        // Predicated region
        $region33: #{net_forward.1} parent=11 // pred_check
          %p312 = pneg %p172
        $region34: #{net_forward.1} parent=11 // pred_check_branch
          %314 = sbr.rel (%p312) target = $region36
        $region35: #{net_forward.1} parent=11 // pred_region
          _
        $region36: #{net_forward.1} parent=11 // pred_fallthru
          _
        // Predicated region
        $region37: #{net_forward.1} parent=11 // pred_check
          %p315 = pneg %p193
        $region38: #{net_forward.1} parent=11 // pred_check_branch
          %317 = sbr.rel (%p315) target = $region40
        $region39: #{net_forward.1} parent=11 // pred_region
          _
        $region40: #{net_forward.1} parent=11 // pred_fallthru
          _
        // Predicated region
        $region41: #{net_forward.1} parent=11 // pred_check
          %p318 = pneg %p214
        $region42: #{net_forward.1} parent=11 // pred_check_branch
          %320 = sbr.rel (%p318) target = $region44
        $region43: #{net_forward.1} parent=11 // pred_region
          _
        $region44: #{net_forward.1} parent=11 // pred_fallthru
          _
        // Predicated region
        $region45: #{net_forward.1} parent=11 // pred_check
          %p321 = pneg %p235
        $region46: #{net_forward.1} parent=11 // pred_check_branch
          %323 = sbr.rel (%p321) target = $region48
        $region47: #{net_forward.1} parent=11 // pred_region
          _
        $region48: #{net_forward.1} parent=11 // pred_fallthru
          _
        // Predicated region
        $region49: #{net_forward.1} parent=11 // pred_check
          %p324 = pneg %p256
        $region50: #{net_forward.1} parent=11 // pred_check_branch
          %326 = sbr.rel (%p324) target = $region52
        $region51: #{net_forward.1} parent=11 // pred_region
          _
        $region52: #{net_forward.1} parent=11 // pred_fallthru
          _
      $region12: #{net_forward.1} parent=5 // pred_fallthru
        _
      %p327 = scmp.lt.s32.totalorder %s20, 2
      // Predicated region
      $region53: #{net_forward.1} parent=5 // pred_check
        %p328 = pneg %p327
      $region54: #{net_forward.1} parent=5 // pred_check_branch
        %330 = sbr.rel (%p328) target = $region56
      $region55: #{net_forward.1} parent=5 // pred_region
        // Predicated region
        $region57: #{net_forward.1} parent=55 // pred_check
          %p331 = pneg %p40
        $region58: #{net_forward.1} parent=55 // pred_check_branch
          %333 = sbr.rel (%p331) target = $region60
        $region59: #{net_forward.1} parent=55 // pred_region
          %s334 = sand.u32 %s30, 1
          %s335 = sand.u32 %s30, 1
          %s336 = smul.addr %s335, 128
          %s337 = scalar_lea.vmem [#allocation2], %s336
          %s338 = smul.addr %s20, 8
          %s339 = scalar_lea.vmem %s0, %s338
          // Predicated region
          $region61: #{net_forward.1} parent=59 // pred_check
            _
          $region62: #{net_forward.1} parent=59 // pred_check_branch
            %341 = sbr.rel (0) target = $region64
          $region63: #{net_forward.1} parent=59 // pred_region
            // Predicated region
            $region65: #{net_forward.1} parent=63 // pred_check
              _
            $region66: #{net_forward.1} parent=63 // pred_check_branch
              %343 = sbr.rel (0) target = $region68
            $region67: #{net_forward.1} parent=63 // pred_region
              // Predicated region
              $region80: #{net_forward.1} parent=67 // pred_check
                _
              $region81: #{net_forward.1} parent=67 // pred_check_branch
                %389 = sbr.rel (0) target = $region83
              $region82: #{net_forward.1} parent=67 // pred_region
                loop: start=0, step=1, limit=1
                $region84: #{net_forward.1} parent=82 // loop_pre_header
                  _
                $region85: #{net_forward.1} parent=82 // loop_header
                  %s391 = sphi 0, %s395
                  %p392 = scmp.ge.s32.totalorder %s391, 1
                  %s396 = sphi %s339, %s339
                  %s397 = sphi %s337, %s337
                $region86: #{net_forward.1} parent=82 // loop_header_branch
                  %394 = sbr.rel (%p392) target = $region90
                $region87: #{net_forward.1} parent=82 // loop_body
                  %v398 = vld [vmem:[%s396] sm:$0xff]
                  %399 = vst [vmem:[%s397] sm:$0xff] %v398
                  %v400 = vld [vmem:[%s396 + $0x10] sm:$0xff]
                  %401 = vst [vmem:[%s397 + $0x8] sm:$0xff] %v400
                  %v402 = vld [vmem:[%s396 + $0x20] sm:$0xff]
                  %403 = vst [vmem:[%s397 + $0x10] sm:$0xff] %v402
                  %v404 = vld [vmem:[%s396 + $0x30] sm:$0xff]
                  %405 = vst [vmem:[%s397 + $0x18] sm:$0xff] %v404
                  %v406 = vld [vmem:[%s396 + $0x40] sm:$0xff]
                  %407 = vst [vmem:[%s397 + $0x20] sm:$0xff] %v406
                  %v408 = vld [vmem:[%s396 + $0x50] sm:$0xff]
                  %409 = vst [vmem:[%s397 + $0x28] sm:$0xff] %v408
                  %v410 = vld [vmem:[%s396 + $0x60] sm:$0xff]
                  %411 = vst [vmem:[%s397 + $0x30] sm:$0xff] %v410
                  %v412 = vld [vmem:[%s396 + $0x70] sm:$0xff]
                  %413 = vst [vmem:[%s397 + $0x38] sm:$0xff] %v412
                  %v414 = vld [vmem:[%s396 + $0x80] sm:$0xff]
                  %415 = vst [vmem:[%s397 + $0x40] sm:$0xff] %v414
                  %v416 = vld [vmem:[%s396 + $0x90] sm:$0xff]
                  %417 = vst [vmem:[%s397 + $0x48] sm:$0xff] %v416
                  %v418 = vld [vmem:[%s396 + $0xa0] sm:$0xff]
                  %419 = vst [vmem:[%s397 + $0x50] sm:$0xff] %v418
                  %v420 = vld [vmem:[%s396 + $0xb0] sm:$0xff]
                  %421 = vst [vmem:[%s397 + $0x58] sm:$0xff] %v420
                  %v422 = vld [vmem:[%s396 + $0xc0] sm:$0xff]
                  %423 = vst [vmem:[%s397 + $0x60] sm:$0xff] %v422
                  %v424 = vld [vmem:[%s396 + $0xd0] sm:$0xff]
                  %425 = vst [vmem:[%s397 + $0x68] sm:$0xff] %v424
                  %v426 = vld [vmem:[%s396 + $0xe0] sm:$0xff]
                  %427 = vst [vmem:[%s397 + $0x70] sm:$0xff] %v426
                  %v428 = vld [vmem:[%s396 + $0xf0] sm:$0xff]
                  %429 = vst [vmem:[%s397 + $0x78] sm:$0xff] %v428
                $region88: #{net_forward.1} parent=82 // loop_footer
                  %s395 = sadd.s32 1, %s391
                $region89: #{net_forward.1} parent=82 // loop_footer_branch
                  %390 = sbr.rel target = $region85
                $region90: #{net_forward.1} parent=82 // loop_exit
                  _
              $region83: #{net_forward.1} parent=67 // pred_fallthru
                _
              // Predicated region
              $region91: #{net_forward.1} parent=67 // pred_check
                _
              $region92: #{net_forward.1} parent=67 // pred_check_branch
                %431 = sbr.rel target = $region94
              $region93: #{net_forward.1} parent=67 // pred_region
                _
              $region94: #{net_forward.1} parent=67 // pred_fallthru
                _
            $region68: #{net_forward.1} parent=63 // pred_fallthru
              _
            // Predicated region
            $region69: #{net_forward.1} parent=63 // pred_check
              _
            $region70: #{net_forward.1} parent=63 // pred_check_branch
              %345 = sbr.rel target = $region72
            $region71: #{net_forward.1} parent=63 // pred_region
              %s347 = ssub.s32 256, 1
              loop: start=0, step=1, limit=1
              $region73: #{net_forward.1} parent=71 // loop_pre_header
                _
              $region74: #{net_forward.1} parent=71 // loop_header
                %s349 = sphi 0, %s353
                %p350 = scmp.ge.s32.totalorder %s349, 1
                %s354 = sphi %s339, %s339
                %s355 = sphi %s337, %s337
              $region75: #{net_forward.1} parent=71 // loop_header_branch
                %352 = sbr.rel (%p350) target = $region79
              $region76: #{net_forward.1} parent=71 // loop_body
                %v356 = vld [vmem:[%s354] sm:%s347]
                %357 = vst [vmem:[%s355] sm:%s347] %v356
                %v358 = vld [vmem:[%s354 + $0x10] sm:%s347]
                %359 = vst [vmem:[%s355 + $0x8] sm:%s347] %v358
                %v360 = vld [vmem:[%s354 + $0x20] sm:%s347]
                %361 = vst [vmem:[%s355 + $0x10] sm:%s347] %v360
                %v362 = vld [vmem:[%s354 + $0x30] sm:%s347]
                %363 = vst [vmem:[%s355 + $0x18] sm:%s347] %v362
                %v364 = vld [vmem:[%s354 + $0x40] sm:%s347]
                %365 = vst [vmem:[%s355 + $0x20] sm:%s347] %v364
                %v366 = vld [vmem:[%s354 + $0x50] sm:%s347]
                %367 = vst [vmem:[%s355 + $0x28] sm:%s347] %v366
                %v368 = vld [vmem:[%s354 + $0x60] sm:%s347]
                %369 = vst [vmem:[%s355 + $0x30] sm:%s347] %v368
                %v370 = vld [vmem:[%s354 + $0x70] sm:%s347]
                %371 = vst [vmem:[%s355 + $0x38] sm:%s347] %v370
                %v372 = vld [vmem:[%s354 + $0x80] sm:%s347]
                %373 = vst [vmem:[%s355 + $0x40] sm:%s347] %v372
                %v374 = vld [vmem:[%s354 + $0x90] sm:%s347]
                %375 = vst [vmem:[%s355 + $0x48] sm:%s347] %v374
                %v376 = vld [vmem:[%s354 + $0xa0] sm:%s347]
                %377 = vst [vmem:[%s355 + $0x50] sm:%s347] %v376
                %v378 = vld [vmem:[%s354 + $0xb0] sm:%s347]
                %379 = vst [vmem:[%s355 + $0x58] sm:%s347] %v378
                %v380 = vld [vmem:[%s354 + $0xc0] sm:%s347]
                %381 = vst [vmem:[%s355 + $0x60] sm:%s347] %v380
                %v382 = vld [vmem:[%s354 + $0xd0] sm:%s347]
                %383 = vst [vmem:[%s355 + $0x68] sm:%s347] %v382
                %v384 = vld [vmem:[%s354 + $0xe0] sm:%s347]
                %385 = vst [vmem:[%s355 + $0x70] sm:%s347] %v384
                %v386 = vld [vmem:[%s354 + $0xf0] sm:%s347]
                %387 = vst [vmem:[%s355 + $0x78] sm:%s347] %v386
              $region77: #{net_forward.1} parent=71 // loop_footer
                %s353 = sadd.s32 1, %s349
              $region78: #{net_forward.1} parent=71 // loop_footer_branch
                %348 = sbr.rel target = $region74
              $region79: #{net_forward.1} parent=71 // loop_exit
                _
            $region72: #{net_forward.1} parent=63 // pred_fallthru
              _
          $region64: #{net_forward.1} parent=59 // pred_fallthru
            _
          %432 = vnop
        $region60: #{net_forward.1} parent=55 // pred_fallthru
          _
      $region56: #{net_forward.1} parent=5 // pred_fallthru
        _
      %p433 = scmp.le.s32.totalorder 1, %s20
      %p434 = scmp.lt.s32.totalorder %s20, 3
      %p435 = pnand %p433, %p434
      %p436 = pneg %p435
      // Predicated region
      $region95: #{net_forward.1} parent=5 // pred_check
        _
      $region96: #{net_forward.1} parent=5 // pred_check_branch
        %438 = sbr.rel (%p435) target = $region98
      $region97: #{net_forward.1} parent=5 // pred_region
        %s439 = ssub.s32 %s20, 1
        %s440 = sand.u32 %s33, 1
        %s441 = sand.u32 %s33, 1
        %s442 = smul.addr %s441, 128
        %s443 = scalar_lea.vmem [#allocation2], %s442
        // Predicated region
        $region99: #{net_forward.1} parent=97 // pred_check
          %p444 = pneg %p46
        $region100: #{net_forward.1} parent=97 // pred_check_branch
          %446 = sbr.rel (%p444) target = $region102
        $region101: #{net_forward.1} parent=97 // pred_region
          _
        $region102: #{net_forward.1} parent=97 // pred_fallthru
          _
        %s447 = sand.u32 %s33, 1
        %s448 = sand.u32 %s33, 1
        %s449 = smul.addr %s448, 128
        %s450 = scalar_lea.vmem [#allocation2], %s449
        %p451 = pneg %p46
        %p452 = pneg %p43
        %p453 = pneg %p67
        %p454 = pneg %p64
        %p455 = pneg %p88
        %p456 = pneg %p85
        %p457 = pneg %p109
        %p458 = pneg %p106
        %p459 = pneg %p130
        %p460 = pneg %p127
        %p461 = pneg %p151
        %p462 = pneg %p148
        %p463 = pneg %p172
        %p464 = pneg %p169
        %p465 = pneg %p193
        %p466 = pneg %p190
        %p467 = pneg %p214
        %p468 = pneg %p211
        %p469 = pneg %p235
        %p470 = pneg %p232
        %p471 = pneg %p256
        %p472 = pneg %p253
        %p473 = pneg %p282
        %p474 = pneg %p279
        %s475 = sand.u32 %s269, 1
        %s476 = scalar_lea.sflag [#allocation4], %s475
        %s477 = sand.u32 %s269, 1
        %s478 = scalar_lea.vmem [#allocation3], %s477
        %v479 = vld [vmem:[%s443] sm:$0x3f]
        %s480 = scalar_lea.vmem %s443, 8 [#allocation2]
        %v481 = vld [vmem:[%s480] sm:$0x3f]
        %s482 = scalar_lea.vmem %s443, 16 [#allocation2]
        %v483 = vld [vmem:[%s482] sm:$0x3f]
        %s484 = scalar_lea.vmem %s443, 24 [#allocation2]
        %v485 = vld [vmem:[%s484] sm:$0x3f]
        %s486 = scalar_lea.vmem %s443, 32 [#allocation2]
        %v487 = vld [vmem:[%s486] sm:$0x3f]
        %s488 = scalar_lea.vmem %s443, 40 [#allocation2]
        %v489 = vld [vmem:[%s488] sm:$0x3f]
        %s490 = scalar_lea.vmem %s443, 48 [#allocation2]
        %v491 = vld [vmem:[%s490] sm:$0x3f]
        %s492 = scalar_lea.vmem %s443, 56 [#allocation2]
        %v493 = vld [vmem:[%s492] sm:$0x3f]
        %s494 = scalar_lea.vmem %s443, 64 [#allocation2]
        %v495 = vld [vmem:[%s494] sm:$0x3f]
        %s496 = scalar_lea.vmem %s443, 72 [#allocation2]
        %v497 = vld [vmem:[%s496] sm:$0x3f]
        %s498 = scalar_lea.vmem %s443, 80 [#allocation2]
        %v499 = vld [vmem:[%s498] sm:$0x3f]
        %s500 = scalar_lea.vmem %s443, 88 [#allocation2]
        %v501 = vld [vmem:[%s500] sm:$0x3f]
        %s502 = scalar_lea.vmem %s443, 96 [#allocation2]
        %v503 = vld [vmem:[%s502] sm:$0x3f]
        %s504 = scalar_lea.vmem %s443, 104 [#allocation2]
        %v505 = vld [vmem:[%s504] sm:$0x3f]
        %s506 = scalar_lea.vmem %s443, 112 [#allocation2]
        %v507 = vld [vmem:[%s506] sm:$0x3f]
        %s508 = scalar_lea.vmem %s443, 120 [#allocation2]
        %v509 = vld [vmem:[%s508] sm:$0x3f]
        %v510 = vld [vmem:[%s443 + $0x1] sm:$0x3f]
        %v511 = vld [vmem:[%s480 + $0x1] sm:$0x3f]
        %v512 = vld [vmem:[%s482 + $0x1] sm:$0x3f]
        %v513 = vld [vmem:[%s484 + $0x1] sm:$0x3f]
        %v514 = vld [vmem:[%s486 + $0x1] sm:$0x3f]
        %v515 = vld [vmem:[%s488 + $0x1] sm:$0x3f]
        %v516 = vld [vmem:[%s490 + $0x1] sm:$0x3f]
        %v517 = vld [vmem:[%s492 + $0x1] sm:$0x3f]
        %v518 = vld [vmem:[%s494 + $0x1] sm:$0x3f]
        %v519 = vld [vmem:[%s496 + $0x1] sm:$0x3f]
        %v520 = vld [vmem:[%s498 + $0x1] sm:$0x3f]
        %v521 = vld [vmem:[%s500 + $0x1] sm:$0x3f]
        %v522 = vld [vmem:[%s502 + $0x1] sm:$0x3f]
        %v523 = vld [vmem:[%s504 + $0x1] sm:$0x3f]
        %v524 = vld [vmem:[%s506 + $0x1] sm:$0x3f]
        %v525 = vld [vmem:[%s508 + $0x1] sm:$0x3f]
        %527 = vrot.lane.b32.xlu0 %v479, 127
        %v528 = vpop.permute.xlu0 %527
        %531 = vrot.lane.b32.xlu0 %v481, 127
        %v532 = vpop.permute.xlu0 %531
        %535 = vrot.lane.b32.xlu0 %v483, 127
        %v536 = vpop.permute.xlu0 %535
        %539 = vrot.lane.b32.xlu0 %v485, 127
        %v540 = vpop.permute.xlu0 %539
        %543 = vrot.lane.b32.xlu0 %v487, 127
        %v544 = vpop.permute.xlu0 %543
        %547 = vrot.lane.b32.xlu0 %v489, 127
        %v548 = vpop.permute.xlu0 %547
        %551 = vrot.lane.b32.xlu0 %v491, 127
        %v552 = vpop.permute.xlu0 %551
        %555 = vrot.lane.b32.xlu0 %v493, 127
        %v556 = vpop.permute.xlu0 %555
        %559 = vrot.lane.b32.xlu0 %v495, 127
        %v560 = vpop.permute.xlu0 %559
        %563 = vrot.lane.b32.xlu0 %v497, 127
        %v564 = vpop.permute.xlu0 %563
        %567 = vrot.lane.b32.xlu0 %v499, 127
        %v568 = vpop.permute.xlu0 %567
        %571 = vrot.lane.b32.xlu0 %v501, 127
        %v572 = vpop.permute.xlu0 %571
        %575 = vrot.lane.b32.xlu0 %v503, 127
        %v576 = vpop.permute.xlu0 %575
        %579 = vrot.lane.b32.xlu0 %v505, 127
        %v580 = vpop.permute.xlu0 %579
        %583 = vrot.lane.b32.xlu0 %v507, 127
        %v584 = vpop.permute.xlu0 %583
        %587 = vrot.lane.b32.xlu0 %v509, 127
        %v588 = vpop.permute.xlu0 %587
        %591 = vrot.lane.b32.xlu0 %v510, 127
        %v592 = vpop.permute.xlu0 %591
        %595 = vrot.lane.b32.xlu0 %v511, 127
        %v596 = vpop.permute.xlu0 %595
        %599 = vrot.lane.b32.xlu0 %v512, 127
        %v600 = vpop.permute.xlu0 %599
        %603 = vrot.lane.b32.xlu0 %v513, 127
        %v604 = vpop.permute.xlu0 %603
        %607 = vrot.lane.b32.xlu0 %v514, 127
        %v608 = vpop.permute.xlu0 %607
        %611 = vrot.lane.b32.xlu0 %v515, 127
        %v612 = vpop.permute.xlu0 %611
        %615 = vrot.lane.b32.xlu0 %v516, 127
        %v616 = vpop.permute.xlu0 %615
        %619 = vrot.lane.b32.xlu0 %v517, 127
        %v620 = vpop.permute.xlu0 %619
        %623 = vrot.lane.b32.xlu0 %v518, 127
        %v624 = vpop.permute.xlu0 %623
        %627 = vrot.lane.b32.xlu0 %v519, 127
        %v628 = vpop.permute.xlu0 %627
        %631 = vrot.lane.b32.xlu0 %v520, 127
        %v632 = vpop.permute.xlu0 %631
        %635 = vrot.lane.b32.xlu0 %v521, 127
        %v636 = vpop.permute.xlu0 %635
        %639 = vrot.lane.b32.xlu0 %v522, 127
        %v640 = vpop.permute.xlu0 %639
        %643 = vrot.lane.b32.xlu0 %v523, 127
        %v644 = vpop.permute.xlu0 %643
        %647 = vrot.lane.b32.xlu0 %v524, 127
        %v648 = vpop.permute.xlu0 %647
        %651 = vrot.lane.b32.xlu0 %v525, 127
        %v652 = vpop.permute.xlu0 %651
        %v654 = vcombine.low %v479, %v483
        %v655 = vcombine.high %v479, %v483
        %v657 = vunpack.c.l.s4 1983009808
        %v658 = vunpack.c.0.s8 %v657
        %v659 = vlaneseq
        %v660 = vshrl.u32 %v659, 7
        %v661 = vsub.s32 %v658, %v660
        %v662 = vrot.slane %v654, %v661
        %v664 = vunpack.c.l.s4 1983009808
        %v665 = vunpack.c.0.s8 %v664
        %v666 = vlaneseq
        %v667 = vshrl.u32 %v666, 7
        %v668 = vsub.s32 %v665, %v667
        %v669 = vrot.slane %v655, %v668
        %v670 = vcombine.low %v481, %v485
        %v671 = vcombine.high %v481, %v485
        %v673 = vunpack.c.l.s4 1983009808
        %v674 = vunpack.c.0.s8 %v673
        %v675 = vlaneseq
        %v676 = vshrl.u32 %v675, 7
        %v677 = vsub.s32 %v674, %v676
        %v678 = vrot.slane %v670, %v677
        %v680 = vunpack.c.l.s4 1983009808
        %v681 = vunpack.c.0.s8 %v680
        %v682 = vlaneseq
        %v683 = vshrl.u32 %v682, 7
        %v684 = vsub.s32 %v681, %v683
        %v685 = vrot.slane %v671, %v684
        %v686 = vcombine.low %v528, %v536
        %v687 = vcombine.high %v528, %v536
        %v689 = vunpack.c.l.s4 1983009808
        %v690 = vunpack.c.0.s8 %v689
        %v691 = vlaneseq
        %v692 = vshrl.u32 %v691, 7
        %v693 = vsub.s32 %v690, %v692
        %v694 = vrot.slane %v686, %v693
        %v696 = vunpack.c.l.s4 1983009808
        %v697 = vunpack.c.0.s8 %v696
        %v698 = vlaneseq
        %v699 = vshrl.u32 %v698, 7
        %v700 = vsub.s32 %v697, %v699
        %v701 = vrot.slane %v687, %v700
        %v702 = vcombine.low %v532, %v540
        %v703 = vcombine.high %v532, %v540
        %v705 = vunpack.c.l.s4 1983009808
        %v706 = vunpack.c.0.s8 %v705
        %v707 = vlaneseq
        %v708 = vshrl.u32 %v707, 7
        %v709 = vsub.s32 %v706, %v708
        %v710 = vrot.slane %v702, %v709
        %v712 = vunpack.c.l.s4 1983009808
        %v713 = vunpack.c.0.s8 %v712
        %v714 = vlaneseq
        %v715 = vshrl.u32 %v714, 7
        %v716 = vsub.s32 %v713, %v715
        %v717 = vrot.slane %v703, %v716
        %v718 = vcombine.low %v662, %v678
        %v719 = vcombine.high %v662, %v678
        %v721 = vunpack.c.l.s4 1934713408
        %v722 = vunpack.c.0.s8 %v721
        %v723 = vlaneseq
        %v724 = vshrl.u32 %v723, 7
        %v725 = vsub.s32 %v722, %v724
        %v726 = vrot.slane %v718, %v725
        %v728 = vunpack.c.l.s4 1934713408
        %v729 = vunpack.c.0.s8 %v728
        %v730 = vlaneseq
        %v731 = vshrl.u32 %v730, 7
        %v732 = vsub.s32 %v729, %v731
        %v733 = vrot.slane %v719, %v732
        %v734 = vcombine.low %v669, %v685
        %v736 = vunpack.c.l.s4 1934713408
        %v737 = vunpack.c.0.s8 %v736
        %v738 = vlaneseq
        %v739 = vshrl.u32 %v738, 7
        %v740 = vsub.s32 %v737, %v739
        %v741 = vrot.slane %v734, %v740
        %v742 = vcombine.low %v694, %v710
        %v743 = vcombine.high %v694, %v710
        %v745 = vunpack.c.l.s4 1934713408
        %v746 = vunpack.c.0.s8 %v745
        %v747 = vlaneseq
        %v748 = vshrl.u32 %v747, 7
        %v749 = vsub.s32 %v746, %v748
        %v750 = vrot.slane %v742, %v749
        %v752 = vunpack.c.l.s4 1934713408
        %v753 = vunpack.c.0.s8 %v752
        %v754 = vlaneseq
        %v755 = vshrl.u32 %v754, 7
        %v756 = vsub.s32 %v753, %v755
        %v757 = vrot.slane %v743, %v756
        %v758 = vcombine.low %v701, %v717
        %v760 = vunpack.c.l.s4 1934713408
        %v761 = vunpack.c.0.s8 %v760
        %v762 = vlaneseq
        %v763 = vshrl.u32 %v762, 7
        %v764 = vsub.s32 %v761, %v763
        %v765 = vrot.slane %v758, %v764
        %v766 = vcombine.low %v726, %v750
        %v767 = vcombine.high %v726, %v750
        %v768 = vcombine.low %v733, %v757
        %v769 = vcombine.high %v733, %v757
        %v770 = vcombine.low %v741, %v765
        %v771 = vcombine.high %v741, %v765
        %v772 = vcombine.low %v487, %v491
        %v773 = vcombine.high %v487, %v491
        %v775 = vunpack.c.l.s4 1983009808
        %v776 = vunpack.c.0.s8 %v775
        %v777 = vlaneseq
        %v778 = vshrl.u32 %v777, 7
        %v779 = vsub.s32 %v776, %v778
        %v780 = vrot.slane %v772, %v779
        %v782 = vunpack.c.l.s4 1983009808
        %v783 = vunpack.c.0.s8 %v782
        %v784 = vlaneseq
        %v785 = vshrl.u32 %v784, 7
        %v786 = vsub.s32 %v783, %v785
        %v787 = vrot.slane %v773, %v786
        %v788 = vcombine.low %v489, %v493
        %v789 = vcombine.high %v489, %v493
        %v791 = vunpack.c.l.s4 1983009808
        %v792 = vunpack.c.0.s8 %v791
        %v793 = vlaneseq
        %v794 = vshrl.u32 %v793, 7
        %v795 = vsub.s32 %v792, %v794
        %v796 = vrot.slane %v788, %v795
        %v798 = vunpack.c.l.s4 1983009808
        %v799 = vunpack.c.0.s8 %v798
        %v800 = vlaneseq
        %v801 = vshrl.u32 %v800, 7
        %v802 = vsub.s32 %v799, %v801
        %v803 = vrot.slane %v789, %v802
        %v804 = vcombine.low %v544, %v552
        %v805 = vcombine.high %v544, %v552
        %v807 = vunpack.c.l.s4 1983009808
        %v808 = vunpack.c.0.s8 %v807
        %v809 = vlaneseq
        %v810 = vshrl.u32 %v809, 7
        %v811 = vsub.s32 %v808, %v810
        %v812 = vrot.slane %v804, %v811
        %v814 = vunpack.c.l.s4 1983009808
        %v815 = vunpack.c.0.s8 %v814
        %v816 = vlaneseq
        %v817 = vshrl.u32 %v816, 7
        %v818 = vsub.s32 %v815, %v817
        %v819 = vrot.slane %v805, %v818
        %v820 = vcombine.low %v548, %v556
        %v821 = vcombine.high %v548, %v556
        %v823 = vunpack.c.l.s4 1983009808
        %v824 = vunpack.c.0.s8 %v823
        %v825 = vlaneseq
        %v826 = vshrl.u32 %v825, 7
        %v827 = vsub.s32 %v824, %v826
        %v828 = vrot.slane %v820, %v827
        %v830 = vunpack.c.l.s4 1983009808
        %v831 = vunpack.c.0.s8 %v830
        %v832 = vlaneseq
        %v833 = vshrl.u32 %v832, 7
        %v834 = vsub.s32 %v831, %v833
        %v835 = vrot.slane %v821, %v834
        %v836 = vcombine.low %v780, %v796
        %v837 = vcombine.high %v780, %v796
        %v839 = vunpack.c.l.s4 1934713408
        %v840 = vunpack.c.0.s8 %v839
        %v841 = vlaneseq
        %v842 = vshrl.u32 %v841, 7
        %v843 = vsub.s32 %v840, %v842
        %v844 = vrot.slane %v836, %v843
        %v846 = vunpack.c.l.s4 1934713408
        %v847 = vunpack.c.0.s8 %v846
        %v848 = vlaneseq
        %v849 = vshrl.u32 %v848, 7
        %v850 = vsub.s32 %v847, %v849
        %v851 = vrot.slane %v837, %v850
        %v852 = vcombine.low %v787, %v803
        %v854 = vunpack.c.l.s4 1934713408
        %v855 = vunpack.c.0.s8 %v854
        %v856 = vlaneseq
        %v857 = vshrl.u32 %v856, 7
        %v858 = vsub.s32 %v855, %v857
        %v859 = vrot.slane %v852, %v858
        %v860 = vcombine.low %v812, %v828
        %v861 = vcombine.high %v812, %v828
        %v863 = vunpack.c.l.s4 1934713408
        %v864 = vunpack.c.0.s8 %v863
        %v865 = vlaneseq
        %v866 = vshrl.u32 %v865, 7
        %v867 = vsub.s32 %v864, %v866
        %v868 = vrot.slane %v860, %v867
        %v870 = vunpack.c.l.s4 1934713408
        %v871 = vunpack.c.0.s8 %v870
        %v872 = vlaneseq
        %v873 = vshrl.u32 %v872, 7
        %v874 = vsub.s32 %v871, %v873
        %v875 = vrot.slane %v861, %v874
        %v876 = vcombine.low %v819, %v835
        %v878 = vunpack.c.l.s4 1934713408
        %v879 = vunpack.c.0.s8 %v878
        %v880 = vlaneseq
        %v881 = vshrl.u32 %v880, 7
        %v882 = vsub.s32 %v879, %v881
        %v883 = vrot.slane %v876, %v882
        %v884 = vcombine.low %v844, %v868
        %v885 = vcombine.high %v844, %v868
        %v886 = vcombine.low %v851, %v875
        %v887 = vcombine.high %v851, %v875
        %v888 = vcombine.low %v859, %v883
        %v889 = vcombine.high %v859, %v883
        %v890 = vcombine.low %v495, %v499
        %v891 = vcombine.high %v495, %v499
        %v893 = vunpack.c.l.s4 1983009808
        %v894 = vunpack.c.0.s8 %v893
        %v895 = vlaneseq
        %v896 = vshrl.u32 %v895, 7
        %v897 = vsub.s32 %v894, %v896
        %v898 = vrot.slane %v890, %v897
        %v900 = vunpack.c.l.s4 1983009808
        %v901 = vunpack.c.0.s8 %v900
        %v902 = vlaneseq
        %v903 = vshrl.u32 %v902, 7
        %v904 = vsub.s32 %v901, %v903
        %v905 = vrot.slane %v891, %v904
        %v906 = vcombine.low %v497, %v501
        %v907 = vcombine.high %v497, %v501
        %v909 = vunpack.c.l.s4 1983009808
        %v910 = vunpack.c.0.s8 %v909
        %v911 = vlaneseq
        %v912 = vshrl.u32 %v911, 7
        %v913 = vsub.s32 %v910, %v912
        %v914 = vrot.slane %v906, %v913
        %v916 = vunpack.c.l.s4 1983009808
        %v917 = vunpack.c.0.s8 %v916
        %v918 = vlaneseq
        %v919 = vshrl.u32 %v918, 7
        %v920 = vsub.s32 %v917, %v919
        %v921 = vrot.slane %v907, %v920
        %v922 = vcombine.low %v560, %v568
        %v923 = vcombine.high %v560, %v568
        %v925 = vunpack.c.l.s4 1983009808
        %v926 = vunpack.c.0.s8 %v925
        %v927 = vlaneseq
        %v928 = vshrl.u32 %v927, 7
        %v929 = vsub.s32 %v926, %v928
        %v930 = vrot.slane %v922, %v929
        %v932 = vunpack.c.l.s4 1983009808
        %v933 = vunpack.c.0.s8 %v932
        %v934 = vlaneseq
        %v935 = vshrl.u32 %v934, 7
        %v936 = vsub.s32 %v933, %v935
        %v937 = vrot.slane %v923, %v936
        %v938 = vcombine.low %v564, %v572
        %v939 = vcombine.high %v564, %v572
        %v941 = vunpack.c.l.s4 1983009808
        %v942 = vunpack.c.0.s8 %v941
        %v943 = vlaneseq
        %v944 = vshrl.u32 %v943, 7
        %v945 = vsub.s32 %v942, %v944
        %v946 = vrot.slane %v938, %v945
        %v948 = vunpack.c.l.s4 1983009808
        %v949 = vunpack.c.0.s8 %v948
        %v950 = vlaneseq
        %v951 = vshrl.u32 %v950, 7
        %v952 = vsub.s32 %v949, %v951
        %v953 = vrot.slane %v939, %v952
        %v954 = vcombine.low %v898, %v914
        %v955 = vcombine.high %v898, %v914
        %v957 = vunpack.c.l.s4 1934713408
        %v958 = vunpack.c.0.s8 %v957
        %v959 = vlaneseq
        %v960 = vshrl.u32 %v959, 7
        %v961 = vsub.s32 %v958, %v960
        %v962 = vrot.slane %v954, %v961
        %v964 = vunpack.c.l.s4 1934713408
        %v965 = vunpack.c.0.s8 %v964
        %v966 = vlaneseq
        %v967 = vshrl.u32 %v966, 7
        %v968 = vsub.s32 %v965, %v967
        %v969 = vrot.slane %v955, %v968
        %v970 = vcombine.low %v905, %v921
        %v972 = vunpack.c.l.s4 1934713408
        %v973 = vunpack.c.0.s8 %v972
        %v974 = vlaneseq
        %v975 = vshrl.u32 %v974, 7
        %v976 = vsub.s32 %v973, %v975
        %v977 = vrot.slane %v970, %v976
        %v978 = vcombine.low %v930, %v946
        %v979 = vcombine.high %v930, %v946
        %v981 = vunpack.c.l.s4 1934713408
        %v982 = vunpack.c.0.s8 %v981
        %v983 = vlaneseq
        %v984 = vshrl.u32 %v983, 7
        %v985 = vsub.s32 %v982, %v984
        %v986 = vrot.slane %v978, %v985
        %v988 = vunpack.c.l.s4 1934713408
        %v989 = vunpack.c.0.s8 %v988
        %v990 = vlaneseq
        %v991 = vshrl.u32 %v990, 7
        %v992 = vsub.s32 %v989, %v991
        %v993 = vrot.slane %v979, %v992
        %v994 = vcombine.low %v937, %v953
        %v996 = vunpack.c.l.s4 1934713408
        %v997 = vunpack.c.0.s8 %v996
        %v998 = vlaneseq
        %v999 = vshrl.u32 %v998, 7
        %v1000 = vsub.s32 %v997, %v999
        %v1001 = vrot.slane %v994, %v1000
        %v1002 = vcombine.low %v962, %v986
        %v1003 = vcombine.high %v962, %v986
        %v1004 = vcombine.low %v969, %v993
        %v1005 = vcombine.high %v969, %v993
        %v1006 = vcombine.low %v977, %v1001
        %v1007 = vcombine.high %v977, %v1001
        %v1008 = vcombine.low %v503, %v507
        %v1009 = vcombine.high %v503, %v507
        %v1011 = vunpack.c.l.s4 1983009808
        %v1012 = vunpack.c.0.s8 %v1011
        %v1013 = vlaneseq
        %v1014 = vshrl.u32 %v1013, 7
        %v1015 = vsub.s32 %v1012, %v1014
        %v1016 = vrot.slane %v1008, %v1015
        %v1018 = vunpack.c.l.s4 1983009808
        %v1019 = vunpack.c.0.s8 %v1018
        %v1020 = vlaneseq
        %v1021 = vshrl.u32 %v1020, 7
        %v1022 = vsub.s32 %v1019, %v1021
        %v1023 = vrot.slane %v1009, %v1022
        %v1024 = vcombine.low %v505, %v509
        %v1025 = vcombine.high %v505, %v509
        %v1027 = vunpack.c.l.s4 1983009808
        %v1028 = vunpack.c.0.s8 %v1027
        %v1029 = vlaneseq
        %v1030 = vshrl.u32 %v1029, 7
        %v1031 = vsub.s32 %v1028, %v1030
        %v1032 = vrot.slane %v1024, %v1031
        %v1034 = vunpack.c.l.s4 1983009808
        %v1035 = vunpack.c.0.s8 %v1034
        %v1036 = vlaneseq
        %v1037 = vshrl.u32 %v1036, 7
        %v1038 = vsub.s32 %v1035, %v1037
        %v1039 = vrot.slane %v1025, %v1038
        %v1040 = vcombine.low %v576, %v584
        %v1041 = vcombine.high %v576, %v584
        %v1043 = vunpack.c.l.s4 1983009808
        %v1044 = vunpack.c.0.s8 %v1043
        %v1045 = vlaneseq
        %v1046 = vshrl.u32 %v1045, 7
        %v1047 = vsub.s32 %v1044, %v1046
        %v1048 = vrot.slane %v1040, %v1047
        %v1050 = vunpack.c.l.s4 1983009808
        %v1051 = vunpack.c.0.s8 %v1050
        %v1052 = vlaneseq
        %v1053 = vshrl.u32 %v1052, 7
        %v1054 = vsub.s32 %v1051, %v1053
        %v1055 = vrot.slane %v1041, %v1054
        %v1056 = vcombine.low %v580, %v588
        %v1057 = vcombine.high %v580, %v588
        %v1059 = vunpack.c.l.s4 1983009808
        %v1060 = vunpack.c.0.s8 %v1059
        %v1061 = vlaneseq
        %v1062 = vshrl.u32 %v1061, 7
        %v1063 = vsub.s32 %v1060, %v1062
        %v1064 = vrot.slane %v1056, %v1063
        %v1066 = vunpack.c.l.s4 1983009808
        %v1067 = vunpack.c.0.s8 %v1066
        %v1068 = vlaneseq
        %v1069 = vshrl.u32 %v1068, 7
        %v1070 = vsub.s32 %v1067, %v1069
        %v1071 = vrot.slane %v1057, %v1070
        %v1072 = vcombine.low %v1016, %v1032
        %v1073 = vcombine.high %v1016, %v1032
        %v1075 = vunpack.c.l.s4 1934713408
        %v1076 = vunpack.c.0.s8 %v1075
        %v1077 = vlaneseq
        %v1078 = vshrl.u32 %v1077, 7
        %v1079 = vsub.s32 %v1076, %v1078
        %v1080 = vrot.slane %v1072, %v1079
        %v1082 = vunpack.c.l.s4 1934713408
        %v1083 = vunpack.c.0.s8 %v1082
        %v1084 = vlaneseq
        %v1085 = vshrl.u32 %v1084, 7
        %v1086 = vsub.s32 %v1083, %v1085
        %v1087 = vrot.slane %v1073, %v1086
        %v1088 = vcombine.low %v1023, %v1039
        %v1090 = vunpack.c.l.s4 1934713408
        %v1091 = vunpack.c.0.s8 %v1090
        %v1092 = vlaneseq
        %v1093 = vshrl.u32 %v1092, 7
        %v1094 = vsub.s32 %v1091, %v1093
        %v1095 = vrot.slane %v1088, %v1094
        %v1096 = vcombine.low %v1048, %v1064
        %v1097 = vcombine.high %v1048, %v1064
        %v1099 = vunpack.c.l.s4 1934713408
        %v1100 = vunpack.c.0.s8 %v1099
        %v1101 = vlaneseq
        %v1102 = vshrl.u32 %v1101, 7
        %v1103 = vsub.s32 %v1100, %v1102
        %v1104 = vrot.slane %v1096, %v1103
        %v1106 = vunpack.c.l.s4 1934713408
        %v1107 = vunpack.c.0.s8 %v1106
        %v1108 = vlaneseq
        %v1109 = vshrl.u32 %v1108, 7
        %v1110 = vsub.s32 %v1107, %v1109
        %v1111 = vrot.slane %v1097, %v1110
        %v1112 = vcombine.low %v1055, %v1071
        %v1114 = vunpack.c.l.s4 1934713408
        %v1115 = vunpack.c.0.s8 %v1114
        %v1116 = vlaneseq
        %v1117 = vshrl.u32 %v1116, 7
        %v1118 = vsub.s32 %v1115, %v1117
        %v1119 = vrot.slane %v1112, %v1118
        %v1120 = vcombine.low %v1080, %v1104
        %v1121 = vcombine.high %v1080, %v1104
        %v1122 = vcombine.low %v1087, %v1111
        %v1123 = vcombine.high %v1087, %v1111
        %v1124 = vcombine.low %v1095, %v1119
        %v1125 = vcombine.high %v1095, %v1119
        %v1126 = vcombine.low %v510, %v512
        %v1127 = vcombine.high %v510, %v512
        %v1129 = vunpack.c.l.s4 1983009808
        %v1130 = vunpack.c.0.s8 %v1129
        %v1131 = vlaneseq
        %v1132 = vshrl.u32 %v1131, 7
        %v1133 = vsub.s32 %v1130, %v1132
        %v1134 = vrot.slane %v1126, %v1133
        %v1136 = vunpack.c.l.s4 1983009808
        %v1137 = vunpack.c.0.s8 %v1136
        %v1138 = vlaneseq
        %v1139 = vshrl.u32 %v1138, 7
        %v1140 = vsub.s32 %v1137, %v1139
        %v1141 = vrot.slane %v1127, %v1140
        %v1142 = vcombine.low %v511, %v513
        %v1143 = vcombine.high %v511, %v513
        %v1145 = vunpack.c.l.s4 1983009808
        %v1146 = vunpack.c.0.s8 %v1145
        %v1147 = vlaneseq
        %v1148 = vshrl.u32 %v1147, 7
        %v1149 = vsub.s32 %v1146, %v1148
        %v1150 = vrot.slane %v1142, %v1149
        %v1152 = vunpack.c.l.s4 1983009808
        %v1153 = vunpack.c.0.s8 %v1152
        %v1154 = vlaneseq
        %v1155 = vshrl.u32 %v1154, 7
        %v1156 = vsub.s32 %v1153, %v1155
        %v1157 = vrot.slane %v1143, %v1156
        %v1158 = vcombine.low %v592, %v600
        %v1159 = vcombine.high %v592, %v600
        %v1161 = vunpack.c.l.s4 1983009808
        %v1162 = vunpack.c.0.s8 %v1161
        %v1163 = vlaneseq
        %v1164 = vshrl.u32 %v1163, 7
        %v1165 = vsub.s32 %v1162, %v1164
        %v1166 = vrot.slane %v1158, %v1165
        %v1168 = vunpack.c.l.s4 1983009808
        %v1169 = vunpack.c.0.s8 %v1168
        %v1170 = vlaneseq
        %v1171 = vshrl.u32 %v1170, 7
        %v1172 = vsub.s32 %v1169, %v1171
        %v1173 = vrot.slane %v1159, %v1172
        %v1174 = vcombine.low %v596, %v604
        %v1175 = vcombine.high %v596, %v604
        %v1177 = vunpack.c.l.s4 1983009808
        %v1178 = vunpack.c.0.s8 %v1177
        %v1179 = vlaneseq
        %v1180 = vshrl.u32 %v1179, 7
        %v1181 = vsub.s32 %v1178, %v1180
        %v1182 = vrot.slane %v1174, %v1181
        %v1184 = vunpack.c.l.s4 1983009808
        %v1185 = vunpack.c.0.s8 %v1184
        %v1186 = vlaneseq
        %v1187 = vshrl.u32 %v1186, 7
        %v1188 = vsub.s32 %v1185, %v1187
        %v1189 = vrot.slane %v1175, %v1188
        %v1190 = vcombine.low %v1134, %v1150
        %v1191 = vcombine.high %v1134, %v1150
        %v1193 = vunpack.c.l.s4 1934713408
        %v1194 = vunpack.c.0.s8 %v1193
        %v1195 = vlaneseq
        %v1196 = vshrl.u32 %v1195, 7
        %v1197 = vsub.s32 %v1194, %v1196
        %v1198 = vrot.slane %v1190, %v1197
        %v1200 = vunpack.c.l.s4 1934713408
        %v1201 = vunpack.c.0.s8 %v1200
        %v1202 = vlaneseq
        %v1203 = vshrl.u32 %v1202, 7
        %v1204 = vsub.s32 %v1201, %v1203
        %v1205 = vrot.slane %v1191, %v1204
        %v1206 = vcombine.low %v1141, %v1157
        %v1208 = vunpack.c.l.s4 1934713408
        %v1209 = vunpack.c.0.s8 %v1208
        %v1210 = vlaneseq
        %v1211 = vshrl.u32 %v1210, 7
        %v1212 = vsub.s32 %v1209, %v1211
        %v1213 = vrot.slane %v1206, %v1212
        %v1214 = vcombine.low %v1166, %v1182
        %v1215 = vcombine.high %v1166, %v1182
        %v1217 = vunpack.c.l.s4 1934713408
        %v1218 = vunpack.c.0.s8 %v1217
        %v1219 = vlaneseq
        %v1220 = vshrl.u32 %v1219, 7
        %v1221 = vsub.s32 %v1218, %v1220
        %v1222 = vrot.slane %v1214, %v1221
        %v1224 = vunpack.c.l.s4 1934713408
        %v1225 = vunpack.c.0.s8 %v1224
        %v1226 = vlaneseq
        %v1227 = vshrl.u32 %v1226, 7
        %v1228 = vsub.s32 %v1225, %v1227
        %v1229 = vrot.slane %v1215, %v1228
        %v1230 = vcombine.low %v1173, %v1189
        %v1232 = vunpack.c.l.s4 1934713408
        %v1233 = vunpack.c.0.s8 %v1232
        %v1234 = vlaneseq
        %v1235 = vshrl.u32 %v1234, 7
        %v1236 = vsub.s32 %v1233, %v1235
        %v1237 = vrot.slane %v1230, %v1236
        %v1238 = vcombine.low %v1198, %v1222
        %v1239 = vcombine.high %v1198, %v1222
        %v1240 = vcombine.low %v1205, %v1229
        %v1241 = vcombine.high %v1205, %v1229
        %v1242 = vcombine.low %v1213, %v1237
        %v1243 = vcombine.high %v1213, %v1237
        %v1244 = vcombine.low %v514, %v516
        %v1245 = vcombine.high %v514, %v516
        %v1247 = vunpack.c.l.s4 1983009808
        %v1248 = vunpack.c.0.s8 %v1247
        %v1249 = vlaneseq
        %v1250 = vshrl.u32 %v1249, 7
        %v1251 = vsub.s32 %v1248, %v1250
        %v1252 = vrot.slane %v1244, %v1251
        %v1254 = vunpack.c.l.s4 1983009808
        %v1255 = vunpack.c.0.s8 %v1254
        %v1256 = vlaneseq
        %v1257 = vshrl.u32 %v1256, 7
        %v1258 = vsub.s32 %v1255, %v1257
        %v1259 = vrot.slane %v1245, %v1258
        %v1260 = vcombine.low %v515, %v517
        %v1261 = vcombine.high %v515, %v517
        %v1263 = vunpack.c.l.s4 1983009808
        %v1264 = vunpack.c.0.s8 %v1263
        %v1265 = vlaneseq
        %v1266 = vshrl.u32 %v1265, 7
        %v1267 = vsub.s32 %v1264, %v1266
        %v1268 = vrot.slane %v1260, %v1267
        %v1270 = vunpack.c.l.s4 1983009808
        %v1271 = vunpack.c.0.s8 %v1270
        %v1272 = vlaneseq
        %v1273 = vshrl.u32 %v1272, 7
        %v1274 = vsub.s32 %v1271, %v1273
        %v1275 = vrot.slane %v1261, %v1274
        %v1276 = vcombine.low %v608, %v616
        %v1277 = vcombine.high %v608, %v616
        %v1279 = vunpack.c.l.s4 1983009808
        %v1280 = vunpack.c.0.s8 %v1279
        %v1281 = vlaneseq
        %v1282 = vshrl.u32 %v1281, 7
        %v1283 = vsub.s32 %v1280, %v1282
        %v1284 = vrot.slane %v1276, %v1283
        %v1286 = vunpack.c.l.s4 1983009808
        %v1287 = vunpack.c.0.s8 %v1286
        %v1288 = vlaneseq
        %v1289 = vshrl.u32 %v1288, 7
        %v1290 = vsub.s32 %v1287, %v1289
        %v1291 = vrot.slane %v1277, %v1290
        %v1292 = vcombine.low %v612, %v620
        %v1293 = vcombine.high %v612, %v620
        %v1295 = vunpack.c.l.s4 1983009808
        %v1296 = vunpack.c.0.s8 %v1295
        %v1297 = vlaneseq
        %v1298 = vshrl.u32 %v1297, 7
        %v1299 = vsub.s32 %v1296, %v1298
        %v1300 = vrot.slane %v1292, %v1299
        %v1302 = vunpack.c.l.s4 1983009808
        %v1303 = vunpack.c.0.s8 %v1302
        %v1304 = vlaneseq
        %v1305 = vshrl.u32 %v1304, 7
        %v1306 = vsub.s32 %v1303, %v1305
        %v1307 = vrot.slane %v1293, %v1306
        %v1308 = vcombine.low %v1252, %v1268
        %v1309 = vcombine.high %v1252, %v1268
        %v1311 = vunpack.c.l.s4 1934713408
        %v1312 = vunpack.c.0.s8 %v1311
        %v1313 = vlaneseq
        %v1314 = vshrl.u32 %v1313, 7
        %v1315 = vsub.s32 %v1312, %v1314
        %v1316 = vrot.slane %v1308, %v1315
        %v1318 = vunpack.c.l.s4 1934713408
        %v1319 = vunpack.c.0.s8 %v1318
        %v1320 = vlaneseq
        %v1321 = vshrl.u32 %v1320, 7
        %v1322 = vsub.s32 %v1319, %v1321
        %v1323 = vrot.slane %v1309, %v1322
        %v1324 = vcombine.low %v1259, %v1275
        %v1326 = vunpack.c.l.s4 1934713408
        %v1327 = vunpack.c.0.s8 %v1326
        %v1328 = vlaneseq
        %v1329 = vshrl.u32 %v1328, 7
        %v1330 = vsub.s32 %v1327, %v1329
        %v1331 = vrot.slane %v1324, %v1330
        %v1332 = vcombine.low %v1284, %v1300
        %v1333 = vcombine.high %v1284, %v1300
        %v1335 = vunpack.c.l.s4 1934713408
        %v1336 = vunpack.c.0.s8 %v1335
        %v1337 = vlaneseq
        %v1338 = vshrl.u32 %v1337, 7
        %v1339 = vsub.s32 %v1336, %v1338
        %v1340 = vrot.slane %v1332, %v1339
        %v1342 = vunpack.c.l.s4 1934713408
        %v1343 = vunpack.c.0.s8 %v1342
        %v1344 = vlaneseq
        %v1345 = vshrl.u32 %v1344, 7
        %v1346 = vsub.s32 %v1343, %v1345
        %v1347 = vrot.slane %v1333, %v1346
        %v1348 = vcombine.low %v1291, %v1307
        %v1350 = vunpack.c.l.s4 1934713408
        %v1351 = vunpack.c.0.s8 %v1350
        %v1352 = vlaneseq
        %v1353 = vshrl.u32 %v1352, 7
        %v1354 = vsub.s32 %v1351, %v1353
        %v1355 = vrot.slane %v1348, %v1354
        %v1356 = vcombine.low %v1316, %v1340
        %v1357 = vcombine.high %v1316, %v1340
        %v1358 = vcombine.low %v1323, %v1347
        %v1359 = vcombine.high %v1323, %v1347
        %v1360 = vcombine.low %v1331, %v1355
        %v1361 = vcombine.high %v1331, %v1355
        %v1362 = vcombine.low %v518, %v520
        %v1363 = vcombine.high %v518, %v520
        %v1365 = vunpack.c.l.s4 1983009808
        %v1366 = vunpack.c.0.s8 %v1365
        %v1367 = vlaneseq
        %v1368 = vshrl.u32 %v1367, 7
        %v1369 = vsub.s32 %v1366, %v1368
        %v1370 = vrot.slane %v1362, %v1369
        %v1372 = vunpack.c.l.s4 1983009808
        %v1373 = vunpack.c.0.s8 %v1372
        %v1374 = vlaneseq
        %v1375 = vshrl.u32 %v1374, 7
        %v1376 = vsub.s32 %v1373, %v1375
        %v1377 = vrot.slane %v1363, %v1376
        %v1378 = vcombine.low %v519, %v521
        %v1379 = vcombine.high %v519, %v521
        %v1381 = vunpack.c.l.s4 1983009808
        %v1382 = vunpack.c.0.s8 %v1381
        %v1383 = vlaneseq
        %v1384 = vshrl.u32 %v1383, 7
        %v1385 = vsub.s32 %v1382, %v1384
        %v1386 = vrot.slane %v1378, %v1385
        %v1388 = vunpack.c.l.s4 1983009808
        %v1389 = vunpack.c.0.s8 %v1388
        %v1390 = vlaneseq
        %v1391 = vshrl.u32 %v1390, 7
        %v1392 = vsub.s32 %v1389, %v1391
        %v1393 = vrot.slane %v1379, %v1392
        %v1394 = vcombine.low %v624, %v632
        %v1395 = vcombine.high %v624, %v632
        %v1397 = vunpack.c.l.s4 1983009808
        %v1398 = vunpack.c.0.s8 %v1397
        %v1399 = vlaneseq
        %v1400 = vshrl.u32 %v1399, 7
        %v1401 = vsub.s32 %v1398, %v1400
        %v1402 = vrot.slane %v1394, %v1401
        %v1404 = vunpack.c.l.s4 1983009808
        %v1405 = vunpack.c.0.s8 %v1404
        %v1406 = vlaneseq
        %v1407 = vshrl.u32 %v1406, 7
        %v1408 = vsub.s32 %v1405, %v1407
        %v1409 = vrot.slane %v1395, %v1408
        %v1410 = vcombine.low %v628, %v636
        %v1411 = vcombine.high %v628, %v636
        %v1413 = vunpack.c.l.s4 1983009808
        %v1414 = vunpack.c.0.s8 %v1413
        %v1415 = vlaneseq
        %v1416 = vshrl.u32 %v1415, 7
        %v1417 = vsub.s32 %v1414, %v1416
        %v1418 = vrot.slane %v1410, %v1417
        %v1420 = vunpack.c.l.s4 1983009808
        %v1421 = vunpack.c.0.s8 %v1420
        %v1422 = vlaneseq
        %v1423 = vshrl.u32 %v1422, 7
        %v1424 = vsub.s32 %v1421, %v1423
        %v1425 = vrot.slane %v1411, %v1424
        %v1426 = vcombine.low %v1370, %v1386
        %v1427 = vcombine.high %v1370, %v1386
        %v1429 = vunpack.c.l.s4 1934713408
        %v1430 = vunpack.c.0.s8 %v1429
        %v1431 = vlaneseq
        %v1432 = vshrl.u32 %v1431, 7
        %v1433 = vsub.s32 %v1430, %v1432
        %v1434 = vrot.slane %v1426, %v1433
        %v1436 = vunpack.c.l.s4 1934713408
        %v1437 = vunpack.c.0.s8 %v1436
        %v1438 = vlaneseq
        %v1439 = vshrl.u32 %v1438, 7
        %v1440 = vsub.s32 %v1437, %v1439
        %v1441 = vrot.slane %v1427, %v1440
        %v1442 = vcombine.low %v1377, %v1393
        %v1444 = vunpack.c.l.s4 1934713408
        %v1445 = vunpack.c.0.s8 %v1444
        %v1446 = vlaneseq
        %v1447 = vshrl.u32 %v1446, 7
        %v1448 = vsub.s32 %v1445, %v1447
        %v1449 = vrot.slane %v1442, %v1448
        %v1450 = vcombine.low %v1402, %v1418
        %v1451 = vcombine.high %v1402, %v1418
        %v1453 = vunpack.c.l.s4 1934713408
        %v1454 = vunpack.c.0.s8 %v1453
        %v1455 = vlaneseq
        %v1456 = vshrl.u32 %v1455, 7
        %v1457 = vsub.s32 %v1454, %v1456
        %v1458 = vrot.slane %v1450, %v1457
        %v1460 = vunpack.c.l.s4 1934713408
        %v1461 = vunpack.c.0.s8 %v1460
        %v1462 = vlaneseq
        %v1463 = vshrl.u32 %v1462, 7
        %v1464 = vsub.s32 %v1461, %v1463
        %v1465 = vrot.slane %v1451, %v1464
        %v1466 = vcombine.low %v1409, %v1425
        %v1468 = vunpack.c.l.s4 1934713408
        %v1469 = vunpack.c.0.s8 %v1468
        %v1470 = vlaneseq
        %v1471 = vshrl.u32 %v1470, 7
        %v1472 = vsub.s32 %v1469, %v1471
        %v1473 = vrot.slane %v1466, %v1472
        %v1474 = vcombine.low %v1434, %v1458
        %v1475 = vcombine.high %v1434, %v1458
        %v1476 = vcombine.low %v1441, %v1465
        %v1477 = vcombine.high %v1441, %v1465
        %v1478 = vcombine.low %v1449, %v1473
        %v1479 = vcombine.high %v1449, %v1473
        %v1480 = vcombine.low %v522, %v524
        %v1481 = vcombine.high %v522, %v524
        %v1483 = vunpack.c.l.s4 1983009808
        %v1484 = vunpack.c.0.s8 %v1483
        %v1485 = vlaneseq
        %v1486 = vshrl.u32 %v1485, 7
        %v1487 = vsub.s32 %v1484, %v1486
        %v1488 = vrot.slane %v1480, %v1487
        %v1490 = vunpack.c.l.s4 1983009808
        %v1491 = vunpack.c.0.s8 %v1490
        %v1492 = vlaneseq
        %v1493 = vshrl.u32 %v1492, 7
        %v1494 = vsub.s32 %v1491, %v1493
        %v1495 = vrot.slane %v1481, %v1494
        %v1496 = vcombine.low %v523, %v525
        %v1497 = vcombine.high %v523, %v525
        %v1499 = vunpack.c.l.s4 1983009808
        %v1500 = vunpack.c.0.s8 %v1499
        %v1501 = vlaneseq
        %v1502 = vshrl.u32 %v1501, 7
        %v1503 = vsub.s32 %v1500, %v1502
        %v1504 = vrot.slane %v1496, %v1503
        %v1506 = vunpack.c.l.s4 1983009808
        %v1507 = vunpack.c.0.s8 %v1506
        %v1508 = vlaneseq
        %v1509 = vshrl.u32 %v1508, 7
        %v1510 = vsub.s32 %v1507, %v1509
        %v1511 = vrot.slane %v1497, %v1510
        %v1512 = vcombine.low %v640, %v648
        %v1513 = vcombine.high %v640, %v648
        %v1515 = vunpack.c.l.s4 1983009808
        %v1516 = vunpack.c.0.s8 %v1515
        %v1517 = vlaneseq
        %v1518 = vshrl.u32 %v1517, 7
        %v1519 = vsub.s32 %v1516, %v1518
        %v1520 = vrot.slane %v1512, %v1519
        %v1522 = vunpack.c.l.s4 1983009808
        %v1523 = vunpack.c.0.s8 %v1522
        %v1524 = vlaneseq
        %v1525 = vshrl.u32 %v1524, 7
        %v1526 = vsub.s32 %v1523, %v1525
        %v1527 = vrot.slane %v1513, %v1526
        %v1528 = vcombine.low %v644, %v652
        %v1529 = vcombine.high %v644, %v652
        %v1531 = vunpack.c.l.s4 1983009808
        %v1532 = vunpack.c.0.s8 %v1531
        %v1533 = vlaneseq
        %v1534 = vshrl.u32 %v1533, 7
        %v1535 = vsub.s32 %v1532, %v1534
        %v1536 = vrot.slane %v1528, %v1535
        %v1538 = vunpack.c.l.s4 1983009808
        %v1539 = vunpack.c.0.s8 %v1538
        %v1540 = vlaneseq
        %v1541 = vshrl.u32 %v1540, 7
        %v1542 = vsub.s32 %v1539, %v1541
        %v1543 = vrot.slane %v1529, %v1542
        %v1544 = vcombine.low %v1488, %v1504
        %v1545 = vcombine.high %v1488, %v1504
        %v1547 = vunpack.c.l.s4 1934713408
        %v1548 = vunpack.c.0.s8 %v1547
        %v1549 = vlaneseq
        %v1550 = vshrl.u32 %v1549, 7
        %v1551 = vsub.s32 %v1548, %v1550
        %v1552 = vrot.slane %v1544, %v1551
        %v1554 = vunpack.c.l.s4 1934713408
        %v1555 = vunpack.c.0.s8 %v1554
        %v1556 = vlaneseq
        %v1557 = vshrl.u32 %v1556, 7
        %v1558 = vsub.s32 %v1555, %v1557
        %v1559 = vrot.slane %v1545, %v1558
        %v1560 = vcombine.low %v1495, %v1511
        %v1562 = vunpack.c.l.s4 1934713408
        %v1563 = vunpack.c.0.s8 %v1562
        %v1564 = vlaneseq
        %v1565 = vshrl.u32 %v1564, 7
        %v1566 = vsub.s32 %v1563, %v1565
        %v1567 = vrot.slane %v1560, %v1566
        %v1568 = vcombine.low %v1520, %v1536
        %v1569 = vcombine.high %v1520, %v1536
        %v1571 = vunpack.c.l.s4 1934713408
        %v1572 = vunpack.c.0.s8 %v1571
        %v1573 = vlaneseq
        %v1574 = vshrl.u32 %v1573, 7
        %v1575 = vsub.s32 %v1572, %v1574
        %v1576 = vrot.slane %v1568, %v1575
        %v1578 = vunpack.c.l.s4 1934713408
        %v1579 = vunpack.c.0.s8 %v1578
        %v1580 = vlaneseq
        %v1581 = vshrl.u32 %v1580, 7
        %v1582 = vsub.s32 %v1579, %v1581
        %v1583 = vrot.slane %v1569, %v1582
        %v1584 = vcombine.low %v1527, %v1543
        %v1586 = vunpack.c.l.s4 1934713408
        %v1587 = vunpack.c.0.s8 %v1586
        %v1588 = vlaneseq
        %v1589 = vshrl.u32 %v1588, 7
        %v1590 = vsub.s32 %v1587, %v1589
        %v1591 = vrot.slane %v1584, %v1590
        %v1592 = vcombine.low %v1552, %v1576
        %v1593 = vcombine.high %v1552, %v1576
        %v1594 = vcombine.low %v1559, %v1583
        %v1595 = vcombine.high %v1559, %v1583
        %v1596 = vcombine.low %v1567, %v1591
        %v1597 = vcombine.high %v1567, %v1591
        %1606 = vrot.lane.b32.xlu0 %v767, 6
        %v1607 = vpop.permute.xlu0 %1606
        %1608 = vrot.lane.b32.xlu0 %v885, 6
        %v1609 = vpop.permute.xlu0 %1608
        %1610 = vrot.lane.b32.xlu0 %v1003, 6
        %v1611 = vpop.permute.xlu0 %1610
        %1612 = vrot.lane.b32.xlu0 %v1121, 6
        %v1613 = vpop.permute.xlu0 %1612
        %1614 = vrot.lane.b32.xlu0 %v1239, 6
        %v1615 = vpop.permute.xlu0 %1614
        %1616 = vrot.lane.b32.xlu0 %v1357, 6
        %v1617 = vpop.permute.xlu0 %1616
        %1618 = vrot.lane.b32.xlu0 %v1475, 6
        %v1619 = vpop.permute.xlu0 %1618
        %1620 = vrot.lane.b32.xlu0 %v1593, 6
        %v1621 = vpop.permute.xlu0 %1620
        %1638 = vrot.lane.b32.xlu0 %v768, 12
        %v1639 = vpop.permute.xlu0 %1638
        %1640 = vrot.lane.b32.xlu0 %v886, 12
        %v1641 = vpop.permute.xlu0 %1640
        %1642 = vrot.lane.b32.xlu0 %v1004, 12
        %v1643 = vpop.permute.xlu0 %1642
        %1644 = vrot.lane.b32.xlu0 %v1122, 12
        %v1645 = vpop.permute.xlu0 %1644
        %1646 = vrot.lane.b32.xlu0 %v1240, 12
        %v1647 = vpop.permute.xlu0 %1646
        %1648 = vrot.lane.b32.xlu0 %v1358, 12
        %v1649 = vpop.permute.xlu0 %1648
        %1650 = vrot.lane.b32.xlu0 %v1476, 12
        %v1651 = vpop.permute.xlu0 %1650
        %1652 = vrot.lane.b32.xlu0 %v1594, 12
        %v1653 = vpop.permute.xlu0 %1652
        %1670 = vrot.lane.b32.xlu0 %v769, 18
        %v1671 = vpop.permute.xlu0 %1670
        %1672 = vrot.lane.b32.xlu0 %v887, 18
        %v1673 = vpop.permute.xlu0 %1672
        %1674 = vrot.lane.b32.xlu0 %v1005, 18
        %v1675 = vpop.permute.xlu0 %1674
        %1676 = vrot.lane.b32.xlu0 %v1123, 18
        %v1677 = vpop.permute.xlu0 %1676
        %1678 = vrot.lane.b32.xlu0 %v1241, 18
        %v1679 = vpop.permute.xlu0 %1678
        %1680 = vrot.lane.b32.xlu0 %v1359, 18
        %v1681 = vpop.permute.xlu0 %1680
        %1682 = vrot.lane.b32.xlu0 %v1477, 18
        %v1683 = vpop.permute.xlu0 %1682
        %1684 = vrot.lane.b32.xlu0 %v1595, 18
        %v1685 = vpop.permute.xlu0 %1684
        %1702 = vrot.lane.b32.xlu0 %v770, 24
        %v1703 = vpop.permute.xlu0 %1702
        %1704 = vrot.lane.b32.xlu0 %v888, 24
        %v1705 = vpop.permute.xlu0 %1704
        %1706 = vrot.lane.b32.xlu0 %v1006, 24
        %v1707 = vpop.permute.xlu0 %1706
        %1708 = vrot.lane.b32.xlu0 %v1124, 24
        %v1709 = vpop.permute.xlu0 %1708
        %1710 = vrot.lane.b32.xlu0 %v1242, 24
        %v1711 = vpop.permute.xlu0 %1710
        %1712 = vrot.lane.b32.xlu0 %v1360, 24
        %v1713 = vpop.permute.xlu0 %1712
        %1714 = vrot.lane.b32.xlu0 %v1478, 24
        %v1715 = vpop.permute.xlu0 %1714
        %1716 = vrot.lane.b32.xlu0 %v1596, 24
        %v1717 = vpop.permute.xlu0 %1716
        %1734 = vrot.lane.b32.xlu0 %v771, 30
        %v1735 = vpop.permute.xlu0 %1734
        %1736 = vrot.lane.b32.xlu0 %v889, 30
        %v1737 = vpop.permute.xlu0 %1736
        %1738 = vrot.lane.b32.xlu0 %v1007, 30
        %v1739 = vpop.permute.xlu0 %1738
        %1740 = vrot.lane.b32.xlu0 %v1125, 30
        %v1741 = vpop.permute.xlu0 %1740
        %1742 = vrot.lane.b32.xlu0 %v1243, 30
        %v1743 = vpop.permute.xlu0 %1742
        %1744 = vrot.lane.b32.xlu0 %v1361, 30
        %v1745 = vpop.permute.xlu0 %1744
        %1746 = vrot.lane.b32.xlu0 %v1479, 30
        %v1747 = vpop.permute.xlu0 %1746
        %1748 = vrot.lane.b32.xlu0 %v1597, 30
        %v1749 = vpop.permute.xlu0 %1748
        %vm1758 = vcmask 48128
        %v1759 = vsel %vm1758, %v766, %v1607
        %v1760 = vsel %vm1758, %v884, %v1609
        %v1761 = vsel %vm1758, %v1002, %v1611
        %v1762 = vsel %vm1758, %v1120, %v1613
        %v1763 = vsel %vm1758, %v1238, %v1615
        %v1764 = vsel %vm1758, %v1356, %v1617
        %v1765 = vsel %vm1758, %v1474, %v1619
        %v1766 = vsel %vm1758, %v1592, %v1621
        %vm1767 = vcmask 97280
        %v1768 = vsel %vm1767, %v1759, %v1639
        %v1769 = vsel %vm1767, %v1760, %v1641
        %v1770 = vsel %vm1767, %v1761, %v1643
        %v1771 = vsel %vm1767, %v1762, %v1645
        %v1772 = vsel %vm1767, %v1763, %v1647
        %v1773 = vsel %vm1767, %v1764, %v1649
        %v1774 = vsel %vm1767, %v1765, %v1651
        %v1775 = vsel %vm1767, %v1766, %v1653
        %vm1776 = vcmask 146432
        %v1777 = vsel %vm1776, %v1768, %v1671
        %v1778 = vsel %vm1776, %v1769, %v1673
        %v1779 = vsel %vm1776, %v1770, %v1675
        %v1780 = vsel %vm1776, %v1771, %v1677
        %v1781 = vsel %vm1776, %v1772, %v1679
        %v1782 = vsel %vm1776, %v1773, %v1681
        %v1783 = vsel %vm1776, %v1774, %v1683
        %v1784 = vsel %vm1776, %v1775, %v1685
        %vm1785 = vcmask 195584
        %v1786 = vsel %vm1785, %v1777, %v1703
        %v1787 = vsel %vm1785, %v1778, %v1705
        %v1788 = vsel %vm1785, %v1779, %v1707
        %v1789 = vsel %vm1785, %v1780, %v1709
        %v1790 = vsel %vm1785, %v1781, %v1711
        %v1791 = vsel %vm1785, %v1782, %v1713
        %v1792 = vsel %vm1785, %v1783, %v1715
        %v1793 = vsel %vm1785, %v1784, %v1717
        %vm1794 = vcmask 244736
        %v1795 = vsel %vm1794, %v1786, %v1735
        %v1796 = vsel %vm1794, %v1787, %v1737
        %v1797 = vsel %vm1794, %v1788, %v1739
        %v1798 = vsel %vm1794, %v1789, %v1741
        %v1799 = vsel %vm1794, %v1790, %v1743
        %v1800 = vsel %vm1794, %v1791, %v1745
        %v1801 = vsel %vm1794, %v1792, %v1747
        %v1802 = vsel %vm1794, %v1793, %v1749
        %v1803 = vld [vmem:[%s1] sm:$0xff]
        %v1804 = vld [vmem:[%s1 + $0x8] sm:$0xff]
        %v1805 = vld [vmem:[%s1 + $0x10] sm:$0xff]
        %v1806 = vld [vmem:[%s1 + $0x18] sm:$0xff]
        %v1807 = vld [vmem:[%s1 + $0x20] sm:$0xff]
        %v1808 = vld [vmem:[%s1 + $0x28] sm:$0xff]
        %v1809 = vld [vmem:[%s1 + $0x30] sm:$0xff]
        %v1810 = vld [vmem:[%s1 + $0x38] sm:$0xff]
        %v1811 = vld [vmem:[%s1 + $0x40] sm:$0xff]
        %v1812 = vld [vmem:[%s1 + $0x48] sm:$0xff]
        %v1813 = vld [vmem:[%s1 + $0x50] sm:$0xff]
        %v1814 = vld [vmem:[%s1 + $0x58] sm:$0xff]
        %vm1815 = vcmask 523264
        %v1817 = vsel %vm1815, %v1803, 0
        %v1820 = vsel %vm1815, %v1804, 0
        %v1823 = vsel %vm1815, %v1805, 0
        %v1826 = vsel %vm1815, %v1806, 0
        %v1829 = vsel %vm1815, %v1807, 0
        %v1832 = vsel %vm1815, %v1808, 0
        %v1835 = vsel %vm1815, %v1809, 0
        %v1838 = vsel %vm1815, %v1810, 0
        %v1841 = vsel %vm1815, %v1811, 0
        %v1844 = vsel %vm1815, %v1812, 0
        %v1847 = vsel %vm1815, %v1813, 0
        %v1850 = vsel %vm1815, %v1814, 0
        %1852 = vmatprep.subr.mxu0 0.0
        %1853 = vmatpush1.msra.mxu0 0.0
        %1854 = vmatprep.subr.mxu0 0.0
        %1855 = vmatpush1.msra.mxu0 0.0
        %1856 = vmatprep.subr.mxu0 0.0
        %1857 = vmatpush1.msra.mxu0 0.0
        %1858 = vmatprep.subr.mxu0 0.0
        %1859 = vmatpush1.msra.mxu0 0.0
        %1860 = vmatprep.subr.mxu0 0.0
        %1861 = vmatpush1.msra.mxu0 0.0
        %1862 = vmatprep.subr.mxu0 0.0
        %1863 = vmatpush1.msra.mxu0 0.0
        %1864 = vmatprep.subr.mxu0 0.0
        %1865 = vmatpush1.msra.mxu0 0.0
        %1866 = vmatprep.subr.mxu0 0.0
        %1867 = vmatpush1.msra.mxu0 0.0
        %1868 = vmatprep.subr.mxu0 0.0
        %1869 = vmatpush1.msra.mxu0 %v1802
        %1870 = vmatprep.subr.mxu0 0.0
        %1871 = vmatpush1.msra.mxu0 %v1801
        %1872 = vmatprep.subr.mxu0 0.0
        %1873 = vmatpush1.msra.mxu0 %v1800
        %1874 = vmatprep.subr.mxu0 0.0
        %1875 = vmatpush1.msra.mxu0 %v1799
        %1876 = vmatprep.subr.mxu0 0.0
        %1877 = vmatpush1.msra.mxu0 %v1798
        %1878 = vmatprep.subr.mxu0 0.0
        %1879 = vmatpush1.msra.mxu0 %v1797
        %1880 = vmatprep.subr.mxu0 0.0
        %1881 = vmatpush1.msra.mxu0 %v1796
        %1882 = vmatprep.subr.mxu0 0.0
        %1883 = vmatpush1.msra.mxu0 %v1795
        %1884 = vmatprep.subr.mxu0 0.0
        %1885 = vmatpush2.msra.mxu0 0.0
        %1886 = vmatprep.subr.mxu0 0.0
        %1887 = vmatpush2.msra.mxu0 0.0
        %1888 = vmatprep.subr.mxu0 0.0
        %1889 = vmatpush2.msra.mxu0 0.0
        %1890 = vmatprep.subr.mxu0 0.0
        %1891 = vmatpush2.msra.mxu0 0.0
        %1892 = vmatprep.subr.mxu0 0.0
        %1893 = vmatpush2.msra.mxu0 0.0
        %1894 = vmatprep.subr.mxu0 0.0
        %1895 = vmatpush2.msra.mxu0 0.0
        %1896 = vmatprep.subr.mxu0 0.0
        %1897 = vmatpush2.msra.mxu0 0.0
        %1898 = vmatprep.subr.mxu0 0.0
        %1899 = vmatpush2.msra.mxu0 0.0
        %1900 = vmatprep.subr.mxu0 0.0
        %1901 = vmatpush2.msra.mxu0 0.0
        %1902 = vmatprep.subr.mxu0 0.0
        %1903 = vmatpush2.msra.mxu0 0.0
        %1904 = vmatprep.subr.mxu0 0.0
        %1905 = vmatpush2.msra.mxu0 0.0
        %1906 = vmatprep.subr.mxu0 0.0
        %1907 = vmatpush2.msra.mxu0 0.0
        %1908 = vmatprep.subr.mxu0 0.0
        %1909 = vmatpush2.msra.mxu0 0.0
        %1910 = vmatprep.subr.mxu0 0.0
        %1911 = vmatpush2.msra.mxu0 0.0
        %1912 = vmatprep.subr.mxu0 0.0
        %1913 = vmatpush2.msra.mxu0 0.0
        %1914 = vmatprep.subr.mxu0 0.0
        %1915 = vmatpush2.msra.mxu0 0.0
        %1916 = vmatprep.mubr.f32.mxu0 0.0
        %1917 = vmatmul.mubr.f32.gmra.mxu0 %v1817
        %v1918 = vpop.f32.mrf.mxu0
        %v1919 = vadd.f32 0.0, %v1918
        %v1920 = vpop.f32.mrf.mxu0
        %1921 = vmatprep.mubr.f32.mxu0 0.0
        %1922 = vmatmul.mubr.f32.gmra.mxu0 %v1820
        %v1923 = vpop.f32.mrf.mxu0
        %v1924 = vadd.f32 0.0, %v1923
        %v1925 = vpop.f32.mrf.mxu0
        %1926 = vmatprep.mubr.f32.mxu0 0.0
        %1927 = vmatmul.mubr.f32.gmra.mxu0 %v1823
        %v1928 = vpop.f32.mrf.mxu0
        %v1929 = vadd.f32 0.0, %v1928
        %v1930 = vpop.f32.mrf.mxu0
        %1931 = vmatprep.mubr.f32.mxu0 0.0
        %1932 = vmatmul.mubr.f32.gmra.mxu0 %v1826
        %v1933 = vpop.f32.mrf.mxu0
        %v1934 = vadd.f32 0.0, %v1933
        %v1935 = vpop.f32.mrf.mxu0
        %1936 = vmatprep.mubr.f32.mxu0 0.0
        %1937 = vmatmul.mubr.f32.gmra.mxu0 %v1829
        %v1938 = vpop.f32.mrf.mxu0
        %v1939 = vadd.f32 0.0, %v1938
        %v1940 = vpop.f32.mrf.mxu0
        %1941 = vmatprep.mubr.f32.mxu0 0.0
        %1942 = vmatmul.mubr.f32.gmra.mxu0 %v1832
        %v1943 = vpop.f32.mrf.mxu0
        %v1944 = vadd.f32 0.0, %v1943
        %v1945 = vpop.f32.mrf.mxu0
        %1946 = vmatprep.mubr.f32.mxu0 0.0
        %1947 = vmatmul.mubr.f32.gmra.mxu0 %v1835
        %v1948 = vpop.f32.mrf.mxu0
        %v1949 = vadd.f32 0.0, %v1948
        %v1950 = vpop.f32.mrf.mxu0
        %1951 = vmatprep.mubr.f32.mxu0 0.0
        %1952 = vmatmul.mubr.f32.gmra.mxu0 %v1838
        %v1953 = vpop.f32.mrf.mxu0
        %v1954 = vadd.f32 0.0, %v1953
        %v1955 = vpop.f32.mrf.mxu0
        %1956 = vmatprep.mubr.f32.mxu0 0.0
        %1957 = vmatmul.mubr.f32.gmra.mxu0 %v1841
        %v1958 = vpop.f32.mrf.mxu0
        %v1959 = vadd.f32 0.0, %v1958
        %v1960 = vpop.f32.mrf.mxu0
        %1961 = vmatprep.mubr.f32.mxu0 0.0
        %1962 = vmatmul.mubr.f32.gmra.mxu0 %v1844
        %v1963 = vpop.f32.mrf.mxu0
        %v1964 = vadd.f32 0.0, %v1963
        %v1965 = vpop.f32.mrf.mxu0
        %1966 = vmatprep.mubr.f32.mxu0 0.0
        %1967 = vmatmul.mubr.f32.gmra.mxu0 %v1847
        %v1968 = vpop.f32.mrf.mxu0
        %v1969 = vadd.f32 0.0, %v1968
        %v1970 = vpop.f32.mrf.mxu0
        %1971 = vmatprep.mubr.f32.mxu0 0.0
        %1972 = vmatmul.mubr.f32.gmra.mxu0 %v1850
        %v1973 = vpop.f32.mrf.mxu0
        %v1974 = vadd.f32 0.0, %v1973
        %v1975 = vpop.f32.mrf.mxu0
        %1976 = vdwg.mxu0
        %v1977 = vmax.f32 %v1919, %v1934
        %v1978 = vmax.f32 %v1924, %v1939
        %v1979 = vmax.f32 %v1929, %v1944
        %v1980 = vmax.f32 %v1949, %v1964
        %v1981 = vmax.f32 %v1954, %v1969
        %v1982 = vmax.f32 %v1959, %v1974
        %v1983 = vmax.f32 %v1977, %v1980
        %v1984 = vmax.f32 %v1978, %v1981
        %v1985 = vmax.f32 %v1979, %v1982
        %v1986 = vld [vmem:[%s2] sm:$0xff]
        %v1987 = vld [vmem:[%s2 + $0x8] sm:$0xff]
        %v1988 = vld [vmem:[%s2 + $0x10] sm:$0xff]
        %1990 = vset.pattern.permute.xlu0 0
        %1991 = vperm.xlu0 %1990, %v1986
        %v1992 = vpop.permute.xlu0 %1991
        %1995 = vset.pattern.permute.xlu0 0
        %1996 = vperm.xlu0 %1995, %v1987
        %v1997 = vpop.permute.xlu0 %1996
        %2000 = vset.pattern.permute.xlu0 0
        %2001 = vperm.xlu0 %2000, %v1988
        %v2002 = vpop.permute.xlu0 %2001
        %v2004 = vadd.f32 %v1983, %v1992
        %v2005 = vadd.f32 %v1984, %v1997
        %v2006 = vadd.f32 %v1985, %v2002
        %v2007 = vmax.f32 %v2004, 0.0
        %v2008 = vmax.f32 %v2005, 0.0
        %v2009 = vmax.f32 %v2006, 0.0
        %2013 = vrot.lane.b32.xlu0 %v2007, 122
        %v2014 = vpop.permute.xlu0 %2013
        %2015 = vrot.lane.b32.xlu0 %v2008, 122
        %v2016 = vpop.permute.xlu0 %2015
        %2017 = vrot.lane.b32.xlu0 %v2009, 122
        %v2018 = vpop.permute.xlu0 %2017
        %2022 = vrot.lane.b32.xlu0 %v2007, 116
        %v2023 = vpop.permute.xlu0 %2022
        %2024 = vrot.lane.b32.xlu0 %v2008, 116
        %v2025 = vpop.permute.xlu0 %2024
        %2026 = vrot.lane.b32.xlu0 %v2009, 116
        %v2027 = vpop.permute.xlu0 %2026
        %2031 = vrot.lane.b32.xlu0 %v2007, 110
        %v2032 = vpop.permute.xlu0 %2031
        %2033 = vrot.lane.b32.xlu0 %v2008, 110
        %v2034 = vpop.permute.xlu0 %2033
        %2035 = vrot.lane.b32.xlu0 %v2009, 110
        %v2036 = vpop.permute.xlu0 %2035
        %2040 = vrot.lane.b32.xlu0 %v2007, 104
        %v2041 = vpop.permute.xlu0 %2040
        %2042 = vrot.lane.b32.xlu0 %v2008, 104
        %v2043 = vpop.permute.xlu0 %2042
        %2044 = vrot.lane.b32.xlu0 %v2009, 104
        %v2045 = vpop.permute.xlu0 %2044
        %2049 = vrot.lane.b32.xlu0 %v2007, 98
        %v2050 = vpop.permute.xlu0 %2049
        %2051 = vrot.lane.b32.xlu0 %v2008, 98
        %v2052 = vpop.permute.xlu0 %2051
        %2053 = vrot.lane.b32.xlu0 %v2009, 98
        %v2054 = vpop.permute.xlu0 %2053
        %v2058 = vcombine.low %v2007, %v2023
        %v2059 = vcombine.high %v2007, %v2023
        %v2061 = vunpack.c.l.s4 1983009808
        %v2062 = vunpack.c.0.s8 %v2061
        %v2063 = vlaneseq
        %v2064 = vshrl.u32 %v2063, 7
        %v2065 = vsub.s32 %v2062, %v2064
        %v2066 = vrot.slane %v2058, %v2065
        %v2068 = vunpack.c.l.s4 1983009808
        %v2069 = vunpack.c.0.s8 %v2068
        %v2070 = vlaneseq
        %v2071 = vshrl.u32 %v2070, 7
        %v2072 = vsub.s32 %v2069, %v2071
        %v2073 = vrot.slane %v2059, %v2072
        %v2074 = vcombine.low %v2014, %v2032
        %v2075 = vcombine.high %v2014, %v2032
        %v2077 = vunpack.c.l.s4 1983009808
        %v2078 = vunpack.c.0.s8 %v2077
        %v2079 = vlaneseq
        %v2080 = vshrl.u32 %v2079, 7
        %v2081 = vsub.s32 %v2078, %v2080
        %v2082 = vrot.slane %v2074, %v2081
        %v2084 = vunpack.c.l.s4 1983009808
        %v2085 = vunpack.c.0.s8 %v2084
        %v2086 = vlaneseq
        %v2087 = vshrl.u32 %v2086, 7
        %v2088 = vsub.s32 %v2085, %v2087
        %v2089 = vrot.slane %v2075, %v2088
        %v2090 = vcombine.high %v2041, 0.0
        %v2092 = vunpack.c.l.s4 1983009808
        %v2093 = vunpack.c.0.s8 %v2092
        %v2094 = vlaneseq
        %v2095 = vshrl.u32 %v2094, 7
        %v2096 = vsub.s32 %v2093, %v2095
        %v2097 = vrot.slane %v2041, %v2096
        %v2099 = vunpack.c.l.s4 1983009808
        %v2100 = vunpack.c.0.s8 %v2099
        %v2101 = vlaneseq
        %v2102 = vshrl.u32 %v2101, 7
        %v2103 = vsub.s32 %v2100, %v2102
        %v2104 = vrot.slane %v2090, %v2103
        %v2105 = vcombine.high %v2050, 0.0
        %v2107 = vunpack.c.l.s4 1983009808
        %v2108 = vunpack.c.0.s8 %v2107
        %v2109 = vlaneseq
        %v2110 = vshrl.u32 %v2109, 7
        %v2111 = vsub.s32 %v2108, %v2110
        %v2112 = vrot.slane %v2050, %v2111
        %v2114 = vunpack.c.l.s4 1983009808
        %v2115 = vunpack.c.0.s8 %v2114
        %v2116 = vlaneseq
        %v2117 = vshrl.u32 %v2116, 7
        %v2118 = vsub.s32 %v2115, %v2117
        %v2119 = vrot.slane %v2105, %v2118
        %v2120 = vcombine.low %v2066, %v2082
        %v2121 = vcombine.high %v2066, %v2082
        %v2123 = vunpack.c.l.s4 1934713408
        %v2124 = vunpack.c.0.s8 %v2123
        %v2125 = vlaneseq
        %v2126 = vshrl.u32 %v2125, 7
        %v2127 = vsub.s32 %v2124, %v2126
        %v2128 = vrot.slane %v2120, %v2127
        %v2130 = vunpack.c.l.s4 1934713408
        %v2131 = vunpack.c.0.s8 %v2130
        %v2132 = vlaneseq
        %v2133 = vshrl.u32 %v2132, 7
        %v2134 = vsub.s32 %v2131, %v2133
        %v2135 = vrot.slane %v2121, %v2134
        %v2136 = vcombine.low %v2073, %v2089
        %v2137 = vcombine.high %v2073, %v2089
        %v2139 = vunpack.c.l.s4 1934713408
        %v2140 = vunpack.c.0.s8 %v2139
        %v2141 = vlaneseq
        %v2142 = vshrl.u32 %v2141, 7
        %v2143 = vsub.s32 %v2140, %v2142
        %v2144 = vrot.slane %v2136, %v2143
        %v2146 = vunpack.c.l.s4 1934713408
        %v2147 = vunpack.c.0.s8 %v2146
        %v2148 = vlaneseq
        %v2149 = vshrl.u32 %v2148, 7
        %v2150 = vsub.s32 %v2147, %v2149
        %v2151 = vrot.slane %v2137, %v2150
        %v2152 = vcombine.low %v2097, %v2112
        %v2153 = vcombine.high %v2097, %v2112
        %v2155 = vunpack.c.l.s4 1934713408
        %v2156 = vunpack.c.0.s8 %v2155
        %v2157 = vlaneseq
        %v2158 = vshrl.u32 %v2157, 7
        %v2159 = vsub.s32 %v2156, %v2158
        %v2160 = vrot.slane %v2152, %v2159
        %v2162 = vunpack.c.l.s4 1934713408
        %v2163 = vunpack.c.0.s8 %v2162
        %v2164 = vlaneseq
        %v2165 = vshrl.u32 %v2164, 7
        %v2166 = vsub.s32 %v2163, %v2165
        %v2167 = vrot.slane %v2153, %v2166
        %v2168 = vcombine.low %v2104, %v2119
        %v2169 = vcombine.high %v2104, %v2119
        %v2171 = vunpack.c.l.s4 1934713408
        %v2172 = vunpack.c.0.s8 %v2171
        %v2173 = vlaneseq
        %v2174 = vshrl.u32 %v2173, 7
        %v2175 = vsub.s32 %v2172, %v2174
        %v2176 = vrot.slane %v2168, %v2175
        %v2178 = vunpack.c.l.s4 1934713408
        %v2179 = vunpack.c.0.s8 %v2178
        %v2180 = vlaneseq
        %v2181 = vshrl.u32 %v2180, 7
        %v2182 = vsub.s32 %v2179, %v2181
        %v2183 = vrot.slane %v2169, %v2182
        %v2184 = vcombine.low %v2128, %v2160
        %v2185 = vcombine.high %v2128, %v2160
        %v2186 = vcombine.low %v2135, %v2167
        %v2187 = vcombine.high %v2135, %v2167
        %v2188 = vcombine.low %v2144, %v2176
        %v2189 = vcombine.high %v2144, %v2176
        %v2190 = vcombine.low %v2151, %v2183
        %v2191 = vcombine.high %v2151, %v2183
        %v2192 = vcombine.low %v2008, %v2025
        %v2193 = vcombine.high %v2008, %v2025
        %v2195 = vunpack.c.l.s4 1983009808
        %v2196 = vunpack.c.0.s8 %v2195
        %v2197 = vlaneseq
        %v2198 = vshrl.u32 %v2197, 7
        %v2199 = vsub.s32 %v2196, %v2198
        %v2200 = vrot.slane %v2192, %v2199
        %v2202 = vunpack.c.l.s4 1983009808
        %v2203 = vunpack.c.0.s8 %v2202
        %v2204 = vlaneseq
        %v2205 = vshrl.u32 %v2204, 7
        %v2206 = vsub.s32 %v2203, %v2205
        %v2207 = vrot.slane %v2193, %v2206
        %v2208 = vcombine.low %v2016, %v2034
        %v2209 = vcombine.high %v2016, %v2034
        %v2211 = vunpack.c.l.s4 1983009808
        %v2212 = vunpack.c.0.s8 %v2211
        %v2213 = vlaneseq
        %v2214 = vshrl.u32 %v2213, 7
        %v2215 = vsub.s32 %v2212, %v2214
        %v2216 = vrot.slane %v2208, %v2215
        %v2218 = vunpack.c.l.s4 1983009808
        %v2219 = vunpack.c.0.s8 %v2218
        %v2220 = vlaneseq
        %v2221 = vshrl.u32 %v2220, 7
        %v2222 = vsub.s32 %v2219, %v2221
        %v2223 = vrot.slane %v2209, %v2222
        %v2224 = vcombine.high %v2043, 0.0
        %v2226 = vunpack.c.l.s4 1983009808
        %v2227 = vunpack.c.0.s8 %v2226
        %v2228 = vlaneseq
        %v2229 = vshrl.u32 %v2228, 7
        %v2230 = vsub.s32 %v2227, %v2229
        %v2231 = vrot.slane %v2043, %v2230
        %v2233 = vunpack.c.l.s4 1983009808
        %v2234 = vunpack.c.0.s8 %v2233
        %v2235 = vlaneseq
        %v2236 = vshrl.u32 %v2235, 7
        %v2237 = vsub.s32 %v2234, %v2236
        %v2238 = vrot.slane %v2224, %v2237
        %v2239 = vcombine.high %v2052, 0.0
        %v2241 = vunpack.c.l.s4 1983009808
        %v2242 = vunpack.c.0.s8 %v2241
        %v2243 = vlaneseq
        %v2244 = vshrl.u32 %v2243, 7
        %v2245 = vsub.s32 %v2242, %v2244
        %v2246 = vrot.slane %v2052, %v2245
        %v2248 = vunpack.c.l.s4 1983009808
        %v2249 = vunpack.c.0.s8 %v2248
        %v2250 = vlaneseq
        %v2251 = vshrl.u32 %v2250, 7
        %v2252 = vsub.s32 %v2249, %v2251
        %v2253 = vrot.slane %v2239, %v2252
        %v2254 = vcombine.low %v2200, %v2216
        %v2255 = vcombine.high %v2200, %v2216
        %v2257 = vunpack.c.l.s4 1934713408
        %v2258 = vunpack.c.0.s8 %v2257
        %v2259 = vlaneseq
        %v2260 = vshrl.u32 %v2259, 7
        %v2261 = vsub.s32 %v2258, %v2260
        %v2262 = vrot.slane %v2254, %v2261
        %v2264 = vunpack.c.l.s4 1934713408
        %v2265 = vunpack.c.0.s8 %v2264
        %v2266 = vlaneseq
        %v2267 = vshrl.u32 %v2266, 7
        %v2268 = vsub.s32 %v2265, %v2267
        %v2269 = vrot.slane %v2255, %v2268
        %v2270 = vcombine.low %v2207, %v2223
        %v2271 = vcombine.high %v2207, %v2223
        %v2273 = vunpack.c.l.s4 1934713408
        %v2274 = vunpack.c.0.s8 %v2273
        %v2275 = vlaneseq
        %v2276 = vshrl.u32 %v2275, 7
        %v2277 = vsub.s32 %v2274, %v2276
        %v2278 = vrot.slane %v2270, %v2277
        %v2280 = vunpack.c.l.s4 1934713408
        %v2281 = vunpack.c.0.s8 %v2280
        %v2282 = vlaneseq
        %v2283 = vshrl.u32 %v2282, 7
        %v2284 = vsub.s32 %v2281, %v2283
        %v2285 = vrot.slane %v2271, %v2284
        %v2286 = vcombine.low %v2231, %v2246
        %v2287 = vcombine.high %v2231, %v2246
        %v2289 = vunpack.c.l.s4 1934713408
        %v2290 = vunpack.c.0.s8 %v2289
        %v2291 = vlaneseq
        %v2292 = vshrl.u32 %v2291, 7
        %v2293 = vsub.s32 %v2290, %v2292
        %v2294 = vrot.slane %v2286, %v2293
        %v2296 = vunpack.c.l.s4 1934713408
        %v2297 = vunpack.c.0.s8 %v2296
        %v2298 = vlaneseq
        %v2299 = vshrl.u32 %v2298, 7
        %v2300 = vsub.s32 %v2297, %v2299
        %v2301 = vrot.slane %v2287, %v2300
        %v2302 = vcombine.low %v2238, %v2253
        %v2303 = vcombine.high %v2238, %v2253
        %v2305 = vunpack.c.l.s4 1934713408
        %v2306 = vunpack.c.0.s8 %v2305
        %v2307 = vlaneseq
        %v2308 = vshrl.u32 %v2307, 7
        %v2309 = vsub.s32 %v2306, %v2308
        %v2310 = vrot.slane %v2302, %v2309
        %v2312 = vunpack.c.l.s4 1934713408
        %v2313 = vunpack.c.0.s8 %v2312
        %v2314 = vlaneseq
        %v2315 = vshrl.u32 %v2314, 7
        %v2316 = vsub.s32 %v2313, %v2315
        %v2317 = vrot.slane %v2303, %v2316
        %v2318 = vcombine.low %v2262, %v2294
        %v2319 = vcombine.high %v2262, %v2294
        %v2320 = vcombine.low %v2269, %v2301
        %v2321 = vcombine.high %v2269, %v2301
        %v2322 = vcombine.low %v2278, %v2310
        %v2323 = vcombine.high %v2278, %v2310
        %v2324 = vcombine.low %v2285, %v2317
        %v2325 = vcombine.high %v2285, %v2317
        %v2326 = vcombine.low %v2009, %v2027
        %v2327 = vcombine.high %v2009, %v2027
        %v2329 = vunpack.c.l.s4 1983009808
        %v2330 = vunpack.c.0.s8 %v2329
        %v2331 = vlaneseq
        %v2332 = vshrl.u32 %v2331, 7
        %v2333 = vsub.s32 %v2330, %v2332
        %v2334 = vrot.slane %v2326, %v2333
        %v2336 = vunpack.c.l.s4 1983009808
        %v2337 = vunpack.c.0.s8 %v2336
        %v2338 = vlaneseq
        %v2339 = vshrl.u32 %v2338, 7
        %v2340 = vsub.s32 %v2337, %v2339
        %v2341 = vrot.slane %v2327, %v2340
        %v2342 = vcombine.low %v2018, %v2036
        %v2343 = vcombine.high %v2018, %v2036
        %v2345 = vunpack.c.l.s4 1983009808
        %v2346 = vunpack.c.0.s8 %v2345
        %v2347 = vlaneseq
        %v2348 = vshrl.u32 %v2347, 7
        %v2349 = vsub.s32 %v2346, %v2348
        %v2350 = vrot.slane %v2342, %v2349
        %v2352 = vunpack.c.l.s4 1983009808
        %v2353 = vunpack.c.0.s8 %v2352
        %v2354 = vlaneseq
        %v2355 = vshrl.u32 %v2354, 7
        %v2356 = vsub.s32 %v2353, %v2355
        %v2357 = vrot.slane %v2343, %v2356
        %v2358 = vcombine.high %v2045, 0.0
        %v2360 = vunpack.c.l.s4 1983009808
        %v2361 = vunpack.c.0.s8 %v2360
        %v2362 = vlaneseq
        %v2363 = vshrl.u32 %v2362, 7
        %v2364 = vsub.s32 %v2361, %v2363
        %v2365 = vrot.slane %v2045, %v2364
        %v2367 = vunpack.c.l.s4 1983009808
        %v2368 = vunpack.c.0.s8 %v2367
        %v2369 = vlaneseq
        %v2370 = vshrl.u32 %v2369, 7
        %v2371 = vsub.s32 %v2368, %v2370
        %v2372 = vrot.slane %v2358, %v2371
        %v2373 = vcombine.high %v2054, 0.0
        %v2375 = vunpack.c.l.s4 1983009808
        %v2376 = vunpack.c.0.s8 %v2375
        %v2377 = vlaneseq
        %v2378 = vshrl.u32 %v2377, 7
        %v2379 = vsub.s32 %v2376, %v2378
        %v2380 = vrot.slane %v2054, %v2379
        %v2382 = vunpack.c.l.s4 1983009808
        %v2383 = vunpack.c.0.s8 %v2382
        %v2384 = vlaneseq
        %v2385 = vshrl.u32 %v2384, 7
        %v2386 = vsub.s32 %v2383, %v2385
        %v2387 = vrot.slane %v2373, %v2386
        %v2388 = vcombine.low %v2334, %v2350
        %v2389 = vcombine.high %v2334, %v2350
        %v2391 = vunpack.c.l.s4 1934713408
        %v2392 = vunpack.c.0.s8 %v2391
        %v2393 = vlaneseq
        %v2394 = vshrl.u32 %v2393, 7
        %v2395 = vsub.s32 %v2392, %v2394
        %v2396 = vrot.slane %v2388, %v2395
        %v2398 = vunpack.c.l.s4 1934713408
        %v2399 = vunpack.c.0.s8 %v2398
        %v2400 = vlaneseq
        %v2401 = vshrl.u32 %v2400, 7
        %v2402 = vsub.s32 %v2399, %v2401
        %v2403 = vrot.slane %v2389, %v2402
        %v2404 = vcombine.low %v2341, %v2357
        %v2405 = vcombine.high %v2341, %v2357
        %v2407 = vunpack.c.l.s4 1934713408
        %v2408 = vunpack.c.0.s8 %v2407
        %v2409 = vlaneseq
        %v2410 = vshrl.u32 %v2409, 7
        %v2411 = vsub.s32 %v2408, %v2410
        %v2412 = vrot.slane %v2404, %v2411
        %v2414 = vunpack.c.l.s4 1934713408
        %v2415 = vunpack.c.0.s8 %v2414
        %v2416 = vlaneseq
        %v2417 = vshrl.u32 %v2416, 7
        %v2418 = vsub.s32 %v2415, %v2417
        %v2419 = vrot.slane %v2405, %v2418
        %v2420 = vcombine.low %v2365, %v2380
        %v2421 = vcombine.high %v2365, %v2380
        %v2423 = vunpack.c.l.s4 1934713408
        %v2424 = vunpack.c.0.s8 %v2423
        %v2425 = vlaneseq
        %v2426 = vshrl.u32 %v2425, 7
        %v2427 = vsub.s32 %v2424, %v2426
        %v2428 = vrot.slane %v2420, %v2427
        %v2430 = vunpack.c.l.s4 1934713408
        %v2431 = vunpack.c.0.s8 %v2430
        %v2432 = vlaneseq
        %v2433 = vshrl.u32 %v2432, 7
        %v2434 = vsub.s32 %v2431, %v2433
        %v2435 = vrot.slane %v2421, %v2434
        %v2436 = vcombine.low %v2372, %v2387
        %v2437 = vcombine.high %v2372, %v2387
        %v2439 = vunpack.c.l.s4 1934713408
        %v2440 = vunpack.c.0.s8 %v2439
        %v2441 = vlaneseq
        %v2442 = vshrl.u32 %v2441, 7
        %v2443 = vsub.s32 %v2440, %v2442
        %v2444 = vrot.slane %v2436, %v2443
        %v2446 = vunpack.c.l.s4 1934713408
        %v2447 = vunpack.c.0.s8 %v2446
        %v2448 = vlaneseq
        %v2449 = vshrl.u32 %v2448, 7
        %v2450 = vsub.s32 %v2447, %v2449
        %v2451 = vrot.slane %v2437, %v2450
        %v2452 = vcombine.low %v2396, %v2428
        %v2453 = vcombine.high %v2396, %v2428
        %v2454 = vcombine.low %v2403, %v2435
        %v2455 = vcombine.high %v2403, %v2435
        %v2456 = vcombine.low %v2412, %v2444
        %v2457 = vcombine.high %v2412, %v2444
        %v2458 = vcombine.low %v2419, %v2451
        %v2459 = vcombine.high %v2419, %v2451
        %v2460 = vcombine.low %v2184, %v2186
        %v2462 = vunpack.c.l.s4 1983009808
        %v2463 = vunpack.c.0.s8 %v2462
        %v2464 = vlaneseq
        %v2465 = vshrl.u32 %v2464, 7
        %v2466 = vsub.s32 %v2463, %v2465
        %v2467 = vrot.slane %v2460, %v2466
        %v2468 = vcombine.low %v2185, %v2187
        %v2470 = vunpack.c.l.s4 1983009808
        %v2471 = vunpack.c.0.s8 %v2470
        %v2472 = vlaneseq
        %v2473 = vshrl.u32 %v2472, 7
        %v2474 = vsub.s32 %v2471, %v2473
        %v2475 = vrot.slane %v2468, %v2474
        %v2477 = vunpack.c.l.s4 1983009808
        %v2478 = vunpack.c.0.s8 %v2477
        %v2479 = vlaneseq
        %v2480 = vshrl.u32 %v2479, 7
        %v2481 = vsub.s32 %v2478, %v2480
        %v2482 = vrot.slane %v2188, %v2481
        %v2484 = vunpack.c.l.s4 1983009808
        %v2485 = vunpack.c.0.s8 %v2484
        %v2486 = vlaneseq
        %v2487 = vshrl.u32 %v2486, 7
        %v2488 = vsub.s32 %v2485, %v2487
        %v2489 = vrot.slane %v2189, %v2488
        %v2490 = vcombine.low %v2467, %v2475
        %v2491 = vcombine.high %v2467, %v2475
        %v2493 = vunpack.c.l.s4 1934713408
        %v2494 = vunpack.c.0.s8 %v2493
        %v2495 = vlaneseq
        %v2496 = vshrl.u32 %v2495, 7
        %v2497 = vsub.s32 %v2494, %v2496
        %v2498 = vrot.slane %v2490, %v2497
        %v2500 = vunpack.c.l.s4 1934713408
        %v2501 = vunpack.c.0.s8 %v2500
        %v2502 = vlaneseq
        %v2503 = vshrl.u32 %v2502, 7
        %v2504 = vsub.s32 %v2501, %v2503
        %v2505 = vrot.slane %v2491, %v2504
        %v2506 = vcombine.low %v2482, %v2489
        %v2507 = vcombine.high %v2482, %v2489
        %v2509 = vunpack.c.l.s4 1934713408
        %v2510 = vunpack.c.0.s8 %v2509
        %v2511 = vlaneseq
        %v2512 = vshrl.u32 %v2511, 7
        %v2513 = vsub.s32 %v2510, %v2512
        %v2514 = vrot.slane %v2506, %v2513
        %v2516 = vunpack.c.l.s4 1934713408
        %v2517 = vunpack.c.0.s8 %v2516
        %v2518 = vlaneseq
        %v2519 = vshrl.u32 %v2518, 7
        %v2520 = vsub.s32 %v2517, %v2519
        %v2521 = vrot.slane %v2507, %v2520
        %v2522 = vcombine.low %v2498, %v2514
        %v2523 = vcombine.high %v2498, %v2514
        %v2524 = vcombine.low %v2505, %v2521
        %v2525 = vcombine.high %v2505, %v2521
        %2527 = vrot.lane.b32.xlu0 %v2523, 4
        %v2528 = vpop.permute.xlu0 %2527
        %2531 = vrot.lane.b32.xlu0 %v2524, 8
        %v2532 = vpop.permute.xlu0 %2531
        %2535 = vrot.lane.b32.xlu0 %v2525, 12
        %v2536 = vpop.permute.xlu0 %2535
        %vm2538 = vcmask 31744
        %v2539 = vsel %vm2538, %v2522, %v2528
        %vm2540 = vcmask 64512
        %v2541 = vsel %vm2540, %v2539, %v2532
        %v2542 = vsel %vm1767, %v2541, %v2536
        %v2543 = vcombine.low %v2190, %v2318
        %v2545 = vunpack.c.l.s4 1983009808
        %v2546 = vunpack.c.0.s8 %v2545
        %v2547 = vlaneseq
        %v2548 = vshrl.u32 %v2547, 7
        %v2549 = vsub.s32 %v2546, %v2548
        %v2550 = vrot.slane %v2543, %v2549
        %v2551 = vcombine.low %v2191, %v2319
        %v2553 = vunpack.c.l.s4 1983009808
        %v2554 = vunpack.c.0.s8 %v2553
        %v2555 = vlaneseq
        %v2556 = vshrl.u32 %v2555, 7
        %v2557 = vsub.s32 %v2554, %v2556
        %v2558 = vrot.slane %v2551, %v2557
        %v2560 = vunpack.c.l.s4 1983009808
        %v2561 = vunpack.c.0.s8 %v2560
        %v2562 = vlaneseq
        %v2563 = vshrl.u32 %v2562, 7
        %v2564 = vsub.s32 %v2561, %v2563
        %v2565 = vrot.slane %v2320, %v2564
        %v2567 = vunpack.c.l.s4 1983009808
        %v2568 = vunpack.c.0.s8 %v2567
        %v2569 = vlaneseq
        %v2570 = vshrl.u32 %v2569, 7
        %v2571 = vsub.s32 %v2568, %v2570
        %v2572 = vrot.slane %v2321, %v2571
        %v2573 = vcombine.low %v2550, %v2558
        %v2574 = vcombine.high %v2550, %v2558
        %v2576 = vunpack.c.l.s4 1934713408
        %v2577 = vunpack.c.0.s8 %v2576
        %v2578 = vlaneseq
        %v2579 = vshrl.u32 %v2578, 7
        %v2580 = vsub.s32 %v2577, %v2579
        %v2581 = vrot.slane %v2573, %v2580
        %v2583 = vunpack.c.l.s4 1934713408
        %v2584 = vunpack.c.0.s8 %v2583
        %v2585 = vlaneseq
        %v2586 = vshrl.u32 %v2585, 7
        %v2587 = vsub.s32 %v2584, %v2586
        %v2588 = vrot.slane %v2574, %v2587
        %v2589 = vcombine.low %v2565, %v2572
        %v2590 = vcombine.high %v2565, %v2572
        %v2592 = vunpack.c.l.s4 1934713408
        %v2593 = vunpack.c.0.s8 %v2592
        %v2594 = vlaneseq
        %v2595 = vshrl.u32 %v2594, 7
        %v2596 = vsub.s32 %v2593, %v2595
        %v2597 = vrot.slane %v2589, %v2596
        %v2599 = vunpack.c.l.s4 1934713408
        %v2600 = vunpack.c.0.s8 %v2599
        %v2601 = vlaneseq
        %v2602 = vshrl.u32 %v2601, 7
        %v2603 = vsub.s32 %v2600, %v2602
        %v2604 = vrot.slane %v2590, %v2603
        %v2605 = vcombine.low %v2581, %v2597
        %v2606 = vcombine.high %v2581, %v2597
        %v2607 = vcombine.low %v2588, %v2604
        %v2608 = vcombine.high %v2588, %v2604
        %2610 = vrot.lane.b32.xlu0 %v2606, 4
        %v2611 = vpop.permute.xlu0 %2610
        %2614 = vrot.lane.b32.xlu0 %v2607, 8
        %v2615 = vpop.permute.xlu0 %2614
        %2618 = vrot.lane.b32.xlu0 %v2608, 12
        %v2619 = vpop.permute.xlu0 %2618
        %v2621 = vsel %vm2538, %v2605, %v2611
        %v2622 = vsel %vm2540, %v2621, %v2615
        %v2623 = vsel %vm1767, %v2622, %v2619
        %2630 = vrot.lane.b32.xlu0 %v2184, 127
        %v2631 = vpop.permute.xlu0 %2630
        %2632 = vrot.lane.b32.xlu0 %v2185, 127
        %v2633 = vpop.permute.xlu0 %2632
        %2634 = vrot.lane.b32.xlu0 %v2186, 127
        %v2635 = vpop.permute.xlu0 %2634
        %2636 = vrot.lane.b32.xlu0 %v2187, 127
        %v2637 = vpop.permute.xlu0 %2636
        %2638 = vrot.lane.b32.xlu0 %v2188, 127
        %v2639 = vpop.permute.xlu0 %2638
        %2640 = vrot.lane.b32.xlu0 %v2189, 127
        %v2641 = vpop.permute.xlu0 %2640
        %v2646 = vcombine.low %v2631, %v2635
        %v2648 = vunpack.c.l.s4 1983009808
        %v2649 = vunpack.c.0.s8 %v2648
        %v2650 = vlaneseq
        %v2651 = vshrl.u32 %v2650, 7
        %v2652 = vsub.s32 %v2649, %v2651
        %v2653 = vrot.slane %v2646, %v2652
        %v2654 = vcombine.low %v2633, %v2637
        %v2656 = vunpack.c.l.s4 1983009808
        %v2657 = vunpack.c.0.s8 %v2656
        %v2658 = vlaneseq
        %v2659 = vshrl.u32 %v2658, 7
        %v2660 = vsub.s32 %v2657, %v2659
        %v2661 = vrot.slane %v2654, %v2660
        %v2664 = vunpack.c.l.s4 1983009808
        %v2665 = vunpack.c.0.s8 %v2664
        %v2666 = vlaneseq
        %v2667 = vshrl.u32 %v2666, 7
        %v2668 = vsub.s32 %v2665, %v2667
        %v2669 = vrot.slane %v2639, %v2668
        %v2672 = vunpack.c.l.s4 1983009808
        %v2673 = vunpack.c.0.s8 %v2672
        %v2674 = vlaneseq
        %v2675 = vshrl.u32 %v2674, 7
        %v2676 = vsub.s32 %v2673, %v2675
        %v2677 = vrot.slane %v2641, %v2676
        %v2678 = vcombine.low %v2653, %v2661
        %v2679 = vcombine.high %v2653, %v2661
        %v2681 = vunpack.c.l.s4 1934713408
        %v2682 = vunpack.c.0.s8 %v2681
        %v2683 = vlaneseq
        %v2684 = vshrl.u32 %v2683, 7
        %v2685 = vsub.s32 %v2682, %v2684
        %v2686 = vrot.slane %v2678, %v2685
        %v2688 = vunpack.c.l.s4 1934713408
        %v2689 = vunpack.c.0.s8 %v2688
        %v2690 = vlaneseq
        %v2691 = vshrl.u32 %v2690, 7
        %v2692 = vsub.s32 %v2689, %v2691
        %v2693 = vrot.slane %v2679, %v2692
        %v2694 = vcombine.low %v2669, %v2677
        %v2695 = vcombine.high %v2669, %v2677
        %v2697 = vunpack.c.l.s4 1934713408
        %v2698 = vunpack.c.0.s8 %v2697
        %v2699 = vlaneseq
        %v2700 = vshrl.u32 %v2699, 7
        %v2701 = vsub.s32 %v2698, %v2700
        %v2702 = vrot.slane %v2694, %v2701
        %v2704 = vunpack.c.l.s4 1934713408
        %v2705 = vunpack.c.0.s8 %v2704
        %v2706 = vlaneseq
        %v2707 = vshrl.u32 %v2706, 7
        %v2708 = vsub.s32 %v2705, %v2707
        %v2709 = vrot.slane %v2695, %v2708
        %v2710 = vcombine.low %v2686, %v2702
        %v2711 = vcombine.high %v2686, %v2702
        %v2712 = vcombine.low %v2693, %v2709
        %v2713 = vcombine.high %v2693, %v2709
        %2715 = vrot.lane.b32.xlu0 %v2711, 4
        %v2716 = vpop.permute.xlu0 %2715
        %2719 = vrot.lane.b32.xlu0 %v2712, 8
        %v2720 = vpop.permute.xlu0 %2719
        %2723 = vrot.lane.b32.xlu0 %v2713, 12
        %v2724 = vpop.permute.xlu0 %2723
        %v2726 = vsel %vm2538, %v2710, %v2716
        %v2727 = vsel %vm2540, %v2726, %v2720
        %v2728 = vsel %vm1767, %v2727, %v2724
        %2735 = vrot.lane.b32.xlu0 %v2190, 127
        %v2736 = vpop.permute.xlu0 %2735
        %2737 = vrot.lane.b32.xlu0 %v2191, 127
        %v2738 = vpop.permute.xlu0 %2737
        %2739 = vrot.lane.b32.xlu0 %v2318, 127
        %v2740 = vpop.permute.xlu0 %2739
        %2741 = vrot.lane.b32.xlu0 %v2319, 127
        %v2742 = vpop.permute.xlu0 %2741
        %2743 = vrot.lane.b32.xlu0 %v2320, 127
        %v2744 = vpop.permute.xlu0 %2743
        %2745 = vrot.lane.b32.xlu0 %v2321, 127
        %v2746 = vpop.permute.xlu0 %2745
        %v2751 = vcombine.low %v2736, %v2740
        %v2753 = vunpack.c.l.s4 1983009808
        %v2754 = vunpack.c.0.s8 %v2753
        %v2755 = vlaneseq
        %v2756 = vshrl.u32 %v2755, 7
        %v2757 = vsub.s32 %v2754, %v2756
        %v2758 = vrot.slane %v2751, %v2757
        %v2759 = vcombine.low %v2738, %v2742
        %v2761 = vunpack.c.l.s4 1983009808
        %v2762 = vunpack.c.0.s8 %v2761
        %v2763 = vlaneseq
        %v2764 = vshrl.u32 %v2763, 7
        %v2765 = vsub.s32 %v2762, %v2764
        %v2766 = vrot.slane %v2759, %v2765
        %v2769 = vunpack.c.l.s4 1983009808
        %v2770 = vunpack.c.0.s8 %v2769
        %v2771 = vlaneseq
        %v2772 = vshrl.u32 %v2771, 7
        %v2773 = vsub.s32 %v2770, %v2772
        %v2774 = vrot.slane %v2744, %v2773
        %v2777 = vunpack.c.l.s4 1983009808
        %v2778 = vunpack.c.0.s8 %v2777
        %v2779 = vlaneseq
        %v2780 = vshrl.u32 %v2779, 7
        %v2781 = vsub.s32 %v2778, %v2780
        %v2782 = vrot.slane %v2746, %v2781
        %v2783 = vcombine.low %v2758, %v2766
        %v2784 = vcombine.high %v2758, %v2766
        %v2786 = vunpack.c.l.s4 1934713408
        %v2787 = vunpack.c.0.s8 %v2786
        %v2788 = vlaneseq
        %v2789 = vshrl.u32 %v2788, 7
        %v2790 = vsub.s32 %v2787, %v2789
        %v2791 = vrot.slane %v2783, %v2790
        %v2793 = vunpack.c.l.s4 1934713408
        %v2794 = vunpack.c.0.s8 %v2793
        %v2795 = vlaneseq
        %v2796 = vshrl.u32 %v2795, 7
        %v2797 = vsub.s32 %v2794, %v2796
        %v2798 = vrot.slane %v2784, %v2797
        %v2799 = vcombine.low %v2774, %v2782
        %v2800 = vcombine.high %v2774, %v2782
        %v2802 = vunpack.c.l.s4 1934713408
        %v2803 = vunpack.c.0.s8 %v2802
        %v2804 = vlaneseq
        %v2805 = vshrl.u32 %v2804, 7
        %v2806 = vsub.s32 %v2803, %v2805
        %v2807 = vrot.slane %v2799, %v2806
        %v2809 = vunpack.c.l.s4 1934713408
        %v2810 = vunpack.c.0.s8 %v2809
        %v2811 = vlaneseq
        %v2812 = vshrl.u32 %v2811, 7
        %v2813 = vsub.s32 %v2810, %v2812
        %v2814 = vrot.slane %v2800, %v2813
        %v2815 = vcombine.low %v2791, %v2807
        %v2816 = vcombine.high %v2791, %v2807
        %v2817 = vcombine.low %v2798, %v2814
        %v2818 = vcombine.high %v2798, %v2814
        %2820 = vrot.lane.b32.xlu0 %v2816, 4
        %v2821 = vpop.permute.xlu0 %2820
        %2824 = vrot.lane.b32.xlu0 %v2817, 8
        %v2825 = vpop.permute.xlu0 %2824
        %2828 = vrot.lane.b32.xlu0 %v2818, 12
        %v2829 = vpop.permute.xlu0 %2828
        %v2831 = vsel %vm2538, %v2815, %v2821
        %v2832 = vsel %vm2540, %v2831, %v2825
        %v2833 = vsel %vm1767, %v2832, %v2829
        %2834 = vrot.lane.b32.xlu0 %v2184, 126
        %v2835 = vpop.permute.xlu0 %2834
        %2836 = vrot.lane.b32.xlu0 %v2185, 126
        %v2837 = vpop.permute.xlu0 %2836
        %2838 = vrot.lane.b32.xlu0 %v2186, 126
        %v2839 = vpop.permute.xlu0 %2838
        %2840 = vrot.lane.b32.xlu0 %v2187, 126
        %v2841 = vpop.permute.xlu0 %2840
        %2842 = vrot.lane.b32.xlu0 %v2188, 126
        %v2843 = vpop.permute.xlu0 %2842
        %2844 = vrot.lane.b32.xlu0 %v2189, 126
        %v2845 = vpop.permute.xlu0 %2844
        %v2850 = vcombine.low %v2835, %v2839
        %v2852 = vunpack.c.l.s4 1983009808
        %v2853 = vunpack.c.0.s8 %v2852
        %v2854 = vlaneseq
        %v2855 = vshrl.u32 %v2854, 7
        %v2856 = vsub.s32 %v2853, %v2855
        %v2857 = vrot.slane %v2850, %v2856
        %v2858 = vcombine.low %v2837, %v2841
        %v2860 = vunpack.c.l.s4 1983009808
        %v2861 = vunpack.c.0.s8 %v2860
        %v2862 = vlaneseq
        %v2863 = vshrl.u32 %v2862, 7
        %v2864 = vsub.s32 %v2861, %v2863
        %v2865 = vrot.slane %v2858, %v2864
        %v2868 = vunpack.c.l.s4 1983009808
        %v2869 = vunpack.c.0.s8 %v2868
        %v2870 = vlaneseq
        %v2871 = vshrl.u32 %v2870, 7
        %v2872 = vsub.s32 %v2869, %v2871
        %v2873 = vrot.slane %v2843, %v2872
        %v2876 = vunpack.c.l.s4 1983009808
        %v2877 = vunpack.c.0.s8 %v2876
        %v2878 = vlaneseq
        %v2879 = vshrl.u32 %v2878, 7
        %v2880 = vsub.s32 %v2877, %v2879
        %v2881 = vrot.slane %v2845, %v2880
        %v2882 = vcombine.low %v2857, %v2865
        %v2883 = vcombine.high %v2857, %v2865
        %v2885 = vunpack.c.l.s4 1934713408
        %v2886 = vunpack.c.0.s8 %v2885
        %v2887 = vlaneseq
        %v2888 = vshrl.u32 %v2887, 7
        %v2889 = vsub.s32 %v2886, %v2888
        %v2890 = vrot.slane %v2882, %v2889
        %v2892 = vunpack.c.l.s4 1934713408
        %v2893 = vunpack.c.0.s8 %v2892
        %v2894 = vlaneseq
        %v2895 = vshrl.u32 %v2894, 7
        %v2896 = vsub.s32 %v2893, %v2895
        %v2897 = vrot.slane %v2883, %v2896
        %v2898 = vcombine.low %v2873, %v2881
        %v2899 = vcombine.high %v2873, %v2881
        %v2901 = vunpack.c.l.s4 1934713408
        %v2902 = vunpack.c.0.s8 %v2901
        %v2903 = vlaneseq
        %v2904 = vshrl.u32 %v2903, 7
        %v2905 = vsub.s32 %v2902, %v2904
        %v2906 = vrot.slane %v2898, %v2905
        %v2908 = vunpack.c.l.s4 1934713408
        %v2909 = vunpack.c.0.s8 %v2908
        %v2910 = vlaneseq
        %v2911 = vshrl.u32 %v2910, 7
        %v2912 = vsub.s32 %v2909, %v2911
        %v2913 = vrot.slane %v2899, %v2912
        %v2914 = vcombine.low %v2890, %v2906
        %v2915 = vcombine.high %v2890, %v2906
        %v2916 = vcombine.low %v2897, %v2913
        %v2917 = vcombine.high %v2897, %v2913
        %2919 = vrot.lane.b32.xlu0 %v2915, 4
        %v2920 = vpop.permute.xlu0 %2919
        %2923 = vrot.lane.b32.xlu0 %v2916, 8
        %v2924 = vpop.permute.xlu0 %2923
        %2927 = vrot.lane.b32.xlu0 %v2917, 12
        %v2928 = vpop.permute.xlu0 %2927
        %v2930 = vsel %vm2538, %v2914, %v2920
        %v2931 = vsel %vm2540, %v2930, %v2924
        %v2932 = vsel %vm1767, %v2931, %v2928
        %2933 = vrot.lane.b32.xlu0 %v2190, 126
        %v2934 = vpop.permute.xlu0 %2933
        %2935 = vrot.lane.b32.xlu0 %v2191, 126
        %v2936 = vpop.permute.xlu0 %2935
        %2937 = vrot.lane.b32.xlu0 %v2318, 126
        %v2938 = vpop.permute.xlu0 %2937
        %2939 = vrot.lane.b32.xlu0 %v2319, 126
        %v2940 = vpop.permute.xlu0 %2939
        %2941 = vrot.lane.b32.xlu0 %v2320, 126
        %v2942 = vpop.permute.xlu0 %2941
        %2943 = vrot.lane.b32.xlu0 %v2321, 126
        %v2944 = vpop.permute.xlu0 %2943
        %v2949 = vcombine.low %v2934, %v2938
        %v2951 = vunpack.c.l.s4 1983009808
        %v2952 = vunpack.c.0.s8 %v2951
        %v2953 = vlaneseq
        %v2954 = vshrl.u32 %v2953, 7
        %v2955 = vsub.s32 %v2952, %v2954
        %v2956 = vrot.slane %v2949, %v2955
        %v2957 = vcombine.low %v2936, %v2940
        %v2959 = vunpack.c.l.s4 1983009808
        %v2960 = vunpack.c.0.s8 %v2959
        %v2961 = vlaneseq
        %v2962 = vshrl.u32 %v2961, 7
        %v2963 = vsub.s32 %v2960, %v2962
        %v2964 = vrot.slane %v2957, %v2963
        %v2967 = vunpack.c.l.s4 1983009808
        %v2968 = vunpack.c.0.s8 %v2967
        %v2969 = vlaneseq
        %v2970 = vshrl.u32 %v2969, 7
        %v2971 = vsub.s32 %v2968, %v2970
        %v2972 = vrot.slane %v2942, %v2971
        %v2975 = vunpack.c.l.s4 1983009808
        %v2976 = vunpack.c.0.s8 %v2975
        %v2977 = vlaneseq
        %v2978 = vshrl.u32 %v2977, 7
        %v2979 = vsub.s32 %v2976, %v2978
        %v2980 = vrot.slane %v2944, %v2979
        %v2981 = vcombine.low %v2956, %v2964
        %v2982 = vcombine.high %v2956, %v2964
        %v2984 = vunpack.c.l.s4 1934713408
        %v2985 = vunpack.c.0.s8 %v2984
        %v2986 = vlaneseq
        %v2987 = vshrl.u32 %v2986, 7
        %v2988 = vsub.s32 %v2985, %v2987
        %v2989 = vrot.slane %v2981, %v2988
        %v2991 = vunpack.c.l.s4 1934713408
        %v2992 = vunpack.c.0.s8 %v2991
        %v2993 = vlaneseq
        %v2994 = vshrl.u32 %v2993, 7
        %v2995 = vsub.s32 %v2992, %v2994
        %v2996 = vrot.slane %v2982, %v2995
        %v2997 = vcombine.low %v2972, %v2980
        %v2998 = vcombine.high %v2972, %v2980
        %v3000 = vunpack.c.l.s4 1934713408
        %v3001 = vunpack.c.0.s8 %v3000
        %v3002 = vlaneseq
        %v3003 = vshrl.u32 %v3002, 7
        %v3004 = vsub.s32 %v3001, %v3003
        %v3005 = vrot.slane %v2997, %v3004
        %v3007 = vunpack.c.l.s4 1934713408
        %v3008 = vunpack.c.0.s8 %v3007
        %v3009 = vlaneseq
        %v3010 = vshrl.u32 %v3009, 7
        %v3011 = vsub.s32 %v3008, %v3010
        %v3012 = vrot.slane %v2998, %v3011
        %v3013 = vcombine.low %v2989, %v3005
        %v3014 = vcombine.high %v2989, %v3005
        %v3015 = vcombine.low %v2996, %v3012
        %v3016 = vcombine.high %v2996, %v3012
        %3018 = vrot.lane.b32.xlu0 %v3014, 4
        %v3019 = vpop.permute.xlu0 %3018
        %3022 = vrot.lane.b32.xlu0 %v3015, 8
        %v3023 = vpop.permute.xlu0 %3022
        %3026 = vrot.lane.b32.xlu0 %v3016, 12
        %v3027 = vpop.permute.xlu0 %3026
        %v3029 = vsel %vm2538, %v3013, %v3019
        %v3030 = vsel %vm2540, %v3029, %v3023
        %v3031 = vsel %vm1767, %v3030, %v3027
        %v3032 = vcombine.low %v2322, %v2324
        %v3034 = vunpack.c.l.s4 1983009808
        %v3035 = vunpack.c.0.s8 %v3034
        %v3036 = vlaneseq
        %v3037 = vshrl.u32 %v3036, 7
        %v3038 = vsub.s32 %v3035, %v3037
        %v3039 = vrot.slane %v3032, %v3038
        %v3040 = vcombine.low %v2323, %v2325
        %v3042 = vunpack.c.l.s4 1983009808
        %v3043 = vunpack.c.0.s8 %v3042
        %v3044 = vlaneseq
        %v3045 = vshrl.u32 %v3044, 7
        %v3046 = vsub.s32 %v3043, %v3045
        %v3047 = vrot.slane %v3040, %v3046
        %v3049 = vunpack.c.l.s4 1983009808
        %v3050 = vunpack.c.0.s8 %v3049
        %v3051 = vlaneseq
        %v3052 = vshrl.u32 %v3051, 7
        %v3053 = vsub.s32 %v3050, %v3052
        %v3054 = vrot.slane %v2452, %v3053
        %v3056 = vunpack.c.l.s4 1983009808
        %v3057 = vunpack.c.0.s8 %v3056
        %v3058 = vlaneseq
        %v3059 = vshrl.u32 %v3058, 7
        %v3060 = vsub.s32 %v3057, %v3059
        %v3061 = vrot.slane %v2453, %v3060
        %v3062 = vcombine.low %v3039, %v3047
        %v3063 = vcombine.high %v3039, %v3047
        %v3065 = vunpack.c.l.s4 1934713408
        %v3066 = vunpack.c.0.s8 %v3065
        %v3067 = vlaneseq
        %v3068 = vshrl.u32 %v3067, 7
        %v3069 = vsub.s32 %v3066, %v3068
        %v3070 = vrot.slane %v3062, %v3069
        %v3072 = vunpack.c.l.s4 1934713408
        %v3073 = vunpack.c.0.s8 %v3072
        %v3074 = vlaneseq
        %v3075 = vshrl.u32 %v3074, 7
        %v3076 = vsub.s32 %v3073, %v3075
        %v3077 = vrot.slane %v3063, %v3076
        %v3078 = vcombine.low %v3054, %v3061
        %v3079 = vcombine.high %v3054, %v3061
        %v3081 = vunpack.c.l.s4 1934713408
        %v3082 = vunpack.c.0.s8 %v3081
        %v3083 = vlaneseq
        %v3084 = vshrl.u32 %v3083, 7
        %v3085 = vsub.s32 %v3082, %v3084
        %v3086 = vrot.slane %v3078, %v3085
        %v3088 = vunpack.c.l.s4 1934713408
        %v3089 = vunpack.c.0.s8 %v3088
        %v3090 = vlaneseq
        %v3091 = vshrl.u32 %v3090, 7
        %v3092 = vsub.s32 %v3089, %v3091
        %v3093 = vrot.slane %v3079, %v3092
        %v3094 = vcombine.low %v3070, %v3086
        %v3095 = vcombine.high %v3070, %v3086
        %v3096 = vcombine.low %v3077, %v3093
        %v3097 = vcombine.high %v3077, %v3093
        %3099 = vrot.lane.b32.xlu0 %v3095, 4
        %v3100 = vpop.permute.xlu0 %3099
        %3103 = vrot.lane.b32.xlu0 %v3096, 8
        %v3104 = vpop.permute.xlu0 %3103
        %3107 = vrot.lane.b32.xlu0 %v3097, 12
        %v3108 = vpop.permute.xlu0 %3107
        %v3110 = vsel %vm2538, %v3094, %v3100
        %v3111 = vsel %vm2540, %v3110, %v3104
        %v3112 = vsel %vm1767, %v3111, %v3108
        %v3113 = vcombine.low %v2454, %v2456
        %v3115 = vunpack.c.l.s4 1983009808
        %v3116 = vunpack.c.0.s8 %v3115
        %v3117 = vlaneseq
        %v3118 = vshrl.u32 %v3117, 7
        %v3119 = vsub.s32 %v3116, %v3118
        %v3120 = vrot.slane %v3113, %v3119
        %v3121 = vcombine.low %v2455, %v2457
        %v3123 = vunpack.c.l.s4 1983009808
        %v3124 = vunpack.c.0.s8 %v3123
        %v3125 = vlaneseq
        %v3126 = vshrl.u32 %v3125, 7
        %v3127 = vsub.s32 %v3124, %v3126
        %v3128 = vrot.slane %v3121, %v3127
        %v3130 = vunpack.c.l.s4 1983009808
        %v3131 = vunpack.c.0.s8 %v3130
        %v3132 = vlaneseq
        %v3133 = vshrl.u32 %v3132, 7
        %v3134 = vsub.s32 %v3131, %v3133
        %v3135 = vrot.slane %v2458, %v3134
        %v3137 = vunpack.c.l.s4 1983009808
        %v3138 = vunpack.c.0.s8 %v3137
        %v3139 = vlaneseq
        %v3140 = vshrl.u32 %v3139, 7
        %v3141 = vsub.s32 %v3138, %v3140
        %v3142 = vrot.slane %v2459, %v3141
        %v3143 = vcombine.low %v3120, %v3128
        %v3144 = vcombine.high %v3120, %v3128
        %v3146 = vunpack.c.l.s4 1934713408
        %v3147 = vunpack.c.0.s8 %v3146
        %v3148 = vlaneseq
        %v3149 = vshrl.u32 %v3148, 7
        %v3150 = vsub.s32 %v3147, %v3149
        %v3151 = vrot.slane %v3143, %v3150
        %v3153 = vunpack.c.l.s4 1934713408
        %v3154 = vunpack.c.0.s8 %v3153
        %v3155 = vlaneseq
        %v3156 = vshrl.u32 %v3155, 7
        %v3157 = vsub.s32 %v3154, %v3156
        %v3158 = vrot.slane %v3144, %v3157
        %v3159 = vcombine.low %v3135, %v3142
        %v3160 = vcombine.high %v3135, %v3142
        %v3162 = vunpack.c.l.s4 1934713408
        %v3163 = vunpack.c.0.s8 %v3162
        %v3164 = vlaneseq
        %v3165 = vshrl.u32 %v3164, 7
        %v3166 = vsub.s32 %v3163, %v3165
        %v3167 = vrot.slane %v3159, %v3166
        %v3169 = vunpack.c.l.s4 1934713408
        %v3170 = vunpack.c.0.s8 %v3169
        %v3171 = vlaneseq
        %v3172 = vshrl.u32 %v3171, 7
        %v3173 = vsub.s32 %v3170, %v3172
        %v3174 = vrot.slane %v3160, %v3173
        %v3175 = vcombine.low %v3151, %v3167
        %v3176 = vcombine.high %v3151, %v3167
        %v3177 = vcombine.low %v3158, %v3174
        %v3178 = vcombine.high %v3158, %v3174
        %3180 = vrot.lane.b32.xlu0 %v3176, 4
        %v3181 = vpop.permute.xlu0 %3180
        %3184 = vrot.lane.b32.xlu0 %v3177, 8
        %v3185 = vpop.permute.xlu0 %3184
        %3188 = vrot.lane.b32.xlu0 %v3178, 12
        %v3189 = vpop.permute.xlu0 %3188
        %v3191 = vsel %vm2538, %v3175, %v3181
        %v3192 = vsel %vm2540, %v3191, %v3185
        %v3193 = vsel %vm1767, %v3192, %v3189
        %3200 = vrot.lane.b32.xlu0 %v2322, 127
        %v3201 = vpop.permute.xlu0 %3200
        %3202 = vrot.lane.b32.xlu0 %v2323, 127
        %v3203 = vpop.permute.xlu0 %3202
        %3204 = vrot.lane.b32.xlu0 %v2324, 127
        %v3205 = vpop.permute.xlu0 %3204
        %3206 = vrot.lane.b32.xlu0 %v2325, 127
        %v3207 = vpop.permute.xlu0 %3206
        %3208 = vrot.lane.b32.xlu0 %v2452, 127
        %v3209 = vpop.permute.xlu0 %3208
        %3210 = vrot.lane.b32.xlu0 %v2453, 127
        %v3211 = vpop.permute.xlu0 %3210
        %v3216 = vcombine.low %v3201, %v3205
        %v3218 = vunpack.c.l.s4 1983009808
        %v3219 = vunpack.c.0.s8 %v3218
        %v3220 = vlaneseq
        %v3221 = vshrl.u32 %v3220, 7
        %v3222 = vsub.s32 %v3219, %v3221
        %v3223 = vrot.slane %v3216, %v3222
        %v3224 = vcombine.low %v3203, %v3207
        %v3226 = vunpack.c.l.s4 1983009808
        %v3227 = vunpack.c.0.s8 %v3226
        %v3228 = vlaneseq
        %v3229 = vshrl.u32 %v3228, 7
        %v3230 = vsub.s32 %v3227, %v3229
        %v3231 = vrot.slane %v3224, %v3230
        %v3234 = vunpack.c.l.s4 1983009808
        %v3235 = vunpack.c.0.s8 %v3234
        %v3236 = vlaneseq
        %v3237 = vshrl.u32 %v3236, 7
        %v3238 = vsub.s32 %v3235, %v3237
        %v3239 = vrot.slane %v3209, %v3238
        %v3242 = vunpack.c.l.s4 1983009808
        %v3243 = vunpack.c.0.s8 %v3242
        %v3244 = vlaneseq
        %v3245 = vshrl.u32 %v3244, 7
        %v3246 = vsub.s32 %v3243, %v3245
        %v3247 = vrot.slane %v3211, %v3246
        %v3248 = vcombine.low %v3223, %v3231
        %v3249 = vcombine.high %v3223, %v3231
        %v3251 = vunpack.c.l.s4 1934713408
        %v3252 = vunpack.c.0.s8 %v3251
        %v3253 = vlaneseq
        %v3254 = vshrl.u32 %v3253, 7
        %v3255 = vsub.s32 %v3252, %v3254
        %v3256 = vrot.slane %v3248, %v3255
        %v3258 = vunpack.c.l.s4 1934713408
        %v3259 = vunpack.c.0.s8 %v3258
        %v3260 = vlaneseq
        %v3261 = vshrl.u32 %v3260, 7
        %v3262 = vsub.s32 %v3259, %v3261
        %v3263 = vrot.slane %v3249, %v3262
        %v3264 = vcombine.low %v3239, %v3247
        %v3265 = vcombine.high %v3239, %v3247
        %v3267 = vunpack.c.l.s4 1934713408
        %v3268 = vunpack.c.0.s8 %v3267
        %v3269 = vlaneseq
        %v3270 = vshrl.u32 %v3269, 7
        %v3271 = vsub.s32 %v3268, %v3270
        %v3272 = vrot.slane %v3264, %v3271
        %v3274 = vunpack.c.l.s4 1934713408
        %v3275 = vunpack.c.0.s8 %v3274
        %v3276 = vlaneseq
        %v3277 = vshrl.u32 %v3276, 7
        %v3278 = vsub.s32 %v3275, %v3277
        %v3279 = vrot.slane %v3265, %v3278
        %v3280 = vcombine.low %v3256, %v3272
        %v3281 = vcombine.high %v3256, %v3272
        %v3282 = vcombine.low %v3263, %v3279
        %v3283 = vcombine.high %v3263, %v3279
        %3285 = vrot.lane.b32.xlu0 %v3281, 4
        %v3286 = vpop.permute.xlu0 %3285
        %3289 = vrot.lane.b32.xlu0 %v3282, 8
        %v3290 = vpop.permute.xlu0 %3289
        %3293 = vrot.lane.b32.xlu0 %v3283, 12
        %v3294 = vpop.permute.xlu0 %3293
        %v3296 = vsel %vm2538, %v3280, %v3286
        %v3297 = vsel %vm2540, %v3296, %v3290
        %v3298 = vsel %vm1767, %v3297, %v3294
        %3305 = vrot.lane.b32.xlu0 %v2454, 127
        %v3306 = vpop.permute.xlu0 %3305
        %3307 = vrot.lane.b32.xlu0 %v2455, 127
        %v3308 = vpop.permute.xlu0 %3307
        %3309 = vrot.lane.b32.xlu0 %v2456, 127
        %v3310 = vpop.permute.xlu0 %3309
        %3311 = vrot.lane.b32.xlu0 %v2457, 127
        %v3312 = vpop.permute.xlu0 %3311
        %3313 = vrot.lane.b32.xlu0 %v2458, 127
        %v3314 = vpop.permute.xlu0 %3313
        %3315 = vrot.lane.b32.xlu0 %v2459, 127
        %v3316 = vpop.permute.xlu0 %3315
        %v3321 = vcombine.low %v3306, %v3310
        %v3323 = vunpack.c.l.s4 1983009808
        %v3324 = vunpack.c.0.s8 %v3323
        %v3325 = vlaneseq
        %v3326 = vshrl.u32 %v3325, 7
        %v3327 = vsub.s32 %v3324, %v3326
        %v3328 = vrot.slane %v3321, %v3327
        %v3329 = vcombine.low %v3308, %v3312
        %v3331 = vunpack.c.l.s4 1983009808
        %v3332 = vunpack.c.0.s8 %v3331
        %v3333 = vlaneseq
        %v3334 = vshrl.u32 %v3333, 7
        %v3335 = vsub.s32 %v3332, %v3334
        %v3336 = vrot.slane %v3329, %v3335
        %v3339 = vunpack.c.l.s4 1983009808
        %v3340 = vunpack.c.0.s8 %v3339
        %v3341 = vlaneseq
        %v3342 = vshrl.u32 %v3341, 7
        %v3343 = vsub.s32 %v3340, %v3342
        %v3344 = vrot.slane %v3314, %v3343
        %v3347 = vunpack.c.l.s4 1983009808
        %v3348 = vunpack.c.0.s8 %v3347
        %v3349 = vlaneseq
        %v3350 = vshrl.u32 %v3349, 7
        %v3351 = vsub.s32 %v3348, %v3350
        %v3352 = vrot.slane %v3316, %v3351
        %v3353 = vcombine.low %v3328, %v3336
        %v3354 = vcombine.high %v3328, %v3336
        %v3356 = vunpack.c.l.s4 1934713408
        %v3357 = vunpack.c.0.s8 %v3356
        %v3358 = vlaneseq
        %v3359 = vshrl.u32 %v3358, 7
        %v3360 = vsub.s32 %v3357, %v3359
        %v3361 = vrot.slane %v3353, %v3360
        %v3363 = vunpack.c.l.s4 1934713408
        %v3364 = vunpack.c.0.s8 %v3363
        %v3365 = vlaneseq
        %v3366 = vshrl.u32 %v3365, 7
        %v3367 = vsub.s32 %v3364, %v3366
        %v3368 = vrot.slane %v3354, %v3367
        %v3369 = vcombine.low %v3344, %v3352
        %v3370 = vcombine.high %v3344, %v3352
        %v3372 = vunpack.c.l.s4 1934713408
        %v3373 = vunpack.c.0.s8 %v3372
        %v3374 = vlaneseq
        %v3375 = vshrl.u32 %v3374, 7
        %v3376 = vsub.s32 %v3373, %v3375
        %v3377 = vrot.slane %v3369, %v3376
        %v3379 = vunpack.c.l.s4 1934713408
        %v3380 = vunpack.c.0.s8 %v3379
        %v3381 = vlaneseq
        %v3382 = vshrl.u32 %v3381, 7
        %v3383 = vsub.s32 %v3380, %v3382
        %v3384 = vrot.slane %v3370, %v3383
        %v3385 = vcombine.low %v3361, %v3377
        %v3386 = vcombine.high %v3361, %v3377
        %v3387 = vcombine.low %v3368, %v3384
        %v3388 = vcombine.high %v3368, %v3384
        %3390 = vrot.lane.b32.xlu0 %v3386, 4
        %v3391 = vpop.permute.xlu0 %3390
        %3394 = vrot.lane.b32.xlu0 %v3387, 8
        %v3395 = vpop.permute.xlu0 %3394
        %3398 = vrot.lane.b32.xlu0 %v3388, 12
        %v3399 = vpop.permute.xlu0 %3398
        %v3401 = vsel %vm2538, %v3385, %v3391
        %v3402 = vsel %vm2540, %v3401, %v3395
        %v3403 = vsel %vm1767, %v3402, %v3399
        %3404 = vrot.lane.b32.xlu0 %v2322, 126
        %v3405 = vpop.permute.xlu0 %3404
        %3406 = vrot.lane.b32.xlu0 %v2323, 126
        %v3407 = vpop.permute.xlu0 %3406
        %3408 = vrot.lane.b32.xlu0 %v2324, 126
        %v3409 = vpop.permute.xlu0 %3408
        %3410 = vrot.lane.b32.xlu0 %v2325, 126
        %v3411 = vpop.permute.xlu0 %3410
        %3412 = vrot.lane.b32.xlu0 %v2452, 126
        %v3413 = vpop.permute.xlu0 %3412
        %3414 = vrot.lane.b32.xlu0 %v2453, 126
        %v3415 = vpop.permute.xlu0 %3414
        %v3420 = vcombine.low %v3405, %v3409
        %v3422 = vunpack.c.l.s4 1983009808
        %v3423 = vunpack.c.0.s8 %v3422
        %v3424 = vlaneseq
        %v3425 = vshrl.u32 %v3424, 7
        %v3426 = vsub.s32 %v3423, %v3425
        %v3427 = vrot.slane %v3420, %v3426
        %v3428 = vcombine.low %v3407, %v3411
        %v3430 = vunpack.c.l.s4 1983009808
        %v3431 = vunpack.c.0.s8 %v3430
        %v3432 = vlaneseq
        %v3433 = vshrl.u32 %v3432, 7
        %v3434 = vsub.s32 %v3431, %v3433
        %v3435 = vrot.slane %v3428, %v3434
        %v3438 = vunpack.c.l.s4 1983009808
        %v3439 = vunpack.c.0.s8 %v3438
        %v3440 = vlaneseq
        %v3441 = vshrl.u32 %v3440, 7
        %v3442 = vsub.s32 %v3439, %v3441
        %v3443 = vrot.slane %v3413, %v3442
        %v3446 = vunpack.c.l.s4 1983009808
        %v3447 = vunpack.c.0.s8 %v3446
        %v3448 = vlaneseq
        %v3449 = vshrl.u32 %v3448, 7
        %v3450 = vsub.s32 %v3447, %v3449
        %v3451 = vrot.slane %v3415, %v3450
        %v3452 = vcombine.low %v3427, %v3435
        %v3453 = vcombine.high %v3427, %v3435
        %v3455 = vunpack.c.l.s4 1934713408
        %v3456 = vunpack.c.0.s8 %v3455
        %v3457 = vlaneseq
        %v3458 = vshrl.u32 %v3457, 7
        %v3459 = vsub.s32 %v3456, %v3458
        %v3460 = vrot.slane %v3452, %v3459
        %v3462 = vunpack.c.l.s4 1934713408
        %v3463 = vunpack.c.0.s8 %v3462
        %v3464 = vlaneseq
        %v3465 = vshrl.u32 %v3464, 7
        %v3466 = vsub.s32 %v3463, %v3465
        %v3467 = vrot.slane %v3453, %v3466
        %v3468 = vcombine.low %v3443, %v3451
        %v3469 = vcombine.high %v3443, %v3451
        %v3471 = vunpack.c.l.s4 1934713408
        %v3472 = vunpack.c.0.s8 %v3471
        %v3473 = vlaneseq
        %v3474 = vshrl.u32 %v3473, 7
        %v3475 = vsub.s32 %v3472, %v3474
        %v3476 = vrot.slane %v3468, %v3475
        %v3478 = vunpack.c.l.s4 1934713408
        %v3479 = vunpack.c.0.s8 %v3478
        %v3480 = vlaneseq
        %v3481 = vshrl.u32 %v3480, 7
        %v3482 = vsub.s32 %v3479, %v3481
        %v3483 = vrot.slane %v3469, %v3482
        %v3484 = vcombine.low %v3460, %v3476
        %v3485 = vcombine.high %v3460, %v3476
        %v3486 = vcombine.low %v3467, %v3483
        %v3487 = vcombine.high %v3467, %v3483
        %3489 = vrot.lane.b32.xlu0 %v3485, 4
        %v3490 = vpop.permute.xlu0 %3489
        %3493 = vrot.lane.b32.xlu0 %v3486, 8
        %v3494 = vpop.permute.xlu0 %3493
        %3497 = vrot.lane.b32.xlu0 %v3487, 12
        %v3498 = vpop.permute.xlu0 %3497
        %v3500 = vsel %vm2538, %v3484, %v3490
        %v3501 = vsel %vm2540, %v3500, %v3494
        %v3502 = vsel %vm1767, %v3501, %v3498
        %3503 = vrot.lane.b32.xlu0 %v2454, 126
        %v3504 = vpop.permute.xlu0 %3503
        %3505 = vrot.lane.b32.xlu0 %v2455, 126
        %v3506 = vpop.permute.xlu0 %3505
        %3507 = vrot.lane.b32.xlu0 %v2456, 126
        %v3508 = vpop.permute.xlu0 %3507
        %3509 = vrot.lane.b32.xlu0 %v2457, 126
        %v3510 = vpop.permute.xlu0 %3509
        %3511 = vrot.lane.b32.xlu0 %v2458, 126
        %v3512 = vpop.permute.xlu0 %3511
        %3513 = vrot.lane.b32.xlu0 %v2459, 126
        %v3514 = vpop.permute.xlu0 %3513
        %v3519 = vcombine.low %v3504, %v3508
        %v3521 = vunpack.c.l.s4 1983009808
        %v3522 = vunpack.c.0.s8 %v3521
        %v3523 = vlaneseq
        %v3524 = vshrl.u32 %v3523, 7
        %v3525 = vsub.s32 %v3522, %v3524
        %v3526 = vrot.slane %v3519, %v3525
        %v3527 = vcombine.low %v3506, %v3510
        %v3529 = vunpack.c.l.s4 1983009808
        %v3530 = vunpack.c.0.s8 %v3529
        %v3531 = vlaneseq
        %v3532 = vshrl.u32 %v3531, 7
        %v3533 = vsub.s32 %v3530, %v3532
        %v3534 = vrot.slane %v3527, %v3533
        %v3537 = vunpack.c.l.s4 1983009808
        %v3538 = vunpack.c.0.s8 %v3537
        %v3539 = vlaneseq
        %v3540 = vshrl.u32 %v3539, 7
        %v3541 = vsub.s32 %v3538, %v3540
        %v3542 = vrot.slane %v3512, %v3541
        %v3545 = vunpack.c.l.s4 1983009808
        %v3546 = vunpack.c.0.s8 %v3545
        %v3547 = vlaneseq
        %v3548 = vshrl.u32 %v3547, 7
        %v3549 = vsub.s32 %v3546, %v3548
        %v3550 = vrot.slane %v3514, %v3549
        %v3551 = vcombine.low %v3526, %v3534
        %v3552 = vcombine.high %v3526, %v3534
        %v3554 = vunpack.c.l.s4 1934713408
        %v3555 = vunpack.c.0.s8 %v3554
        %v3556 = vlaneseq
        %v3557 = vshrl.u32 %v3556, 7
        %v3558 = vsub.s32 %v3555, %v3557
        %v3559 = vrot.slane %v3551, %v3558
        %v3561 = vunpack.c.l.s4 1934713408
        %v3562 = vunpack.c.0.s8 %v3561
        %v3563 = vlaneseq
        %v3564 = vshrl.u32 %v3563, 7
        %v3565 = vsub.s32 %v3562, %v3564
        %v3566 = vrot.slane %v3552, %v3565
        %v3567 = vcombine.low %v3542, %v3550
        %v3568 = vcombine.high %v3542, %v3550
        %v3570 = vunpack.c.l.s4 1934713408
        %v3571 = vunpack.c.0.s8 %v3570
        %v3572 = vlaneseq
        %v3573 = vshrl.u32 %v3572, 7
        %v3574 = vsub.s32 %v3571, %v3573
        %v3575 = vrot.slane %v3567, %v3574
        %v3577 = vunpack.c.l.s4 1934713408
        %v3578 = vunpack.c.0.s8 %v3577
        %v3579 = vlaneseq
        %v3580 = vshrl.u32 %v3579, 7
        %v3581 = vsub.s32 %v3578, %v3580
        %v3582 = vrot.slane %v3568, %v3581
        %v3583 = vcombine.low %v3559, %v3575
        %v3584 = vcombine.high %v3559, %v3575
        %v3585 = vcombine.low %v3566, %v3582
        %v3586 = vcombine.high %v3566, %v3582
        %3588 = vrot.lane.b32.xlu0 %v3584, 4
        %v3589 = vpop.permute.xlu0 %3588
        %3592 = vrot.lane.b32.xlu0 %v3585, 8
        %v3593 = vpop.permute.xlu0 %3592
        %3596 = vrot.lane.b32.xlu0 %v3586, 12
        %v3597 = vpop.permute.xlu0 %3596
        %v3599 = vsel %vm2538, %v3583, %v3589
        %v3600 = vsel %vm2540, %v3599, %v3593
        %v3601 = vsel %vm1767, %v3600, %v3597
        %v3602 = vrot.slane %v2184, 1
        %v3603 = vrot.slane %v2185, 1
        %v3604 = vrot.slane %v2186, 1
        %v3605 = vrot.slane %v2187, 1
        %v3606 = vrot.slane %v2188, 1
        %v3607 = vrot.slane %v2189, 1
        %v3612 = vcombine.low %v3602, %v3604
        %v3614 = vunpack.c.l.s4 1983009808
        %v3615 = vunpack.c.0.s8 %v3614
        %v3616 = vlaneseq
        %v3617 = vshrl.u32 %v3616, 7
        %v3618 = vsub.s32 %v3615, %v3617
        %v3619 = vrot.slane %v3612, %v3618
        %v3620 = vcombine.low %v3603, %v3605
        %v3622 = vunpack.c.l.s4 1983009808
        %v3623 = vunpack.c.0.s8 %v3622
        %v3624 = vlaneseq
        %v3625 = vshrl.u32 %v3624, 7
        %v3626 = vsub.s32 %v3623, %v3625
        %v3627 = vrot.slane %v3620, %v3626
        %v3630 = vunpack.c.l.s4 1983009808
        %v3631 = vunpack.c.0.s8 %v3630
        %v3632 = vlaneseq
        %v3633 = vshrl.u32 %v3632, 7
        %v3634 = vsub.s32 %v3631, %v3633
        %v3635 = vrot.slane %v3606, %v3634
        %v3638 = vunpack.c.l.s4 1983009808
        %v3639 = vunpack.c.0.s8 %v3638
        %v3640 = vlaneseq
        %v3641 = vshrl.u32 %v3640, 7
        %v3642 = vsub.s32 %v3639, %v3641
        %v3643 = vrot.slane %v3607, %v3642
        %v3644 = vcombine.low %v3619, %v3627
        %v3645 = vcombine.high %v3619, %v3627
        %v3647 = vunpack.c.l.s4 1934713408
        %v3648 = vunpack.c.0.s8 %v3647
        %v3649 = vlaneseq
        %v3650 = vshrl.u32 %v3649, 7
        %v3651 = vsub.s32 %v3648, %v3650
        %v3652 = vrot.slane %v3644, %v3651
        %v3654 = vunpack.c.l.s4 1934713408
        %v3655 = vunpack.c.0.s8 %v3654
        %v3656 = vlaneseq
        %v3657 = vshrl.u32 %v3656, 7
        %v3658 = vsub.s32 %v3655, %v3657
        %v3659 = vrot.slane %v3645, %v3658
        %v3660 = vcombine.low %v3635, %v3643
        %v3661 = vcombine.high %v3635, %v3643
        %v3663 = vunpack.c.l.s4 1934713408
        %v3664 = vunpack.c.0.s8 %v3663
        %v3665 = vlaneseq
        %v3666 = vshrl.u32 %v3665, 7
        %v3667 = vsub.s32 %v3664, %v3666
        %v3668 = vrot.slane %v3660, %v3667
        %v3670 = vunpack.c.l.s4 1934713408
        %v3671 = vunpack.c.0.s8 %v3670
        %v3672 = vlaneseq
        %v3673 = vshrl.u32 %v3672, 7
        %v3674 = vsub.s32 %v3671, %v3673
        %v3675 = vrot.slane %v3661, %v3674
        %v3676 = vcombine.low %v3652, %v3668
        %v3677 = vcombine.high %v3652, %v3668
        %v3678 = vcombine.low %v3659, %v3675
        %v3679 = vcombine.high %v3659, %v3675
        %3681 = vrot.lane.b32.xlu0 %v3677, 4
        %v3682 = vpop.permute.xlu0 %3681
        %3685 = vrot.lane.b32.xlu0 %v3678, 8
        %v3686 = vpop.permute.xlu0 %3685
        %3689 = vrot.lane.b32.xlu0 %v3679, 12
        %v3690 = vpop.permute.xlu0 %3689
        %v3692 = vsel %vm2538, %v3676, %v3682
        %v3693 = vsel %vm2540, %v3692, %v3686
        %v3694 = vsel %vm1767, %v3693, %v3690
        %v3695 = vrot.slane %v2190, 1
        %v3696 = vrot.slane %v2191, 1
        %v3697 = vrot.slane %v2318, 1
        %v3698 = vrot.slane %v2319, 1
        %v3699 = vrot.slane %v2320, 1
        %v3700 = vrot.slane %v2321, 1
        %v3705 = vcombine.low %v3695, %v3697
        %v3707 = vunpack.c.l.s4 1983009808
        %v3708 = vunpack.c.0.s8 %v3707
        %v3709 = vlaneseq
        %v3710 = vshrl.u32 %v3709, 7
        %v3711 = vsub.s32 %v3708, %v3710
        %v3712 = vrot.slane %v3705, %v3711
        %v3713 = vcombine.low %v3696, %v3698
        %v3715 = vunpack.c.l.s4 1983009808
        %v3716 = vunpack.c.0.s8 %v3715
        %v3717 = vlaneseq
        %v3718 = vshrl.u32 %v3717, 7
        %v3719 = vsub.s32 %v3716, %v3718
        %v3720 = vrot.slane %v3713, %v3719
        %v3723 = vunpack.c.l.s4 1983009808
        %v3724 = vunpack.c.0.s8 %v3723
        %v3725 = vlaneseq
        %v3726 = vshrl.u32 %v3725, 7
        %v3727 = vsub.s32 %v3724, %v3726
        %v3728 = vrot.slane %v3699, %v3727
        %v3731 = vunpack.c.l.s4 1983009808
        %v3732 = vunpack.c.0.s8 %v3731
        %v3733 = vlaneseq
        %v3734 = vshrl.u32 %v3733, 7
        %v3735 = vsub.s32 %v3732, %v3734
        %v3736 = vrot.slane %v3700, %v3735
        %v3737 = vcombine.low %v3712, %v3720
        %v3738 = vcombine.high %v3712, %v3720
        %v3740 = vunpack.c.l.s4 1934713408
        %v3741 = vunpack.c.0.s8 %v3740
        %v3742 = vlaneseq
        %v3743 = vshrl.u32 %v3742, 7
        %v3744 = vsub.s32 %v3741, %v3743
        %v3745 = vrot.slane %v3737, %v3744
        %v3747 = vunpack.c.l.s4 1934713408
        %v3748 = vunpack.c.0.s8 %v3747
        %v3749 = vlaneseq
        %v3750 = vshrl.u32 %v3749, 7
        %v3751 = vsub.s32 %v3748, %v3750
        %v3752 = vrot.slane %v3738, %v3751
        %v3753 = vcombine.low %v3728, %v3736
        %v3754 = vcombine.high %v3728, %v3736
        %v3756 = vunpack.c.l.s4 1934713408
        %v3757 = vunpack.c.0.s8 %v3756
        %v3758 = vlaneseq
        %v3759 = vshrl.u32 %v3758, 7
        %v3760 = vsub.s32 %v3757, %v3759
        %v3761 = vrot.slane %v3753, %v3760
        %v3763 = vunpack.c.l.s4 1934713408
        %v3764 = vunpack.c.0.s8 %v3763
        %v3765 = vlaneseq
        %v3766 = vshrl.u32 %v3765, 7
        %v3767 = vsub.s32 %v3764, %v3766
        %v3768 = vrot.slane %v3754, %v3767
        %v3769 = vcombine.low %v3745, %v3761
        %v3770 = vcombine.high %v3745, %v3761
        %v3771 = vcombine.low %v3752, %v3768
        %v3772 = vcombine.high %v3752, %v3768
        %3774 = vrot.lane.b32.xlu0 %v3770, 4
        %v3775 = vpop.permute.xlu0 %3774
        %3778 = vrot.lane.b32.xlu0 %v3771, 8
        %v3779 = vpop.permute.xlu0 %3778
        %3782 = vrot.lane.b32.xlu0 %v3772, 12
        %v3783 = vpop.permute.xlu0 %3782
        %v3785 = vsel %vm2538, %v3769, %v3775
        %v3786 = vsel %vm2540, %v3785, %v3779
        %v3787 = vsel %vm1767, %v3786, %v3783
        %3788 = vrot.lane.b32.xlu0 %v3602, 127
        %v3789 = vpop.permute.xlu0 %3788
        %3790 = vrot.lane.b32.xlu0 %v3603, 127
        %v3791 = vpop.permute.xlu0 %3790
        %3792 = vrot.lane.b32.xlu0 %v3604, 127
        %v3793 = vpop.permute.xlu0 %3792
        %3794 = vrot.lane.b32.xlu0 %v3605, 127
        %v3795 = vpop.permute.xlu0 %3794
        %3796 = vrot.lane.b32.xlu0 %v3606, 127
        %v3797 = vpop.permute.xlu0 %3796
        %3798 = vrot.lane.b32.xlu0 %v3607, 127
        %v3799 = vpop.permute.xlu0 %3798
        %v3804 = vcombine.low %v3789, %v3793
        %v3806 = vunpack.c.l.s4 1983009808
        %v3807 = vunpack.c.0.s8 %v3806
        %v3808 = vlaneseq
        %v3809 = vshrl.u32 %v3808, 7
        %v3810 = vsub.s32 %v3807, %v3809
        %v3811 = vrot.slane %v3804, %v3810
        %v3812 = vcombine.low %v3791, %v3795
        %v3814 = vunpack.c.l.s4 1983009808
        %v3815 = vunpack.c.0.s8 %v3814
        %v3816 = vlaneseq
        %v3817 = vshrl.u32 %v3816, 7
        %v3818 = vsub.s32 %v3815, %v3817
        %v3819 = vrot.slane %v3812, %v3818
        %v3822 = vunpack.c.l.s4 1983009808
        %v3823 = vunpack.c.0.s8 %v3822
        %v3824 = vlaneseq
        %v3825 = vshrl.u32 %v3824, 7
        %v3826 = vsub.s32 %v3823, %v3825
        %v3827 = vrot.slane %v3797, %v3826
        %v3830 = vunpack.c.l.s4 1983009808
        %v3831 = vunpack.c.0.s8 %v3830
        %v3832 = vlaneseq
        %v3833 = vshrl.u32 %v3832, 7
        %v3834 = vsub.s32 %v3831, %v3833
        %v3835 = vrot.slane %v3799, %v3834
        %v3836 = vcombine.low %v3811, %v3819
        %v3837 = vcombine.high %v3811, %v3819
        %v3839 = vunpack.c.l.s4 1934713408
        %v3840 = vunpack.c.0.s8 %v3839
        %v3841 = vlaneseq
        %v3842 = vshrl.u32 %v3841, 7
        %v3843 = vsub.s32 %v3840, %v3842
        %v3844 = vrot.slane %v3836, %v3843
        %v3846 = vunpack.c.l.s4 1934713408
        %v3847 = vunpack.c.0.s8 %v3846
        %v3848 = vlaneseq
        %v3849 = vshrl.u32 %v3848, 7
        %v3850 = vsub.s32 %v3847, %v3849
        %v3851 = vrot.slane %v3837, %v3850
        %v3852 = vcombine.low %v3827, %v3835
        %v3853 = vcombine.high %v3827, %v3835
        %v3855 = vunpack.c.l.s4 1934713408
        %v3856 = vunpack.c.0.s8 %v3855
        %v3857 = vlaneseq
        %v3858 = vshrl.u32 %v3857, 7
        %v3859 = vsub.s32 %v3856, %v3858
        %v3860 = vrot.slane %v3852, %v3859
        %v3862 = vunpack.c.l.s4 1934713408
        %v3863 = vunpack.c.0.s8 %v3862
        %v3864 = vlaneseq
        %v3865 = vshrl.u32 %v3864, 7
        %v3866 = vsub.s32 %v3863, %v3865
        %v3867 = vrot.slane %v3853, %v3866
        %v3868 = vcombine.low %v3844, %v3860
        %v3869 = vcombine.high %v3844, %v3860
        %v3870 = vcombine.low %v3851, %v3867
        %v3871 = vcombine.high %v3851, %v3867
        %3873 = vrot.lane.b32.xlu0 %v3869, 4
        %v3874 = vpop.permute.xlu0 %3873
        %3877 = vrot.lane.b32.xlu0 %v3870, 8
        %v3878 = vpop.permute.xlu0 %3877
        %3881 = vrot.lane.b32.xlu0 %v3871, 12
        %v3882 = vpop.permute.xlu0 %3881
        %v3884 = vsel %vm2538, %v3868, %v3874
        %v3885 = vsel %vm2540, %v3884, %v3878
        %v3886 = vsel %vm1767, %v3885, %v3882
        %3887 = vrot.lane.b32.xlu0 %v3695, 127
        %v3888 = vpop.permute.xlu0 %3887
        %3889 = vrot.lane.b32.xlu0 %v3696, 127
        %v3890 = vpop.permute.xlu0 %3889
        %3891 = vrot.lane.b32.xlu0 %v3697, 127
        %v3892 = vpop.permute.xlu0 %3891
        %3893 = vrot.lane.b32.xlu0 %v3698, 127
        %v3894 = vpop.permute.xlu0 %3893
        %3895 = vrot.lane.b32.xlu0 %v3699, 127
        %v3896 = vpop.permute.xlu0 %3895
        %3897 = vrot.lane.b32.xlu0 %v3700, 127
        %v3898 = vpop.permute.xlu0 %3897
        %v3903 = vcombine.low %v3888, %v3892
        %v3905 = vunpack.c.l.s4 1983009808
        %v3906 = vunpack.c.0.s8 %v3905
        %v3907 = vlaneseq
        %v3908 = vshrl.u32 %v3907, 7
        %v3909 = vsub.s32 %v3906, %v3908
        %v3910 = vrot.slane %v3903, %v3909
        %v3911 = vcombine.low %v3890, %v3894
        %v3913 = vunpack.c.l.s4 1983009808
        %v3914 = vunpack.c.0.s8 %v3913
        %v3915 = vlaneseq
        %v3916 = vshrl.u32 %v3915, 7
        %v3917 = vsub.s32 %v3914, %v3916
        %v3918 = vrot.slane %v3911, %v3917
        %v3921 = vunpack.c.l.s4 1983009808
        %v3922 = vunpack.c.0.s8 %v3921
        %v3923 = vlaneseq
        %v3924 = vshrl.u32 %v3923, 7
        %v3925 = vsub.s32 %v3922, %v3924
        %v3926 = vrot.slane %v3896, %v3925
        %v3929 = vunpack.c.l.s4 1983009808
        %v3930 = vunpack.c.0.s8 %v3929
        %v3931 = vlaneseq
        %v3932 = vshrl.u32 %v3931, 7
        %v3933 = vsub.s32 %v3930, %v3932
        %v3934 = vrot.slane %v3898, %v3933
        %v3935 = vcombine.low %v3910, %v3918
        %v3936 = vcombine.high %v3910, %v3918
        %v3938 = vunpack.c.l.s4 1934713408
        %v3939 = vunpack.c.0.s8 %v3938
        %v3940 = vlaneseq
        %v3941 = vshrl.u32 %v3940, 7
        %v3942 = vsub.s32 %v3939, %v3941
        %v3943 = vrot.slane %v3935, %v3942
        %v3945 = vunpack.c.l.s4 1934713408
        %v3946 = vunpack.c.0.s8 %v3945
        %v3947 = vlaneseq
        %v3948 = vshrl.u32 %v3947, 7
        %v3949 = vsub.s32 %v3946, %v3948
        %v3950 = vrot.slane %v3936, %v3949
        %v3951 = vcombine.low %v3926, %v3934
        %v3952 = vcombine.high %v3926, %v3934
        %v3954 = vunpack.c.l.s4 1934713408
        %v3955 = vunpack.c.0.s8 %v3954
        %v3956 = vlaneseq
        %v3957 = vshrl.u32 %v3956, 7
        %v3958 = vsub.s32 %v3955, %v3957
        %v3959 = vrot.slane %v3951, %v3958
        %v3961 = vunpack.c.l.s4 1934713408
        %v3962 = vunpack.c.0.s8 %v3961
        %v3963 = vlaneseq
        %v3964 = vshrl.u32 %v3963, 7
        %v3965 = vsub.s32 %v3962, %v3964
        %v3966 = vrot.slane %v3952, %v3965
        %v3967 = vcombine.low %v3943, %v3959
        %v3968 = vcombine.high %v3943, %v3959
        %v3969 = vcombine.low %v3950, %v3966
        %v3970 = vcombine.high %v3950, %v3966
        %3972 = vrot.lane.b32.xlu0 %v3968, 4
        %v3973 = vpop.permute.xlu0 %3972
        %3976 = vrot.lane.b32.xlu0 %v3969, 8
        %v3977 = vpop.permute.xlu0 %3976
        %3980 = vrot.lane.b32.xlu0 %v3970, 12
        %v3981 = vpop.permute.xlu0 %3980
        %v3983 = vsel %vm2538, %v3967, %v3973
        %v3984 = vsel %vm2540, %v3983, %v3977
        %v3985 = vsel %vm1767, %v3984, %v3981
        %3986 = vrot.lane.b32.xlu0 %v3602, 126
        %v3987 = vpop.permute.xlu0 %3986
        %3988 = vrot.lane.b32.xlu0 %v3603, 126
        %v3989 = vpop.permute.xlu0 %3988
        %3990 = vrot.lane.b32.xlu0 %v3604, 126
        %v3991 = vpop.permute.xlu0 %3990
        %3992 = vrot.lane.b32.xlu0 %v3605, 126
        %v3993 = vpop.permute.xlu0 %3992
        %3994 = vrot.lane.b32.xlu0 %v3606, 126
        %v3995 = vpop.permute.xlu0 %3994
        %3996 = vrot.lane.b32.xlu0 %v3607, 126
        %v3997 = vpop.permute.xlu0 %3996
        %v4002 = vcombine.low %v3987, %v3991
        %v4004 = vunpack.c.l.s4 1983009808
        %v4005 = vunpack.c.0.s8 %v4004
        %v4006 = vlaneseq
        %v4007 = vshrl.u32 %v4006, 7
        %v4008 = vsub.s32 %v4005, %v4007
        %v4009 = vrot.slane %v4002, %v4008
        %v4010 = vcombine.low %v3989, %v3993
        %v4012 = vunpack.c.l.s4 1983009808
        %v4013 = vunpack.c.0.s8 %v4012
        %v4014 = vlaneseq
        %v4015 = vshrl.u32 %v4014, 7
        %v4016 = vsub.s32 %v4013, %v4015
        %v4017 = vrot.slane %v4010, %v4016
        %v4020 = vunpack.c.l.s4 1983009808
        %v4021 = vunpack.c.0.s8 %v4020
        %v4022 = vlaneseq
        %v4023 = vshrl.u32 %v4022, 7
        %v4024 = vsub.s32 %v4021, %v4023
        %v4025 = vrot.slane %v3995, %v4024
        %v4028 = vunpack.c.l.s4 1983009808
        %v4029 = vunpack.c.0.s8 %v4028
        %v4030 = vlaneseq
        %v4031 = vshrl.u32 %v4030, 7
        %v4032 = vsub.s32 %v4029, %v4031
        %v4033 = vrot.slane %v3997, %v4032
        %v4034 = vcombine.low %v4009, %v4017
        %v4035 = vcombine.high %v4009, %v4017
        %v4037 = vunpack.c.l.s4 1934713408
        %v4038 = vunpack.c.0.s8 %v4037
        %v4039 = vlaneseq
        %v4040 = vshrl.u32 %v4039, 7
        %v4041 = vsub.s32 %v4038, %v4040
        %v4042 = vrot.slane %v4034, %v4041
        %v4044 = vunpack.c.l.s4 1934713408
        %v4045 = vunpack.c.0.s8 %v4044
        %v4046 = vlaneseq
        %v4047 = vshrl.u32 %v4046, 7
        %v4048 = vsub.s32 %v4045, %v4047
        %v4049 = vrot.slane %v4035, %v4048
        %v4050 = vcombine.low %v4025, %v4033
        %v4051 = vcombine.high %v4025, %v4033
        %v4053 = vunpack.c.l.s4 1934713408
        %v4054 = vunpack.c.0.s8 %v4053
        %v4055 = vlaneseq
        %v4056 = vshrl.u32 %v4055, 7
        %v4057 = vsub.s32 %v4054, %v4056
        %v4058 = vrot.slane %v4050, %v4057
        %v4060 = vunpack.c.l.s4 1934713408
        %v4061 = vunpack.c.0.s8 %v4060
        %v4062 = vlaneseq
        %v4063 = vshrl.u32 %v4062, 7
        %v4064 = vsub.s32 %v4061, %v4063
        %v4065 = vrot.slane %v4051, %v4064
        %v4066 = vcombine.low %v4042, %v4058
        %v4067 = vcombine.high %v4042, %v4058
        %v4068 = vcombine.low %v4049, %v4065
        %v4069 = vcombine.high %v4049, %v4065
        %4071 = vrot.lane.b32.xlu0 %v4067, 4
        %v4072 = vpop.permute.xlu0 %4071
        %4075 = vrot.lane.b32.xlu0 %v4068, 8
        %v4076 = vpop.permute.xlu0 %4075
        %4079 = vrot.lane.b32.xlu0 %v4069, 12
        %v4080 = vpop.permute.xlu0 %4079
        %v4082 = vsel %vm2538, %v4066, %v4072
        %v4083 = vsel %vm2540, %v4082, %v4076
        %v4084 = vsel %vm1767, %v4083, %v4080
        %4085 = vrot.lane.b32.xlu0 %v3695, 126
        %v4086 = vpop.permute.xlu0 %4085
        %4087 = vrot.lane.b32.xlu0 %v3696, 126
        %v4088 = vpop.permute.xlu0 %4087
        %4089 = vrot.lane.b32.xlu0 %v3697, 126
        %v4090 = vpop.permute.xlu0 %4089
        %4091 = vrot.lane.b32.xlu0 %v3698, 126
        %v4092 = vpop.permute.xlu0 %4091
        %4093 = vrot.lane.b32.xlu0 %v3699, 126
        %v4094 = vpop.permute.xlu0 %4093
        %4095 = vrot.lane.b32.xlu0 %v3700, 126
        %v4096 = vpop.permute.xlu0 %4095
        %v4101 = vcombine.low %v4086, %v4090
        %v4103 = vunpack.c.l.s4 1983009808
        %v4104 = vunpack.c.0.s8 %v4103
        %v4105 = vlaneseq
        %v4106 = vshrl.u32 %v4105, 7
        %v4107 = vsub.s32 %v4104, %v4106
        %v4108 = vrot.slane %v4101, %v4107
        %v4109 = vcombine.low %v4088, %v4092
        %v4111 = vunpack.c.l.s4 1983009808
        %v4112 = vunpack.c.0.s8 %v4111
        %v4113 = vlaneseq
        %v4114 = vshrl.u32 %v4113, 7
        %v4115 = vsub.s32 %v4112, %v4114
        %v4116 = vrot.slane %v4109, %v4115
        %v4119 = vunpack.c.l.s4 1983009808
        %v4120 = vunpack.c.0.s8 %v4119
        %v4121 = vlaneseq
        %v4122 = vshrl.u32 %v4121, 7
        %v4123 = vsub.s32 %v4120, %v4122
        %v4124 = vrot.slane %v4094, %v4123
        %v4127 = vunpack.c.l.s4 1983009808
        %v4128 = vunpack.c.0.s8 %v4127
        %v4129 = vlaneseq
        %v4130 = vshrl.u32 %v4129, 7
        %v4131 = vsub.s32 %v4128, %v4130
        %v4132 = vrot.slane %v4096, %v4131
        %v4133 = vcombine.low %v4108, %v4116
        %v4134 = vcombine.high %v4108, %v4116
        %v4136 = vunpack.c.l.s4 1934713408
        %v4137 = vunpack.c.0.s8 %v4136
        %v4138 = vlaneseq
        %v4139 = vshrl.u32 %v4138, 7
        %v4140 = vsub.s32 %v4137, %v4139
        %v4141 = vrot.slane %v4133, %v4140
        %v4143 = vunpack.c.l.s4 1934713408
        %v4144 = vunpack.c.0.s8 %v4143
        %v4145 = vlaneseq
        %v4146 = vshrl.u32 %v4145, 7
        %v4147 = vsub.s32 %v4144, %v4146
        %v4148 = vrot.slane %v4134, %v4147
        %v4149 = vcombine.low %v4124, %v4132
        %v4150 = vcombine.high %v4124, %v4132
        %v4152 = vunpack.c.l.s4 1934713408
        %v4153 = vunpack.c.0.s8 %v4152
        %v4154 = vlaneseq
        %v4155 = vshrl.u32 %v4154, 7
        %v4156 = vsub.s32 %v4153, %v4155
        %v4157 = vrot.slane %v4149, %v4156
        %v4159 = vunpack.c.l.s4 1934713408
        %v4160 = vunpack.c.0.s8 %v4159
        %v4161 = vlaneseq
        %v4162 = vshrl.u32 %v4161, 7
        %v4163 = vsub.s32 %v4160, %v4162
        %v4164 = vrot.slane %v4150, %v4163
        %v4165 = vcombine.low %v4141, %v4157
        %v4166 = vcombine.high %v4141, %v4157
        %v4167 = vcombine.low %v4148, %v4164
        %v4168 = vcombine.high %v4148, %v4164
        %4170 = vrot.lane.b32.xlu0 %v4166, 4
        %v4171 = vpop.permute.xlu0 %4170
        %4174 = vrot.lane.b32.xlu0 %v4167, 8
        %v4175 = vpop.permute.xlu0 %4174
        %4178 = vrot.lane.b32.xlu0 %v4168, 12
        %v4179 = vpop.permute.xlu0 %4178
        %v4181 = vsel %vm2538, %v4165, %v4171
        %v4182 = vsel %vm2540, %v4181, %v4175
        %v4183 = vsel %vm1767, %v4182, %v4179
        %v4184 = vrot.slane %v2322, 1
        %v4185 = vrot.slane %v2323, 1
        %v4186 = vrot.slane %v2324, 1
        %v4187 = vrot.slane %v2325, 1
        %v4188 = vrot.slane %v2452, 1
        %v4189 = vrot.slane %v2453, 1
        %v4194 = vcombine.low %v4184, %v4186
        %v4196 = vunpack.c.l.s4 1983009808
        %v4197 = vunpack.c.0.s8 %v4196
        %v4198 = vlaneseq
        %v4199 = vshrl.u32 %v4198, 7
        %v4200 = vsub.s32 %v4197, %v4199
        %v4201 = vrot.slane %v4194, %v4200
        %v4202 = vcombine.low %v4185, %v4187
        %v4204 = vunpack.c.l.s4 1983009808
        %v4205 = vunpack.c.0.s8 %v4204
        %v4206 = vlaneseq
        %v4207 = vshrl.u32 %v4206, 7
        %v4208 = vsub.s32 %v4205, %v4207
        %v4209 = vrot.slane %v4202, %v4208
        %v4212 = vunpack.c.l.s4 1983009808
        %v4213 = vunpack.c.0.s8 %v4212
        %v4214 = vlaneseq
        %v4215 = vshrl.u32 %v4214, 7
        %v4216 = vsub.s32 %v4213, %v4215
        %v4217 = vrot.slane %v4188, %v4216
        %v4220 = vunpack.c.l.s4 1983009808
        %v4221 = vunpack.c.0.s8 %v4220
        %v4222 = vlaneseq
        %v4223 = vshrl.u32 %v4222, 7
        %v4224 = vsub.s32 %v4221, %v4223
        %v4225 = vrot.slane %v4189, %v4224
        %v4226 = vcombine.low %v4201, %v4209
        %v4227 = vcombine.high %v4201, %v4209
        %v4229 = vunpack.c.l.s4 1934713408
        %v4230 = vunpack.c.0.s8 %v4229
        %v4231 = vlaneseq
        %v4232 = vshrl.u32 %v4231, 7
        %v4233 = vsub.s32 %v4230, %v4232
        %v4234 = vrot.slane %v4226, %v4233
        %v4236 = vunpack.c.l.s4 1934713408
        %v4237 = vunpack.c.0.s8 %v4236
        %v4238 = vlaneseq
        %v4239 = vshrl.u32 %v4238, 7
        %v4240 = vsub.s32 %v4237, %v4239
        %v4241 = vrot.slane %v4227, %v4240
        %v4242 = vcombine.low %v4217, %v4225
        %v4243 = vcombine.high %v4217, %v4225
        %v4245 = vunpack.c.l.s4 1934713408
        %v4246 = vunpack.c.0.s8 %v4245
        %v4247 = vlaneseq
        %v4248 = vshrl.u32 %v4247, 7
        %v4249 = vsub.s32 %v4246, %v4248
        %v4250 = vrot.slane %v4242, %v4249
        %v4252 = vunpack.c.l.s4 1934713408
        %v4253 = vunpack.c.0.s8 %v4252
        %v4254 = vlaneseq
        %v4255 = vshrl.u32 %v4254, 7
        %v4256 = vsub.s32 %v4253, %v4255
        %v4257 = vrot.slane %v4243, %v4256
        %v4258 = vcombine.low %v4234, %v4250
        %v4259 = vcombine.high %v4234, %v4250
        %v4260 = vcombine.low %v4241, %v4257
        %v4261 = vcombine.high %v4241, %v4257
        %4263 = vrot.lane.b32.xlu0 %v4259, 4
        %v4264 = vpop.permute.xlu0 %4263
        %4267 = vrot.lane.b32.xlu0 %v4260, 8
        %v4268 = vpop.permute.xlu0 %4267
        %4271 = vrot.lane.b32.xlu0 %v4261, 12
        %v4272 = vpop.permute.xlu0 %4271
        %v4274 = vsel %vm2538, %v4258, %v4264
        %v4275 = vsel %vm2540, %v4274, %v4268
        %v4276 = vsel %vm1767, %v4275, %v4272
        %v4277 = vrot.slane %v2454, 1
        %v4278 = vrot.slane %v2455, 1
        %v4279 = vrot.slane %v2456, 1
        %v4280 = vrot.slane %v2457, 1
        %v4281 = vrot.slane %v2458, 1
        %v4282 = vrot.slane %v2459, 1
        %v4287 = vcombine.low %v4277, %v4279
        %v4289 = vunpack.c.l.s4 1983009808
        %v4290 = vunpack.c.0.s8 %v4289
        %v4291 = vlaneseq
        %v4292 = vshrl.u32 %v4291, 7
        %v4293 = vsub.s32 %v4290, %v4292
        %v4294 = vrot.slane %v4287, %v4293
        %v4295 = vcombine.low %v4278, %v4280
        %v4297 = vunpack.c.l.s4 1983009808
        %v4298 = vunpack.c.0.s8 %v4297
        %v4299 = vlaneseq
        %v4300 = vshrl.u32 %v4299, 7
        %v4301 = vsub.s32 %v4298, %v4300
        %v4302 = vrot.slane %v4295, %v4301
        %v4305 = vunpack.c.l.s4 1983009808
        %v4306 = vunpack.c.0.s8 %v4305
        %v4307 = vlaneseq
        %v4308 = vshrl.u32 %v4307, 7
        %v4309 = vsub.s32 %v4306, %v4308
        %v4310 = vrot.slane %v4281, %v4309
        %v4313 = vunpack.c.l.s4 1983009808
        %v4314 = vunpack.c.0.s8 %v4313
        %v4315 = vlaneseq
        %v4316 = vshrl.u32 %v4315, 7
        %v4317 = vsub.s32 %v4314, %v4316
        %v4318 = vrot.slane %v4282, %v4317
        %v4319 = vcombine.low %v4294, %v4302
        %v4320 = vcombine.high %v4294, %v4302
        %v4322 = vunpack.c.l.s4 1934713408
        %v4323 = vunpack.c.0.s8 %v4322
        %v4324 = vlaneseq
        %v4325 = vshrl.u32 %v4324, 7
        %v4326 = vsub.s32 %v4323, %v4325
        %v4327 = vrot.slane %v4319, %v4326
        %v4329 = vunpack.c.l.s4 1934713408
        %v4330 = vunpack.c.0.s8 %v4329
        %v4331 = vlaneseq
        %v4332 = vshrl.u32 %v4331, 7
        %v4333 = vsub.s32 %v4330, %v4332
        %v4334 = vrot.slane %v4320, %v4333
        %v4335 = vcombine.low %v4310, %v4318
        %v4336 = vcombine.high %v4310, %v4318
        %v4338 = vunpack.c.l.s4 1934713408
        %v4339 = vunpack.c.0.s8 %v4338
        %v4340 = vlaneseq
        %v4341 = vshrl.u32 %v4340, 7
        %v4342 = vsub.s32 %v4339, %v4341
        %v4343 = vrot.slane %v4335, %v4342
        %v4345 = vunpack.c.l.s4 1934713408
        %v4346 = vunpack.c.0.s8 %v4345
        %v4347 = vlaneseq
        %v4348 = vshrl.u32 %v4347, 7
        %v4349 = vsub.s32 %v4346, %v4348
        %v4350 = vrot.slane %v4336, %v4349
        %v4351 = vcombine.low %v4327, %v4343
        %v4352 = vcombine.high %v4327, %v4343
        %v4353 = vcombine.low %v4334, %v4350
        %v4354 = vcombine.high %v4334, %v4350
        %4356 = vrot.lane.b32.xlu0 %v4352, 4
        %v4357 = vpop.permute.xlu0 %4356
        %4360 = vrot.lane.b32.xlu0 %v4353, 8
        %v4361 = vpop.permute.xlu0 %4360
        %4364 = vrot.lane.b32.xlu0 %v4354, 12
        %v4365 = vpop.permute.xlu0 %4364
        %v4367 = vsel %vm2538, %v4351, %v4357
        %v4368 = vsel %vm2540, %v4367, %v4361
        %v4369 = vsel %vm1767, %v4368, %v4365
        %4370 = vrot.lane.b32.xlu0 %v4184, 127
        %v4371 = vpop.permute.xlu0 %4370
        %4372 = vrot.lane.b32.xlu0 %v4185, 127
        %v4373 = vpop.permute.xlu0 %4372
        %4374 = vrot.lane.b32.xlu0 %v4186, 127
        %v4375 = vpop.permute.xlu0 %4374
        %4376 = vrot.lane.b32.xlu0 %v4187, 127
        %v4377 = vpop.permute.xlu0 %4376
        %4378 = vrot.lane.b32.xlu0 %v4188, 127
        %v4379 = vpop.permute.xlu0 %4378
        %4380 = vrot.lane.b32.xlu0 %v4189, 127
        %v4381 = vpop.permute.xlu0 %4380
        %v4386 = vcombine.low %v4371, %v4375
        %v4388 = vunpack.c.l.s4 1983009808
        %v4389 = vunpack.c.0.s8 %v4388
        %v4390 = vlaneseq
        %v4391 = vshrl.u32 %v4390, 7
        %v4392 = vsub.s32 %v4389, %v4391
        %v4393 = vrot.slane %v4386, %v4392
        %v4394 = vcombine.low %v4373, %v4377
        %v4396 = vunpack.c.l.s4 1983009808
        %v4397 = vunpack.c.0.s8 %v4396
        %v4398 = vlaneseq
        %v4399 = vshrl.u32 %v4398, 7
        %v4400 = vsub.s32 %v4397, %v4399
        %v4401 = vrot.slane %v4394, %v4400
        %v4404 = vunpack.c.l.s4 1983009808
        %v4405 = vunpack.c.0.s8 %v4404
        %v4406 = vlaneseq
        %v4407 = vshrl.u32 %v4406, 7
        %v4408 = vsub.s32 %v4405, %v4407
        %v4409 = vrot.slane %v4379, %v4408
        %v4412 = vunpack.c.l.s4 1983009808
        %v4413 = vunpack.c.0.s8 %v4412
        %v4414 = vlaneseq
        %v4415 = vshrl.u32 %v4414, 7
        %v4416 = vsub.s32 %v4413, %v4415
        %v4417 = vrot.slane %v4381, %v4416
        %v4418 = vcombine.low %v4393, %v4401
        %v4419 = vcombine.high %v4393, %v4401
        %v4421 = vunpack.c.l.s4 1934713408
        %v4422 = vunpack.c.0.s8 %v4421
        %v4423 = vlaneseq
        %v4424 = vshrl.u32 %v4423, 7
        %v4425 = vsub.s32 %v4422, %v4424
        %v4426 = vrot.slane %v4418, %v4425
        %v4428 = vunpack.c.l.s4 1934713408
        %v4429 = vunpack.c.0.s8 %v4428
        %v4430 = vlaneseq
        %v4431 = vshrl.u32 %v4430, 7
        %v4432 = vsub.s32 %v4429, %v4431
        %v4433 = vrot.slane %v4419, %v4432
        %v4434 = vcombine.low %v4409, %v4417
        %v4435 = vcombine.high %v4409, %v4417
        %v4437 = vunpack.c.l.s4 1934713408
        %v4438 = vunpack.c.0.s8 %v4437
        %v4439 = vlaneseq
        %v4440 = vshrl.u32 %v4439, 7
        %v4441 = vsub.s32 %v4438, %v4440
        %v4442 = vrot.slane %v4434, %v4441
        %v4444 = vunpack.c.l.s4 1934713408
        %v4445 = vunpack.c.0.s8 %v4444
        %v4446 = vlaneseq
        %v4447 = vshrl.u32 %v4446, 7
        %v4448 = vsub.s32 %v4445, %v4447
        %v4449 = vrot.slane %v4435, %v4448
        %v4450 = vcombine.low %v4426, %v4442
        %v4451 = vcombine.high %v4426, %v4442
        %v4452 = vcombine.low %v4433, %v4449
        %v4453 = vcombine.high %v4433, %v4449
        %4455 = vrot.lane.b32.xlu0 %v4451, 4
        %v4456 = vpop.permute.xlu0 %4455
        %4459 = vrot.lane.b32.xlu0 %v4452, 8
        %v4460 = vpop.permute.xlu0 %4459
        %4463 = vrot.lane.b32.xlu0 %v4453, 12
        %v4464 = vpop.permute.xlu0 %4463
        %v4466 = vsel %vm2538, %v4450, %v4456
        %v4467 = vsel %vm2540, %v4466, %v4460
        %v4468 = vsel %vm1767, %v4467, %v4464
        %4469 = vrot.lane.b32.xlu0 %v4277, 127
        %v4470 = vpop.permute.xlu0 %4469
        %4471 = vrot.lane.b32.xlu0 %v4278, 127
        %v4472 = vpop.permute.xlu0 %4471
        %4473 = vrot.lane.b32.xlu0 %v4279, 127
        %v4474 = vpop.permute.xlu0 %4473
        %4475 = vrot.lane.b32.xlu0 %v4280, 127
        %v4476 = vpop.permute.xlu0 %4475
        %4477 = vrot.lane.b32.xlu0 %v4281, 127
        %v4478 = vpop.permute.xlu0 %4477
        %4479 = vrot.lane.b32.xlu0 %v4282, 127
        %v4480 = vpop.permute.xlu0 %4479
        %v4485 = vcombine.low %v4470, %v4474
        %v4487 = vunpack.c.l.s4 1983009808
        %v4488 = vunpack.c.0.s8 %v4487
        %v4489 = vlaneseq
        %v4490 = vshrl.u32 %v4489, 7
        %v4491 = vsub.s32 %v4488, %v4490
        %v4492 = vrot.slane %v4485, %v4491
        %v4493 = vcombine.low %v4472, %v4476
        %v4495 = vunpack.c.l.s4 1983009808
        %v4496 = vunpack.c.0.s8 %v4495
        %v4497 = vlaneseq
        %v4498 = vshrl.u32 %v4497, 7
        %v4499 = vsub.s32 %v4496, %v4498
        %v4500 = vrot.slane %v4493, %v4499
        %v4503 = vunpack.c.l.s4 1983009808
        %v4504 = vunpack.c.0.s8 %v4503
        %v4505 = vlaneseq
        %v4506 = vshrl.u32 %v4505, 7
        %v4507 = vsub.s32 %v4504, %v4506
        %v4508 = vrot.slane %v4478, %v4507
        %v4511 = vunpack.c.l.s4 1983009808
        %v4512 = vunpack.c.0.s8 %v4511
        %v4513 = vlaneseq
        %v4514 = vshrl.u32 %v4513, 7
        %v4515 = vsub.s32 %v4512, %v4514
        %v4516 = vrot.slane %v4480, %v4515
        %v4517 = vcombine.low %v4492, %v4500
        %v4518 = vcombine.high %v4492, %v4500
        %v4520 = vunpack.c.l.s4 1934713408
        %v4521 = vunpack.c.0.s8 %v4520
        %v4522 = vlaneseq
        %v4523 = vshrl.u32 %v4522, 7
        %v4524 = vsub.s32 %v4521, %v4523
        %v4525 = vrot.slane %v4517, %v4524
        %v4527 = vunpack.c.l.s4 1934713408
        %v4528 = vunpack.c.0.s8 %v4527
        %v4529 = vlaneseq
        %v4530 = vshrl.u32 %v4529, 7
        %v4531 = vsub.s32 %v4528, %v4530
        %v4532 = vrot.slane %v4518, %v4531
        %v4533 = vcombine.low %v4508, %v4516
        %v4534 = vcombine.high %v4508, %v4516
        %v4536 = vunpack.c.l.s4 1934713408
        %v4537 = vunpack.c.0.s8 %v4536
        %v4538 = vlaneseq
        %v4539 = vshrl.u32 %v4538, 7
        %v4540 = vsub.s32 %v4537, %v4539
        %v4541 = vrot.slane %v4533, %v4540
        %v4543 = vunpack.c.l.s4 1934713408
        %v4544 = vunpack.c.0.s8 %v4543
        %v4545 = vlaneseq
        %v4546 = vshrl.u32 %v4545, 7
        %v4547 = vsub.s32 %v4544, %v4546
        %v4548 = vrot.slane %v4534, %v4547
        %v4549 = vcombine.low %v4525, %v4541
        %v4550 = vcombine.high %v4525, %v4541
        %v4551 = vcombine.low %v4532, %v4548
        %v4552 = vcombine.high %v4532, %v4548
        %4554 = vrot.lane.b32.xlu0 %v4550, 4
        %v4555 = vpop.permute.xlu0 %4554
        %4558 = vrot.lane.b32.xlu0 %v4551, 8
        %v4559 = vpop.permute.xlu0 %4558
        %4562 = vrot.lane.b32.xlu0 %v4552, 12
        %v4563 = vpop.permute.xlu0 %4562
        %v4565 = vsel %vm2538, %v4549, %v4555
        %v4566 = vsel %vm2540, %v4565, %v4559
        %v4567 = vsel %vm1767, %v4566, %v4563
        %4568 = vrot.lane.b32.xlu0 %v4184, 126
        %v4569 = vpop.permute.xlu0 %4568
        %4570 = vrot.lane.b32.xlu0 %v4185, 126
        %v4571 = vpop.permute.xlu0 %4570
        %4572 = vrot.lane.b32.xlu0 %v4186, 126
        %v4573 = vpop.permute.xlu0 %4572
        %4574 = vrot.lane.b32.xlu0 %v4187, 126
        %v4575 = vpop.permute.xlu0 %4574
        %4576 = vrot.lane.b32.xlu0 %v4188, 126
        %v4577 = vpop.permute.xlu0 %4576
        %4578 = vrot.lane.b32.xlu0 %v4189, 126
        %v4579 = vpop.permute.xlu0 %4578
        %v4584 = vcombine.low %v4569, %v4573
        %v4586 = vunpack.c.l.s4 1983009808
        %v4587 = vunpack.c.0.s8 %v4586
        %v4588 = vlaneseq
        %v4589 = vshrl.u32 %v4588, 7
        %v4590 = vsub.s32 %v4587, %v4589
        %v4591 = vrot.slane %v4584, %v4590
        %v4592 = vcombine.low %v4571, %v4575
        %v4594 = vunpack.c.l.s4 1983009808
        %v4595 = vunpack.c.0.s8 %v4594
        %v4596 = vlaneseq
        %v4597 = vshrl.u32 %v4596, 7
        %v4598 = vsub.s32 %v4595, %v4597
        %v4599 = vrot.slane %v4592, %v4598
        %v4602 = vunpack.c.l.s4 1983009808
        %v4603 = vunpack.c.0.s8 %v4602
        %v4604 = vlaneseq
        %v4605 = vshrl.u32 %v4604, 7
        %v4606 = vsub.s32 %v4603, %v4605
        %v4607 = vrot.slane %v4577, %v4606
        %v4610 = vunpack.c.l.s4 1983009808
        %v4611 = vunpack.c.0.s8 %v4610
        %v4612 = vlaneseq
        %v4613 = vshrl.u32 %v4612, 7
        %v4614 = vsub.s32 %v4611, %v4613
        %v4615 = vrot.slane %v4579, %v4614
        %v4616 = vcombine.low %v4591, %v4599
        %v4617 = vcombine.high %v4591, %v4599
        %v4619 = vunpack.c.l.s4 1934713408
        %v4620 = vunpack.c.0.s8 %v4619
        %v4621 = vlaneseq
        %v4622 = vshrl.u32 %v4621, 7
        %v4623 = vsub.s32 %v4620, %v4622
        %v4624 = vrot.slane %v4616, %v4623
        %v4626 = vunpack.c.l.s4 1934713408
        %v4627 = vunpack.c.0.s8 %v4626
        %v4628 = vlaneseq
        %v4629 = vshrl.u32 %v4628, 7
        %v4630 = vsub.s32 %v4627, %v4629
        %v4631 = vrot.slane %v4617, %v4630
        %v4632 = vcombine.low %v4607, %v4615
        %v4633 = vcombine.high %v4607, %v4615
        %v4635 = vunpack.c.l.s4 1934713408
        %v4636 = vunpack.c.0.s8 %v4635
        %v4637 = vlaneseq
        %v4638 = vshrl.u32 %v4637, 7
        %v4639 = vsub.s32 %v4636, %v4638
        %v4640 = vrot.slane %v4632, %v4639
        %v4642 = vunpack.c.l.s4 1934713408
        %v4643 = vunpack.c.0.s8 %v4642
        %v4644 = vlaneseq
        %v4645 = vshrl.u32 %v4644, 7
        %v4646 = vsub.s32 %v4643, %v4645
        %v4647 = vrot.slane %v4633, %v4646
        %v4648 = vcombine.low %v4624, %v4640
        %v4649 = vcombine.high %v4624, %v4640
        %v4650 = vcombine.low %v4631, %v4647
        %v4651 = vcombine.high %v4631, %v4647
        %4653 = vrot.lane.b32.xlu0 %v4649, 4
        %v4654 = vpop.permute.xlu0 %4653
        %4657 = vrot.lane.b32.xlu0 %v4650, 8
        %v4658 = vpop.permute.xlu0 %4657
        %4661 = vrot.lane.b32.xlu0 %v4651, 12
        %v4662 = vpop.permute.xlu0 %4661
        %v4664 = vsel %vm2538, %v4648, %v4654
        %v4665 = vsel %vm2540, %v4664, %v4658
        %v4666 = vsel %vm1767, %v4665, %v4662
        %4667 = vrot.lane.b32.xlu0 %v4277, 126
        %v4668 = vpop.permute.xlu0 %4667
        %4669 = vrot.lane.b32.xlu0 %v4278, 126
        %v4670 = vpop.permute.xlu0 %4669
        %4671 = vrot.lane.b32.xlu0 %v4279, 126
        %v4672 = vpop.permute.xlu0 %4671
        %4673 = vrot.lane.b32.xlu0 %v4280, 126
        %v4674 = vpop.permute.xlu0 %4673
        %4675 = vrot.lane.b32.xlu0 %v4281, 126
        %v4676 = vpop.permute.xlu0 %4675
        %4677 = vrot.lane.b32.xlu0 %v4282, 126
        %v4678 = vpop.permute.xlu0 %4677
        %v4683 = vcombine.low %v4668, %v4672
        %v4685 = vunpack.c.l.s4 1983009808
        %v4686 = vunpack.c.0.s8 %v4685
        %v4687 = vlaneseq
        %v4688 = vshrl.u32 %v4687, 7
        %v4689 = vsub.s32 %v4686, %v4688
        %v4690 = vrot.slane %v4683, %v4689
        %v4691 = vcombine.low %v4670, %v4674
        %v4693 = vunpack.c.l.s4 1983009808
        %v4694 = vunpack.c.0.s8 %v4693
        %v4695 = vlaneseq
        %v4696 = vshrl.u32 %v4695, 7
        %v4697 = vsub.s32 %v4694, %v4696
        %v4698 = vrot.slane %v4691, %v4697
        %v4701 = vunpack.c.l.s4 1983009808
        %v4702 = vunpack.c.0.s8 %v4701
        %v4703 = vlaneseq
        %v4704 = vshrl.u32 %v4703, 7
        %v4705 = vsub.s32 %v4702, %v4704
        %v4706 = vrot.slane %v4676, %v4705
        %v4709 = vunpack.c.l.s4 1983009808
        %v4710 = vunpack.c.0.s8 %v4709
        %v4711 = vlaneseq
        %v4712 = vshrl.u32 %v4711, 7
        %v4713 = vsub.s32 %v4710, %v4712
        %v4714 = vrot.slane %v4678, %v4713
        %v4715 = vcombine.low %v4690, %v4698
        %v4716 = vcombine.high %v4690, %v4698
        %v4718 = vunpack.c.l.s4 1934713408
        %v4719 = vunpack.c.0.s8 %v4718
        %v4720 = vlaneseq
        %v4721 = vshrl.u32 %v4720, 7
        %v4722 = vsub.s32 %v4719, %v4721
        %v4723 = vrot.slane %v4715, %v4722
        %v4725 = vunpack.c.l.s4 1934713408
        %v4726 = vunpack.c.0.s8 %v4725
        %v4727 = vlaneseq
        %v4728 = vshrl.u32 %v4727, 7
        %v4729 = vsub.s32 %v4726, %v4728
        %v4730 = vrot.slane %v4716, %v4729
        %v4731 = vcombine.low %v4706, %v4714
        %v4732 = vcombine.high %v4706, %v4714
        %v4734 = vunpack.c.l.s4 1934713408
        %v4735 = vunpack.c.0.s8 %v4734
        %v4736 = vlaneseq
        %v4737 = vshrl.u32 %v4736, 7
        %v4738 = vsub.s32 %v4735, %v4737
        %v4739 = vrot.slane %v4731, %v4738
        %v4741 = vunpack.c.l.s4 1934713408
        %v4742 = vunpack.c.0.s8 %v4741
        %v4743 = vlaneseq
        %v4744 = vshrl.u32 %v4743, 7
        %v4745 = vsub.s32 %v4742, %v4744
        %v4746 = vrot.slane %v4732, %v4745
        %v4747 = vcombine.low %v4723, %v4739
        %v4748 = vcombine.high %v4723, %v4739
        %v4749 = vcombine.low %v4730, %v4746
        %v4750 = vcombine.high %v4730, %v4746
        %4752 = vrot.lane.b32.xlu0 %v4748, 4
        %v4753 = vpop.permute.xlu0 %4752
        %4756 = vrot.lane.b32.xlu0 %v4749, 8
        %v4757 = vpop.permute.xlu0 %4756
        %4760 = vrot.lane.b32.xlu0 %v4750, 12
        %v4761 = vpop.permute.xlu0 %4760
        %v4763 = vsel %vm2538, %v4747, %v4753
        %v4764 = vsel %vm2540, %v4763, %v4757
        %v4765 = vsel %vm1767, %v4764, %v4761
        %v4766 = vrot.slane %v2184, 2
        %v4767 = vrot.slane %v2185, 2
        %v4768 = vrot.slane %v2186, 2
        %v4769 = vrot.slane %v2187, 2
        %v4770 = vrot.slane %v2188, 2
        %v4771 = vrot.slane %v2189, 2
        %v4776 = vcombine.low %v4766, %v4768
        %v4778 = vunpack.c.l.s4 1983009808
        %v4779 = vunpack.c.0.s8 %v4778
        %v4780 = vlaneseq
        %v4781 = vshrl.u32 %v4780, 7
        %v4782 = vsub.s32 %v4779, %v4781
        %v4783 = vrot.slane %v4776, %v4782
        %v4784 = vcombine.low %v4767, %v4769
        %v4786 = vunpack.c.l.s4 1983009808
        %v4787 = vunpack.c.0.s8 %v4786
        %v4788 = vlaneseq
        %v4789 = vshrl.u32 %v4788, 7
        %v4790 = vsub.s32 %v4787, %v4789
        %v4791 = vrot.slane %v4784, %v4790
        %v4794 = vunpack.c.l.s4 1983009808
        %v4795 = vunpack.c.0.s8 %v4794
        %v4796 = vlaneseq
        %v4797 = vshrl.u32 %v4796, 7
        %v4798 = vsub.s32 %v4795, %v4797
        %v4799 = vrot.slane %v4770, %v4798
        %v4802 = vunpack.c.l.s4 1983009808
        %v4803 = vunpack.c.0.s8 %v4802
        %v4804 = vlaneseq
        %v4805 = vshrl.u32 %v4804, 7
        %v4806 = vsub.s32 %v4803, %v4805
        %v4807 = vrot.slane %v4771, %v4806
        %v4808 = vcombine.low %v4783, %v4791
        %v4809 = vcombine.high %v4783, %v4791
        %v4811 = vunpack.c.l.s4 1934713408
        %v4812 = vunpack.c.0.s8 %v4811
        %v4813 = vlaneseq
        %v4814 = vshrl.u32 %v4813, 7
        %v4815 = vsub.s32 %v4812, %v4814
        %v4816 = vrot.slane %v4808, %v4815
        %v4818 = vunpack.c.l.s4 1934713408
        %v4819 = vunpack.c.0.s8 %v4818
        %v4820 = vlaneseq
        %v4821 = vshrl.u32 %v4820, 7
        %v4822 = vsub.s32 %v4819, %v4821
        %v4823 = vrot.slane %v4809, %v4822
        %v4824 = vcombine.low %v4799, %v4807
        %v4825 = vcombine.high %v4799, %v4807
        %v4827 = vunpack.c.l.s4 1934713408
        %v4828 = vunpack.c.0.s8 %v4827
        %v4829 = vlaneseq
        %v4830 = vshrl.u32 %v4829, 7
        %v4831 = vsub.s32 %v4828, %v4830
        %v4832 = vrot.slane %v4824, %v4831
        %v4834 = vunpack.c.l.s4 1934713408
        %v4835 = vunpack.c.0.s8 %v4834
        %v4836 = vlaneseq
        %v4837 = vshrl.u32 %v4836, 7
        %v4838 = vsub.s32 %v4835, %v4837
        %v4839 = vrot.slane %v4825, %v4838
        %v4840 = vcombine.low %v4816, %v4832
        %v4841 = vcombine.high %v4816, %v4832
        %v4842 = vcombine.low %v4823, %v4839
        %v4843 = vcombine.high %v4823, %v4839
        %4845 = vrot.lane.b32.xlu0 %v4841, 4
        %v4846 = vpop.permute.xlu0 %4845
        %4849 = vrot.lane.b32.xlu0 %v4842, 8
        %v4850 = vpop.permute.xlu0 %4849
        %4853 = vrot.lane.b32.xlu0 %v4843, 12
        %v4854 = vpop.permute.xlu0 %4853
        %v4856 = vsel %vm2538, %v4840, %v4846
        %v4857 = vsel %vm2540, %v4856, %v4850
        %v4858 = vsel %vm1767, %v4857, %v4854
        %v4859 = vrot.slane %v2190, 2
        %v4860 = vrot.slane %v2191, 2
        %v4861 = vrot.slane %v2318, 2
        %v4862 = vrot.slane %v2319, 2
        %v4863 = vrot.slane %v2320, 2
        %v4864 = vrot.slane %v2321, 2
        %v4869 = vcombine.low %v4859, %v4861
        %v4871 = vunpack.c.l.s4 1983009808
        %v4872 = vunpack.c.0.s8 %v4871
        %v4873 = vlaneseq
        %v4874 = vshrl.u32 %v4873, 7
        %v4875 = vsub.s32 %v4872, %v4874
        %v4876 = vrot.slane %v4869, %v4875
        %v4877 = vcombine.low %v4860, %v4862
        %v4879 = vunpack.c.l.s4 1983009808
        %v4880 = vunpack.c.0.s8 %v4879
        %v4881 = vlaneseq
        %v4882 = vshrl.u32 %v4881, 7
        %v4883 = vsub.s32 %v4880, %v4882
        %v4884 = vrot.slane %v4877, %v4883
        %v4887 = vunpack.c.l.s4 1983009808
        %v4888 = vunpack.c.0.s8 %v4887
        %v4889 = vlaneseq
        %v4890 = vshrl.u32 %v4889, 7
        %v4891 = vsub.s32 %v4888, %v4890
        %v4892 = vrot.slane %v4863, %v4891
        %v4895 = vunpack.c.l.s4 1983009808
        %v4896 = vunpack.c.0.s8 %v4895
        %v4897 = vlaneseq
        %v4898 = vshrl.u32 %v4897, 7
        %v4899 = vsub.s32 %v4896, %v4898
        %v4900 = vrot.slane %v4864, %v4899
        %v4901 = vcombine.low %v4876, %v4884
        %v4902 = vcombine.high %v4876, %v4884
        %v4904 = vunpack.c.l.s4 1934713408
        %v4905 = vunpack.c.0.s8 %v4904
        %v4906 = vlaneseq
        %v4907 = vshrl.u32 %v4906, 7
        %v4908 = vsub.s32 %v4905, %v4907
        %v4909 = vrot.slane %v4901, %v4908
        %v4911 = vunpack.c.l.s4 1934713408
        %v4912 = vunpack.c.0.s8 %v4911
        %v4913 = vlaneseq
        %v4914 = vshrl.u32 %v4913, 7
        %v4915 = vsub.s32 %v4912, %v4914
        %v4916 = vrot.slane %v4902, %v4915
        %v4917 = vcombine.low %v4892, %v4900
        %v4918 = vcombine.high %v4892, %v4900
        %v4920 = vunpack.c.l.s4 1934713408
        %v4921 = vunpack.c.0.s8 %v4920
        %v4922 = vlaneseq
        %v4923 = vshrl.u32 %v4922, 7
        %v4924 = vsub.s32 %v4921, %v4923
        %v4925 = vrot.slane %v4917, %v4924
        %v4927 = vunpack.c.l.s4 1934713408
        %v4928 = vunpack.c.0.s8 %v4927
        %v4929 = vlaneseq
        %v4930 = vshrl.u32 %v4929, 7
        %v4931 = vsub.s32 %v4928, %v4930
        %v4932 = vrot.slane %v4918, %v4931
        %v4933 = vcombine.low %v4909, %v4925
        %v4934 = vcombine.high %v4909, %v4925
        %v4935 = vcombine.low %v4916, %v4932
        %v4936 = vcombine.high %v4916, %v4932
        %4938 = vrot.lane.b32.xlu0 %v4934, 4
        %v4939 = vpop.permute.xlu0 %4938
        %4942 = vrot.lane.b32.xlu0 %v4935, 8
        %v4943 = vpop.permute.xlu0 %4942
        %4946 = vrot.lane.b32.xlu0 %v4936, 12
        %v4947 = vpop.permute.xlu0 %4946
        %v4949 = vsel %vm2538, %v4933, %v4939
        %v4950 = vsel %vm2540, %v4949, %v4943
        %v4951 = vsel %vm1767, %v4950, %v4947
        %4952 = vrot.lane.b32.xlu0 %v4766, 127
        %v4953 = vpop.permute.xlu0 %4952
        %4954 = vrot.lane.b32.xlu0 %v4767, 127
        %v4955 = vpop.permute.xlu0 %4954
        %4956 = vrot.lane.b32.xlu0 %v4768, 127
        %v4957 = vpop.permute.xlu0 %4956
        %4958 = vrot.lane.b32.xlu0 %v4769, 127
        %v4959 = vpop.permute.xlu0 %4958
        %4960 = vrot.lane.b32.xlu0 %v4770, 127
        %v4961 = vpop.permute.xlu0 %4960
        %4962 = vrot.lane.b32.xlu0 %v4771, 127
        %v4963 = vpop.permute.xlu0 %4962
        %v4968 = vcombine.low %v4953, %v4957
        %v4970 = vunpack.c.l.s4 1983009808
        %v4971 = vunpack.c.0.s8 %v4970
        %v4972 = vlaneseq
        %v4973 = vshrl.u32 %v4972, 7
        %v4974 = vsub.s32 %v4971, %v4973
        %v4975 = vrot.slane %v4968, %v4974
        %v4976 = vcombine.low %v4955, %v4959
        %v4978 = vunpack.c.l.s4 1983009808
        %v4979 = vunpack.c.0.s8 %v4978
        %v4980 = vlaneseq
        %v4981 = vshrl.u32 %v4980, 7
        %v4982 = vsub.s32 %v4979, %v4981
        %v4983 = vrot.slane %v4976, %v4982
        %v4986 = vunpack.c.l.s4 1983009808
        %v4987 = vunpack.c.0.s8 %v4986
        %v4988 = vlaneseq
        %v4989 = vshrl.u32 %v4988, 7
        %v4990 = vsub.s32 %v4987, %v4989
        %v4991 = vrot.slane %v4961, %v4990
        %v4994 = vunpack.c.l.s4 1983009808
        %v4995 = vunpack.c.0.s8 %v4994
        %v4996 = vlaneseq
        %v4997 = vshrl.u32 %v4996, 7
        %v4998 = vsub.s32 %v4995, %v4997
        %v4999 = vrot.slane %v4963, %v4998
        %v5000 = vcombine.low %v4975, %v4983
        %v5001 = vcombine.high %v4975, %v4983
        %v5003 = vunpack.c.l.s4 1934713408
        %v5004 = vunpack.c.0.s8 %v5003
        %v5005 = vlaneseq
        %v5006 = vshrl.u32 %v5005, 7
        %v5007 = vsub.s32 %v5004, %v5006
        %v5008 = vrot.slane %v5000, %v5007
        %v5010 = vunpack.c.l.s4 1934713408
        %v5011 = vunpack.c.0.s8 %v5010
        %v5012 = vlaneseq
        %v5013 = vshrl.u32 %v5012, 7
        %v5014 = vsub.s32 %v5011, %v5013
        %v5015 = vrot.slane %v5001, %v5014
        %v5016 = vcombine.low %v4991, %v4999
        %v5017 = vcombine.high %v4991, %v4999
        %v5019 = vunpack.c.l.s4 1934713408
        %v5020 = vunpack.c.0.s8 %v5019
        %v5021 = vlaneseq
        %v5022 = vshrl.u32 %v5021, 7
        %v5023 = vsub.s32 %v5020, %v5022
        %v5024 = vrot.slane %v5016, %v5023
        %v5026 = vunpack.c.l.s4 1934713408
        %v5027 = vunpack.c.0.s8 %v5026
        %v5028 = vlaneseq
        %v5029 = vshrl.u32 %v5028, 7
        %v5030 = vsub.s32 %v5027, %v5029
        %v5031 = vrot.slane %v5017, %v5030
        %v5032 = vcombine.low %v5008, %v5024
        %v5033 = vcombine.high %v5008, %v5024
        %v5034 = vcombine.low %v5015, %v5031
        %v5035 = vcombine.high %v5015, %v5031
        %5037 = vrot.lane.b32.xlu0 %v5033, 4
        %v5038 = vpop.permute.xlu0 %5037
        %5041 = vrot.lane.b32.xlu0 %v5034, 8
        %v5042 = vpop.permute.xlu0 %5041
        %5045 = vrot.lane.b32.xlu0 %v5035, 12
        %v5046 = vpop.permute.xlu0 %5045
        %v5048 = vsel %vm2538, %v5032, %v5038
        %v5049 = vsel %vm2540, %v5048, %v5042
        %v5050 = vsel %vm1767, %v5049, %v5046
        %5051 = vrot.lane.b32.xlu0 %v4859, 127
        %v5052 = vpop.permute.xlu0 %5051
        %5053 = vrot.lane.b32.xlu0 %v4860, 127
        %v5054 = vpop.permute.xlu0 %5053
        %5055 = vrot.lane.b32.xlu0 %v4861, 127
        %v5056 = vpop.permute.xlu0 %5055
        %5057 = vrot.lane.b32.xlu0 %v4862, 127
        %v5058 = vpop.permute.xlu0 %5057
        %5059 = vrot.lane.b32.xlu0 %v4863, 127
        %v5060 = vpop.permute.xlu0 %5059
        %5061 = vrot.lane.b32.xlu0 %v4864, 127
        %v5062 = vpop.permute.xlu0 %5061
        %v5067 = vcombine.low %v5052, %v5056
        %v5069 = vunpack.c.l.s4 1983009808
        %v5070 = vunpack.c.0.s8 %v5069
        %v5071 = vlaneseq
        %v5072 = vshrl.u32 %v5071, 7
        %v5073 = vsub.s32 %v5070, %v5072
        %v5074 = vrot.slane %v5067, %v5073
        %v5075 = vcombine.low %v5054, %v5058
        %v5077 = vunpack.c.l.s4 1983009808
        %v5078 = vunpack.c.0.s8 %v5077
        %v5079 = vlaneseq
        %v5080 = vshrl.u32 %v5079, 7
        %v5081 = vsub.s32 %v5078, %v5080
        %v5082 = vrot.slane %v5075, %v5081
        %v5085 = vunpack.c.l.s4 1983009808
        %v5086 = vunpack.c.0.s8 %v5085
        %v5087 = vlaneseq
        %v5088 = vshrl.u32 %v5087, 7
        %v5089 = vsub.s32 %v5086, %v5088
        %v5090 = vrot.slane %v5060, %v5089
        %v5093 = vunpack.c.l.s4 1983009808
        %v5094 = vunpack.c.0.s8 %v5093
        %v5095 = vlaneseq
        %v5096 = vshrl.u32 %v5095, 7
        %v5097 = vsub.s32 %v5094, %v5096
        %v5098 = vrot.slane %v5062, %v5097
        %v5099 = vcombine.low %v5074, %v5082
        %v5100 = vcombine.high %v5074, %v5082
        %v5102 = vunpack.c.l.s4 1934713408
        %v5103 = vunpack.c.0.s8 %v5102
        %v5104 = vlaneseq
        %v5105 = vshrl.u32 %v5104, 7
        %v5106 = vsub.s32 %v5103, %v5105
        %v5107 = vrot.slane %v5099, %v5106
        %v5109 = vunpack.c.l.s4 1934713408
        %v5110 = vunpack.c.0.s8 %v5109
        %v5111 = vlaneseq
        %v5112 = vshrl.u32 %v5111, 7
        %v5113 = vsub.s32 %v5110, %v5112
        %v5114 = vrot.slane %v5100, %v5113
        %v5115 = vcombine.low %v5090, %v5098
        %v5116 = vcombine.high %v5090, %v5098
        %v5118 = vunpack.c.l.s4 1934713408
        %v5119 = vunpack.c.0.s8 %v5118
        %v5120 = vlaneseq
        %v5121 = vshrl.u32 %v5120, 7
        %v5122 = vsub.s32 %v5119, %v5121
        %v5123 = vrot.slane %v5115, %v5122
        %v5125 = vunpack.c.l.s4 1934713408
        %v5126 = vunpack.c.0.s8 %v5125
        %v5127 = vlaneseq
        %v5128 = vshrl.u32 %v5127, 7
        %v5129 = vsub.s32 %v5126, %v5128
        %v5130 = vrot.slane %v5116, %v5129
        %v5131 = vcombine.low %v5107, %v5123
        %v5132 = vcombine.high %v5107, %v5123
        %v5133 = vcombine.low %v5114, %v5130
        %v5134 = vcombine.high %v5114, %v5130
        %5136 = vrot.lane.b32.xlu0 %v5132, 4
        %v5137 = vpop.permute.xlu0 %5136
        %5140 = vrot.lane.b32.xlu0 %v5133, 8
        %v5141 = vpop.permute.xlu0 %5140
        %5144 = vrot.lane.b32.xlu0 %v5134, 12
        %v5145 = vpop.permute.xlu0 %5144
        %v5147 = vsel %vm2538, %v5131, %v5137
        %v5148 = vsel %vm2540, %v5147, %v5141
        %v5149 = vsel %vm1767, %v5148, %v5145
        %5150 = vrot.lane.b32.xlu0 %v4766, 126
        %v5151 = vpop.permute.xlu0 %5150
        %5152 = vrot.lane.b32.xlu0 %v4767, 126
        %v5153 = vpop.permute.xlu0 %5152
        %5154 = vrot.lane.b32.xlu0 %v4768, 126
        %v5155 = vpop.permute.xlu0 %5154
        %5156 = vrot.lane.b32.xlu0 %v4769, 126
        %v5157 = vpop.permute.xlu0 %5156
        %5158 = vrot.lane.b32.xlu0 %v4770, 126
        %v5159 = vpop.permute.xlu0 %5158
        %5160 = vrot.lane.b32.xlu0 %v4771, 126
        %v5161 = vpop.permute.xlu0 %5160
        %v5166 = vcombine.low %v5151, %v5155
        %v5168 = vunpack.c.l.s4 1983009808
        %v5169 = vunpack.c.0.s8 %v5168
        %v5170 = vlaneseq
        %v5171 = vshrl.u32 %v5170, 7
        %v5172 = vsub.s32 %v5169, %v5171
        %v5173 = vrot.slane %v5166, %v5172
        %v5174 = vcombine.low %v5153, %v5157
        %v5176 = vunpack.c.l.s4 1983009808
        %v5177 = vunpack.c.0.s8 %v5176
        %v5178 = vlaneseq
        %v5179 = vshrl.u32 %v5178, 7
        %v5180 = vsub.s32 %v5177, %v5179
        %v5181 = vrot.slane %v5174, %v5180
        %v5184 = vunpack.c.l.s4 1983009808
        %v5185 = vunpack.c.0.s8 %v5184
        %v5186 = vlaneseq
        %v5187 = vshrl.u32 %v5186, 7
        %v5188 = vsub.s32 %v5185, %v5187
        %v5189 = vrot.slane %v5159, %v5188
        %v5192 = vunpack.c.l.s4 1983009808
        %v5193 = vunpack.c.0.s8 %v5192
        %v5194 = vlaneseq
        %v5195 = vshrl.u32 %v5194, 7
        %v5196 = vsub.s32 %v5193, %v5195
        %v5197 = vrot.slane %v5161, %v5196
        %v5198 = vcombine.low %v5173, %v5181
        %v5199 = vcombine.high %v5173, %v5181
        %v5201 = vunpack.c.l.s4 1934713408
        %v5202 = vunpack.c.0.s8 %v5201
        %v5203 = vlaneseq
        %v5204 = vshrl.u32 %v5203, 7
        %v5205 = vsub.s32 %v5202, %v5204
        %v5206 = vrot.slane %v5198, %v5205
        %v5208 = vunpack.c.l.s4 1934713408
        %v5209 = vunpack.c.0.s8 %v5208
        %v5210 = vlaneseq
        %v5211 = vshrl.u32 %v5210, 7
        %v5212 = vsub.s32 %v5209, %v5211
        %v5213 = vrot.slane %v5199, %v5212
        %v5214 = vcombine.low %v5189, %v5197
        %v5215 = vcombine.high %v5189, %v5197
        %v5217 = vunpack.c.l.s4 1934713408
        %v5218 = vunpack.c.0.s8 %v5217
        %v5219 = vlaneseq
        %v5220 = vshrl.u32 %v5219, 7
        %v5221 = vsub.s32 %v5218, %v5220
        %v5222 = vrot.slane %v5214, %v5221
        %v5224 = vunpack.c.l.s4 1934713408
        %v5225 = vunpack.c.0.s8 %v5224
        %v5226 = vlaneseq
        %v5227 = vshrl.u32 %v5226, 7
        %v5228 = vsub.s32 %v5225, %v5227
        %v5229 = vrot.slane %v5215, %v5228
        %v5230 = vcombine.low %v5206, %v5222
        %v5231 = vcombine.high %v5206, %v5222
        %v5232 = vcombine.low %v5213, %v5229
        %v5233 = vcombine.high %v5213, %v5229
        %5235 = vrot.lane.b32.xlu0 %v5231, 4
        %v5236 = vpop.permute.xlu0 %5235
        %5239 = vrot.lane.b32.xlu0 %v5232, 8
        %v5240 = vpop.permute.xlu0 %5239
        %5243 = vrot.lane.b32.xlu0 %v5233, 12
        %v5244 = vpop.permute.xlu0 %5243
        %v5246 = vsel %vm2538, %v5230, %v5236
        %v5247 = vsel %vm2540, %v5246, %v5240
        %v5248 = vsel %vm1767, %v5247, %v5244
        %5249 = vrot.lane.b32.xlu0 %v4859, 126
        %v5250 = vpop.permute.xlu0 %5249
        %5251 = vrot.lane.b32.xlu0 %v4860, 126
        %v5252 = vpop.permute.xlu0 %5251
        %5253 = vrot.lane.b32.xlu0 %v4861, 126
        %v5254 = vpop.permute.xlu0 %5253
        %5255 = vrot.lane.b32.xlu0 %v4862, 126
        %v5256 = vpop.permute.xlu0 %5255
        %5257 = vrot.lane.b32.xlu0 %v4863, 126
        %v5258 = vpop.permute.xlu0 %5257
        %5259 = vrot.lane.b32.xlu0 %v4864, 126
        %v5260 = vpop.permute.xlu0 %5259
        %v5265 = vcombine.low %v5250, %v5254
        %v5267 = vunpack.c.l.s4 1983009808
        %v5268 = vunpack.c.0.s8 %v5267
        %v5269 = vlaneseq
        %v5270 = vshrl.u32 %v5269, 7
        %v5271 = vsub.s32 %v5268, %v5270
        %v5272 = vrot.slane %v5265, %v5271
        %v5273 = vcombine.low %v5252, %v5256
        %v5275 = vunpack.c.l.s4 1983009808
        %v5276 = vunpack.c.0.s8 %v5275
        %v5277 = vlaneseq
        %v5278 = vshrl.u32 %v5277, 7
        %v5279 = vsub.s32 %v5276, %v5278
        %v5280 = vrot.slane %v5273, %v5279
        %v5283 = vunpack.c.l.s4 1983009808
        %v5284 = vunpack.c.0.s8 %v5283
        %v5285 = vlaneseq
        %v5286 = vshrl.u32 %v5285, 7
        %v5287 = vsub.s32 %v5284, %v5286
        %v5288 = vrot.slane %v5258, %v5287
        %v5291 = vunpack.c.l.s4 1983009808
        %v5292 = vunpack.c.0.s8 %v5291
        %v5293 = vlaneseq
        %v5294 = vshrl.u32 %v5293, 7
        %v5295 = vsub.s32 %v5292, %v5294
        %v5296 = vrot.slane %v5260, %v5295
        %v5297 = vcombine.low %v5272, %v5280
        %v5298 = vcombine.high %v5272, %v5280
        %v5300 = vunpack.c.l.s4 1934713408
        %v5301 = vunpack.c.0.s8 %v5300
        %v5302 = vlaneseq
        %v5303 = vshrl.u32 %v5302, 7
        %v5304 = vsub.s32 %v5301, %v5303
        %v5305 = vrot.slane %v5297, %v5304
        %v5307 = vunpack.c.l.s4 1934713408
        %v5308 = vunpack.c.0.s8 %v5307
        %v5309 = vlaneseq
        %v5310 = vshrl.u32 %v5309, 7
        %v5311 = vsub.s32 %v5308, %v5310
        %v5312 = vrot.slane %v5298, %v5311
        %v5313 = vcombine.low %v5288, %v5296
        %v5314 = vcombine.high %v5288, %v5296
        %v5316 = vunpack.c.l.s4 1934713408
        %v5317 = vunpack.c.0.s8 %v5316
        %v5318 = vlaneseq
        %v5319 = vshrl.u32 %v5318, 7
        %v5320 = vsub.s32 %v5317, %v5319
        %v5321 = vrot.slane %v5313, %v5320
        %v5323 = vunpack.c.l.s4 1934713408
        %v5324 = vunpack.c.0.s8 %v5323
        %v5325 = vlaneseq
        %v5326 = vshrl.u32 %v5325, 7
        %v5327 = vsub.s32 %v5324, %v5326
        %v5328 = vrot.slane %v5314, %v5327
        %v5329 = vcombine.low %v5305, %v5321
        %v5330 = vcombine.high %v5305, %v5321
        %v5331 = vcombine.low %v5312, %v5328
        %v5332 = vcombine.high %v5312, %v5328
        %5334 = vrot.lane.b32.xlu0 %v5330, 4
        %v5335 = vpop.permute.xlu0 %5334
        %5338 = vrot.lane.b32.xlu0 %v5331, 8
        %v5339 = vpop.permute.xlu0 %5338
        %5342 = vrot.lane.b32.xlu0 %v5332, 12
        %v5343 = vpop.permute.xlu0 %5342
        %v5345 = vsel %vm2538, %v5329, %v5335
        %v5346 = vsel %vm2540, %v5345, %v5339
        %v5347 = vsel %vm1767, %v5346, %v5343
        %v5348 = vrot.slane %v2322, 2
        %v5349 = vrot.slane %v2323, 2
        %v5350 = vrot.slane %v2324, 2
        %v5351 = vrot.slane %v2325, 2
        %v5352 = vrot.slane %v2452, 2
        %v5353 = vrot.slane %v2453, 2
        %v5358 = vcombine.low %v5348, %v5350
        %v5360 = vunpack.c.l.s4 1983009808
        %v5361 = vunpack.c.0.s8 %v5360
        %v5362 = vlaneseq
        %v5363 = vshrl.u32 %v5362, 7
        %v5364 = vsub.s32 %v5361, %v5363
        %v5365 = vrot.slane %v5358, %v5364
        %v5366 = vcombine.low %v5349, %v5351
        %v5368 = vunpack.c.l.s4 1983009808
        %v5369 = vunpack.c.0.s8 %v5368
        %v5370 = vlaneseq
        %v5371 = vshrl.u32 %v5370, 7
        %v5372 = vsub.s32 %v5369, %v5371
        %v5373 = vrot.slane %v5366, %v5372
        %v5376 = vunpack.c.l.s4 1983009808
        %v5377 = vunpack.c.0.s8 %v5376
        %v5378 = vlaneseq
        %v5379 = vshrl.u32 %v5378, 7
        %v5380 = vsub.s32 %v5377, %v5379
        %v5381 = vrot.slane %v5352, %v5380
        %v5384 = vunpack.c.l.s4 1983009808
        %v5385 = vunpack.c.0.s8 %v5384
        %v5386 = vlaneseq
        %v5387 = vshrl.u32 %v5386, 7
        %v5388 = vsub.s32 %v5385, %v5387
        %v5389 = vrot.slane %v5353, %v5388
        %v5390 = vcombine.low %v5365, %v5373
        %v5391 = vcombine.high %v5365, %v5373
        %v5393 = vunpack.c.l.s4 1934713408
        %v5394 = vunpack.c.0.s8 %v5393
        %v5395 = vlaneseq
        %v5396 = vshrl.u32 %v5395, 7
        %v5397 = vsub.s32 %v5394, %v5396
        %v5398 = vrot.slane %v5390, %v5397
        %v5400 = vunpack.c.l.s4 1934713408
        %v5401 = vunpack.c.0.s8 %v5400
        %v5402 = vlaneseq
        %v5403 = vshrl.u32 %v5402, 7
        %v5404 = vsub.s32 %v5401, %v5403
        %v5405 = vrot.slane %v5391, %v5404
        %v5406 = vcombine.low %v5381, %v5389
        %v5407 = vcombine.high %v5381, %v5389
        %v5409 = vunpack.c.l.s4 1934713408
        %v5410 = vunpack.c.0.s8 %v5409
        %v5411 = vlaneseq
        %v5412 = vshrl.u32 %v5411, 7
        %v5413 = vsub.s32 %v5410, %v5412
        %v5414 = vrot.slane %v5406, %v5413
        %v5416 = vunpack.c.l.s4 1934713408
        %v5417 = vunpack.c.0.s8 %v5416
        %v5418 = vlaneseq
        %v5419 = vshrl.u32 %v5418, 7
        %v5420 = vsub.s32 %v5417, %v5419
        %v5421 = vrot.slane %v5407, %v5420
        %v5422 = vcombine.low %v5398, %v5414
        %v5423 = vcombine.high %v5398, %v5414
        %v5424 = vcombine.low %v5405, %v5421
        %v5425 = vcombine.high %v5405, %v5421
        %5427 = vrot.lane.b32.xlu0 %v5423, 4
        %v5428 = vpop.permute.xlu0 %5427
        %5431 = vrot.lane.b32.xlu0 %v5424, 8
        %v5432 = vpop.permute.xlu0 %5431
        %5435 = vrot.lane.b32.xlu0 %v5425, 12
        %v5436 = vpop.permute.xlu0 %5435
        %v5438 = vsel %vm2538, %v5422, %v5428
        %v5439 = vsel %vm2540, %v5438, %v5432
        %v5440 = vsel %vm1767, %v5439, %v5436
        %v5441 = vrot.slane %v2454, 2
        %v5442 = vrot.slane %v2455, 2
        %v5443 = vrot.slane %v2456, 2
        %v5444 = vrot.slane %v2457, 2
        %v5445 = vrot.slane %v2458, 2
        %v5446 = vrot.slane %v2459, 2
        %v5451 = vcombine.low %v5441, %v5443
        %v5453 = vunpack.c.l.s4 1983009808
        %v5454 = vunpack.c.0.s8 %v5453
        %v5455 = vlaneseq
        %v5456 = vshrl.u32 %v5455, 7
        %v5457 = vsub.s32 %v5454, %v5456
        %v5458 = vrot.slane %v5451, %v5457
        %v5459 = vcombine.low %v5442, %v5444
        %v5461 = vunpack.c.l.s4 1983009808
        %v5462 = vunpack.c.0.s8 %v5461
        %v5463 = vlaneseq
        %v5464 = vshrl.u32 %v5463, 7
        %v5465 = vsub.s32 %v5462, %v5464
        %v5466 = vrot.slane %v5459, %v5465
        %v5469 = vunpack.c.l.s4 1983009808
        %v5470 = vunpack.c.0.s8 %v5469
        %v5471 = vlaneseq
        %v5472 = vshrl.u32 %v5471, 7
        %v5473 = vsub.s32 %v5470, %v5472
        %v5474 = vrot.slane %v5445, %v5473
        %v5477 = vunpack.c.l.s4 1983009808
        %v5478 = vunpack.c.0.s8 %v5477
        %v5479 = vlaneseq
        %v5480 = vshrl.u32 %v5479, 7
        %v5481 = vsub.s32 %v5478, %v5480
        %v5482 = vrot.slane %v5446, %v5481
        %v5483 = vcombine.low %v5458, %v5466
        %v5484 = vcombine.high %v5458, %v5466
        %v5486 = vunpack.c.l.s4 1934713408
        %v5487 = vunpack.c.0.s8 %v5486
        %v5488 = vlaneseq
        %v5489 = vshrl.u32 %v5488, 7
        %v5490 = vsub.s32 %v5487, %v5489
        %v5491 = vrot.slane %v5483, %v5490
        %v5493 = vunpack.c.l.s4 1934713408
        %v5494 = vunpack.c.0.s8 %v5493
        %v5495 = vlaneseq
        %v5496 = vshrl.u32 %v5495, 7
        %v5497 = vsub.s32 %v5494, %v5496
        %v5498 = vrot.slane %v5484, %v5497
        %v5499 = vcombine.low %v5474, %v5482
        %v5500 = vcombine.high %v5474, %v5482
        %v5502 = vunpack.c.l.s4 1934713408
        %v5503 = vunpack.c.0.s8 %v5502
        %v5504 = vlaneseq
        %v5505 = vshrl.u32 %v5504, 7
        %v5506 = vsub.s32 %v5503, %v5505
        %v5507 = vrot.slane %v5499, %v5506
        %v5509 = vunpack.c.l.s4 1934713408
        %v5510 = vunpack.c.0.s8 %v5509
        %v5511 = vlaneseq
        %v5512 = vshrl.u32 %v5511, 7
        %v5513 = vsub.s32 %v5510, %v5512
        %v5514 = vrot.slane %v5500, %v5513
        %v5515 = vcombine.low %v5491, %v5507
        %v5516 = vcombine.high %v5491, %v5507
        %v5517 = vcombine.low %v5498, %v5514
        %v5518 = vcombine.high %v5498, %v5514
        %5520 = vrot.lane.b32.xlu0 %v5516, 4
        %v5521 = vpop.permute.xlu0 %5520
        %5524 = vrot.lane.b32.xlu0 %v5517, 8
        %v5525 = vpop.permute.xlu0 %5524
        %5528 = vrot.lane.b32.xlu0 %v5518, 12
        %v5529 = vpop.permute.xlu0 %5528
        %v5531 = vsel %vm2538, %v5515, %v5521
        %v5532 = vsel %vm2540, %v5531, %v5525
        %v5533 = vsel %vm1767, %v5532, %v5529
        %5534 = vrot.lane.b32.xlu0 %v5348, 127
        %v5535 = vpop.permute.xlu0 %5534
        %5536 = vrot.lane.b32.xlu0 %v5349, 127
        %v5537 = vpop.permute.xlu0 %5536
        %5538 = vrot.lane.b32.xlu0 %v5350, 127
        %v5539 = vpop.permute.xlu0 %5538
        %5540 = vrot.lane.b32.xlu0 %v5351, 127
        %v5541 = vpop.permute.xlu0 %5540
        %5542 = vrot.lane.b32.xlu0 %v5352, 127
        %v5543 = vpop.permute.xlu0 %5542
        %5544 = vrot.lane.b32.xlu0 %v5353, 127
        %v5545 = vpop.permute.xlu0 %5544
        %v5550 = vcombine.low %v5535, %v5539
        %v5552 = vunpack.c.l.s4 1983009808
        %v5553 = vunpack.c.0.s8 %v5552
        %v5554 = vlaneseq
        %v5555 = vshrl.u32 %v5554, 7
        %v5556 = vsub.s32 %v5553, %v5555
        %v5557 = vrot.slane %v5550, %v5556
        %v5558 = vcombine.low %v5537, %v5541
        %v5560 = vunpack.c.l.s4 1983009808
        %v5561 = vunpack.c.0.s8 %v5560
        %v5562 = vlaneseq
        %v5563 = vshrl.u32 %v5562, 7
        %v5564 = vsub.s32 %v5561, %v5563
        %v5565 = vrot.slane %v5558, %v5564
        %v5568 = vunpack.c.l.s4 1983009808
        %v5569 = vunpack.c.0.s8 %v5568
        %v5570 = vlaneseq
        %v5571 = vshrl.u32 %v5570, 7
        %v5572 = vsub.s32 %v5569, %v5571
        %v5573 = vrot.slane %v5543, %v5572
        %v5576 = vunpack.c.l.s4 1983009808
        %v5577 = vunpack.c.0.s8 %v5576
        %v5578 = vlaneseq
        %v5579 = vshrl.u32 %v5578, 7
        %v5580 = vsub.s32 %v5577, %v5579
        %v5581 = vrot.slane %v5545, %v5580
        %v5582 = vcombine.low %v5557, %v5565
        %v5583 = vcombine.high %v5557, %v5565
        %v5585 = vunpack.c.l.s4 1934713408
        %v5586 = vunpack.c.0.s8 %v5585
        %v5587 = vlaneseq
        %v5588 = vshrl.u32 %v5587, 7
        %v5589 = vsub.s32 %v5586, %v5588
        %v5590 = vrot.slane %v5582, %v5589
        %v5592 = vunpack.c.l.s4 1934713408
        %v5593 = vunpack.c.0.s8 %v5592
        %v5594 = vlaneseq
        %v5595 = vshrl.u32 %v5594, 7
        %v5596 = vsub.s32 %v5593, %v5595
        %v5597 = vrot.slane %v5583, %v5596
        %v5598 = vcombine.low %v5573, %v5581
        %v5599 = vcombine.high %v5573, %v5581
        %v5601 = vunpack.c.l.s4 1934713408
        %v5602 = vunpack.c.0.s8 %v5601
        %v5603 = vlaneseq
        %v5604 = vshrl.u32 %v5603, 7
        %v5605 = vsub.s32 %v5602, %v5604
        %v5606 = vrot.slane %v5598, %v5605
        %v5608 = vunpack.c.l.s4 1934713408
        %v5609 = vunpack.c.0.s8 %v5608
        %v5610 = vlaneseq
        %v5611 = vshrl.u32 %v5610, 7
        %v5612 = vsub.s32 %v5609, %v5611
        %v5613 = vrot.slane %v5599, %v5612
        %v5614 = vcombine.low %v5590, %v5606
        %v5615 = vcombine.high %v5590, %v5606
        %v5616 = vcombine.low %v5597, %v5613
        %v5617 = vcombine.high %v5597, %v5613
        %5619 = vrot.lane.b32.xlu0 %v5615, 4
        %v5620 = vpop.permute.xlu0 %5619
        %5623 = vrot.lane.b32.xlu0 %v5616, 8
        %v5624 = vpop.permute.xlu0 %5623
        %5627 = vrot.lane.b32.xlu0 %v5617, 12
        %v5628 = vpop.permute.xlu0 %5627
        %v5630 = vsel %vm2538, %v5614, %v5620
        %v5631 = vsel %vm2540, %v5630, %v5624
        %v5632 = vsel %vm1767, %v5631, %v5628
        %5633 = vrot.lane.b32.xlu0 %v5441, 127
        %v5634 = vpop.permute.xlu0 %5633
        %5635 = vrot.lane.b32.xlu0 %v5442, 127
        %v5636 = vpop.permute.xlu0 %5635
        %5637 = vrot.lane.b32.xlu0 %v5443, 127
        %v5638 = vpop.permute.xlu0 %5637
        %5639 = vrot.lane.b32.xlu0 %v5444, 127
        %v5640 = vpop.permute.xlu0 %5639
        %5641 = vrot.lane.b32.xlu0 %v5445, 127
        %v5642 = vpop.permute.xlu0 %5641
        %5643 = vrot.lane.b32.xlu0 %v5446, 127
        %v5644 = vpop.permute.xlu0 %5643
        %v5649 = vcombine.low %v5634, %v5638
        %v5651 = vunpack.c.l.s4 1983009808
        %v5652 = vunpack.c.0.s8 %v5651
        %v5653 = vlaneseq
        %v5654 = vshrl.u32 %v5653, 7
        %v5655 = vsub.s32 %v5652, %v5654
        %v5656 = vrot.slane %v5649, %v5655
        %v5657 = vcombine.low %v5636, %v5640
        %v5659 = vunpack.c.l.s4 1983009808
        %v5660 = vunpack.c.0.s8 %v5659
        %v5661 = vlaneseq
        %v5662 = vshrl.u32 %v5661, 7
        %v5663 = vsub.s32 %v5660, %v5662
        %v5664 = vrot.slane %v5657, %v5663
        %v5667 = vunpack.c.l.s4 1983009808
        %v5668 = vunpack.c.0.s8 %v5667
        %v5669 = vlaneseq
        %v5670 = vshrl.u32 %v5669, 7
        %v5671 = vsub.s32 %v5668, %v5670
        %v5672 = vrot.slane %v5642, %v5671
        %v5675 = vunpack.c.l.s4 1983009808
        %v5676 = vunpack.c.0.s8 %v5675
        %v5677 = vlaneseq
        %v5678 = vshrl.u32 %v5677, 7
        %v5679 = vsub.s32 %v5676, %v5678
        %v5680 = vrot.slane %v5644, %v5679
        %v5681 = vcombine.low %v5656, %v5664
        %v5682 = vcombine.high %v5656, %v5664
        %v5684 = vunpack.c.l.s4 1934713408
        %v5685 = vunpack.c.0.s8 %v5684
        %v5686 = vlaneseq
        %v5687 = vshrl.u32 %v5686, 7
        %v5688 = vsub.s32 %v5685, %v5687
        %v5689 = vrot.slane %v5681, %v5688
        %v5691 = vunpack.c.l.s4 1934713408
        %v5692 = vunpack.c.0.s8 %v5691
        %v5693 = vlaneseq
        %v5694 = vshrl.u32 %v5693, 7
        %v5695 = vsub.s32 %v5692, %v5694
        %v5696 = vrot.slane %v5682, %v5695
        %v5697 = vcombine.low %v5672, %v5680
        %v5698 = vcombine.high %v5672, %v5680
        %v5700 = vunpack.c.l.s4 1934713408
        %v5701 = vunpack.c.0.s8 %v5700
        %v5702 = vlaneseq
        %v5703 = vshrl.u32 %v5702, 7
        %v5704 = vsub.s32 %v5701, %v5703
        %v5705 = vrot.slane %v5697, %v5704
        %v5707 = vunpack.c.l.s4 1934713408
        %v5708 = vunpack.c.0.s8 %v5707
        %v5709 = vlaneseq
        %v5710 = vshrl.u32 %v5709, 7
        %v5711 = vsub.s32 %v5708, %v5710
        %v5712 = vrot.slane %v5698, %v5711
        %v5713 = vcombine.low %v5689, %v5705
        %v5714 = vcombine.high %v5689, %v5705
        %v5715 = vcombine.low %v5696, %v5712
        %v5716 = vcombine.high %v5696, %v5712
        %5718 = vrot.lane.b32.xlu0 %v5714, 4
        %v5719 = vpop.permute.xlu0 %5718
        %5722 = vrot.lane.b32.xlu0 %v5715, 8
        %v5723 = vpop.permute.xlu0 %5722
        %5726 = vrot.lane.b32.xlu0 %v5716, 12
        %v5727 = vpop.permute.xlu0 %5726
        %v5729 = vsel %vm2538, %v5713, %v5719
        %v5730 = vsel %vm2540, %v5729, %v5723
        %v5731 = vsel %vm1767, %v5730, %v5727
        %5732 = vrot.lane.b32.xlu0 %v5348, 126
        %v5733 = vpop.permute.xlu0 %5732
        %5734 = vrot.lane.b32.xlu0 %v5349, 126
        %v5735 = vpop.permute.xlu0 %5734
        %5736 = vrot.lane.b32.xlu0 %v5350, 126
        %v5737 = vpop.permute.xlu0 %5736
        %5738 = vrot.lane.b32.xlu0 %v5351, 126
        %v5739 = vpop.permute.xlu0 %5738
        %5740 = vrot.lane.b32.xlu0 %v5352, 126
        %v5741 = vpop.permute.xlu0 %5740
        %5742 = vrot.lane.b32.xlu0 %v5353, 126
        %v5743 = vpop.permute.xlu0 %5742
        %v5748 = vcombine.low %v5733, %v5737
        %v5750 = vunpack.c.l.s4 1983009808
        %v5751 = vunpack.c.0.s8 %v5750
        %v5752 = vlaneseq
        %v5753 = vshrl.u32 %v5752, 7
        %v5754 = vsub.s32 %v5751, %v5753
        %v5755 = vrot.slane %v5748, %v5754
        %v5756 = vcombine.low %v5735, %v5739
        %v5758 = vunpack.c.l.s4 1983009808
        %v5759 = vunpack.c.0.s8 %v5758
        %v5760 = vlaneseq
        %v5761 = vshrl.u32 %v5760, 7
        %v5762 = vsub.s32 %v5759, %v5761
        %v5763 = vrot.slane %v5756, %v5762
        %v5766 = vunpack.c.l.s4 1983009808
        %v5767 = vunpack.c.0.s8 %v5766
        %v5768 = vlaneseq
        %v5769 = vshrl.u32 %v5768, 7
        %v5770 = vsub.s32 %v5767, %v5769
        %v5771 = vrot.slane %v5741, %v5770
        %v5774 = vunpack.c.l.s4 1983009808
        %v5775 = vunpack.c.0.s8 %v5774
        %v5776 = vlaneseq
        %v5777 = vshrl.u32 %v5776, 7
        %v5778 = vsub.s32 %v5775, %v5777
        %v5779 = vrot.slane %v5743, %v5778
        %v5780 = vcombine.low %v5755, %v5763
        %v5781 = vcombine.high %v5755, %v5763
        %v5783 = vunpack.c.l.s4 1934713408
        %v5784 = vunpack.c.0.s8 %v5783
        %v5785 = vlaneseq
        %v5786 = vshrl.u32 %v5785, 7
        %v5787 = vsub.s32 %v5784, %v5786
        %v5788 = vrot.slane %v5780, %v5787
        %v5790 = vunpack.c.l.s4 1934713408
        %v5791 = vunpack.c.0.s8 %v5790
        %v5792 = vlaneseq
        %v5793 = vshrl.u32 %v5792, 7
        %v5794 = vsub.s32 %v5791, %v5793
        %v5795 = vrot.slane %v5781, %v5794
        %v5796 = vcombine.low %v5771, %v5779
        %v5797 = vcombine.high %v5771, %v5779
        %v5799 = vunpack.c.l.s4 1934713408
        %v5800 = vunpack.c.0.s8 %v5799
        %v5801 = vlaneseq
        %v5802 = vshrl.u32 %v5801, 7
        %v5803 = vsub.s32 %v5800, %v5802
        %v5804 = vrot.slane %v5796, %v5803
        %v5806 = vunpack.c.l.s4 1934713408
        %v5807 = vunpack.c.0.s8 %v5806
        %v5808 = vlaneseq
        %v5809 = vshrl.u32 %v5808, 7
        %v5810 = vsub.s32 %v5807, %v5809
        %v5811 = vrot.slane %v5797, %v5810
        %v5812 = vcombine.low %v5788, %v5804
        %v5813 = vcombine.high %v5788, %v5804
        %v5814 = vcombine.low %v5795, %v5811
        %v5815 = vcombine.high %v5795, %v5811
        %5817 = vrot.lane.b32.xlu0 %v5813, 4
        %v5818 = vpop.permute.xlu0 %5817
        %5821 = vrot.lane.b32.xlu0 %v5814, 8
        %v5822 = vpop.permute.xlu0 %5821
        %5825 = vrot.lane.b32.xlu0 %v5815, 12
        %v5826 = vpop.permute.xlu0 %5825
        %v5828 = vsel %vm2538, %v5812, %v5818
        %v5829 = vsel %vm2540, %v5828, %v5822
        %v5830 = vsel %vm1767, %v5829, %v5826
        %5831 = vrot.lane.b32.xlu0 %v5441, 126
        %v5832 = vpop.permute.xlu0 %5831
        %5833 = vrot.lane.b32.xlu0 %v5442, 126
        %v5834 = vpop.permute.xlu0 %5833
        %5835 = vrot.lane.b32.xlu0 %v5443, 126
        %v5836 = vpop.permute.xlu0 %5835
        %5837 = vrot.lane.b32.xlu0 %v5444, 126
        %v5838 = vpop.permute.xlu0 %5837
        %5839 = vrot.lane.b32.xlu0 %v5445, 126
        %v5840 = vpop.permute.xlu0 %5839
        %5841 = vrot.lane.b32.xlu0 %v5446, 126
        %v5842 = vpop.permute.xlu0 %5841
        %v5847 = vcombine.low %v5832, %v5836
        %v5849 = vunpack.c.l.s4 1983009808
        %v5850 = vunpack.c.0.s8 %v5849
        %v5851 = vlaneseq
        %v5852 = vshrl.u32 %v5851, 7
        %v5853 = vsub.s32 %v5850, %v5852
        %v5854 = vrot.slane %v5847, %v5853
        %v5855 = vcombine.low %v5834, %v5838
        %v5857 = vunpack.c.l.s4 1983009808
        %v5858 = vunpack.c.0.s8 %v5857
        %v5859 = vlaneseq
        %v5860 = vshrl.u32 %v5859, 7
        %v5861 = vsub.s32 %v5858, %v5860
        %v5862 = vrot.slane %v5855, %v5861
        %v5865 = vunpack.c.l.s4 1983009808
        %v5866 = vunpack.c.0.s8 %v5865
        %v5867 = vlaneseq
        %v5868 = vshrl.u32 %v5867, 7
        %v5869 = vsub.s32 %v5866, %v5868
        %v5870 = vrot.slane %v5840, %v5869
        %v5873 = vunpack.c.l.s4 1983009808
        %v5874 = vunpack.c.0.s8 %v5873
        %v5875 = vlaneseq
        %v5876 = vshrl.u32 %v5875, 7
        %v5877 = vsub.s32 %v5874, %v5876
        %v5878 = vrot.slane %v5842, %v5877
        %v5879 = vcombine.low %v5854, %v5862
        %v5880 = vcombine.high %v5854, %v5862
        %v5882 = vunpack.c.l.s4 1934713408
        %v5883 = vunpack.c.0.s8 %v5882
        %v5884 = vlaneseq
        %v5885 = vshrl.u32 %v5884, 7
        %v5886 = vsub.s32 %v5883, %v5885
        %v5887 = vrot.slane %v5879, %v5886
        %v5889 = vunpack.c.l.s4 1934713408
        %v5890 = vunpack.c.0.s8 %v5889
        %v5891 = vlaneseq
        %v5892 = vshrl.u32 %v5891, 7
        %v5893 = vsub.s32 %v5890, %v5892
        %v5894 = vrot.slane %v5880, %v5893
        %v5895 = vcombine.low %v5870, %v5878
        %v5896 = vcombine.high %v5870, %v5878
        %v5898 = vunpack.c.l.s4 1934713408
        %v5899 = vunpack.c.0.s8 %v5898
        %v5900 = vlaneseq
        %v5901 = vshrl.u32 %v5900, 7
        %v5902 = vsub.s32 %v5899, %v5901
        %v5903 = vrot.slane %v5895, %v5902
        %v5905 = vunpack.c.l.s4 1934713408
        %v5906 = vunpack.c.0.s8 %v5905
        %v5907 = vlaneseq
        %v5908 = vshrl.u32 %v5907, 7
        %v5909 = vsub.s32 %v5906, %v5908
        %v5910 = vrot.slane %v5896, %v5909
        %v5911 = vcombine.low %v5887, %v5903
        %v5912 = vcombine.high %v5887, %v5903
        %v5913 = vcombine.low %v5894, %v5910
        %v5914 = vcombine.high %v5894, %v5910
        %5916 = vrot.lane.b32.xlu0 %v5912, 4
        %v5917 = vpop.permute.xlu0 %5916
        %5920 = vrot.lane.b32.xlu0 %v5913, 8
        %v5921 = vpop.permute.xlu0 %5920
        %5924 = vrot.lane.b32.xlu0 %v5914, 12
        %v5925 = vpop.permute.xlu0 %5924
        %v5927 = vsel %vm2538, %v5911, %v5917
        %v5928 = vsel %vm2540, %v5927, %v5921
        %v5929 = vsel %vm1767, %v5928, %v5925
        %v5931 = vrot.slane %v2623, 2
        %v5934 = vrot.slane %v2728, 4
        %v5937 = vrot.slane %v2833, 6
        %v5940 = vrot.slane %v3031, 2
        %v5943 = vrot.slane %v3112, 4
        %v5946 = vrot.slane %v3193, 6
        %v5949 = vrot.slane %v3403, 2
        %v5952 = vrot.slane %v3502, 4
        %v5955 = vrot.slane %v3601, 6
        %v5958 = vrot.slane %v3787, 2
        %v5961 = vrot.slane %v3886, 4
        %v5964 = vrot.slane %v3985, 6
        %vm5966 = vcmask 1045504
        %v5967 = vsel %vm5966, %v2542, %v5931
        %vm5968 = vcmask 1043456
        %v5969 = vsel %vm5968, %v5931, %v5934
        %vm5970 = vcmask 1041408
        %v5971 = vsel %vm5970, %v5934, %v5937
        %v5972 = vsel %vm5966, %v2932, %v5940
        %v5973 = vsel %vm5968, %v5940, %v5943
        %v5974 = vsel %vm5970, %v5943, %v5946
        %v5975 = vsel %vm5966, %v3298, %v5949
        %v5976 = vsel %vm5968, %v5949, %v5952
        %v5977 = vsel %vm5970, %v5952, %v5955
        %v5978 = vsel %vm5966, %v3694, %v5958
        %v5979 = vsel %vm5968, %v5958, %v5961
        %v5980 = vsel %vm5970, %v5961, %v5964
        %v5982 = vrot.slane %v4183, 2
        %v5985 = vrot.slane %v4276, 4
        %v5988 = vrot.slane %v4369, 6
        %v5991 = vrot.slane %v4567, 2
        %v5994 = vrot.slane %v4666, 4
        %v5997 = vrot.slane %v4765, 6
        %v6000 = vrot.slane %v4951, 2
        %v6003 = vrot.slane %v5050, 4
        %v6006 = vrot.slane %v5149, 6
        %v6009 = vrot.slane %v5347, 2
        %v6012 = vrot.slane %v5440, 4
        %v6015 = vrot.slane %v5533, 6
        %v6017 = vsel %vm5966, %v4084, %v5982
        %v6018 = vsel %vm5968, %v5982, %v5985
        %v6019 = vsel %vm5970, %v5985, %v5988
        %v6020 = vsel %vm5966, %v4468, %v5991
        %v6021 = vsel %vm5968, %v5991, %v5994
        %v6022 = vsel %vm5970, %v5994, %v5997
        %v6023 = vsel %vm5966, %v4858, %v6000
        %v6024 = vsel %vm5968, %v6000, %v6003
        %v6025 = vsel %vm5970, %v6003, %v6006
        %v6026 = vsel %vm5966, %v5248, %v6009
        %v6027 = vsel %vm5968, %v6009, %v6012
        %v6028 = vsel %vm5970, %v6012, %v6015
        %v6030 = vrot.slane %v5731, 2
        %v6033 = vrot.slane %v5830, 4
        %v6036 = vrot.slane %v5929, 6
        %v6038 = vsel %vm5966, %v5632, %v6030
        %v6039 = vsel %vm5968, %v6030, %v6033
        %v6040 = vsel %vm5970, %v6033, %v6036
        %v6041 = vld [vmem:[%s3] sm:$0xff]
        %v6042 = vld [vmem:[%s3 + $0x8] sm:$0xff]
        %v6043 = vld [vmem:[%s3 + $0x10] sm:$0xff]
        %v6044 = vld [vmem:[%s3 + $0x18] sm:$0xff]
        %v6045 = vld [vmem:[%s3 + $0x20] sm:$0xff]
        %v6046 = vld [vmem:[%s3 + $0x28] sm:$0xff]
        %v6047 = vld [vmem:[%s3 + $0x30] sm:$0xff]
        %v6048 = vld [vmem:[%s3 + $0x38] sm:$0xff]
        %v6049 = vld [vmem:[%s3 + $0x40] sm:$0xff]
        %v6050 = vld [vmem:[%s3 + $0x48] sm:$0xff]
        %v6051 = vld [vmem:[%s3 + $0x50] sm:$0xff]
        %v6052 = vld [vmem:[%s3 + $0x58] sm:$0xff]
        %v6053 = vld [vmem:[%s3 + $0x60] sm:$0xff]
        %v6054 = vld [vmem:[%s3 + $0x68] sm:$0xff]
        %v6055 = vld [vmem:[%s3 + $0x70] sm:$0xff]
        %v6056 = vld [vmem:[%s3 + $0x78] sm:$0xff]
        %vm6057 = vcmask 719872
        %v6059 = vsel %vm6057, %v6042, 0
        %v6062 = vsel %vm6057, %v6044, 0
        %v6065 = vsel %vm6057, %v6046, 0
        %v6068 = vsel %vm6057, %v6048, 0
        %v6071 = vsel %vm6057, %v6050, 0
        %v6074 = vsel %vm6057, %v6052, 0
        %v6077 = vsel %vm6057, %v6054, 0
        %v6080 = vsel %vm6057, %v6056, 0
        %6082 = vmatprep.subr.mxu0 0.0
        %6083 = vmatpush1.msra.mxu0 %v6020
        %6084 = vmatprep.subr.mxu0 0.0
        %6085 = vmatpush1.msra.mxu0 %v6019
        %6086 = vmatprep.subr.mxu0 0.0
        %6087 = vmatpush1.msra.mxu0 %v6018
        %6088 = vmatprep.subr.mxu0 0.0
        %6089 = vmatpush1.msra.mxu0 %v6017
        %6090 = vmatprep.subr.mxu0 0.0
        %6091 = vmatpush1.msra.mxu0 %v5980
        %6092 = vmatprep.subr.mxu0 0.0
        %6093 = vmatpush1.msra.mxu0 %v5979
        %6094 = vmatprep.subr.mxu0 0.0
        %6095 = vmatpush1.msra.mxu0 %v5978
        %6096 = vmatprep.subr.mxu0 0.0
        %6097 = vmatpush1.msra.mxu0 %v5977
        %6098 = vmatprep.subr.mxu0 0.0
        %6099 = vmatpush1.msra.mxu0 %v5976
        %6100 = vmatprep.subr.mxu0 0.0
        %6101 = vmatpush1.msra.mxu0 %v5975
        %6102 = vmatprep.subr.mxu0 0.0
        %6103 = vmatpush1.msra.mxu0 %v5974
        %6104 = vmatprep.subr.mxu0 0.0
        %6105 = vmatpush1.msra.mxu0 %v5973
        %6106 = vmatprep.subr.mxu0 0.0
        %6107 = vmatpush1.msra.mxu0 %v5972
        %6108 = vmatprep.subr.mxu0 0.0
        %6109 = vmatpush1.msra.mxu0 %v5971
        %6110 = vmatprep.subr.mxu0 0.0
        %6111 = vmatpush1.msra.mxu0 %v5969
        %6112 = vmatprep.subr.mxu0 0.0
        %6113 = vmatpush1.msra.mxu0 %v5967
        %6114 = vmatprep.subr.mxu0 0.0
        %6115 = vmatpush2.msra.mxu0 0.0
        %6116 = vmatprep.subr.mxu0 0.0
        %6117 = vmatpush2.msra.mxu0 0.0
        %6118 = vmatprep.subr.mxu0 0.0
        %6119 = vmatpush2.msra.mxu0 0.0
        %6120 = vmatprep.subr.mxu0 0.0
        %6121 = vmatpush2.msra.mxu0 0.0
        %6122 = vmatprep.subr.mxu0 0.0
        %6123 = vmatpush2.msra.mxu0 0.0
        %6124 = vmatprep.subr.mxu0 0.0
        %6125 = vmatpush2.msra.mxu0 %v6040
        %6126 = vmatprep.subr.mxu0 0.0
        %6127 = vmatpush2.msra.mxu0 %v6039
        %6128 = vmatprep.subr.mxu0 0.0
        %6129 = vmatpush2.msra.mxu0 %v6038
        %6130 = vmatprep.subr.mxu0 0.0
        %6131 = vmatpush2.msra.mxu0 %v6028
        %6132 = vmatprep.subr.mxu0 0.0
        %6133 = vmatpush2.msra.mxu0 %v6027
        %6134 = vmatprep.subr.mxu0 0.0
        %6135 = vmatpush2.msra.mxu0 %v6026
        %6136 = vmatprep.subr.mxu0 0.0
        %6137 = vmatpush2.msra.mxu0 %v6025
        %6138 = vmatprep.subr.mxu0 0.0
        %6139 = vmatpush2.msra.mxu0 %v6024
        %6140 = vmatprep.subr.mxu0 0.0
        %6141 = vmatpush2.msra.mxu0 %v6023
        %6142 = vmatprep.subr.mxu0 0.0
        %6143 = vmatpush2.msra.mxu0 %v6022
        %6144 = vmatprep.subr.mxu0 0.0
        %6145 = vmatpush2.msra.mxu0 %v6021
        %6146 = vmatprep.mubr.f32.mxu0 %v6059
        %6147 = vmatmul.mubr.f32.gmra.mxu0 %v6041
        %v6148 = vpop.f32.mrf.mxu0
        %v6149 = vadd.f32 0.0, %v6148
        %v6150 = vpop.f32.mrf.mxu0
        %6151 = vmatprep.mubr.f32.mxu0 %v6062
        %6152 = vmatmul.mubr.f32.gmra.mxu0 %v6043
        %v6153 = vpop.f32.mrf.mxu0
        %v6154 = vadd.f32 0.0, %v6153
        %v6155 = vpop.f32.mrf.mxu0
        %6156 = vmatprep.mubr.f32.mxu0 %v6065
        %6157 = vmatmul.mubr.f32.gmra.mxu0 %v6045
        %v6158 = vpop.f32.mrf.mxu0
        %v6159 = vadd.f32 0.0, %v6158
        %v6160 = vpop.f32.mrf.mxu0
        %6161 = vmatprep.mubr.f32.mxu0 %v6068
        %6162 = vmatmul.mubr.f32.gmra.mxu0 %v6047
        %v6163 = vpop.f32.mrf.mxu0
        %v6164 = vadd.f32 0.0, %v6163
        %v6165 = vpop.f32.mrf.mxu0
        %6166 = vmatprep.mubr.f32.mxu0 %v6071
        %6167 = vmatmul.mubr.f32.gmra.mxu0 %v6049
        %v6168 = vpop.f32.mrf.mxu0
        %v6169 = vadd.f32 0.0, %v6168
        %v6170 = vpop.f32.mrf.mxu0
        %6171 = vmatprep.mubr.f32.mxu0 %v6074
        %6172 = vmatmul.mubr.f32.gmra.mxu0 %v6051
        %v6173 = vpop.f32.mrf.mxu0
        %v6174 = vadd.f32 0.0, %v6173
        %v6175 = vpop.f32.mrf.mxu0
        %6176 = vmatprep.mubr.f32.mxu0 %v6077
        %6177 = vmatmul.mubr.f32.gmra.mxu0 %v6053
        %v6178 = vpop.f32.mrf.mxu0
        %v6179 = vadd.f32 0.0, %v6178
        %v6180 = vpop.f32.mrf.mxu0
        %6181 = vmatprep.mubr.f32.mxu0 %v6080
        %6182 = vmatmul.mubr.f32.gmra.mxu0 %v6055
        %v6183 = vpop.f32.mrf.mxu0
        %v6184 = vadd.f32 0.0, %v6183
        %v6185 = vpop.f32.mrf.mxu0
        %6186 = vdwg.mxu0
        %v6187 = vmax.f32 %v6149, %v6159
        %v6188 = vmax.f32 %v6154, %v6164
        %v6189 = vmax.f32 %v6169, %v6179
        %v6190 = vmax.f32 %v6174, %v6184
        %v6191 = vmax.f32 %v6187, %v6189
        %v6192 = vmax.f32 %v6188, %v6190
        %v6193 = vld [vmem:[%s4] sm:$0xff]
        %v6194 = vld [vmem:[%s4 + $0x8] sm:$0xff]
        %6196 = vset.pattern.permute.xlu0 0
        %6197 = vperm.xlu0 %6196, %v6193
        %v6198 = vpop.permute.xlu0 %6197
        %6201 = vset.pattern.permute.xlu0 0
        %6202 = vperm.xlu0 %6201, %v6194
        %v6203 = vpop.permute.xlu0 %6202
        %v6205 = vadd.f32 %v6191, %v6198
        %v6206 = vadd.f32 %v6192, %v6203
        %v6207 = vmax.f32 %v6205, 0.0
        %v6208 = vmax.f32 %v6206, 0.0
        %v6211 = vcombine.high %v6207, %v6207
        %v6213 = vunpack.c.l.s4 1966171168
        %v6214 = vunpack.c.0.s8 %v6213
        %v6215 = vlaneseq
        %v6216 = vshrl.u32 %v6215, 7
        %v6217 = vsub.s32 %v6214, %v6216
        %v6218 = vrot.slane %v6207, %v6217
        %v6220 = vunpack.c.l.s4 1966171168
        %v6221 = vunpack.c.0.s8 %v6220
        %v6222 = vlaneseq
        %v6223 = vshrl.u32 %v6222, 7
        %v6224 = vsub.s32 %v6221, %v6223
        %v6225 = vrot.slane %v6211, %v6224
        %v6226 = vcombine.high %v6218, %v6218
        %v6227 = vcombine.high %v6225, %v6225
        %v6229 = vunpack.c.l.s4 1966171168
        %v6230 = vunpack.c.0.s8 %v6229
        %v6231 = vlaneseq
        %v6232 = vshrl.u32 %v6231, 7
        %v6233 = vsub.s32 %v6230, %v6232
        %v6234 = vrot.slane %v6218, %v6233
        %v6236 = vunpack.c.l.s4 1966171168
        %v6237 = vunpack.c.0.s8 %v6236
        %v6238 = vlaneseq
        %v6239 = vshrl.u32 %v6238, 7
        %v6240 = vsub.s32 %v6237, %v6239
        %v6241 = vrot.slane %v6225, %v6240
        %v6243 = vunpack.c.l.s4 1966171168
        %v6244 = vunpack.c.0.s8 %v6243
        %v6245 = vlaneseq
        %v6246 = vshrl.u32 %v6245, 7
        %v6247 = vsub.s32 %v6244, %v6246
        %v6248 = vrot.slane %v6226, %v6247
        %v6250 = vunpack.c.l.s4 1966171168
        %v6251 = vunpack.c.0.s8 %v6250
        %v6252 = vlaneseq
        %v6253 = vshrl.u32 %v6252, 7
        %v6254 = vsub.s32 %v6251, %v6253
        %v6255 = vrot.slane %v6227, %v6254
        %v6256 = vcombine.high %v6234, %v6234
        %v6257 = vcombine.high %v6241, %v6241
        %v6258 = vcombine.high %v6248, %v6248
        %v6259 = vcombine.high %v6255, %v6255
        %v6260 = vcombine.high %v6208, %v6208
        %v6262 = vunpack.c.l.s4 1966171168
        %v6263 = vunpack.c.0.s8 %v6262
        %v6264 = vlaneseq
        %v6265 = vshrl.u32 %v6264, 7
        %v6266 = vsub.s32 %v6263, %v6265
        %v6267 = vrot.slane %v6208, %v6266
        %v6269 = vunpack.c.l.s4 1966171168
        %v6270 = vunpack.c.0.s8 %v6269
        %v6271 = vlaneseq
        %v6272 = vshrl.u32 %v6271, 7
        %v6273 = vsub.s32 %v6270, %v6272
        %v6274 = vrot.slane %v6260, %v6273
        %v6275 = vcombine.high %v6267, %v6267
        %v6276 = vcombine.high %v6274, %v6274
        %v6278 = vunpack.c.l.s4 1966171168
        %v6279 = vunpack.c.0.s8 %v6278
        %v6280 = vlaneseq
        %v6281 = vshrl.u32 %v6280, 7
        %v6282 = vsub.s32 %v6279, %v6281
        %v6283 = vrot.slane %v6267, %v6282
        %v6285 = vunpack.c.l.s4 1966171168
        %v6286 = vunpack.c.0.s8 %v6285
        %v6287 = vlaneseq
        %v6288 = vshrl.u32 %v6287, 7
        %v6289 = vsub.s32 %v6286, %v6288
        %v6290 = vrot.slane %v6274, %v6289
        %v6292 = vunpack.c.l.s4 1966171168
        %v6293 = vunpack.c.0.s8 %v6292
        %v6294 = vlaneseq
        %v6295 = vshrl.u32 %v6294, 7
        %v6296 = vsub.s32 %v6293, %v6295
        %v6297 = vrot.slane %v6275, %v6296
        %v6299 = vunpack.c.l.s4 1966171168
        %v6300 = vunpack.c.0.s8 %v6299
        %v6301 = vlaneseq
        %v6302 = vshrl.u32 %v6301, 7
        %v6303 = vsub.s32 %v6300, %v6302
        %v6304 = vrot.slane %v6276, %v6303
        %v6305 = vcombine.high %v6283, %v6283
        %v6306 = vcombine.high %v6290, %v6290
        %v6307 = vcombine.high %v6297, %v6297
        %v6308 = vcombine.high %v6304, %v6304
        %v6311 = vlaneseq
        %v6312 = vshrl.u32 %v6311, 7
        %v6313 = vsub.s32 0, %v6312
        %v6314 = vrot.slane %v6248, %v6313
        %6315 = vrot.lane.b32.xlu0 %v6314, 16
        %v6316 = vpop.permute.xlu0 %6315
        %v6318 = vlaneseq
        %v6319 = vshrl.u32 %v6318, 7
        %v6320 = vsub.s32 0, %v6319
        %v6321 = vrot.slane %v6256, %v6320
        %6322 = vrot.lane.b32.xlu0 %v6321, 32
        %v6323 = vpop.permute.xlu0 %6322
        %v6325 = vlaneseq
        %v6326 = vshrl.u32 %v6325, 7
        %v6327 = vsub.s32 0, %v6326
        %v6328 = vrot.slane %v6258, %v6327
        %6329 = vrot.lane.b32.xlu0 %v6328, 48
        %v6330 = vpop.permute.xlu0 %6329
        %v6332 = vlaneseq
        %v6333 = vshrl.u32 %v6332, 7
        %v6334 = vsub.s32 0, %v6333
        %v6335 = vrot.slane %v6241, %v6334
        %6336 = vrot.lane.b32.xlu0 %v6335, 64
        %v6337 = vpop.permute.xlu0 %6336
        %v6339 = vlaneseq
        %v6340 = vshrl.u32 %v6339, 7
        %v6341 = vsub.s32 0, %v6340
        %v6342 = vrot.slane %v6255, %v6341
        %6343 = vrot.lane.b32.xlu0 %v6342, 80
        %v6344 = vpop.permute.xlu0 %6343
        %v6346 = vlaneseq
        %v6347 = vshrl.u32 %v6346, 7
        %v6348 = vsub.s32 0, %v6347
        %v6349 = vrot.slane %v6257, %v6348
        %6350 = vrot.lane.b32.xlu0 %v6349, 96
        %v6351 = vpop.permute.xlu0 %6350
        %v6353 = vlaneseq
        %v6354 = vshrl.u32 %v6353, 7
        %v6355 = vsub.s32 0, %v6354
        %v6356 = vrot.slane %v6259, %v6355
        %6357 = vrot.lane.b32.xlu0 %v6356, 112
        %v6358 = vpop.permute.xlu0 %6357
        %v6360 = vlaneseq
        %v6361 = vshrl.u32 %v6360, 7
        %v6362 = vsub.s32 0, %v6361
        %v6363 = vrot.slane %v6297, %v6362
        %6364 = vrot.lane.b32.xlu0 %v6363, 16
        %v6365 = vpop.permute.xlu0 %6364
        %v6367 = vlaneseq
        %v6368 = vshrl.u32 %v6367, 7
        %v6369 = vsub.s32 0, %v6368
        %v6370 = vrot.slane %v6305, %v6369
        %6371 = vrot.lane.b32.xlu0 %v6370, 32
        %v6372 = vpop.permute.xlu0 %6371
        %v6374 = vlaneseq
        %v6375 = vshrl.u32 %v6374, 7
        %v6376 = vsub.s32 0, %v6375
        %v6377 = vrot.slane %v6307, %v6376
        %6378 = vrot.lane.b32.xlu0 %v6377, 48
        %v6379 = vpop.permute.xlu0 %6378
        %v6381 = vlaneseq
        %v6382 = vshrl.u32 %v6381, 7
        %v6383 = vsub.s32 0, %v6382
        %v6384 = vrot.slane %v6290, %v6383
        %6385 = vrot.lane.b32.xlu0 %v6384, 64
        %v6386 = vpop.permute.xlu0 %6385
        %v6388 = vlaneseq
        %v6389 = vshrl.u32 %v6388, 7
        %v6390 = vsub.s32 0, %v6389
        %v6391 = vrot.slane %v6304, %v6390
        %6392 = vrot.lane.b32.xlu0 %v6391, 80
        %v6393 = vpop.permute.xlu0 %6392
        %v6395 = vlaneseq
        %v6396 = vshrl.u32 %v6395, 7
        %v6397 = vsub.s32 0, %v6396
        %v6398 = vrot.slane %v6306, %v6397
        %6399 = vrot.lane.b32.xlu0 %v6398, 96
        %v6400 = vpop.permute.xlu0 %6399
        %v6402 = vlaneseq
        %v6403 = vshrl.u32 %v6402, 7
        %v6404 = vsub.s32 0, %v6403
        %v6405 = vrot.slane %v6308, %v6404
        %6406 = vrot.lane.b32.xlu0 %v6405, 112
        %v6407 = vpop.permute.xlu0 %6406
        %vm6409 = vcmask 130048
        %v6410 = vsel %vm6409, %v6234, %v6316
        %vm6411 = vcmask 261120
        %v6412 = vsel %vm6411, %v6410, %v6323
        %vm6413 = vcmask 392192
        %v6414 = vsel %vm6413, %v6412, %v6330
        %v6415 = vsel %vm1815, %v6414, %v6337
        %vm6416 = vcmask 654336
        %v6417 = vsel %vm6416, %v6415, %v6344
        %vm6418 = vcmask 785408
        %v6419 = vsel %vm6418, %v6417, %v6351
        %vm6420 = vcmask 916480
        %v6421 = vsel %vm6420, %v6419, %v6358
        %v6422 = vsel %vm6409, %v6283, %v6365
        %v6423 = vsel %vm6411, %v6422, %v6372
        %v6424 = vsel %vm6413, %v6423, %v6379
        %v6425 = vsel %vm1815, %v6424, %v6386
        %v6426 = vsel %vm6416, %v6425, %v6393
        %v6427 = vsel %vm6418, %v6426, %v6400
        %v6428 = vsel %vm6420, %v6427, %v6407
        %v6429 = vld [vmem:[%s5] sm:$0xff]
        %v6430 = vld [vmem:[%s5 + $0x8] sm:$0xff]
        %v6431 = vld [vmem:[%s5 + $0x10] sm:$0xff]
        %v6432 = vld [vmem:[%s5 + $0x18] sm:$0xff]
        %v6433 = vld [vmem:[%s5 + $0x20] sm:$0xff]
        %v6434 = vld [vmem:[%s5 + $0x28] sm:$0xff]
        %v6435 = vld [vmem:[%s5 + $0x30] sm:$0xff]
        %v6436 = vld [vmem:[%s5 + $0x38] sm:$0xff]
        %v6437 = vld [vmem:[%s5 + $0x40] sm:$0xff]
        %v6438 = vld [vmem:[%s5 + $0x48] sm:$0xff]
        %v6439 = vld [vmem:[%s5 + $0x50] sm:$0xff]
        %v6440 = vld [vmem:[%s5 + $0x58] sm:$0xff]
        %v6441 = vld [vmem:[%s5 + $0x60] sm:$0xff]
        %v6442 = vld [vmem:[%s5 + $0x68] sm:$0xff]
        %v6443 = vld [vmem:[%s5 + $0x70] sm:$0xff]
        %v6444 = vld [vmem:[%s5 + $0x78] sm:$0xff]
        %v6445 = vld [vmem:[%s5 + $0x80] sm:$0xff]
        %v6446 = vld [vmem:[%s5 + $0x88] sm:$0xff]
        %v6447 = vld [vmem:[%s5 + $0x90] sm:$0xff]
        %v6448 = vld [vmem:[%s5 + $0x98] sm:$0xff]
        %v6449 = vld [vmem:[%s5 + $0xa0] sm:$0xff]
        %v6450 = vld [vmem:[%s5 + $0xa8] sm:$0xff]
        %v6451 = vld [vmem:[%s5 + $0xb0] sm:$0xff]
        %v6452 = vld [vmem:[%s5 + $0xb8] sm:$0xff]
        %v6453 = vld [vmem:[%s5 + $0xc0] sm:$0xff]
        %v6454 = vld [vmem:[%s5 + $0xc8] sm:$0xff]
        %v6455 = vld [vmem:[%s5 + $0xd0] sm:$0xff]
        %v6456 = vld [vmem:[%s5 + $0xd8] sm:$0xff]
        %v6457 = vld [vmem:[%s5 + $0xe0] sm:$0xff]
        %v6458 = vld [vmem:[%s5 + $0xe8] sm:$0xff]
        %v6459 = vld [vmem:[%s5 + $0xf0] sm:$0xff]
        %v6460 = vld [vmem:[%s5 + $0xf8] sm:$0xff]
        %v6461 = vld [vmem:[%s6] sm:$0x1]
        %6462 = vmatprep.subr.mxu0 0.0
        %6463 = vmatpush1.msra.mxu0 %v6444
        %6464 = vmatprep.subr.mxu0 0.0
        %6465 = vmatpush1.msra.mxu0 %v6443
        %6466 = vmatprep.subr.mxu0 0.0
        %6467 = vmatpush1.msra.mxu0 %v6442
        %6468 = vmatprep.subr.mxu0 0.0
        %6469 = vmatpush1.msra.mxu0 %v6441
        %6470 = vmatprep.subr.mxu0 0.0
        %6471 = vmatpush1.msra.mxu0 %v6440
        %6472 = vmatprep.subr.mxu0 0.0
        %6473 = vmatpush1.msra.mxu0 %v6439
        %6474 = vmatprep.subr.mxu0 0.0
        %6475 = vmatpush1.msra.mxu0 %v6438
        %6476 = vmatprep.subr.mxu0 0.0
        %6477 = vmatpush1.msra.mxu0 %v6437
        %6478 = vmatprep.subr.mxu0 0.0
        %6479 = vmatpush1.msra.mxu0 %v6436
        %6480 = vmatprep.subr.mxu0 0.0
        %6481 = vmatpush1.msra.mxu0 %v6435
        %6482 = vmatprep.subr.mxu0 0.0
        %6483 = vmatpush1.msra.mxu0 %v6434
        %6484 = vmatprep.subr.mxu0 0.0
        %6485 = vmatpush1.msra.mxu0 %v6433
        %6486 = vmatprep.subr.mxu0 0.0
        %6487 = vmatpush1.msra.mxu0 %v6432
        %6488 = vmatprep.subr.mxu0 0.0
        %6489 = vmatpush1.msra.mxu0 %v6431
        %6490 = vmatprep.subr.mxu0 0.0
        %6491 = vmatpush1.msra.mxu0 %v6430
        %6492 = vmatprep.subr.mxu0 0.0
        %6493 = vmatpush1.msra.mxu0 %v6429
        %6494 = vmatprep.subr.mxu0 0.0
        %6495 = vmatpush2.msra.mxu0 %v6460
        %6496 = vmatprep.subr.mxu0 0.0
        %6497 = vmatpush2.msra.mxu0 %v6459
        %6498 = vmatprep.subr.mxu0 0.0
        %6499 = vmatpush2.msra.mxu0 %v6458
        %6500 = vmatprep.subr.mxu0 0.0
        %6501 = vmatpush2.msra.mxu0 %v6457
        %6502 = vmatprep.subr.mxu0 0.0
        %6503 = vmatpush2.msra.mxu0 %v6456
        %6504 = vmatprep.subr.mxu0 0.0
        %6505 = vmatpush2.msra.mxu0 %v6455
        %6506 = vmatprep.subr.mxu0 0.0
        %6507 = vmatpush2.msra.mxu0 %v6454
        %6508 = vmatprep.subr.mxu0 0.0
        %6509 = vmatpush2.msra.mxu0 %v6453
        %6510 = vmatprep.subr.mxu0 0.0
        %6511 = vmatpush2.msra.mxu0 %v6452
        %6512 = vmatprep.subr.mxu0 0.0
        %6513 = vmatpush2.msra.mxu0 %v6451
        %6514 = vmatprep.subr.mxu0 0.0
        %6515 = vmatpush2.msra.mxu0 %v6450
        %6516 = vmatprep.subr.mxu0 0.0
        %6517 = vmatpush2.msra.mxu0 %v6449
        %6518 = vmatprep.subr.mxu0 0.0
        %6519 = vmatpush2.msra.mxu0 %v6448
        %6520 = vmatprep.subr.mxu0 0.0
        %6521 = vmatpush2.msra.mxu0 %v6447
        %6522 = vmatprep.subr.mxu0 0.0
        %6523 = vmatpush2.msra.mxu0 %v6446
        %6524 = vmatprep.subr.mxu0 0.0
        %6525 = vmatpush2.msra.mxu0 %v6445
        %6526 = vmatprep.mubr.f32.mxu0 %v6428
        %6527 = vmatmul.mubr.f32.gmra.mxu0 %v6421
        %v6528 = vpop.f32.mrf.mxu0
        %v6529 = vadd.f32 %v6461, %v6528
        %v6530 = vpop.f32.mrf.mxu0
        %6531 = vdwg.mxu0
        %v6532 = vmax.f32 %v6529, 0.0
        %v6533 = vld [vmem:[%s7] sm:$0xff]
        %v6534 = vld [vmem:[%s7 + $0x8] sm:$0xff]
        %v6535 = vld [vmem:[%s7 + $0x10] sm:$0xff]
        %v6536 = vld [vmem:[%s7 + $0x18] sm:$0xff]
        %v6537 = vld [vmem:[%s7 + $0x20] sm:$0xff]
        %v6538 = vld [vmem:[%s7 + $0x28] sm:$0xff]
        %v6539 = vld [vmem:[%s7 + $0x30] sm:$0xff]
        %v6540 = vld [vmem:[%s7 + $0x38] sm:$0xff]
        %v6541 = vld [vmem:[%s7 + $0x40] sm:$0xff]
        %v6542 = vld [vmem:[%s7 + $0x48] sm:$0xff]
        %v6543 = vld [vmem:[%s7 + $0x50] sm:$0xff]
        %v6544 = vld [vmem:[%s7 + $0x58] sm:$0xff]
        %v6545 = vld [vmem:[%s7 + $0x60] sm:$0xff]
        %v6546 = vld [vmem:[%s7 + $0x68] sm:$0xff]
        %v6547 = vld [vmem:[%s7 + $0x70] sm:$0xff]
        %v6548 = vld [vmem:[%s8] sm:$0x1]
        %vm6549 = vcmask 982016
        %v6551 = vsel %vm6549, %v6532, 0
        %6553 = vmatprep.subr.mxu0 0.0
        %6554 = vmatpush1.msra.mxu0 0.0
        %6555 = vmatprep.subr.mxu0 0.0
        %6556 = vmatpush1.msra.mxu0 %v6547
        %6557 = vmatprep.subr.mxu0 0.0
        %6558 = vmatpush1.msra.mxu0 %v6546
        %6559 = vmatprep.subr.mxu0 0.0
        %6560 = vmatpush1.msra.mxu0 %v6545
        %6561 = vmatprep.subr.mxu0 0.0
        %6562 = vmatpush1.msra.mxu0 %v6544
        %6563 = vmatprep.subr.mxu0 0.0
        %6564 = vmatpush1.msra.mxu0 %v6543
        %6565 = vmatprep.subr.mxu0 0.0
        %6566 = vmatpush1.msra.mxu0 %v6542
        %6567 = vmatprep.subr.mxu0 0.0
        %6568 = vmatpush1.msra.mxu0 %v6541
        %6569 = vmatprep.subr.mxu0 0.0
        %6570 = vmatpush1.msra.mxu0 %v6540
        %6571 = vmatprep.subr.mxu0 0.0
        %6572 = vmatpush1.msra.mxu0 %v6539
        %6573 = vmatprep.subr.mxu0 0.0
        %6574 = vmatpush1.msra.mxu0 %v6538
        %6575 = vmatprep.subr.mxu0 0.0
        %6576 = vmatpush1.msra.mxu0 %v6537
        %6577 = vmatprep.subr.mxu0 0.0
        %6578 = vmatpush1.msra.mxu0 %v6536
        %6579 = vmatprep.subr.mxu0 0.0
        %6580 = vmatpush1.msra.mxu0 %v6535
        %6581 = vmatprep.subr.mxu0 0.0
        %6582 = vmatpush1.msra.mxu0 %v6534
        %6583 = vmatprep.subr.mxu0 0.0
        %6584 = vmatpush1.msra.mxu0 %v6533
        %6585 = vmatprep.subr.mxu0 0.0
        %6586 = vmatpush2.msra.mxu0 0.0
        %6587 = vmatprep.subr.mxu0 0.0
        %6588 = vmatpush2.msra.mxu0 0.0
        %6589 = vmatprep.subr.mxu0 0.0
        %6590 = vmatpush2.msra.mxu0 0.0
        %6591 = vmatprep.subr.mxu0 0.0
        %6592 = vmatpush2.msra.mxu0 0.0
        %6593 = vmatprep.subr.mxu0 0.0
        %6594 = vmatpush2.msra.mxu0 0.0
        %6595 = vmatprep.subr.mxu0 0.0
        %6596 = vmatpush2.msra.mxu0 0.0
        %6597 = vmatprep.subr.mxu0 0.0
        %6598 = vmatpush2.msra.mxu0 0.0
        %6599 = vmatprep.subr.mxu0 0.0
        %6600 = vmatpush2.msra.mxu0 0.0
        %6601 = vmatprep.subr.mxu0 0.0
        %6602 = vmatpush2.msra.mxu0 0.0
        %6603 = vmatprep.subr.mxu0 0.0
        %6604 = vmatpush2.msra.mxu0 0.0
        %6605 = vmatprep.subr.mxu0 0.0
        %6606 = vmatpush2.msra.mxu0 0.0
        %6607 = vmatprep.subr.mxu0 0.0
        %6608 = vmatpush2.msra.mxu0 0.0
        %6609 = vmatprep.subr.mxu0 0.0
        %6610 = vmatpush2.msra.mxu0 0.0
        %6611 = vmatprep.subr.mxu0 0.0
        %6612 = vmatpush2.msra.mxu0 0.0
        %6613 = vmatprep.subr.mxu0 0.0
        %6614 = vmatpush2.msra.mxu0 0.0
        %6615 = vmatprep.subr.mxu0 0.0
        %6616 = vmatpush2.msra.mxu0 0.0
        %6617 = vmatprep.mubr.f32.mxu0 0.0
        %6618 = vmatmul.mubr.f32.gmra.mxu0 %v6551
        %v6619 = vpop.f32.mrf.mxu0
        %v6620 = vadd.f32 %v6548, %v6619
        %v6621 = vpop.f32.mrf.mxu0
        %6622 = vdwg.mxu0
        %v6623 = vmax.f32 %v6620, 0.0
        %v6624 = vld [vmem:[%s9] sm:$0xff]
        %v6625 = vld [vmem:[%s9 + $0x8] sm:$0xff]
        %v6626 = vld [vmem:[%s9 + $0x10] sm:$0xff]
        %v6627 = vld [vmem:[%s9 + $0x18] sm:$0xff]
        %v6628 = vld [vmem:[%s9 + $0x20] sm:$0xff]
        %v6629 = vld [vmem:[%s9 + $0x28] sm:$0xff]
        %v6630 = vld [vmem:[%s9 + $0x30] sm:$0xff]
        %v6631 = vld [vmem:[%s9 + $0x38] sm:$0xff]
        %v6632 = vld [vmem:[%s9 + $0x40] sm:$0xff]
        %v6633 = vld [vmem:[%s9 + $0x48] sm:$0xff]
        %v6634 = vld [vmem:[%s9 + $0x50] sm:$0xf]
        %v6635 = vld [vmem:[%s10] sm:$0x1]
        %vm6636 = vcmask 687104
        %v6638 = vsel %vm6636, %v6623, 0
        %v6641 = vsel %vm5968, %v6634, 0
        %6643 = vmatprep.subr.mxu0 0.0
        %6644 = vmatpush1.msra.mxu0 0.0
        %6645 = vmatprep.subr.mxu0 0.0
        %6646 = vmatpush1.msra.mxu0 0.0
        %6647 = vmatprep.subr.mxu0 0.0
        %6648 = vmatpush1.msra.mxu0 0.0
        %6649 = vmatprep.subr.mxu0 0.0
        %6650 = vmatpush1.msra.mxu0 0.0
        %6651 = vmatprep.subr.mxu0 0.0
        %6652 = vmatpush1.msra.mxu0 0.0
        %6653 = vmatprep.subr.mxu0 0.0
        %6654 = vmatpush1.msra.mxu0 %v6641
        %6655 = vmatprep.subr.mxu0 0.0
        %6656 = vmatpush1.msra.mxu0 %v6633
        %6657 = vmatprep.subr.mxu0 0.0
        %6658 = vmatpush1.msra.mxu0 %v6632
        %6659 = vmatprep.subr.mxu0 0.0
        %6660 = vmatpush1.msra.mxu0 %v6631
        %6661 = vmatprep.subr.mxu0 0.0
        %6662 = vmatpush1.msra.mxu0 %v6630
        %6663 = vmatprep.subr.mxu0 0.0
        %6664 = vmatpush1.msra.mxu0 %v6629
        %6665 = vmatprep.subr.mxu0 0.0
        %6666 = vmatpush1.msra.mxu0 %v6628
        %6667 = vmatprep.subr.mxu0 0.0
        %6668 = vmatpush1.msra.mxu0 %v6627
        %6669 = vmatprep.subr.mxu0 0.0
        %6670 = vmatpush1.msra.mxu0 %v6626
        %6671 = vmatprep.subr.mxu0 0.0
        %6672 = vmatpush1.msra.mxu0 %v6625
        %6673 = vmatprep.subr.mxu0 0.0
        %6674 = vmatpush1.msra.mxu0 %v6624
        %6675 = vmatprep.subr.mxu0 0.0
        %6676 = vmatpush2.msra.mxu0 0.0
        %6677 = vmatprep.subr.mxu0 0.0
        %6678 = vmatpush2.msra.mxu0 0.0
        %6679 = vmatprep.subr.mxu0 0.0
        %6680 = vmatpush2.msra.mxu0 0.0
        %6681 = vmatprep.subr.mxu0 0.0
        %6682 = vmatpush2.msra.mxu0 0.0
        %6683 = vmatprep.subr.mxu0 0.0
        %6684 = vmatpush2.msra.mxu0 0.0
        %6685 = vmatprep.subr.mxu0 0.0
        %6686 = vmatpush2.msra.mxu0 0.0
        %6687 = vmatprep.subr.mxu0 0.0
        %6688 = vmatpush2.msra.mxu0 0.0
        %6689 = vmatprep.subr.mxu0 0.0
        %6690 = vmatpush2.msra.mxu0 0.0
        %6691 = vmatprep.subr.mxu0 0.0
        %6692 = vmatpush2.msra.mxu0 0.0
        %6693 = vmatprep.subr.mxu0 0.0
        %6694 = vmatpush2.msra.mxu0 0.0
        %6695 = vmatprep.subr.mxu0 0.0
        %6696 = vmatpush2.msra.mxu0 0.0
        %6697 = vmatprep.subr.mxu0 0.0
        %6698 = vmatpush2.msra.mxu0 0.0
        %6699 = vmatprep.subr.mxu0 0.0
        %6700 = vmatpush2.msra.mxu0 0.0
        %6701 = vmatprep.subr.mxu0 0.0
        %6702 = vmatpush2.msra.mxu0 0.0
        %6703 = vmatprep.subr.mxu0 0.0
        %6704 = vmatpush2.msra.mxu0 0.0
        %6705 = vmatprep.subr.mxu0 0.0
        %6706 = vmatpush2.msra.mxu0 0.0
        %6707 = vmatprep.mubr.f32.mxu0 0.0
        %6708 = vmatmul.mubr.f32.gmra.mxu0 %v6638
        %v6709 = vpop.f32.mrf.mxu0
        %v6710 = vadd.f32 %v6635, %v6709
        %v6711 = vpop.f32.mrf.mxu0
        %6712 = vdwg.mxu0
        %vm6713 = vcmask 73728
        %6714 = vst.msk [vmem:[%s478] sm:$0x1] %vm6713, %v6710
        %s6715 = sand.u32 %s269, 1
        %s6716 = scalar_lea.sflag [#allocation4], %s6715
        %s6717 = sand.u32 %s269, 1
        %s6718 = scalar_lea.vmem [#allocation3], %s6717
        // Predicated region
        $region103: #{net_forward.1} parent=97 // pred_check
          %p6719 = pneg %p279
        $region104: #{net_forward.1} parent=97 // pred_check_branch
          %6721 = sbr.rel (%p6719) target = $region106
        $region105: #{net_forward.1} parent=97 // pred_region
          %s6723 = ssub.s32 16, 16
          %6724 = vsyncadd %s6716, %s6723
          %s6725 = smul.addr %s25, 16
          %s6726 = scalar_lea.hbm %s11, %s6725
          %s6728 = sshll.u32 %s6718, 4
          %s6729 = int_to_ptr.vmem [resolvable:$true] %s6728
          %6731 = dma.vmem_to_hbm [thread:$0]  %s6729, 16, %s6726, %s6716
        $region106: #{net_forward.1} parent=97 // pred_fallthru
          _
      $region98: #{net_forward.1} parent=5 // pred_fallthru
        _
      %p6732 = scmp.le.s32.totalorder 2, %s20
      // Predicated region
      $region107: #{net_forward.1} parent=5 // pred_check
        %p6733 = pneg %p6732
      $region108: #{net_forward.1} parent=5 // pred_check_branch
        %6735 = sbr.rel (%p6733) target = $region110
      $region109: #{net_forward.1} parent=5 // pred_region
        %s6736 = ssub.s32 %s20, 2
        // Predicated region
        $region111: #{net_forward.1} parent=109 // pred_check
          %p6737 = pneg %p285
        $region112: #{net_forward.1} parent=109 // pred_check_branch
          %6739 = sbr.rel (%p6737) target = $region114
        $region113: #{net_forward.1} parent=109 // pred_region
          %s6740 = sand.u32 %s270, 1
          %s6741 = scalar_lea.sflag [#allocation4], %s6740
          %s6742 = sand.u32 %s270, 1
          %s6743 = scalar_lea.vmem [#allocation3], %s6742
          %6744 = dma.done %s6741, 16
        $region114: #{net_forward.1} parent=109 // pred_fallthru
          _
      $region110: #{net_forward.1} parent=5 // pred_fallthru
        _
    $region6: #{net_forward.1} parent=1 // loop_footer
      %s24 = sadd.s32 1, %s20
    $region7: #{net_forward.1} parent=1 // loop_footer_branch
      %19 = sbr.rel target = $region3
    $region8: #{net_forward.1} parent=1 // loop_exit
      _
    %6745 = vsyncpa [#allocation4], 1
    %s6746 = scalar_lea.sflag [#allocation4], 1
    %6747 = vsyncpa %s6746, 1

</llo_original>
